<compile_context>
chip_gen: v7x
topology: tpu7x:2x2x1
jax: 0.10.0
libtpu: 0.0.40
codegen_flags: <defaults>
</compile_context>

<pallas_src>
import jax
import jax.numpy as jnp
from jax import lax
from jax.experimental import pallas as pl
from jax.experimental.pallas import tpu as pltpu

_BN_EPS = 1e-5


# ---------------------------------------------------------------------------
# Fused kernel (B_blk batch elements per grid step; everything VMEM resident)
# ---------------------------------------------------------------------------

def _make_fused_kernel(B, C, D, H, W, hid, se_hid, off):
    HW = H * W
    L = D * hid                      # packed lane width: lanes = (d, hidden)
    S = D * se_hid                   # packed SE lane width: lanes = (d, se)
    M = B * HW                       # matmul M (rows = (b, h, w))
    prec = lax.Precision.HIGHEST     # match the full-precision reference

    o_wexp = off["w_exp"]
    o_ws = off["w_s"]
    o_tm = off["t_mat"]
    o_se1 = off["w_se1"]
    o_se2 = off["w_se2"]
    o_wpr = off["w_proj"]
    o_b = off["bias"]
    o_bpr = off["b_proj"]

    def mm(a, b, dnums):
        return lax.dot_general(a, b, dimension_numbers=dnums,
                               preferred_element_type=jnp.float32,
                               precision=prec)

    def kernel(x_ref, p_ref, o_ref, hpad_ref):
        # x_ref block: (B, C, D*H*W) -- pure reshape of NCDHW, 256-lane dense loads.
        x_imgs = [x_ref[b] for b in range(B)]                    # each (C, D*HW)

        # Gather the input into MXU-lhs layout: rows = (d, c) (the contraction axis of
        # the block-diagonal expansion weight), lanes = (b, h, w) (the matmul M axis).
        x_dc = jnp.concatenate(
            [jnp.concatenate([xi[:, d * HW:(d + 1) * HW] for xi in x_imgs], axis=1)
             for d in range(D)], axis=0)                         # (D*C, M)

        # (1) 1x1x1 expansion conv + folded BN + ReLU.  Contraction on the sublane axis
        #     of both operands (lhs-transposed MXU-native form): no vxpose needed.
        h = mm(x_dc, p_ref[o_wexp:o_wexp + D * C, :], (((0,), (0,)), ((), ())))
        h = jnp.maximum(h + p_ref[o_b:o_b + 1, :], 0.0)          # (M, L), lanes=(d,hid)
        h4 = h.reshape(B, H, W, L)

        # (2) depthwise (1,3,3) conv, reflect pad on H and W, folded BN + ReLU.
        #     Scratch is padded only along H (a free, non-tiled axis) so every scratch
        #     read/write is full-row aligned.  NOTE: hpad_ref persists across grid steps
        #     and is fully overwritten every step (rows 0 .. H+1 all written below).
        hpad_ref[:, 1:H + 1] = h4
        hpad_ref[:, 0:1] = h4[:, 1:2]                            # reflect: row -1 -> 1
        hpad_ref[:, H + 1:H + 2] = h4[:, H - 2:H - 1]            # reflect: row  H -> H-2

        ws = p_ref[o_ws:o_ws + 9, :]                             # (9, L) per-lane taps
        acc = None
        for dh in range(3):
            t = hpad_ref[:, dh:dh + H]                           # per-tap slice (B,H,W,L)
            for dw in range(3):
                if dw == 0:      # w-1 with reflect at w=0
                    sh = jnp.concatenate([t[:, :, 1:2], t[:, :, :W - 1]], axis=2)
                elif dw == 1:
                    sh = t
                else:            # w+1 with reflect at w=W-1
                    sh = jnp.concatenate([t[:, :, 1:], t[:, :, W - 2:W - 1]], axis=2)
                term = sh * ws[3 * dh + dw]
                acc = term if acc is None else acc + term
        h4 = jnp.maximum(acc + p_ref[o_b + 1:o_b + 2, :], 0.0)
        hf = h4.reshape(M, L)

        # (3) depthwise (3,1,1) conv along D: D lives on the lane axis, so the 3-tap
        #     reflect-padded conv (BN scale folded) is a single (L,L) lane-mixing matmul.
        #     (For much larger D*hid, replace with pltpu.roll-by-hid shifts + VPU FMAs.)
        hf = mm(hf, p_ref[o_tm:o_tm + L, :], (((1,), (0,)), ((), ())))
        hf = jnp.maximum(hf + p_ref[o_b + 2:o_b + 3, :], 0.0)

        # (4) PWSqueezeExcite3D (pointwise gating, no pooling), block-diagonal over D.
        u = mm(hf, p_ref[o_se1:o_se1 + S, :], (((1,), (1,)), ((), ())))     # (M, S)
        u = jnp.maximum(u + p_ref[o_b + 3:o_b + 4, 0:S], 0.0)
        g = mm(u, p_ref[o_se2:o_se2 + S, :], (((1,), (0,)), ((), ())))      # (M, L)
        hf = hf * jax.nn.sigmoid(g + p_ref[o_b + 4:o_b + 5, :])

        # (5) 1x1x1 projection + folded BN + ReLU, produced channel-major directly:
        #     rows = (d, c), lanes = (b, h, w) -> no output transpose needed.
        y = mm(p_ref[o_wpr:o_wpr + D * C, :], hf, (((1,), (1,)), ((), ())))  # (D*C, M)
        y = jnp.maximum(y + p_ref[o_bpr:o_bpr + D * C, 0:1], 0.0)

        # residual add + lane-dense (C, D*H*W) store, one image at a time.
        for b in range(B):
            y_b = y[:, b * HW:(b + 1) * HW]                      # (D*C, HW), rows (d, c)
            out_b = jnp.concatenate(
                [y_b[d * C:(d + 1) * C, :] for d in range(D)], axis=1)   # (C, D*HW)
            o_ref[b] = (x_imgs[b] + out_b).astype(o_ref.dtype)

    return kernel


# ---------------------------------------------------------------------------
# pallas_call wrapper
# ---------------------------------------------------------------------------

def _choose_b_blk(N, HW):
    """Largest divisor of N with B*HW <= 256 (MXU M target / register budget) that still
    leaves >= 2 grid steps so both v7x TensorCores get work."""
    best = 1
    for cand in range(2, N + 1):
        if N % cand == 0 and cand * HW <= 256 and N // cand >= 2:
            best = cand
    return best


def inverted_bottleneck_2plus1(x_ncdhw, param_slab, offsets, hid, se_hid, b_blk=None):
    N, C, D, H, W = x_ncdhw.shape
    assert D >= 2 and H >= 2 and W >= 2, "reflect padding of width 1 needs size >= 2"
    HW = H * W
    L = D * hid
    assert param_slab.shape[1] == L
    if b_blk is None:
        b_blk = _choose_b_blk(N, HW)
    assert N % b_blk == 0

    # (N, C, D*H*W) is a pure reshape of NCDHW: no HBM transpose, and the last block dim
    # (D*H*W = 256 here) keeps both the input load and the output store lane-dense.
    x_io = x_ncdhw.reshape(N, C, D * HW)
    io_spec = pl.BlockSpec((b_blk, C, D * HW), lambda n: (n, 0, 0))
    p_spec = pl.BlockSpec(param_slab.shape, lambda n: (0, 0))

    flops = int((N // b_blk) * 2 * (b_blk * HW) * L
                * (2 * D * C + L + 2 * D * se_hid + 9))
    cost = pl.CostEstimate(
        flops=flops,
        transcendentals=int(N * HW * L),
        bytes_accessed=int(2 * x_io.size * x_io.dtype.itemsize
                           + param_slab.size * param_slab.dtype.itemsize),
    )

    out = pl.pallas_call(
        _make_fused_kernel(b_blk, C, D, H, W, hid, se_hid, offsets),
        out_shape=jax.ShapeDtypeStruct((N, C, D * HW), x_ncdhw.dtype),
        grid=(N // b_blk,),
        in_specs=[io_spec, p_spec],
        out_specs=io_spec,
        scratch_shapes=[pltpu.VMEM((b_blk, H + 2, W, L), jnp.float32)],
        input_output_aliases={0: 0},   # x is fully read before the residual store
        compiler_params=pltpu.CompilerParams(dimension_semantics=("parallel",)),
        cost_estimate=cost,
    )(x_io, param_slab)
    return out.reshape(N, C, D, H, W)


# ---------------------------------------------------------------------------
# Parameters: raw (PyTorch-like) params + host-side folding / lane packing
# ---------------------------------------------------------------------------

def init_raw_params(key, channels, expansion_factor=4, excitation_ratio=0.25):
    hid = channels * expansion_factor
    se_hid = int(excitation_ratio * hid)
    ks = list(jax.random.split(key, 16))

    def nrm(k, shape, s=0.1):
        return (s * jax.random.normal(k, shape)).astype(jnp.float32)

    def bn(k, c):
        k1, k2, k3, k4 = jax.random.split(k, 4)
        gamma = 1.0 + nrm(k1, (c,))
        beta = nrm(k2, (c,))
        mean = nrm(k3, (c,), 0.05)
        var = 1.0 + jnp.abs(nrm(k4, (c,)))
        return (gamma, beta, mean, var)

    raw = {
        "w_exp": nrm(ks[0], (channels, hid)),   # Conv3d(C, hid, 1) weight^T
        "b_exp": nrm(ks[1], (hid,)),
        "bn_exp": bn(ks[2], hid),
        "w_dw_s": nrm(ks[3], (3, 3, hid)),      # depthwise (1,3,3)
        "b_dw_s": nrm(ks[4], (hid,)),
        "bn_dw_s": bn(ks[5], hid),
        "w_dw_t": nrm(ks[6], (3, hid)),         # depthwise (3,1,1)
        "b_dw_t": nrm(ks[7], (hid,)),
        "bn_dw_t": bn(ks[8], hid),
        "w_se1": nrm(ks[9], (hid, se_hid)),     # SE conv_reduce weight^T
        "b_se1": nrm(ks[10], (se_hid,)),
        "w_se2": nrm(ks[11], (se_hid, hid)),    # SE conv_expand weight^T
        "b_se2": nrm(ks[12], (hid,)),
        "w_proj": nrm(ks[13], (hid, channels)),  # Conv3d(hid, C, 1) weight^T
        "b_proj": nrm(ks[14], (channels,)),
        "bn_proj": bn(ks[15], channels),
    }
    return raw, hid, se_hid


def _fold_bn(p):
    gamma, beta, mean, var = p
    scale = gamma / jnp.sqrt(var + _BN_EPS)
    shift = beta - mean * scale
    return scale, shift


def _pad_rows8(a):
    r = (-a.shape[0]) % 8
    return jnp.pad(a, ((0, r), (0, 0))) if r else a


def build_param_slab(raw, C, D, hid, se_hid):
    """Fold BN + conv biases into the weights, pack the D axis onto lanes (block-diagonal
    weights), and concatenate everything into ONE (rows, L) slab -> a single parameter DMA.
    Every segment row offset is a multiple of 8 so in-kernel slices are sublane-aligned."""
    L = D * hid
    S = D * se_hid
    assert S <= L
    eye = jnp.eye(D, dtype=jnp.float32)
    s_exp, t_exp = _fold_bn(raw["bn_exp"])
    s_sp, t_sp = _fold_bn(raw["bn_dw_s"])
    s_tm, t_tm = _fold_bn(raw["bn_dw_t"])
    s_pr, t_pr = _fold_bn(raw["bn_proj"])

    # expansion: rows = (d, c), cols = (d', hid), block-diagonal in d
    w_exp = jnp.einsum("ck,de->dcek", raw["w_exp"] * s_exp[None, :], eye).reshape(D * C, L)
    b_exp = jnp.tile(raw["b_exp"] * s_exp + t_exp, D)

    # spatial depthwise taps (shared across d), BN scale folded
    w_s = jnp.tile((raw["w_dw_s"] * s_sp[None, None, :]).reshape(9, hid), (1, D))
    b_s = jnp.tile(raw["b_dw_s"] * s_sp + t_sp, D)

    # temporal depthwise conv along D as an (L,L) lane-mixing matrix (reflect pad + BN folded)
    wt = raw["w_dw_t"] * s_tm[None, :]
    eye_h = jnp.eye(hid, dtype=jnp.float32)
    t_mat = jnp.zeros((L, L), jnp.float32)
    for d_dst in range(D):
        for tap in range(3):
            d_src = d_dst + tap - 1
            if d_src < 0:
                d_src = -d_src                    # reflect: -1 -> 1
            elif d_src > D - 1:
                d_src = 2 * (D - 1) - d_src       # reflect:  D -> D-2
            t_mat = t_mat.at[d_src * hid:(d_src + 1) * hid,
                             d_dst * hid:(d_dst + 1) * hid].add(eye_h * wt[tap][None, :])
    b_t = jnp.tile(raw["b_dw_t"] * s_tm + t_tm, D)

    # squeeze-and-excite, block-diagonal over d; stored transposed so every row is L wide
    w_se1T = jnp.einsum("ks,de->dsek", raw["w_se1"], eye).reshape(S, L)
    b_se1 = jnp.tile(raw["b_se1"], D)
    w_se2 = jnp.einsum("sk,de->dsek", raw["w_se2"], eye).reshape(S, L)
    b_se2 = jnp.tile(raw["b_se2"], D)

    # projection: rows = (d, c), cols = (d', hid) -> matmul output is channel-major directly
    w_projT = jnp.einsum("kc,de->dcek", raw["w_proj"] * s_pr[None, :], eye).reshape(D * C, L)
    b_proj = jnp.tile(raw["b_proj"] * s_pr + t_pr, D)            # per (d, c) output row

    bias_rows = jnp.stack(
        [b_exp, b_s, b_t, jnp.pad(b_se1, (0, L - S)), b_se2], axis=0)       # (5, L)
    b_proj_blk = jnp.broadcast_to(b_proj[:, None], (D * C, L))              # lane 0 is read

    segments = [("w_exp", w_exp), ("w_s", w_s), ("t_mat", t_mat),
                ("w_se1", w_se1T), ("w_se2", w_se2), ("w_proj", w_projT),
                ("bias", bias_rows), ("b_proj", b_proj_blk)]
    offsets, rows, cur = {}, [], 0
    for name, arr in segments:
        arr = _pad_rows8(jnp.asarray(arr, jnp.float32))
        offsets[name] = cur
        cur += arr.shape[0]
        rows.append(arr)
    # bf16 weight packing would halve this DMA on v6e/v7x if the accuracy budget allows;
    # kept f32 so the comparison against the full-precision reference stays tight.
    return jnp.concatenate(rows, axis=0), offsets


# ---------------------------------------------------------------------------
# Pure-JAX reference (BN applied from raw running stats, un-folded)
# ---------------------------------------------------------------------------

def reference_forward(x_ncdhw, raw):
    N, C, D, H, W = x_ncdhw.shape
    prec = lax.Precision.HIGHEST

    def bn(y, p):
        gamma, beta, mean, var = p
        return (y - mean) / jnp.sqrt(var + _BN_EPS) * gamma + beta

    x = jnp.transpose(x_ncdhw, (0, 2, 3, 4, 1))                          # NDHWC
    h = jnp.einsum("ndhwc,ck->ndhwk", x, raw["w_exp"], precision=prec) + raw["b_exp"]
    h = jax.nn.relu(bn(h, raw["bn_exp"]))

    xp = jnp.pad(h, ((0, 0), (0, 0), (1, 1), (1, 1), (0, 0)), mode="reflect")
    acc = jnp.zeros_like(h)
    for i in range(3):
        for j in range(3):
            acc = acc + xp[:, :, i:i + H, j:j + W, :] * raw["w_dw_s"][i, j]
    h = jax.nn.relu(bn(acc + raw["b_dw_s"], raw["bn_dw_s"]))

    xp = jnp.pad(h, ((0, 0), (1, 1), (0, 0), (0, 0), (0, 0)), mode="reflect")
    acc = jnp.zeros_like(h)
    for i in range(3):
        acc = acc + xp[:, i:i + D] * raw["w_dw_t"][i]
    h = jax.nn.relu(bn(acc + raw["b_dw_t"], raw["bn_dw_t"]))

    u = jax.nn.relu(jnp.einsum("ndhwk,kj->ndhwj", h, raw["w_se1"], precision=prec)
                    + raw["b_se1"])
    g = jax.nn.sigmoid(jnp.einsum("ndhwj,jk->ndhwk", u, raw["w_se2"], precision=prec)
                       + raw["b_se2"])
    h = h * g

    y = jnp.einsum("ndhwk,kc->ndhwc", h, raw["w_proj"], precision=prec) + raw["b_proj"]
    y = jax.nn.relu(bn(y, raw["bn_proj"]))
    out = x + y
    return jnp.transpose(out, (0, 4, 1, 2, 3))                           # back to NCDHW


# ---------------------------------------------------------------------------
# Main
# ---------------------------------------------------------------------------

if __name__ == "__main__":
    key = jax.random.PRNGKey(0)
    k_param, k_x = jax.random.split(key)

    # NCDHW; C=8, expansion 4 -> hidden=32; D=4 so D*hidden = 128 (one full lane span)
    # and D*H*W = 256 (lane-dense I/O blocks).  N=4 lets the wrapper pick B_blk=2
    # (matmul M = 128) while keeping 2 "parallel" grid steps for v7x's two TensorCores.
    N, C, D, H, W = 4, 8, 4, 8, 8
    x = jax.random.normal(k_x, (N, C, D, H, W), jnp.float32)

    raw, hid, se_hid = init_raw_params(k_param, C, expansion_factor=4, excitation_ratio=0.25)
    slab, offsets = build_param_slab(raw, C, D, hid, se_hid)

    fwd = jax.jit(lambda inp: inverted_bottleneck_2plus1(inp, slab, offsets, hid, se_hid))
    y = jax.block_until_ready(fwd(x))
    assert y.shape == (N, C, D, H, W), y.shape
    assert bool(jnp.all(jnp.isfinite(y)))

    y_ref = jax.jit(lambda inp: reference_forward(inp, raw))(x)
    err = float(jnp.max(jnp.abs(y - y_ref)))
    # Kernel matmuls request Precision.HIGHEST like the reference, so the expected drift
    # is ~1e-5 (BN folding / accumulation-order differences); the 2e-3 bound keeps headroom
    # for TPU generations whose MXU uses fewer f32 passes.
    assert err < 2e-3, f"max abs error vs reference: {err}"

    print("KERNEL_OK")
</pallas_src>

<mosaic_0001>
module attributes {stable_mosaic.version = 11 : i64} {
  func.func @kernel(%arg0: i32, %arg1: memref<2x8x256xf32, #tpu.memory_space<vmem>>, %arg2: memref<312x128xf32, #tpu.memory_space<vmem>>, %arg3: memref<2x8x256xf32, #tpu.memory_space<vmem>>, %arg4: memref<2x10x8x128xf32, #tpu.memory_space<vmem>>) attributes {dimension_semantics = [#tpu.dimension_semantics<parallel>], iteration_bounds = array<i64: 2>, scalar_prefetch = 0 : i64, scratch_operands = 1 : i64, tpu.core_type = #tpu.core_type<tc>, window_params = [{transform_indices = @transform_0, window_bounds = array<i64: 2, 8, 256>}, {pipeline_mode = #tpu.pipeline_mode<synchronous>, transform_indices = @transform_1, window_bounds = array<i64: 312, 128>}, {transform_indices = @transform_2, window_bounds = array<i64: 2, 8, 256>}]} {
    %c0 = arith.constant 0 : index
    %c0_0 = arith.constant 0 : index
    %c0_1 = arith.constant 0 : index
    %0 = vector.load %arg1[%c0, %c0_0, %c0_1] : memref<2x8x256xf32, #tpu.memory_space<vmem>>, vector<1x8x256xf32>
    %1 = vector.shape_cast %0 : vector<1x8x256xf32> to vector<8x256xf32>
    %c1 = arith.constant 1 : index
    %c0_2 = arith.constant 0 : index
    %c0_3 = arith.constant 0 : index
    %2 = vector.load %arg1[%c1, %c0_2, %c0_3] : memref<2x8x256xf32, #tpu.memory_space<vmem>>, vector<1x8x256xf32>
    %3 = vector.shape_cast %2 : vector<1x8x256xf32> to vector<8x256xf32>
    %4 = vector.extract_strided_slice %1 {offsets = [0, 0], sizes = [8, 64], strides = [1, 1]} : vector<8x256xf32> to vector<8x64xf32>
    %5 = vector.extract_strided_slice %3 {offsets = [0, 0], sizes = [8, 64], strides = [1, 1]} : vector<8x256xf32> to vector<8x64xf32>
    %6 = tpu.concatenate %4, %5 in 1 : vector<8x64xf32>, vector<8x64xf32> -> vector<8x128xf32>
    %7 = vector.extract_strided_slice %1 {offsets = [0, 64], sizes = [8, 64], strides = [1, 1]} : vector<8x256xf32> to vector<8x64xf32>
    %8 = vector.extract_strided_slice %3 {offsets = [0, 64], sizes = [8, 64], strides = [1, 1]} : vector<8x256xf32> to vector<8x64xf32>
    %9 = tpu.concatenate %7, %8 in 1 : vector<8x64xf32>, vector<8x64xf32> -> vector<8x128xf32>
    %10 = vector.extract_strided_slice %1 {offsets = [0, 128], sizes = [8, 64], strides = [1, 1]} : vector<8x256xf32> to vector<8x64xf32>
    %11 = vector.extract_strided_slice %3 {offsets = [0, 128], sizes = [8, 64], strides = [1, 1]} : vector<8x256xf32> to vector<8x64xf32>
    %12 = tpu.concatenate %10, %11 in 1 : vector<8x64xf32>, vector<8x64xf32> -> vector<8x128xf32>
    %13 = vector.extract_strided_slice %1 {offsets = [0, 192], sizes = [8, 64], strides = [1, 1]} : vector<8x256xf32> to vector<8x64xf32>
    %14 = vector.extract_strided_slice %3 {offsets = [0, 192], sizes = [8, 64], strides = [1, 1]} : vector<8x256xf32> to vector<8x64xf32>
    %15 = tpu.concatenate %13, %14 in 1 : vector<8x64xf32>, vector<8x64xf32> -> vector<8x128xf32>
    %16 = tpu.concatenate %6, %9, %12, %15 in 0 : vector<8x128xf32>, vector<8x128xf32>, vector<8x128xf32>, vector<8x128xf32> -> vector<32x128xf32>
    %c0_4 = arith.constant 0 : index
    %c0_5 = arith.constant 0 : index
    %17 = vector.load %arg2[%c0_4, %c0_5] : memref<312x128xf32, #tpu.memory_space<vmem>>, vector<32x128xf32>
    %cst = arith.constant dense<0.000000e+00> : vector<128x128xf32>
    %18 = tpu.matmul %16, %17, %cst {dimension_numbers = #tpu.dot_dimension_numbers<[0], [0], [1], [1], [0, 1, 1, 1], [], []>, precision = #tpu.contract_precision<fp32>} : vector<32x128xf32>, vector<32x128xf32>, vector<128x128xf32> -> vector<128x128xf32>
    %c272 = arith.constant 272 : index
    %c0_6 = arith.constant 0 : index
    %19 = vector.load %arg2[%c272, %c0_6] : memref<312x128xf32, #tpu.memory_space<vmem>>, vector<1x128xf32>
    %20 = vector.broadcast %19 : vector<1x128xf32> to vector<128x128xf32>
    %21 = arith.addf %18, %20 : vector<128x128xf32>
    %cst_7 = arith.constant 0.000000e+00 : f32
    %22 = vector.broadcast %cst_7 : f32 to vector<128x128xf32>
    %23 = arith.maximumf %21, %22 : vector<128x128xf32>
    %24 = vector.shape_cast %23 : vector<128x128xf32> to vector<2x8x8x128xf32>
    %c0_8 = arith.constant 0 : index
    %c1_9 = arith.constant 1 : index
    %c0_10 = arith.constant 0 : index
    %c0_11 = arith.constant 0 : index
    %25 = vector.load %arg4[%c0_8, %c1_9, %c0_10, %c0_11] : memref<2x10x8x128xf32, #tpu.memory_space<vmem>>, vector<2x8x8x128xf32>
    tpu.vector_store %arg4[%c0_8, %c1_9, %c0_10, %c0_11], %24 {strides = array<i32>} : memref<2x10x8x128xf32, #tpu.memory_space<vmem>>, vector<2x8x8x128xf32>,
    %26 = vector.extract_strided_slice %24 {offsets = [0, 1, 0, 0], sizes = [2, 1, 8, 128], strides = [1, 1, 1, 1]} : vector<2x8x8x128xf32> to vector<2x1x8x128xf32>
    %c0_12 = arith.constant 0 : index
    %c0_13 = arith.constant 0 : index
    %c0_14 = arith.constant 0 : index
    %c0_15 = arith.constant 0 : index
    %27 = vector.load %arg4[%c0_12, %c0_13, %c0_14, %c0_15] : memref<2x10x8x128xf32, #tpu.memory_space<vmem>>, vector<2x1x8x128xf32>
    tpu.vector_store %arg4[%c0_12, %c0_13, %c0_14, %c0_15], %26 {strides = array<i32>} : memref<2x10x8x128xf32, #tpu.memory_space<vmem>>, vector<2x1x8x128xf32>,
    %28 = vector.extract_strided_slice %24 {offsets = [0, 6, 0, 0], sizes = [2, 1, 8, 128], strides = [1, 1, 1, 1]} : vector<2x8x8x128xf32> to vector<2x1x8x128xf32>
    %c0_16 = arith.constant 0 : index
    %c9 = arith.constant 9 : index
    %c0_17 = arith.constant 0 : index
    %c0_18 = arith.constant 0 : index
    %29 = vector.load %arg4[%c0_16, %c9, %c0_17, %c0_18] : memref<2x10x8x128xf32, #tpu.memory_space<vmem>>, vector<2x1x8x128xf32>
    tpu.vector_store %arg4[%c0_16, %c9, %c0_17, %c0_18], %28 {strides = array<i32>} : memref<2x10x8x128xf32, #tpu.memory_space<vmem>>, vector<2x1x8x128xf32>,
    %c32 = arith.constant 32 : index
    %c0_19 = arith.constant 0 : index
    %30 = vector.load %arg2[%c32, %c0_19] : memref<312x128xf32, #tpu.memory_space<vmem>>, vector<9x128xf32>
    %c0_20 = arith.constant 0 : index
    %c0_21 = arith.constant 0 : index
    %c0_22 = arith.constant 0 : index
    %c0_23 = arith.constant 0 : index
    %31 = vector.load %arg4[%c0_20, %c0_21, %c0_22, %c0_23] : memref<2x10x8x128xf32, #tpu.memory_space<vmem>>, vector<2x8x8x128xf32>
    %32 = vector.extract_strided_slice %31 {offsets = [0, 0, 1, 0], sizes = [2, 8, 1, 128], strides = [1, 1, 1, 1]} : vector<2x8x8x128xf32> to vector<2x8x1x128xf32>
    %33 = vector.extract_strided_slice %31 {offsets = [0, 0, 0, 0], sizes = [2, 8, 7, 128], strides = [1, 1, 1, 1]} : vector<2x8x8x128xf32> to vector<2x8x7x128xf32>
    %34 = tpu.concatenate %32, %33 in 2 : vector<2x8x1x128xf32>, vector<2x8x7x128xf32> -> vector<2x8x8x128xf32>
    %35 = vector.extract_strided_slice %30 {offsets = [0, 0], sizes = [1, 128], strides = [1, 1]} : vector<9x128xf32> to vector<1x128xf32>
    %36 = vector.shape_cast %35 : vector<1x128xf32> to vector<128xf32>
    %37 = vector.shape_cast %36 : vector<128xf32> to vector<1x1x1x128xf32>
    %38 = vector.broadcast %37 : vector<1x1x1x128xf32> to vector<2x8x8x128xf32>
    %39 = arith.mulf %34, %38 : vector<2x8x8x128xf32>
    %40 = vector.extract_strided_slice %30 {offsets = [1, 0], sizes = [1, 128], strides = [1, 1]} : vector<9x128xf32> to vector<1x128xf32>
    %41 = vector.shape_cast %40 : vector<1x128xf32> to vector<128xf32>
    %42 = vector.shape_cast %41 : vector<128xf32> to vector<1x1x1x128xf32>
    %43 = vector.broadcast %42 : vector<1x1x1x128xf32> to vector<2x8x8x128xf32>
    %44 = arith.mulf %31, %43 : vector<2x8x8x128xf32>
    %45 = arith.addf %39, %44 : vector<2x8x8x128xf32>
    %46 = vector.extract_strided_slice %31 {offsets = [0, 0, 1, 0], sizes = [2, 8, 7, 128], strides = [1, 1, 1, 1]} : vector<2x8x8x128xf32> to vector<2x8x7x128xf32>
    %47 = vector.extract_strided_slice %31 {offsets = [0, 0, 6, 0], sizes = [2, 8, 1, 128], strides = [1, 1, 1, 1]} : vector<2x8x8x128xf32> to vector<2x8x1x128xf32>
    %48 = tpu.concatenate %46, %47 in 2 : vector<2x8x7x128xf32>, vector<2x8x1x128xf32> -> vector<2x8x8x128xf32>
    %49 = vector.extract_strided_slice %30 {offsets = [2, 0], sizes = [1, 128], strides = [1, 1]} : vector<9x128xf32> to vector<1x128xf32>
    %50 = vector.shape_cast %49 : vector<1x128xf32> to vector<128xf32>
    %51 = vector.shape_cast %50 : vector<128xf32> to vector<1x1x1x128xf32>
    %52 = vector.broadcast %51 : vector<1x1x1x128xf32> to vector<2x8x8x128xf32>
    %53 = arith.mulf %48, %52 : vector<2x8x8x128xf32>
    %54 = arith.addf %45, %53 : vector<2x8x8x128xf32>
    %c0_24 = arith.constant 0 : index
    %c1_25 = arith.constant 1 : index
    %c0_26 = arith.constant 0 : index
    %c0_27 = arith.constant 0 : index
    %55 = vector.load %arg4[%c0_24, %c1_25, %c0_26, %c0_27] : memref<2x10x8x128xf32, #tpu.memory_space<vmem>>, vector<2x8x8x128xf32>
    %56 = vector.extract_strided_slice %55 {offsets = [0, 0, 1, 0], sizes = [2, 8, 1, 128], strides = [1, 1, 1, 1]} : vector<2x8x8x128xf32> to vector<2x8x1x128xf32>
    %57 = vector.extract_strided_slice %55 {offsets = [0, 0, 0, 0], sizes = [2, 8, 7, 128], strides = [1, 1, 1, 1]} : vector<2x8x8x128xf32> to vector<2x8x7x128xf32>
    %58 = tpu.concatenate %56, %57 in 2 : vector<2x8x1x128xf32>, vector<2x8x7x128xf32> -> vector<2x8x8x128xf32>
    %59 = vector.extract_strided_slice %30 {offsets = [3, 0], sizes = [1, 128], strides = [1, 1]} : vector<9x128xf32> to vector<1x128xf32>
    %60 = vector.shape_cast %59 : vector<1x128xf32> to vector<128xf32>
    %61 = vector.shape_cast %60 : vector<128xf32> to vector<1x1x1x128xf32>
    %62 = vector.broadcast %61 : vector<1x1x1x128xf32> to vector<2x8x8x128xf32>
    %63 = arith.mulf %58, %62 : vector<2x8x8x128xf32>
    %64 = arith.addf %54, %63 : vector<2x8x8x128xf32>
    %65 = vector.extract_strided_slice %30 {offsets = [4, 0], sizes = [1, 128], strides = [1, 1]} : vector<9x128xf32> to vector<1x128xf32>
    %66 = vector.shape_cast %65 : vector<1x128xf32> to vector<128xf32>
    %67 = vector.shape_cast %66 : vector<128xf32> to vector<1x1x1x128xf32>
    %68 = vector.broadcast %67 : vector<1x1x1x128xf32> to vector<2x8x8x128xf32>
    %69 = arith.mulf %55, %68 : vector<2x8x8x128xf32>
    %70 = arith.addf %64, %69 : vector<2x8x8x128xf32>
    %71 = vector.extract_strided_slice %55 {offsets = [0, 0, 1, 0], sizes = [2, 8, 7, 128], strides = [1, 1, 1, 1]} : vector<2x8x8x128xf32> to vector<2x8x7x128xf32>
    %72 = vector.extract_strided_slice %55 {offsets = [0, 0, 6, 0], sizes = [2, 8, 1, 128], strides = [1, 1, 1, 1]} : vector<2x8x8x128xf32> to vector<2x8x1x128xf32>
    %73 = tpu.concatenate %71, %72 in 2 : vector<2x8x7x128xf32>, vector<2x8x1x128xf32> -> vector<2x8x8x128xf32>
    %74 = vector.extract_strided_slice %30 {offsets = [5, 0], sizes = [1, 128], strides = [1, 1]} : vector<9x128xf32> to vector<1x128xf32>
    %75 = vector.shape_cast %74 : vector<1x128xf32> to vector<128xf32>
    %76 = vector.shape_cast %75 : vector<128xf32> to vector<1x1x1x128xf32>
    %77 = vector.broadcast %76 : vector<1x1x1x128xf32> to vector<2x8x8x128xf32>
    %78 = arith.mulf %73, %77 : vector<2x8x8x128xf32>
    %79 = arith.addf %70, %78 : vector<2x8x8x128xf32>
    %c0_28 = arith.constant 0 : index
    %c2 = arith.constant 2 : index
    %c0_29 = arith.constant 0 : index
    %c0_30 = arith.constant 0 : index
    %80 = vector.load %arg4[%c0_28, %c2, %c0_29, %c0_30] : memref<2x10x8x128xf32, #tpu.memory_space<vmem>>, vector<2x8x8x128xf32>
    %81 = vector.extract_strided_slice %80 {offsets = [0, 0, 1, 0], sizes = [2, 8, 1, 128], strides = [1, 1, 1, 1]} : vector<2x8x8x128xf32> to vector<2x8x1x128xf32>
    %82 = vector.extract_strided_slice %80 {offsets = [0, 0, 0, 0], sizes = [2, 8, 7, 128], strides = [1, 1, 1, 1]} : vector<2x8x8x128xf32> to vector<2x8x7x128xf32>
    %83 = tpu.concatenate %81, %82 in 2 : vector<2x8x1x128xf32>, vector<2x8x7x128xf32> -> vector<2x8x8x128xf32>
    %84 = vector.extract_strided_slice %30 {offsets = [6, 0], sizes = [1, 128], strides = [1, 1]} : vector<9x128xf32> to vector<1x128xf32>
    %85 = vector.shape_cast %84 : vector<1x128xf32> to vector<128xf32>
    %86 = vector.shape_cast %85 : vector<128xf32> to vector<1x1x1x128xf32>
    %87 = vector.broadcast %86 : vector<1x1x1x128xf32> to vector<2x8x8x128xf32>
    %88 = arith.mulf %83, %87 : vector<2x8x8x128xf32>
    %89 = arith.addf %79, %88 : vector<2x8x8x128xf32>
    %90 = vector.extract_strided_slice %30 {offsets = [7, 0], sizes = [1, 128], strides = [1, 1]} : vector<9x128xf32> to vector<1x128xf32>
    %91 = vector.shape_cast %90 : vector<1x128xf32> to vector<128xf32>
    %92 = vector.shape_cast %91 : vector<128xf32> to vector<1x1x1x128xf32>
    %93 = vector.broadcast %92 : vector<1x1x1x128xf32> to vector<2x8x8x128xf32>
    %94 = arith.mulf %80, %93 : vector<2x8x8x128xf32>
    %95 = arith.addf %89, %94 : vector<2x8x8x128xf32>
    %96 = vector.extract_strided_slice %80 {offsets = [0, 0, 1, 0], sizes = [2, 8, 7, 128], strides = [1, 1, 1, 1]} : vector<2x8x8x128xf32> to vector<2x8x7x128xf32>
    %97 = vector.extract_strided_slice %80 {offsets = [0, 0, 6, 0], sizes = [2, 8, 1, 128], strides = [1, 1, 1, 1]} : vector<2x8x8x128xf32> to vector<2x8x1x128xf32>
    %98 = tpu.concatenate %96, %97 in 2 : vector<2x8x7x128xf32>, vector<2x8x1x128xf32> -> vector<2x8x8x128xf32>
    %99 = vector.extract_strided_slice %30 {offsets = [8, 0], sizes = [1, 128], strides = [1, 1]} : vector<9x128xf32> to vector<1x128xf32>
    %100 = vector.shape_cast %99 : vector<1x128xf32> to vector<128xf32>
    %101 = vector.shape_cast %100 : vector<128xf32> to vector<1x1x1x128xf32>
    %102 = vector.broadcast %101 : vector<1x1x1x128xf32> to vector<2x8x8x128xf32>
    %103 = arith.mulf %98, %102 : vector<2x8x8x128xf32>
    %104 = arith.addf %95, %103 : vector<2x8x8x128xf32>
    %c273 = arith.constant 273 : index
    %c0_31 = arith.constant 0 : index
    %105 = vector.load %arg2[%c273, %c0_31] : memref<312x128xf32, #tpu.memory_space<vmem>>, vector<1x128xf32>
    %106 = vector.shape_cast %105 : vector<1x128xf32> to vector<1x1x1x128xf32>
    %107 = vector.broadcast %106 : vector<1x1x1x128xf32> to vector<2x8x8x128xf32>
    %108 = arith.addf %104, %107 : vector<2x8x8x128xf32>
    %cst_32 = arith.constant 0.000000e+00 : f32
    %109 = vector.broadcast %cst_32 : f32 to vector<2x8x8x128xf32>
    %110 = arith.maximumf %108, %109 : vector<2x8x8x128xf32>
    %111 = vector.shape_cast %110 : vector<2x8x8x128xf32> to vector<128x128xf32>
    %c48 = arith.constant 48 : index
    %c0_33 = arith.constant 0 : index
    %112 = vector.load %arg2[%c48, %c0_33] : memref<312x128xf32, #tpu.memory_space<vmem>>, vector<128x128xf32>
    %cst_34 = arith.constant dense<0.000000e+00> : vector<128x128xf32>
    %113 = tpu.matmul %111, %112, %cst_34 {dimension_numbers = #tpu.dot_dimension_numbers<[1], [0], [0], [1], [0, 0, 1, 1], [], []>, precision = #tpu.contract_precision<fp32>} : vector<128x128xf32>, vector<128x128xf32>, vector<128x128xf32> -> vector<128x128xf32>
    %c274 = arith.constant 274 : index
    %c0_35 = arith.constant 0 : index
    %114 = vector.load %arg2[%c274, %c0_35] : memref<312x128xf32, #tpu.memory_space<vmem>>, vector<1x128xf32>
    %115 = vector.broadcast %114 : vector<1x128xf32> to vector<128x128xf32>
    %116 = arith.addf %113, %115 : vector<128x128xf32>
    %cst_36 = arith.constant 0.000000e+00 : f32
    %117 = vector.broadcast %cst_36 : f32 to vector<128x128xf32>
    %118 = arith.maximumf %116, %117 : vector<128x128xf32>
    %c176 = arith.constant 176 : index
    %c0_37 = arith.constant 0 : index
    %119 = vector.load %arg2[%c176, %c0_37] : memref<312x128xf32, #tpu.memory_space<vmem>>, vector<32x128xf32>
    %cst_38 = arith.constant dense<0.000000e+00> : vector<128x32xf32>
    %120 = tpu.matmul %118, %119, %cst_38 {dimension_numbers = #tpu.dot_dimension_numbers<[1], [1], [0], [0], [0, 0, 1, 0], [], []>, precision = #tpu.contract_precision<fp32>} : vector<128x128xf32>, vector<32x128xf32>, vector<128x32xf32> -> vector<128x32xf32>
    %c275 = arith.constant 275 : index
    %c0_39 = arith.constant 0 : index
    %121 = vector.load %arg2[%c275, %c0_39] : memref<312x128xf32, #tpu.memory_space<vmem>>, vector<1x32xf32>
    %122 = vector.broadcast %121 : vector<1x32xf32> to vector<128x32xf32>
    %123 = arith.addf %120, %122 : vector<128x32xf32>
    %cst_40 = arith.constant 0.000000e+00 : f32
    %124 = vector.broadcast %cst_40 : f32 to vector<128x32xf32>
    %125 = arith.maximumf %123, %124 : vector<128x32xf32>
    %c208 = arith.constant 208 : index
    %c0_41 = arith.constant 0 : index
    %126 = vector.load %arg2[%c208, %c0_41] : memref<312x128xf32, #tpu.memory_space<vmem>>, vector<32x128xf32>
    %cst_42 = arith.constant dense<0.000000e+00> : vector<128x128xf32>
    %127 = tpu.matmul %125, %126, %cst_42 {dimension_numbers = #tpu.dot_dimension_numbers<[1], [0], [0], [1], [0, 0, 1, 1], [], []>, precision = #tpu.contract_precision<fp32>} : vector<128x32xf32>, vector<32x128xf32>, vector<128x128xf32> -> vector<128x128xf32>
    %c276 = arith.constant 276 : index
    %c0_43 = arith.constant 0 : index
    %128 = vector.load %arg2[%c276, %c0_43] : memref<312x128xf32, #tpu.memory_space<vmem>>, vector<1x128xf32>
    %129 = vector.broadcast %128 : vector<1x128xf32> to vector<128x128xf32>
    %130 = arith.addf %127, %129 : vector<128x128xf32>
    %131 = arith.negf %130 : vector<128x128xf32>
    %132 = math.exp %131 : vector<128x128xf32>
    %cst_44 = arith.constant 1.000000e+00 : f32
    %133 = vector.broadcast %cst_44 : f32 to vector<128x128xf32>
    %134 = arith.addf %133, %132 : vector<128x128xf32>
    %135 = arith.divf %133, %134 : vector<128x128xf32>
    %136 = arith.mulf %118, %135 : vector<128x128xf32>
    %c240 = arith.constant 240 : index
    %c0_45 = arith.constant 0 : index
    %137 = vector.load %arg2[%c240, %c0_45] : memref<312x128xf32, #tpu.memory_space<vmem>>, vector<32x128xf32>
    %cst_46 = arith.constant dense<0.000000e+00> : vector<32x128xf32>
    %138 = tpu.matmul %137, %136, %cst_46 {dimension_numbers = #tpu.dot_dimension_numbers<[1], [1], [0], [0], [0, 0, 1, 0], [], []>, precision = #tpu.contract_precision<fp32>} : vector<32x128xf32>, vector<128x128xf32>, vector<32x128xf32> -> vector<32x128xf32>
    %c280 = arith.constant 280 : index
    %c0_47 = arith.constant 0 : index
    %139 = vector.load %arg2[%c280, %c0_47] : memref<312x128xf32, #tpu.memory_space<vmem>>, vector<32x1xf32>
    %140 = vector.broadcast %139 : vector<32x1xf32> to vector<32x128xf32>
    %141 = arith.addf %138, %140 : vector<32x128xf32>
    %cst_48 = arith.constant 0.000000e+00 : f32
    %142 = vector.broadcast %cst_48 : f32 to vector<32x128xf32>
    %143 = arith.maximumf %141, %142 : vector<32x128xf32>
    %144 = vector.extract_strided_slice %143 {offsets = [0, 0], sizes = [32, 64], strides = [1, 1]} : vector<32x128xf32> to vector<32x64xf32>
    %145 = vector.extract_strided_slice %144 {offsets = [0, 0], sizes = [8, 64], strides = [1, 1]} : vector<32x64xf32> to vector<8x64xf32>
    %146 = vector.extract_strided_slice %144 {offsets = [8, 0], sizes = [8, 64], strides = [1, 1]} : vector<32x64xf32> to vector<8x64xf32>
    %147 = vector.extract_strided_slice %144 {offsets = [16, 0], sizes = [8, 64], strides = [1, 1]} : vector<32x64xf32> to vector<8x64xf32>
    %148 = vector.extract_strided_slice %144 {offsets = [24, 0], sizes = [8, 64], strides = [1, 1]} : vector<32x64xf32> to vector<8x64xf32>
    %149 = tpu.concatenate %145, %146, %147, %148 in 1 : vector<8x64xf32>, vector<8x64xf32>, vector<8x64xf32>, vector<8x64xf32> -> vector<8x256xf32>
    %150 = arith.addf %1, %149 : vector<8x256xf32>
    %c0_49 = arith.constant 0 : index
    %c0_50 = arith.constant 0 : index
    %c0_51 = arith.constant 0 : index
    %151 = vector.load %arg3[%c0_49, %c0_50, %c0_51] : memref<2x8x256xf32, #tpu.memory_space<vmem>>, vector<1x8x256xf32>
    %152 = vector.shape_cast %151 : vector<1x8x256xf32> to vector<8x256xf32>
    %153 = vector.shape_cast %150 : vector<8x256xf32> to vector<1x8x256xf32>
    tpu.vector_store %arg3[%c0_49, %c0_50, %c0_51], %153 {strides = array<i32>} : memref<2x8x256xf32, #tpu.memory_space<vmem>>, vector<1x8x256xf32>,
    %154 = vector.extract_strided_slice %143 {offsets = [0, 64], sizes = [32, 64], strides = [1, 1]} : vector<32x128xf32> to vector<32x64xf32>
    %155 = vector.extract_strided_slice %154 {offsets = [0, 0], sizes = [8, 64], strides = [1, 1]} : vector<32x64xf32> to vector<8x64xf32>
    %156 = vector.extract_strided_slice %154 {offsets = [8, 0], sizes = [8, 64], strides = [1, 1]} : vector<32x64xf32> to vector<8x64xf32>
    %157 = vector.extract_strided_slice %154 {offsets = [16, 0], sizes = [8, 64], strides = [1, 1]} : vector<32x64xf32> to vector<8x64xf32>
    %158 = vector.extract_strided_slice %154 {offsets = [24, 0], sizes = [8, 64], strides = [1, 1]} : vector<32x64xf32> to vector<8x64xf32>
    %159 = tpu.concatenate %155, %156, %157, %158 in 1 : vector<8x64xf32>, vector<8x64xf32>, vector<8x64xf32>, vector<8x64xf32> -> vector<8x256xf32>
    %160 = arith.addf %3, %159 : vector<8x256xf32>
    %c1_52 = arith.constant 1 : index
    %c0_53 = arith.constant 0 : index
    %c0_54 = arith.constant 0 : index
    %161 = vector.load %arg3[%c1_52, %c0_53, %c0_54] : memref<2x8x256xf32, #tpu.memory_space<vmem>>, vector<1x8x256xf32>
    %162 = vector.shape_cast %161 : vector<1x8x256xf32> to vector<8x256xf32>
    %163 = vector.shape_cast %160 : vector<8x256xf32> to vector<1x8x256xf32>
    tpu.vector_store %arg3[%c1_52, %c0_53, %c0_54], %163 {strides = array<i32>} : memref<2x8x256xf32, #tpu.memory_space<vmem>>, vector<1x8x256xf32>,
    return
  }
  func.func @transform_0(%arg0: i32) -> (i32, i32, i32) {
    %c0_i32 = arith.constant 0 : i32
    %c0_i32_0 = arith.constant 0 : i32
    %c0_i32_1 = arith.constant 0 : i32
    return %arg0, %c0_i32, %c0_i32_0 : i32, i32, i32
  }
  func.func @transform_1(%arg0: i32) -> (i32, i32) {
    %c0_i32 = arith.constant 0 : i32
    %c0_i32_0 = arith.constant 0 : i32
    %c0_i32_1 = arith.constant 0 : i32
    return %c0_i32, %c0_i32_0 : i32, i32
  }
  func.func @transform_2(%arg0: i32) -> (i32, i32, i32) {
    %c0_i32 = arith.constant 0 : i32
    %c0_i32_0 = arith.constant 0 : i32
    %c0_i32_1 = arith.constant 0 : i32
    return %arg0, %c0_i32, %c0_i32_0 : i32, i32, i32
  }
}

</mosaic_0001>

<llo_original>
// kernel: _lambda_.1
$region0: #{_lambda_.1}
  #allocation0 [shape = 'u32[]', space=smem, size = 0x4, offset = 0x4, fixed_abs, tag = 'smem constant byte address 0x4 - core index']
  #allocation1 [shape = 'u32[144,128]{1,0:T(1,128)}', space=vmem, size = 0x12000, scoped, tag = 'internal scratch']
  #allocation2 [shape = 'f32[2,10,8,128]{3,2,1,0:T(8,128)}', space=vmem, size = 0x14000, scoped, tag = 'scratch operand']
  %s0 = inlined_call_operand.vmem [shape: f32[4,8,256], index: 0, kind: input, shape index: {}, may-alias: {0,2}]
  %s1 = inlined_call_operand.vmem [shape: f32[312,128], index: 1, kind: input, shape index: {}]
  %s2 = inlined_call_operand.vmem [shape: f32[4,8,256], index: 2, kind: output, shape index: {}, may-alias: {0,2}]
  %s3 = sld [smem:[#allocation0]]
  $region41: #{_lambda_.1} parent=0
    _
  %s5 = ssub.s32 1, %s3
  %s6 = scalar_select 0, %s5, %s3
  loop: start=0, step=1, limit=4
  $region2: #{_lambda_.1} parent=0 // loop_pre_header
    _
  $region3: #{_lambda_.1} parent=0 // loop_header
    %s8 = sphi 0, %s12
    %p9 = scmp.ge.s32.totalorder %s8, 4
    %s18 = sphi 0, %s20
    %s21 = sphi 0, %s18
    %s22 = sphi 0, %s21
    %s38 = sphi 0, %s22
    %s42 = sphi 0, %s42
    %s44 = sphi 0, %s42
    %s45 = sphi 0, %s44
    %s59 = sphi 0, %s45
    %s65 = sphi 0, %s67
    %s68 = sphi 0, %s65
    %s69 = sphi 0, %s68
    %s85 = sphi 0, %s69
  $region4: #{_lambda_.1} parent=0 // loop_header_branch
    %11 = sbr.rel (%p9) target = $region8
  $region5: #{_lambda_.1} parent=0 // loop_body
    %s13 = ssub.s32 %s8, 1
    %s14 = ssub.s32 %s8, 2
    %s15 = sadd.s32 %s8, 1
    %s16 = ssub.s32 %s8, %s15
    %p17 = scmp.eq.s32.totalorder %s16, 0
    %s19 = sadd.s32 %s18, 1
    %s20 = scalar_select %p17, %s18, %s19
    %p23 = pneg %p17
    %p24 = scmp.eq.s32.totalorder %s8, 1
    %p25 = por %p23, %p24
    %p26 = scmp.ne.s32.totalorder %s18, %s21
    %p27 = scmp.eq.s32.totalorder %s8, 0
    %p28 = por %p26, %p27
    %p29 = scmp.ne.s32.totalorder %s18, %s21
    %p30 = scmp.eq.s32.totalorder %s13, 1
    %p31 = por %p29, %p30
    %p32 = scmp.ne.s32.totalorder %s21, %s22
    %p33 = scmp.eq.s32.totalorder %s13, 0
    %p34 = por %p32, %p33
    %p35 = scmp.ne.s32.totalorder %s21, %s22
    %p36 = scmp.eq.s32.totalorder %s14, 1
    %p37 = por %p35, %p36
    %p39 = scmp.ne.s32.totalorder %s22, %s38
    %p40 = scmp.eq.s32.totalorder %s14, 0
    %p41 = por %p39, %p40
    %s43 = sadd.s32 %s42, 1
    %p46 = scmp.eq.s32.totalorder %s8, 1
    %p47 = scmp.ne.s32.totalorder %s42, %s44
    %p48 = scmp.eq.s32.totalorder %s8, 0
    %p49 = por %p47, %p48
    %p50 = scmp.ne.s32.totalorder %s42, %s44
    %p51 = scmp.eq.s32.totalorder %s13, 1
    %p52 = por %p50, %p51
    %p53 = scmp.ne.s32.totalorder %s44, %s45
    %p54 = scmp.eq.s32.totalorder %s13, 0
    %p55 = por %p53, %p54
    %p56 = scmp.ne.s32.totalorder %s44, %s45
    %p57 = scmp.eq.s32.totalorder %s14, 1
    %p58 = por %p56, %p57
    %p60 = scmp.ne.s32.totalorder %s45, %s59
    %p61 = scmp.eq.s32.totalorder %s14, 0
    %p62 = por %p60, %p61
    %s63 = ssub.s32 %s8, %s15
    %p64 = scmp.eq.s32.totalorder %s63, 0
    %s66 = sadd.s32 %s65, 1
    %s67 = scalar_select %p64, %s65, %s66
    %p70 = pneg %p64
    %p71 = scmp.eq.s32.totalorder %s8, 1
    %p72 = por %p70, %p71
    %p73 = scmp.ne.s32.totalorder %s65, %s68
    %p74 = scmp.eq.s32.totalorder %s8, 0
    %p75 = por %p73, %p74
    %p76 = scmp.ne.s32.totalorder %s65, %s68
    %p77 = scmp.eq.s32.totalorder %s13, 1
    %p78 = por %p76, %p77
    %p79 = scmp.ne.s32.totalorder %s68, %s69
    %p80 = scmp.eq.s32.totalorder %s13, 0
    %p81 = por %p79, %p80
    %p82 = scmp.ne.s32.totalorder %s68, %s69
    %p83 = scmp.eq.s32.totalorder %s14, 1
    %p84 = por %p82, %p83
    %p86 = scmp.ne.s32.totalorder %s69, %s85
    %p87 = scmp.eq.s32.totalorder %s14, 0
    %p88 = por %p86, %p87
    %p89 = scmp.le.s32.totalorder 1, %s8
    %p90 = scmp.lt.s32.totalorder %s8, 3
    %p91 = pnand %p89, %p90
    %p92 = pneg %p91
    // Predicated region
    $region9: #{_lambda_.1} parent=5 // pred_check
      _
    $region10: #{_lambda_.1} parent=5 // pred_check_branch
      %94 = sbr.rel (%p91) target = $region12
    $region11: #{_lambda_.1} parent=5 // pred_region
      %s95 = ssub.s32 %s8, 1
      // Predicated region
      $region13: #{_lambda_.1} parent=11 // pred_check
        %p96 = pneg %p55
      $region14: #{_lambda_.1} parent=11 // pred_check_branch
        %98 = sbr.rel (%p96) target = $region16
      $region15: #{_lambda_.1} parent=11 // pred_region
        _
      $region16: #{_lambda_.1} parent=11 // pred_fallthru
        _
    $region12: #{_lambda_.1} parent=5 // pred_fallthru
      _
    %p99 = scmp.lt.s32.totalorder %s8, 2
    // Predicated region
    $region17: #{_lambda_.1} parent=5 // pred_check
      %p100 = pneg %p99
    $region18: #{_lambda_.1} parent=5 // pred_check_branch
      %102 = sbr.rel (%p100) target = $region20
    $region19: #{_lambda_.1} parent=5 // pred_region
      // Predicated region
      $region21: #{_lambda_.1} parent=19 // pred_check
        %p103 = pneg %p28
      $region22: #{_lambda_.1} parent=19 // pred_check_branch
        %105 = sbr.rel (%p103) target = $region24
      $region23: #{_lambda_.1} parent=19 // pred_region
        %s106 = smul.u32 2, %s8
        %p107 = scmp.lt.s32.totalorder %s106, 3
        %s108 = scalar_select %p107, %s106, 3
        %s109 = smul.addr %s108, 2
        %s110 = smul.addr %s109, 8
        %s111 = scalar_lea.vmem %s0, %s110
        %s112 = smul.u32 2, %s8
      $region24: #{_lambda_.1} parent=19 // pred_fallthru
        _
    $region20: #{_lambda_.1} parent=5 // pred_fallthru
      _
    %p113 = scmp.le.s32.totalorder 1, %s8
    %p114 = scmp.lt.s32.totalorder %s8, 3
    %p115 = pnand %p113, %p114
    %p116 = pneg %p115
    // Predicated region
    $region25: #{_lambda_.1} parent=5 // pred_check
      _
    $region26: #{_lambda_.1} parent=5 // pred_check_branch
      %118 = sbr.rel (%p115) target = $region28
    $region27: #{_lambda_.1} parent=5 // pred_region
      %s119 = ssub.s32 %s8, 1
      %s120 = smul.u32 2, %s13
      %p121 = scmp.lt.s32.totalorder %s120, 3
      %s122 = scalar_select %p121, %s120, 3
      %s123 = smul.addr %s122, 2
      %s124 = smul.addr %s123, 8
      %s125 = scalar_lea.vmem %s0, %s124
      %p126 = pneg %p34
      %p127 = pneg %p31
      %p128 = pneg %p55
      %p129 = pneg %p52
      %p130 = pneg %p81
      %p131 = pneg %p78
      %s132 = smul.u32 2, %s13
      %p133 = scmp.lt.s32.totalorder %s132, 3
      %s134 = scalar_select %p133, %s132, 3
      %s135 = smul.addr %s134, 2
      %s136 = smul.addr %s135, 8
      %s137 = scalar_lea.vmem %s2, %s136
      %s138 = smul.u32 2, %s13
      %p139 = scmp.lt.s32.totalorder %s138, 3
      %s140 = scalar_select %p139, %s138, 3
      %s141 = smul.addr %s140, 2
      %s142 = smul.addr %s141, 8
      %s143 = scalar_lea.vmem %s0, %s142
      %s144 = smul.u32 2, %s13
      %s145 = smul.u32 2, %s13
      %p146 = scmp.lt.s32.totalorder %s145, 3
      %s147 = scalar_select %p146, %s145, 3
      %s148 = smul.addr %s147, 2
      %s149 = smul.addr %s148, 8
      %s150 = scalar_lea.vmem %s2, %s149
      %s151 = smul.u32 2, %s13
      %v152 = vld [vmem:[%s143] sm:$0xff]
      %v153 = vld [vmem:[%s143 + $0x8] sm:$0xff]
      %s154 = scalar_lea.vmem %s143, 16
      %v155 = vld [vmem:[%s154] sm:$0xff]
      %v156 = vld [vmem:[%s154 + $0x8] sm:$0xff]
      %158 = vrot.lane.b32.xlu0 %v155, 64
      %v159 = vpop.permute.xlu0 %158
      %vm161 = vcmask 523264
      %v162 = vsel %vm161, %v152, %v159
      %164 = vrot.lane.b32.xlu0 %v152, 64
      %v165 = vpop.permute.xlu0 %164
      %v167 = vsel %vm161, %v165, %v155
      %169 = vrot.lane.b32.xlu0 %v156, 64
      %v170 = vpop.permute.xlu0 %169
      %v172 = vsel %vm161, %v153, %v170
      %174 = vrot.lane.b32.xlu0 %v153, 64
      %v175 = vpop.permute.xlu0 %174
      %v177 = vsel %vm161, %v175, %v156
      %v178 = vld [vmem:[%s1] sm:$0xff]
      %v179 = vld [vmem:[%s1 + $0x8] sm:$0xff]
      %v180 = vld [vmem:[%s1 + $0x10] sm:$0xff]
      %v181 = vld [vmem:[%s1 + $0x18] sm:$0xff]
      %v182 = vld [vmem:[%s1 + $0x110] sm:$0x1]
      %v183 = vlaneseq
      %v184 = vshrl.u32 %v183, 7
      %v185 = vsub.s32 0, %v184
      %v186 = vrot.slane %v182, %v185
      %187 = vxpose.xlu0.b32.start [1/16] %v162, 128
      %188 = vxpose.xlu0.b32.cont [2/16] %v167, 128
      %189 = vxpose.xlu0.b32.cont [3/16] %v172, 128
      %190 = vxpose.xlu0.b32.cont [4/16] %v177, 128
      %191 = vxpose.xlu0.b32.cont [5/16] 0.0, 128
      %192 = vxpose.xlu0.b32.cont [6/16] 0.0, 128
      %193 = vxpose.xlu0.b32.cont [7/16] 0.0, 128
      %194 = vxpose.xlu0.b32.cont [8/16] 0.0, 128
      %195 = vxpose.xlu0.b32.cont [9/16] 0.0, 128
      %196 = vxpose.xlu0.b32.cont [10/16] 0.0, 128
      %197 = vxpose.xlu0.b32.cont [11/16] 0.0, 128
      %198 = vxpose.xlu0.b32.cont [12/16] 0.0, 128
      %199 = vxpose.xlu0.b32.cont [13/16] 0.0, 128
      %200 = vxpose.xlu0.b32.cont [14/16] 0.0, 128
      %201 = vxpose.xlu0.b32.cont [15/16] 0.0, 128
      %202 = vxpose.xlu0.b32.end [16/16] 0.0, 128
      %v203 = vpop.trf.xlu0
      %v204 = vpop.trf.xlu0
      %v205 = vpop.trf.xlu0
      %v206 = vpop.trf.xlu0
      %v207 = vpop.trf.xlu0
      %v208 = vpop.trf.xlu0
      %v209 = vpop.trf.xlu0
      %v210 = vpop.trf.xlu0
      %v211 = vpop.trf.xlu0
      %v212 = vpop.trf.xlu0
      %v213 = vpop.trf.xlu0
      %v214 = vpop.trf.xlu0
      %v215 = vpop.trf.xlu0
      %v216 = vpop.trf.xlu0
      %v217 = vpop.trf.xlu0
      %v218 = vpop.trf.xlu0
      %vm219 = vcmask 261120
      %v221 = vsel %vm219, %v203, 0
      %v224 = vsel %vm219, %v204, 0
      %v227 = vsel %vm219, %v205, 0
      %v230 = vsel %vm219, %v206, 0
      %v233 = vsel %vm219, %v207, 0
      %v236 = vsel %vm219, %v208, 0
      %v239 = vsel %vm219, %v209, 0
      %v242 = vsel %vm219, %v210, 0
      %v245 = vsel %vm219, %v211, 0
      %v248 = vsel %vm219, %v212, 0
      %v251 = vsel %vm219, %v213, 0
      %v254 = vsel %vm219, %v214, 0
      %v257 = vsel %vm219, %v215, 0
      %v260 = vsel %vm219, %v216, 0
      %v263 = vsel %vm219, %v217, 0
      %v266 = vsel %vm219, %v218, 0
      %268 = vmatprep.subr.mxu0 0.0
      %v269 = vand.u32 %v178, 4294901760
      %270 = vmatpush1.msra.mxu0 %v269
      %271 = vmatprep.subr.mxu0 0.0
      %v272 = vand.u32 %v179, 4294901760
      %273 = vmatpush1.msra.mxu0 %v272
      %274 = vmatprep.subr.mxu0 0.0
      %v275 = vand.u32 %v180, 4294901760
      %276 = vmatpush1.msra.mxu0 %v275
      %277 = vmatprep.subr.mxu0 0.0
      %v278 = vand.u32 %v181, 4294901760
      %279 = vmatpush1.msra.mxu0 %v278
      %280 = vmatprep.subr.mxu0 0.0
      %281 = vmatpush1.msra.mxu0 0.0
      %282 = vmatprep.subr.mxu0 0.0
      %283 = vmatpush1.msra.mxu0 0.0
      %284 = vmatprep.subr.mxu0 0.0
      %285 = vmatpush1.msra.mxu0 0.0
      %286 = vmatprep.subr.mxu0 0.0
      %287 = vmatpush1.msra.mxu0 0.0
      %288 = vmatprep.subr.mxu0 0.0
      %289 = vmatpush1.msra.mxu0 0.0
      %290 = vmatprep.subr.mxu0 0.0
      %291 = vmatpush1.msra.mxu0 0.0
      %292 = vmatprep.subr.mxu0 0.0
      %293 = vmatpush1.msra.mxu0 0.0
      %294 = vmatprep.subr.mxu0 0.0
      %295 = vmatpush1.msra.mxu0 0.0
      %296 = vmatprep.subr.mxu0 0.0
      %297 = vmatpush1.msra.mxu0 0.0
      %298 = vmatprep.subr.mxu0 0.0
      %299 = vmatpush1.msra.mxu0 0.0
      %300 = vmatprep.subr.mxu0 0.0
      %301 = vmatpush1.msra.mxu0 0.0
      %302 = vmatprep.subr.mxu0 0.0
      %303 = vmatpush1.msra.mxu0 0.0
      %304 = vmatprep.subr.mxu0 0.0
      %305 = vmatpush1.msra.mxu0 0.0
      %306 = vmatprep.subr.mxu0 0.0
      %307 = vmatpush1.msra.mxu0 0.0
      %308 = vmatprep.subr.mxu0 0.0
      %309 = vmatpush1.msra.mxu0 0.0
      %310 = vmatprep.subr.mxu0 0.0
      %311 = vmatpush1.msra.mxu0 0.0
      %312 = vmatprep.subr.mxu0 0.0
      %313 = vmatpush1.msra.mxu0 0.0
      %314 = vmatprep.subr.mxu0 0.0
      %315 = vmatpush1.msra.mxu0 0.0
      %316 = vmatprep.subr.mxu0 0.0
      %317 = vmatpush1.msra.mxu0 0.0
      %318 = vmatprep.subr.mxu0 0.0
      %319 = vmatpush1.msra.mxu0 0.0
      %320 = vmatprep.subr.mxu0 0.0
      %321 = vmatpush1.msra.mxu0 0.0
      %322 = vmatprep.subr.mxu0 0.0
      %323 = vmatpush1.msra.mxu0 0.0
      %324 = vmatprep.subr.mxu0 0.0
      %325 = vmatpush1.msra.mxu0 0.0
      %326 = vmatprep.subr.mxu0 0.0
      %327 = vmatpush1.msra.mxu0 0.0
      %328 = vmatprep.subr.mxu0 0.0
      %329 = vmatpush1.msra.mxu0 0.0
      %330 = vmatprep.subr.mxu0 0.0
      %331 = vmatpush1.msra.mxu0 0.0
      %332 = vmatprep.subr.mxu0 0.0
      %333 = vmatpush1.msra.mxu0 0.0
      %334 = vmatprep.subr.mxu0 0.0
      %335 = vmatpush1.msra.mxu0 0.0
      %336 = vmatprep.mubr.f32.mxu0 0.0
      %v337 = vand.u32 %v221, 4294901760
      %v338 = vsub.f32 %v221, %v337
      %v339 = vand.u32 %v338, 4294901760
      %v340 = vsub.f32 %v338, %v339
      %v341 = vand.u32 %v340, 4294901760
      %342 = vmatmul.mubr.f32.gmra.mrb[0].mxu0 %v341
      %v343 = vpop.f32.mrb[0].mxu0
      %v344 = vadd.f32 %v186, %v343
      %v345 = vpop.f32.mrb[0].mxu0
      %346 = vmatprep.mubr.f32.mxu0 0.0
      %v347 = vand.u32 %v224, 4294901760
      %v348 = vsub.f32 %v224, %v347
      %v349 = vand.u32 %v348, 4294901760
      %v350 = vsub.f32 %v348, %v349
      %v351 = vand.u32 %v350, 4294901760
      %352 = vmatmul.mubr.f32.gmra.mrb[0].mxu0 %v351
      %v353 = vpop.f32.mrb[0].mxu0
      %v354 = vadd.f32 %v186, %v353
      %v355 = vpop.f32.mrb[0].mxu0
      %356 = vmatprep.mubr.f32.mxu0 0.0
      %v357 = vand.u32 %v227, 4294901760
      %v358 = vsub.f32 %v227, %v357
      %v359 = vand.u32 %v358, 4294901760
      %v360 = vsub.f32 %v358, %v359
      %v361 = vand.u32 %v360, 4294901760
      %362 = vmatmul.mubr.f32.gmra.mrb[0].mxu0 %v361
      %v363 = vpop.f32.mrb[0].mxu0
      %v364 = vadd.f32 %v186, %v363
      %v365 = vpop.f32.mrb[0].mxu0
      %366 = vmatprep.mubr.f32.mxu0 0.0
      %v367 = vand.u32 %v230, 4294901760
      %v368 = vsub.f32 %v230, %v367
      %v369 = vand.u32 %v368, 4294901760
      %v370 = vsub.f32 %v368, %v369
      %v371 = vand.u32 %v370, 4294901760
      %372 = vmatmul.mubr.f32.gmra.mrb[0].mxu0 %v371
      %v373 = vpop.f32.mrb[0].mxu0
      %v374 = vadd.f32 %v186, %v373
      %v375 = vpop.f32.mrb[0].mxu0
      %376 = vmatprep.mubr.f32.mxu0 0.0
      %v377 = vand.u32 %v233, 4294901760
      %v378 = vsub.f32 %v233, %v377
      %v379 = vand.u32 %v378, 4294901760
      %v380 = vsub.f32 %v378, %v379
      %v381 = vand.u32 %v380, 4294901760
      %382 = vmatmul.mubr.f32.gmra.mrb[0].mxu0 %v381
      %v383 = vpop.f32.mrb[0].mxu0
      %v384 = vadd.f32 %v186, %v383
      %v385 = vpop.f32.mrb[0].mxu0
      %386 = vmatprep.mubr.f32.mxu0 0.0
      %v387 = vand.u32 %v236, 4294901760
      %v388 = vsub.f32 %v236, %v387
      %v389 = vand.u32 %v388, 4294901760
      %v390 = vsub.f32 %v388, %v389
      %v391 = vand.u32 %v390, 4294901760
      %392 = vmatmul.mubr.f32.gmra.mrb[0].mxu0 %v391
      %v393 = vpop.f32.mrb[0].mxu0
      %v394 = vadd.f32 %v186, %v393
      %v395 = vpop.f32.mrb[0].mxu0
      %396 = vmatprep.mubr.f32.mxu0 0.0
      %v397 = vand.u32 %v239, 4294901760
      %v398 = vsub.f32 %v239, %v397
      %v399 = vand.u32 %v398, 4294901760
      %v400 = vsub.f32 %v398, %v399
      %v401 = vand.u32 %v400, 4294901760
      %402 = vmatmul.mubr.f32.gmra.mrb[0].mxu0 %v401
      %v403 = vpop.f32.mrb[0].mxu0
      %v404 = vadd.f32 %v186, %v403
      %v405 = vpop.f32.mrb[0].mxu0
      %406 = vmatprep.mubr.f32.mxu0 0.0
      %v407 = vand.u32 %v242, 4294901760
      %v408 = vsub.f32 %v242, %v407
      %v409 = vand.u32 %v408, 4294901760
      %v410 = vsub.f32 %v408, %v409
      %v411 = vand.u32 %v410, 4294901760
      %412 = vmatmul.mubr.f32.gmra.mrb[0].mxu0 %v411
      %v413 = vpop.f32.mrb[0].mxu0
      %v414 = vadd.f32 %v186, %v413
      %v415 = vpop.f32.mrb[0].mxu0
      %416 = vmatprep.mubr.f32.mxu0 0.0
      %v417 = vand.u32 %v245, 4294901760
      %v418 = vsub.f32 %v245, %v417
      %v419 = vand.u32 %v418, 4294901760
      %v420 = vsub.f32 %v418, %v419
      %v421 = vand.u32 %v420, 4294901760
      %422 = vmatmul.mubr.f32.gmra.mrb[0].mxu0 %v421
      %v423 = vpop.f32.mrb[0].mxu0
      %v424 = vadd.f32 %v186, %v423
      %v425 = vpop.f32.mrb[0].mxu0
      %426 = vmatprep.mubr.f32.mxu0 0.0
      %v427 = vand.u32 %v248, 4294901760
      %v428 = vsub.f32 %v248, %v427
      %v429 = vand.u32 %v428, 4294901760
      %v430 = vsub.f32 %v428, %v429
      %v431 = vand.u32 %v430, 4294901760
      %432 = vmatmul.mubr.f32.gmra.mrb[0].mxu0 %v431
      %v433 = vpop.f32.mrb[0].mxu0
      %v434 = vadd.f32 %v186, %v433
      %v435 = vpop.f32.mrb[0].mxu0
      %436 = vmatprep.mubr.f32.mxu0 0.0
      %v437 = vand.u32 %v251, 4294901760
      %v438 = vsub.f32 %v251, %v437
      %v439 = vand.u32 %v438, 4294901760
      %v440 = vsub.f32 %v438, %v439
      %v441 = vand.u32 %v440, 4294901760
      %442 = vmatmul.mubr.f32.gmra.mrb[0].mxu0 %v441
      %v443 = vpop.f32.mrb[0].mxu0
      %v444 = vadd.f32 %v186, %v443
      %v445 = vpop.f32.mrb[0].mxu0
      %446 = vmatprep.mubr.f32.mxu0 0.0
      %v447 = vand.u32 %v254, 4294901760
      %v448 = vsub.f32 %v254, %v447
      %v449 = vand.u32 %v448, 4294901760
      %v450 = vsub.f32 %v448, %v449
      %v451 = vand.u32 %v450, 4294901760
      %452 = vmatmul.mubr.f32.gmra.mrb[0].mxu0 %v451
      %v453 = vpop.f32.mrb[0].mxu0
      %v454 = vadd.f32 %v186, %v453
      %v455 = vpop.f32.mrb[0].mxu0
      %456 = vmatprep.mubr.f32.mxu0 0.0
      %v457 = vand.u32 %v257, 4294901760
      %v458 = vsub.f32 %v257, %v457
      %v459 = vand.u32 %v458, 4294901760
      %v460 = vsub.f32 %v458, %v459
      %v461 = vand.u32 %v460, 4294901760
      %462 = vmatmul.mubr.f32.gmra.mrb[0].mxu0 %v461
      %v463 = vpop.f32.mrb[0].mxu0
      %v464 = vadd.f32 %v186, %v463
      %v465 = vpop.f32.mrb[0].mxu0
      %466 = vmatprep.mubr.f32.mxu0 0.0
      %v467 = vand.u32 %v260, 4294901760
      %v468 = vsub.f32 %v260, %v467
      %v469 = vand.u32 %v468, 4294901760
      %v470 = vsub.f32 %v468, %v469
      %v471 = vand.u32 %v470, 4294901760
      %472 = vmatmul.mubr.f32.gmra.mrb[0].mxu0 %v471
      %v473 = vpop.f32.mrb[0].mxu0
      %v474 = vadd.f32 %v186, %v473
      %v475 = vpop.f32.mrb[0].mxu0
      %476 = vmatprep.mubr.f32.mxu0 0.0
      %v477 = vand.u32 %v263, 4294901760
      %v478 = vsub.f32 %v263, %v477
      %v479 = vand.u32 %v478, 4294901760
      %v480 = vsub.f32 %v478, %v479
      %v481 = vand.u32 %v480, 4294901760
      %482 = vmatmul.mubr.f32.gmra.mrb[0].mxu0 %v481
      %v483 = vpop.f32.mrb[0].mxu0
      %v484 = vadd.f32 %v186, %v483
      %v485 = vpop.f32.mrb[0].mxu0
      %486 = vmatprep.mubr.f32.mxu0 0.0
      %v487 = vand.u32 %v266, 4294901760
      %v488 = vsub.f32 %v266, %v487
      %v489 = vand.u32 %v488, 4294901760
      %v490 = vsub.f32 %v488, %v489
      %v491 = vand.u32 %v490, 4294901760
      %492 = vmatmul.mubr.f32.gmra.mrb[0].mxu0 %v491
      %v493 = vpop.f32.mrb[0].mxu0
      %v494 = vadd.f32 %v186, %v493
      %v495 = vpop.f32.mrb[0].mxu0
      %496 = vdwg.mxu0
      %497 = vmatprep.subr.mxu0 0.0
      %v498 = vand.u32 %v178, 4294901760
      %v499 = vsub.f32 %v178, %v498
      %v500 = vand.u32 %v499, 4294901760
      %v501 = vsub.f32 %v499, %v500
      %v502 = vand.u32 %v501, 4294901760
      %503 = vmatpush1.msra.mxu0 %v502
      %504 = vmatprep.subr.mxu0 0.0
      %v505 = vand.u32 %v179, 4294901760
      %v506 = vsub.f32 %v179, %v505
      %v507 = vand.u32 %v506, 4294901760
      %v508 = vsub.f32 %v506, %v507
      %v509 = vand.u32 %v508, 4294901760
      %510 = vmatpush1.msra.mxu0 %v509
      %511 = vmatprep.subr.mxu0 0.0
      %v512 = vand.u32 %v180, 4294901760
      %v513 = vsub.f32 %v180, %v512
      %v514 = vand.u32 %v513, 4294901760
      %v515 = vsub.f32 %v513, %v514
      %v516 = vand.u32 %v515, 4294901760
      %517 = vmatpush1.msra.mxu0 %v516
      %518 = vmatprep.subr.mxu0 0.0
      %v519 = vand.u32 %v181, 4294901760
      %v520 = vsub.f32 %v181, %v519
      %v521 = vand.u32 %v520, 4294901760
      %v522 = vsub.f32 %v520, %v521
      %v523 = vand.u32 %v522, 4294901760
      %524 = vmatpush1.msra.mxu0 %v523
      %525 = vmatprep.subr.mxu0 0.0
      %526 = vmatpush1.msra.mxu0 0.0
      %527 = vmatprep.subr.mxu0 0.0
      %528 = vmatpush1.msra.mxu0 0.0
      %529 = vmatprep.subr.mxu0 0.0
      %530 = vmatpush1.msra.mxu0 0.0
      %531 = vmatprep.subr.mxu0 0.0
      %532 = vmatpush1.msra.mxu0 0.0
      %533 = vmatprep.subr.mxu0 0.0
      %534 = vmatpush1.msra.mxu0 0.0
      %535 = vmatprep.subr.mxu0 0.0
      %536 = vmatpush1.msra.mxu0 0.0
      %537 = vmatprep.subr.mxu0 0.0
      %538 = vmatpush1.msra.mxu0 0.0
      %539 = vmatprep.subr.mxu0 0.0
      %540 = vmatpush1.msra.mxu0 0.0
      %541 = vmatprep.subr.mxu0 0.0
      %542 = vmatpush1.msra.mxu0 0.0
      %543 = vmatprep.subr.mxu0 0.0
      %544 = vmatpush1.msra.mxu0 0.0
      %545 = vmatprep.subr.mxu0 0.0
      %546 = vmatpush1.msra.mxu0 0.0
      %547 = vmatprep.subr.mxu0 0.0
      %548 = vmatpush1.msra.mxu0 0.0
      %549 = vmatprep.subr.mxu0 0.0
      %550 = vmatpush1.msra.mxu0 0.0
      %551 = vmatprep.subr.mxu0 0.0
      %552 = vmatpush1.msra.mxu0 0.0
      %553 = vmatprep.subr.mxu0 0.0
      %554 = vmatpush1.msra.mxu0 0.0
      %555 = vmatprep.subr.mxu0 0.0
      %556 = vmatpush1.msra.mxu0 0.0
      %557 = vmatprep.subr.mxu0 0.0
      %558 = vmatpush1.msra.mxu0 0.0
      %559 = vmatprep.subr.mxu0 0.0
      %560 = vmatpush1.msra.mxu0 0.0
      %561 = vmatprep.subr.mxu0 0.0
      %562 = vmatpush1.msra.mxu0 0.0
      %563 = vmatprep.subr.mxu0 0.0
      %564 = vmatpush1.msra.mxu0 0.0
      %565 = vmatprep.subr.mxu0 0.0
      %566 = vmatpush1.msra.mxu0 0.0
      %567 = vmatprep.subr.mxu0 0.0
      %568 = vmatpush1.msra.mxu0 0.0
      %569 = vmatprep.subr.mxu0 0.0
      %570 = vmatpush1.msra.mxu0 0.0
      %571 = vmatprep.subr.mxu0 0.0
      %572 = vmatpush1.msra.mxu0 0.0
      %573 = vmatprep.subr.mxu0 0.0
      %574 = vmatpush1.msra.mxu0 0.0
      %575 = vmatprep.subr.mxu0 0.0
      %576 = vmatpush1.msra.mxu0 0.0
      %577 = vmatprep.subr.mxu0 0.0
      %578 = vmatpush1.msra.mxu0 0.0
      %579 = vmatprep.subr.mxu0 0.0
      %580 = vmatpush1.msra.mxu0 0.0
      %581 = vmatprep.mubr.f32.mxu0 0.0
      %v582 = vand.u32 %v221, 4294901760
      %583 = vmatmul.mubr.f32.gmra.mrb[0].mxu0 %v582
      %v584 = vpop.f32.mrb[0].mxu0
      %v585 = vadd.f32 %v344, %v584
      %v586 = vpop.f32.mrb[0].mxu0
      %587 = vmatprep.mubr.f32.mxu0 0.0
      %v588 = vand.u32 %v224, 4294901760
      %589 = vmatmul.mubr.f32.gmra.mrb[0].mxu0 %v588
      %v590 = vpop.f32.mrb[0].mxu0
      %v591 = vadd.f32 %v354, %v590
      %v592 = vpop.f32.mrb[0].mxu0
      %593 = vmatprep.mubr.f32.mxu0 0.0
      %v594 = vand.u32 %v227, 4294901760
      %595 = vmatmul.mubr.f32.gmra.mrb[0].mxu0 %v594
      %v596 = vpop.f32.mrb[0].mxu0
      %v597 = vadd.f32 %v364, %v596
      %v598 = vpop.f32.mrb[0].mxu0
      %599 = vmatprep.mubr.f32.mxu0 0.0
      %v600 = vand.u32 %v230, 4294901760
      %601 = vmatmul.mubr.f32.gmra.mrb[0].mxu0 %v600
      %v602 = vpop.f32.mrb[0].mxu0
      %v603 = vadd.f32 %v374, %v602
      %v604 = vpop.f32.mrb[0].mxu0
      %605 = vmatprep.mubr.f32.mxu0 0.0
      %v606 = vand.u32 %v233, 4294901760
      %607 = vmatmul.mubr.f32.gmra.mrb[0].mxu0 %v606
      %v608 = vpop.f32.mrb[0].mxu0
      %v609 = vadd.f32 %v384, %v608
      %v610 = vpop.f32.mrb[0].mxu0
      %611 = vmatprep.mubr.f32.mxu0 0.0
      %v612 = vand.u32 %v236, 4294901760
      %613 = vmatmul.mubr.f32.gmra.mrb[0].mxu0 %v612
      %v614 = vpop.f32.mrb[0].mxu0
      %v615 = vadd.f32 %v394, %v614
      %v616 = vpop.f32.mrb[0].mxu0
      %617 = vmatprep.mubr.f32.mxu0 0.0
      %v618 = vand.u32 %v239, 4294901760
      %619 = vmatmul.mubr.f32.gmra.mrb[0].mxu0 %v618
      %v620 = vpop.f32.mrb[0].mxu0
      %v621 = vadd.f32 %v404, %v620
      %v622 = vpop.f32.mrb[0].mxu0
      %623 = vmatprep.mubr.f32.mxu0 0.0
      %v624 = vand.u32 %v242, 4294901760
      %625 = vmatmul.mubr.f32.gmra.mrb[0].mxu0 %v624
      %v626 = vpop.f32.mrb[0].mxu0
      %v627 = vadd.f32 %v414, %v626
      %v628 = vpop.f32.mrb[0].mxu0
      %629 = vmatprep.mubr.f32.mxu0 0.0
      %v630 = vand.u32 %v245, 4294901760
      %631 = vmatmul.mubr.f32.gmra.mrb[0].mxu0 %v630
      %v632 = vpop.f32.mrb[0].mxu0
      %v633 = vadd.f32 %v424, %v632
      %v634 = vpop.f32.mrb[0].mxu0
      %635 = vmatprep.mubr.f32.mxu0 0.0
      %v636 = vand.u32 %v248, 4294901760
      %637 = vmatmul.mubr.f32.gmra.mrb[0].mxu0 %v636
      %v638 = vpop.f32.mrb[0].mxu0
      %v639 = vadd.f32 %v434, %v638
      %v640 = vpop.f32.mrb[0].mxu0
      %641 = vmatprep.mubr.f32.mxu0 0.0
      %v642 = vand.u32 %v251, 4294901760
      %643 = vmatmul.mubr.f32.gmra.mrb[0].mxu0 %v642
      %v644 = vpop.f32.mrb[0].mxu0
      %v645 = vadd.f32 %v444, %v644
      %v646 = vpop.f32.mrb[0].mxu0
      %647 = vmatprep.mubr.f32.mxu0 0.0
      %v648 = vand.u32 %v254, 4294901760
      %649 = vmatmul.mubr.f32.gmra.mrb[0].mxu0 %v648
      %v650 = vpop.f32.mrb[0].mxu0
      %v651 = vadd.f32 %v454, %v650
      %v652 = vpop.f32.mrb[0].mxu0
      %653 = vmatprep.mubr.f32.mxu0 0.0
      %v654 = vand.u32 %v257, 4294901760
      %655 = vmatmul.mubr.f32.gmra.mrb[0].mxu0 %v654
      %v656 = vpop.f32.mrb[0].mxu0
      %v657 = vadd.f32 %v464, %v656
      %v658 = vpop.f32.mrb[0].mxu0
      %659 = vmatprep.mubr.f32.mxu0 0.0
      %v660 = vand.u32 %v260, 4294901760
      %661 = vmatmul.mubr.f32.gmra.mrb[0].mxu0 %v660
      %v662 = vpop.f32.mrb[0].mxu0
      %v663 = vadd.f32 %v474, %v662
      %v664 = vpop.f32.mrb[0].mxu0
      %665 = vmatprep.mubr.f32.mxu0 0.0
      %v666 = vand.u32 %v263, 4294901760
      %667 = vmatmul.mubr.f32.gmra.mrb[0].mxu0 %v666
      %v668 = vpop.f32.mrb[0].mxu0
      %v669 = vadd.f32 %v484, %v668
      %v670 = vpop.f32.mrb[0].mxu0
      %671 = vmatprep.mubr.f32.mxu0 0.0
      %v672 = vand.u32 %v266, 4294901760
      %673 = vmatmul.mubr.f32.gmra.mrb[0].mxu0 %v672
      %v674 = vpop.f32.mrb[0].mxu0
      %v675 = vadd.f32 %v494, %v674
      %v676 = vpop.f32.mrb[0].mxu0
      %677 = vdwg.mxu0
      %678 = vmatprep.subr.mxu0 0.0
      %v679 = vand.u32 %v178, 4294901760
      %v680 = vsub.f32 %v178, %v679
      %681 = vmatpush1.msra.mxu0 %v680
      %682 = vmatprep.subr.mxu0 0.0
      %v683 = vand.u32 %v179, 4294901760
      %v684 = vsub.f32 %v179, %v683
      %685 = vmatpush1.msra.mxu0 %v684
      %686 = vmatprep.subr.mxu0 0.0
      %v687 = vand.u32 %v180, 4294901760
      %v688 = vsub.f32 %v180, %v687
      %689 = vmatpush1.msra.mxu0 %v688
      %690 = vmatprep.subr.mxu0 0.0
      %v691 = vand.u32 %v181, 4294901760
      %v692 = vsub.f32 %v181, %v691
      %693 = vmatpush1.msra.mxu0 %v692
      %694 = vmatprep.subr.mxu0 0.0
      %695 = vmatpush1.msra.mxu0 0.0
      %696 = vmatprep.subr.mxu0 0.0
      %697 = vmatpush1.msra.mxu0 0.0
      %698 = vmatprep.subr.mxu0 0.0
      %699 = vmatpush1.msra.mxu0 0.0
      %700 = vmatprep.subr.mxu0 0.0
      %701 = vmatpush1.msra.mxu0 0.0
      %702 = vmatprep.subr.mxu0 0.0
      %703 = vmatpush1.msra.mxu0 0.0
      %704 = vmatprep.subr.mxu0 0.0
      %705 = vmatpush1.msra.mxu0 0.0
      %706 = vmatprep.subr.mxu0 0.0
      %707 = vmatpush1.msra.mxu0 0.0
      %708 = vmatprep.subr.mxu0 0.0
      %709 = vmatpush1.msra.mxu0 0.0
      %710 = vmatprep.subr.mxu0 0.0
      %711 = vmatpush1.msra.mxu0 0.0
      %712 = vmatprep.subr.mxu0 0.0
      %713 = vmatpush1.msra.mxu0 0.0
      %714 = vmatprep.subr.mxu0 0.0
      %715 = vmatpush1.msra.mxu0 0.0
      %716 = vmatprep.subr.mxu0 0.0
      %717 = vmatpush1.msra.mxu0 0.0
      %718 = vmatprep.subr.mxu0 0.0
      %719 = vmatpush1.msra.mxu0 0.0
      %720 = vmatprep.subr.mxu0 0.0
      %721 = vmatpush1.msra.mxu0 0.0
      %722 = vmatprep.subr.mxu0 0.0
      %723 = vmatpush1.msra.mxu0 0.0
      %724 = vmatprep.subr.mxu0 0.0
      %725 = vmatpush1.msra.mxu0 0.0
      %726 = vmatprep.subr.mxu0 0.0
      %727 = vmatpush1.msra.mxu0 0.0
      %728 = vmatprep.subr.mxu0 0.0
      %729 = vmatpush1.msra.mxu0 0.0
      %730 = vmatprep.subr.mxu0 0.0
      %731 = vmatpush1.msra.mxu0 0.0
      %732 = vmatprep.subr.mxu0 0.0
      %733 = vmatpush1.msra.mxu0 0.0
      %734 = vmatprep.subr.mxu0 0.0
      %735 = vmatpush1.msra.mxu0 0.0
      %736 = vmatprep.subr.mxu0 0.0
      %737 = vmatpush1.msra.mxu0 0.0
      %738 = vmatprep.subr.mxu0 0.0
      %739 = vmatpush1.msra.mxu0 0.0
      %740 = vmatprep.subr.mxu0 0.0
      %741 = vmatpush1.msra.mxu0 0.0
      %742 = vmatprep.subr.mxu0 0.0
      %743 = vmatpush1.msra.mxu0 0.0
      %744 = vmatprep.subr.mxu0 0.0
      %745 = vmatpush1.msra.mxu0 0.0
      %746 = vmatprep.subr.mxu0 0.0
      %747 = vmatpush1.msra.mxu0 0.0
      %748 = vmatprep.subr.mxu0 0.0
      %749 = vmatpush1.msra.mxu0 0.0
      %750 = vmatprep.mubr.f32.mxu0 0.0
      %v751 = vand.u32 %v221, 4294901760
      %v752 = vsub.f32 %v221, %v751
      %753 = vmatmul.mubr.f32.gmra.mrb[0].mxu0 %v752
      %v754 = vpop.f32.mrb[0].mxu0
      %v755 = vadd.f32 %v585, %v754
      %v756 = vpop.f32.mrb[0].mxu0
      %757 = vmatprep.mubr.f32.mxu0 0.0
      %v758 = vand.u32 %v224, 4294901760
      %v759 = vsub.f32 %v224, %v758
      %760 = vmatmul.mubr.f32.gmra.mrb[0].mxu0 %v759
      %v761 = vpop.f32.mrb[0].mxu0
      %v762 = vadd.f32 %v591, %v761
      %v763 = vpop.f32.mrb[0].mxu0
      %764 = vmatprep.mubr.f32.mxu0 0.0
      %v765 = vand.u32 %v227, 4294901760
      %v766 = vsub.f32 %v227, %v765
      %767 = vmatmul.mubr.f32.gmra.mrb[0].mxu0 %v766
      %v768 = vpop.f32.mrb[0].mxu0
      %v769 = vadd.f32 %v597, %v768
      %v770 = vpop.f32.mrb[0].mxu0
      %771 = vmatprep.mubr.f32.mxu0 0.0
      %v772 = vand.u32 %v230, 4294901760
      %v773 = vsub.f32 %v230, %v772
      %774 = vmatmul.mubr.f32.gmra.mrb[0].mxu0 %v773
      %v775 = vpop.f32.mrb[0].mxu0
      %v776 = vadd.f32 %v603, %v775
      %v777 = vpop.f32.mrb[0].mxu0
      %778 = vmatprep.mubr.f32.mxu0 0.0
      %v779 = vand.u32 %v233, 4294901760
      %v780 = vsub.f32 %v233, %v779
      %781 = vmatmul.mubr.f32.gmra.mrb[0].mxu0 %v780
      %v782 = vpop.f32.mrb[0].mxu0
      %v783 = vadd.f32 %v609, %v782
      %v784 = vpop.f32.mrb[0].mxu0
      %785 = vmatprep.mubr.f32.mxu0 0.0
      %v786 = vand.u32 %v236, 4294901760
      %v787 = vsub.f32 %v236, %v786
      %788 = vmatmul.mubr.f32.gmra.mrb[0].mxu0 %v787
      %v789 = vpop.f32.mrb[0].mxu0
      %v790 = vadd.f32 %v615, %v789
      %v791 = vpop.f32.mrb[0].mxu0
      %792 = vmatprep.mubr.f32.mxu0 0.0
      %v793 = vand.u32 %v239, 4294901760
      %v794 = vsub.f32 %v239, %v793
      %795 = vmatmul.mubr.f32.gmra.mrb[0].mxu0 %v794
      %v796 = vpop.f32.mrb[0].mxu0
      %v797 = vadd.f32 %v621, %v796
      %v798 = vpop.f32.mrb[0].mxu0
      %799 = vmatprep.mubr.f32.mxu0 0.0
      %v800 = vand.u32 %v242, 4294901760
      %v801 = vsub.f32 %v242, %v800
      %802 = vmatmul.mubr.f32.gmra.mrb[0].mxu0 %v801
      %v803 = vpop.f32.mrb[0].mxu0
      %v804 = vadd.f32 %v627, %v803
      %v805 = vpop.f32.mrb[0].mxu0
      %806 = vmatprep.mubr.f32.mxu0 0.0
      %v807 = vand.u32 %v245, 4294901760
      %v808 = vsub.f32 %v245, %v807
      %809 = vmatmul.mubr.f32.gmra.mrb[0].mxu0 %v808
      %v810 = vpop.f32.mrb[0].mxu0
      %v811 = vadd.f32 %v633, %v810
      %v812 = vpop.f32.mrb[0].mxu0
      %813 = vmatprep.mubr.f32.mxu0 0.0
      %v814 = vand.u32 %v248, 4294901760
      %v815 = vsub.f32 %v248, %v814
      %816 = vmatmul.mubr.f32.gmra.mrb[0].mxu0 %v815
      %v817 = vpop.f32.mrb[0].mxu0
      %v818 = vadd.f32 %v639, %v817
      %v819 = vpop.f32.mrb[0].mxu0
      %820 = vmatprep.mubr.f32.mxu0 0.0
      %v821 = vand.u32 %v251, 4294901760
      %v822 = vsub.f32 %v251, %v821
      %823 = vmatmul.mubr.f32.gmra.mrb[0].mxu0 %v822
      %v824 = vpop.f32.mrb[0].mxu0
      %v825 = vadd.f32 %v645, %v824
      %v826 = vpop.f32.mrb[0].mxu0
      %827 = vmatprep.mubr.f32.mxu0 0.0
      %v828 = vand.u32 %v254, 4294901760
      %v829 = vsub.f32 %v254, %v828
      %830 = vmatmul.mubr.f32.gmra.mrb[0].mxu0 %v829
      %v831 = vpop.f32.mrb[0].mxu0
      %v832 = vadd.f32 %v651, %v831
      %v833 = vpop.f32.mrb[0].mxu0
      %834 = vmatprep.mubr.f32.mxu0 0.0
      %v835 = vand.u32 %v257, 4294901760
      %v836 = vsub.f32 %v257, %v835
      %837 = vmatmul.mubr.f32.gmra.mrb[0].mxu0 %v836
      %v838 = vpop.f32.mrb[0].mxu0
      %v839 = vadd.f32 %v657, %v838
      %v840 = vpop.f32.mrb[0].mxu0
      %841 = vmatprep.mubr.f32.mxu0 0.0
      %v842 = vand.u32 %v260, 4294901760
      %v843 = vsub.f32 %v260, %v842
      %844 = vmatmul.mubr.f32.gmra.mrb[0].mxu0 %v843
      %v845 = vpop.f32.mrb[0].mxu0
      %v846 = vadd.f32 %v663, %v845
      %v847 = vpop.f32.mrb[0].mxu0
      %848 = vmatprep.mubr.f32.mxu0 0.0
      %v849 = vand.u32 %v263, 4294901760
      %v850 = vsub.f32 %v263, %v849
      %851 = vmatmul.mubr.f32.gmra.mrb[0].mxu0 %v850
      %v852 = vpop.f32.mrb[0].mxu0
      %v853 = vadd.f32 %v669, %v852
      %v854 = vpop.f32.mrb[0].mxu0
      %855 = vmatprep.mubr.f32.mxu0 0.0
      %v856 = vand.u32 %v266, 4294901760
      %v857 = vsub.f32 %v266, %v856
      %858 = vmatmul.mubr.f32.gmra.mrb[0].mxu0 %v857
      %v859 = vpop.f32.mrb[0].mxu0
      %v860 = vadd.f32 %v675, %v859
      %v861 = vpop.f32.mrb[0].mxu0
      %862 = vdwg.mxu0
      %863 = vmatprep.subr.mxu0 0.0
      %v864 = vand.u32 %v178, 4294901760
      %865 = vmatpush1.msra.mxu0 %v864
      %866 = vmatprep.subr.mxu0 0.0
      %v867 = vand.u32 %v179, 4294901760
      %868 = vmatpush1.msra.mxu0 %v867
      %869 = vmatprep.subr.mxu0 0.0
      %v870 = vand.u32 %v180, 4294901760
      %871 = vmatpush1.msra.mxu0 %v870
      %872 = vmatprep.subr.mxu0 0.0
      %v873 = vand.u32 %v181, 4294901760
      %874 = vmatpush1.msra.mxu0 %v873
      %875 = vmatprep.subr.mxu0 0.0
      %876 = vmatpush1.msra.mxu0 0.0
      %877 = vmatprep.subr.mxu0 0.0
      %878 = vmatpush1.msra.mxu0 0.0
      %879 = vmatprep.subr.mxu0 0.0
      %880 = vmatpush1.msra.mxu0 0.0
      %881 = vmatprep.subr.mxu0 0.0
      %882 = vmatpush1.msra.mxu0 0.0
      %883 = vmatprep.subr.mxu0 0.0
      %884 = vmatpush1.msra.mxu0 0.0
      %885 = vmatprep.subr.mxu0 0.0
      %886 = vmatpush1.msra.mxu0 0.0
      %887 = vmatprep.subr.mxu0 0.0
      %888 = vmatpush1.msra.mxu0 0.0
      %889 = vmatprep.subr.mxu0 0.0
      %890 = vmatpush1.msra.mxu0 0.0
      %891 = vmatprep.subr.mxu0 0.0
      %892 = vmatpush1.msra.mxu0 0.0
      %893 = vmatprep.subr.mxu0 0.0
      %894 = vmatpush1.msra.mxu0 0.0
      %895 = vmatprep.subr.mxu0 0.0
      %896 = vmatpush1.msra.mxu0 0.0
      %897 = vmatprep.subr.mxu0 0.0
      %898 = vmatpush1.msra.mxu0 0.0
      %899 = vmatprep.subr.mxu0 0.0
      %900 = vmatpush1.msra.mxu0 0.0
      %901 = vmatprep.subr.mxu0 0.0
      %902 = vmatpush1.msra.mxu0 0.0
      %903 = vmatprep.subr.mxu0 0.0
      %904 = vmatpush1.msra.mxu0 0.0
      %905 = vmatprep.subr.mxu0 0.0
      %906 = vmatpush1.msra.mxu0 0.0
      %907 = vmatprep.subr.mxu0 0.0
      %908 = vmatpush1.msra.mxu0 0.0
      %909 = vmatprep.subr.mxu0 0.0
      %910 = vmatpush1.msra.mxu0 0.0
      %911 = vmatprep.subr.mxu0 0.0
      %912 = vmatpush1.msra.mxu0 0.0
      %913 = vmatprep.subr.mxu0 0.0
      %914 = vmatpush1.msra.mxu0 0.0
      %915 = vmatprep.subr.mxu0 0.0
      %916 = vmatpush1.msra.mxu0 0.0
      %917 = vmatprep.subr.mxu0 0.0
      %918 = vmatpush1.msra.mxu0 0.0
      %919 = vmatprep.subr.mxu0 0.0
      %920 = vmatpush1.msra.mxu0 0.0
      %921 = vmatprep.subr.mxu0 0.0
      %922 = vmatpush1.msra.mxu0 0.0
      %923 = vmatprep.subr.mxu0 0.0
      %924 = vmatpush1.msra.mxu0 0.0
      %925 = vmatprep.subr.mxu0 0.0
      %926 = vmatpush1.msra.mxu0 0.0
      %927 = vmatprep.subr.mxu0 0.0
      %928 = vmatpush1.msra.mxu0 0.0
      %929 = vmatprep.subr.mxu0 0.0
      %930 = vmatpush1.msra.mxu0 0.0
      %931 = vmatprep.mubr.f32.mxu0 0.0
      %v932 = vand.u32 %v221, 4294901760
      %v933 = vsub.f32 %v221, %v932
      %v934 = vand.u32 %v933, 4294901760
      %935 = vmatmul.mubr.f32.gmra.mrb[0].mxu0 %v934
      %v936 = vpop.f32.mrb[0].mxu0
      %v937 = vadd.f32 %v755, %v936
      %v938 = vpop.f32.mrb[0].mxu0
      %939 = vmatprep.mubr.f32.mxu0 0.0
      %v940 = vand.u32 %v224, 4294901760
      %v941 = vsub.f32 %v224, %v940
      %v942 = vand.u32 %v941, 4294901760
      %943 = vmatmul.mubr.f32.gmra.mrb[0].mxu0 %v942
      %v944 = vpop.f32.mrb[0].mxu0
      %v945 = vadd.f32 %v762, %v944
      %v946 = vpop.f32.mrb[0].mxu0
      %947 = vmatprep.mubr.f32.mxu0 0.0
      %v948 = vand.u32 %v227, 4294901760
      %v949 = vsub.f32 %v227, %v948
      %v950 = vand.u32 %v949, 4294901760
      %951 = vmatmul.mubr.f32.gmra.mrb[0].mxu0 %v950
      %v952 = vpop.f32.mrb[0].mxu0
      %v953 = vadd.f32 %v769, %v952
      %v954 = vpop.f32.mrb[0].mxu0
      %955 = vmatprep.mubr.f32.mxu0 0.0
      %v956 = vand.u32 %v230, 4294901760
      %v957 = vsub.f32 %v230, %v956
      %v958 = vand.u32 %v957, 4294901760
      %959 = vmatmul.mubr.f32.gmra.mrb[0].mxu0 %v958
      %v960 = vpop.f32.mrb[0].mxu0
      %v961 = vadd.f32 %v776, %v960
      %v962 = vpop.f32.mrb[0].mxu0
      %963 = vmatprep.mubr.f32.mxu0 0.0
      %v964 = vand.u32 %v233, 4294901760
      %v965 = vsub.f32 %v233, %v964
      %v966 = vand.u32 %v965, 4294901760
      %967 = vmatmul.mubr.f32.gmra.mrb[0].mxu0 %v966
      %v968 = vpop.f32.mrb[0].mxu0
      %v969 = vadd.f32 %v783, %v968
      %v970 = vpop.f32.mrb[0].mxu0
      %971 = vmatprep.mubr.f32.mxu0 0.0
      %v972 = vand.u32 %v236, 4294901760
      %v973 = vsub.f32 %v236, %v972
      %v974 = vand.u32 %v973, 4294901760
      %975 = vmatmul.mubr.f32.gmra.mrb[0].mxu0 %v974
      %v976 = vpop.f32.mrb[0].mxu0
      %v977 = vadd.f32 %v790, %v976
      %v978 = vpop.f32.mrb[0].mxu0
      %979 = vmatprep.mubr.f32.mxu0 0.0
      %v980 = vand.u32 %v239, 4294901760
      %v981 = vsub.f32 %v239, %v980
      %v982 = vand.u32 %v981, 4294901760
      %983 = vmatmul.mubr.f32.gmra.mrb[0].mxu0 %v982
      %v984 = vpop.f32.mrb[0].mxu0
      %v985 = vadd.f32 %v797, %v984
      %v986 = vpop.f32.mrb[0].mxu0
      %987 = vmatprep.mubr.f32.mxu0 0.0
      %v988 = vand.u32 %v242, 4294901760
      %v989 = vsub.f32 %v242, %v988
      %v990 = vand.u32 %v989, 4294901760
      %991 = vmatmul.mubr.f32.gmra.mrb[0].mxu0 %v990
      %v992 = vpop.f32.mrb[0].mxu0
      %v993 = vadd.f32 %v804, %v992
      %v994 = vpop.f32.mrb[0].mxu0
      %995 = vmatprep.mubr.f32.mxu0 0.0
      %v996 = vand.u32 %v245, 4294901760
      %v997 = vsub.f32 %v245, %v996
      %v998 = vand.u32 %v997, 4294901760
      %999 = vmatmul.mubr.f32.gmra.mrb[0].mxu0 %v998
      %v1000 = vpop.f32.mrb[0].mxu0
      %v1001 = vadd.f32 %v811, %v1000
      %v1002 = vpop.f32.mrb[0].mxu0
      %1003 = vmatprep.mubr.f32.mxu0 0.0
      %v1004 = vand.u32 %v248, 4294901760
      %v1005 = vsub.f32 %v248, %v1004
      %v1006 = vand.u32 %v1005, 4294901760
      %1007 = vmatmul.mubr.f32.gmra.mrb[0].mxu0 %v1006
      %v1008 = vpop.f32.mrb[0].mxu0
      %v1009 = vadd.f32 %v818, %v1008
      %v1010 = vpop.f32.mrb[0].mxu0
      %1011 = vmatprep.mubr.f32.mxu0 0.0
      %v1012 = vand.u32 %v251, 4294901760
      %v1013 = vsub.f32 %v251, %v1012
      %v1014 = vand.u32 %v1013, 4294901760
      %1015 = vmatmul.mubr.f32.gmra.mrb[0].mxu0 %v1014
      %v1016 = vpop.f32.mrb[0].mxu0
      %v1017 = vadd.f32 %v825, %v1016
      %v1018 = vpop.f32.mrb[0].mxu0
      %1019 = vmatprep.mubr.f32.mxu0 0.0
      %v1020 = vand.u32 %v254, 4294901760
      %v1021 = vsub.f32 %v254, %v1020
      %v1022 = vand.u32 %v1021, 4294901760
      %1023 = vmatmul.mubr.f32.gmra.mrb[0].mxu0 %v1022
      %v1024 = vpop.f32.mrb[0].mxu0
      %v1025 = vadd.f32 %v832, %v1024
      %v1026 = vpop.f32.mrb[0].mxu0
      %1027 = vmatprep.mubr.f32.mxu0 0.0
      %v1028 = vand.u32 %v257, 4294901760
      %v1029 = vsub.f32 %v257, %v1028
      %v1030 = vand.u32 %v1029, 4294901760
      %1031 = vmatmul.mubr.f32.gmra.mrb[0].mxu0 %v1030
      %v1032 = vpop.f32.mrb[0].mxu0
      %v1033 = vadd.f32 %v839, %v1032
      %v1034 = vpop.f32.mrb[0].mxu0
      %1035 = vmatprep.mubr.f32.mxu0 0.0
      %v1036 = vand.u32 %v260, 4294901760
      %v1037 = vsub.f32 %v260, %v1036
      %v1038 = vand.u32 %v1037, 4294901760
      %1039 = vmatmul.mubr.f32.gmra.mrb[0].mxu0 %v1038
      %v1040 = vpop.f32.mrb[0].mxu0
      %v1041 = vadd.f32 %v846, %v1040
      %v1042 = vpop.f32.mrb[0].mxu0
      %1043 = vmatprep.mubr.f32.mxu0 0.0
      %v1044 = vand.u32 %v263, 4294901760
      %v1045 = vsub.f32 %v263, %v1044
      %v1046 = vand.u32 %v1045, 4294901760
      %1047 = vmatmul.mubr.f32.gmra.mrb[0].mxu0 %v1046
      %v1048 = vpop.f32.mrb[0].mxu0
      %v1049 = vadd.f32 %v853, %v1048
      %v1050 = vpop.f32.mrb[0].mxu0
      %1051 = vmatprep.mubr.f32.mxu0 0.0
      %v1052 = vand.u32 %v266, 4294901760
      %v1053 = vsub.f32 %v266, %v1052
      %v1054 = vand.u32 %v1053, 4294901760
      %1055 = vmatmul.mubr.f32.gmra.mrb[0].mxu0 %v1054
      %v1056 = vpop.f32.mrb[0].mxu0
      %v1057 = vadd.f32 %v860, %v1056
      %v1058 = vpop.f32.mrb[0].mxu0
      %1059 = vdwg.mxu0
      %1060 = vmatprep.subr.mxu0 0.0
      %v1061 = vand.u32 %v178, 4294901760
      %v1062 = vsub.f32 %v178, %v1061
      %v1063 = vand.u32 %v1062, 4294901760
      %1064 = vmatpush1.msra.mxu0 %v1063
      %1065 = vmatprep.subr.mxu0 0.0
      %v1066 = vand.u32 %v179, 4294901760
      %v1067 = vsub.f32 %v179, %v1066
      %v1068 = vand.u32 %v1067, 4294901760
      %1069 = vmatpush1.msra.mxu0 %v1068
      %1070 = vmatprep.subr.mxu0 0.0
      %v1071 = vand.u32 %v180, 4294901760
      %v1072 = vsub.f32 %v180, %v1071
      %v1073 = vand.u32 %v1072, 4294901760
      %1074 = vmatpush1.msra.mxu0 %v1073
      %1075 = vmatprep.subr.mxu0 0.0
      %v1076 = vand.u32 %v181, 4294901760
      %v1077 = vsub.f32 %v181, %v1076
      %v1078 = vand.u32 %v1077, 4294901760
      %1079 = vmatpush1.msra.mxu0 %v1078
      %1080 = vmatprep.subr.mxu0 0.0
      %1081 = vmatpush1.msra.mxu0 0.0
      %1082 = vmatprep.subr.mxu0 0.0
      %1083 = vmatpush1.msra.mxu0 0.0
      %1084 = vmatprep.subr.mxu0 0.0
      %1085 = vmatpush1.msra.mxu0 0.0
      %1086 = vmatprep.subr.mxu0 0.0
      %1087 = vmatpush1.msra.mxu0 0.0
      %1088 = vmatprep.subr.mxu0 0.0
      %1089 = vmatpush1.msra.mxu0 0.0
      %1090 = vmatprep.subr.mxu0 0.0
      %1091 = vmatpush1.msra.mxu0 0.0
      %1092 = vmatprep.subr.mxu0 0.0
      %1093 = vmatpush1.msra.mxu0 0.0
      %1094 = vmatprep.subr.mxu0 0.0
      %1095 = vmatpush1.msra.mxu0 0.0
      %1096 = vmatprep.subr.mxu0 0.0
      %1097 = vmatpush1.msra.mxu0 0.0
      %1098 = vmatprep.subr.mxu0 0.0
      %1099 = vmatpush1.msra.mxu0 0.0
      %1100 = vmatprep.subr.mxu0 0.0
      %1101 = vmatpush1.msra.mxu0 0.0
      %1102 = vmatprep.subr.mxu0 0.0
      %1103 = vmatpush1.msra.mxu0 0.0
      %1104 = vmatprep.subr.mxu0 0.0
      %1105 = vmatpush1.msra.mxu0 0.0
      %1106 = vmatprep.subr.mxu0 0.0
      %1107 = vmatpush1.msra.mxu0 0.0
      %1108 = vmatprep.subr.mxu0 0.0
      %1109 = vmatpush1.msra.mxu0 0.0
      %1110 = vmatprep.subr.mxu0 0.0
      %1111 = vmatpush1.msra.mxu0 0.0
      %1112 = vmatprep.subr.mxu0 0.0
      %1113 = vmatpush1.msra.mxu0 0.0
      %1114 = vmatprep.subr.mxu0 0.0
      %1115 = vmatpush1.msra.mxu0 0.0
      %1116 = vmatprep.subr.mxu0 0.0
      %1117 = vmatpush1.msra.mxu0 0.0
      %1118 = vmatprep.subr.mxu0 0.0
      %1119 = vmatpush1.msra.mxu0 0.0
      %1120 = vmatprep.subr.mxu0 0.0
      %1121 = vmatpush1.msra.mxu0 0.0
      %1122 = vmatprep.subr.mxu0 0.0
      %1123 = vmatpush1.msra.mxu0 0.0
      %1124 = vmatprep.subr.mxu0 0.0
      %1125 = vmatpush1.msra.mxu0 0.0
      %1126 = vmatprep.subr.mxu0 0.0
      %1127 = vmatpush1.msra.mxu0 0.0
      %1128 = vmatprep.subr.mxu0 0.0
      %1129 = vmatpush1.msra.mxu0 0.0
      %1130 = vmatprep.subr.mxu0 0.0
      %1131 = vmatpush1.msra.mxu0 0.0
      %1132 = vmatprep.subr.mxu0 0.0
      %1133 = vmatpush1.msra.mxu0 0.0
      %1134 = vmatprep.subr.mxu0 0.0
      %1135 = vmatpush1.msra.mxu0 0.0
      %1136 = vmatprep.mubr.f32.mxu0 0.0
      %v1137 = vand.u32 %v221, 4294901760
      %1138 = vmatmul.mubr.f32.gmra.mrb[0].mxu0 %v1137
      %v1139 = vpop.f32.mrb[0].mxu0
      %v1140 = vadd.f32 %v937, %v1139
      %v1141 = vpop.f32.mrb[0].mxu0
      %1142 = vmatprep.mubr.f32.mxu0 0.0
      %v1143 = vand.u32 %v224, 4294901760
      %1144 = vmatmul.mubr.f32.gmra.mrb[0].mxu0 %v1143
      %v1145 = vpop.f32.mrb[0].mxu0
      %v1146 = vadd.f32 %v945, %v1145
      %v1147 = vpop.f32.mrb[0].mxu0
      %1148 = vmatprep.mubr.f32.mxu0 0.0
      %v1149 = vand.u32 %v227, 4294901760
      %1150 = vmatmul.mubr.f32.gmra.mrb[0].mxu0 %v1149
      %v1151 = vpop.f32.mrb[0].mxu0
      %v1152 = vadd.f32 %v953, %v1151
      %v1153 = vpop.f32.mrb[0].mxu0
      %1154 = vmatprep.mubr.f32.mxu0 0.0
      %v1155 = vand.u32 %v230, 4294901760
      %1156 = vmatmul.mubr.f32.gmra.mrb[0].mxu0 %v1155
      %v1157 = vpop.f32.mrb[0].mxu0
      %v1158 = vadd.f32 %v961, %v1157
      %v1159 = vpop.f32.mrb[0].mxu0
      %1160 = vmatprep.mubr.f32.mxu0 0.0
      %v1161 = vand.u32 %v233, 4294901760
      %1162 = vmatmul.mubr.f32.gmra.mrb[0].mxu0 %v1161
      %v1163 = vpop.f32.mrb[0].mxu0
      %v1164 = vadd.f32 %v969, %v1163
      %v1165 = vpop.f32.mrb[0].mxu0
      %1166 = vmatprep.mubr.f32.mxu0 0.0
      %v1167 = vand.u32 %v236, 4294901760
      %1168 = vmatmul.mubr.f32.gmra.mrb[0].mxu0 %v1167
      %v1169 = vpop.f32.mrb[0].mxu0
      %v1170 = vadd.f32 %v977, %v1169
      %v1171 = vpop.f32.mrb[0].mxu0
      %1172 = vmatprep.mubr.f32.mxu0 0.0
      %v1173 = vand.u32 %v239, 4294901760
      %1174 = vmatmul.mubr.f32.gmra.mrb[0].mxu0 %v1173
      %v1175 = vpop.f32.mrb[0].mxu0
      %v1176 = vadd.f32 %v985, %v1175
      %v1177 = vpop.f32.mrb[0].mxu0
      %1178 = vmatprep.mubr.f32.mxu0 0.0
      %v1179 = vand.u32 %v242, 4294901760
      %1180 = vmatmul.mubr.f32.gmra.mrb[0].mxu0 %v1179
      %v1181 = vpop.f32.mrb[0].mxu0
      %v1182 = vadd.f32 %v993, %v1181
      %v1183 = vpop.f32.mrb[0].mxu0
      %1184 = vmatprep.mubr.f32.mxu0 0.0
      %v1185 = vand.u32 %v245, 4294901760
      %1186 = vmatmul.mubr.f32.gmra.mrb[0].mxu0 %v1185
      %v1187 = vpop.f32.mrb[0].mxu0
      %v1188 = vadd.f32 %v1001, %v1187
      %v1189 = vpop.f32.mrb[0].mxu0
      %1190 = vmatprep.mubr.f32.mxu0 0.0
      %v1191 = vand.u32 %v248, 4294901760
      %1192 = vmatmul.mubr.f32.gmra.mrb[0].mxu0 %v1191
      %v1193 = vpop.f32.mrb[0].mxu0
      %v1194 = vadd.f32 %v1009, %v1193
      %v1195 = vpop.f32.mrb[0].mxu0
      %1196 = vmatprep.mubr.f32.mxu0 0.0
      %v1197 = vand.u32 %v251, 4294901760
      %1198 = vmatmul.mubr.f32.gmra.mrb[0].mxu0 %v1197
      %v1199 = vpop.f32.mrb[0].mxu0
      %v1200 = vadd.f32 %v1017, %v1199
      %v1201 = vpop.f32.mrb[0].mxu0
      %1202 = vmatprep.mubr.f32.mxu0 0.0
      %v1203 = vand.u32 %v254, 4294901760
      %1204 = vmatmul.mubr.f32.gmra.mrb[0].mxu0 %v1203
      %v1205 = vpop.f32.mrb[0].mxu0
      %v1206 = vadd.f32 %v1025, %v1205
      %v1207 = vpop.f32.mrb[0].mxu0
      %1208 = vmatprep.mubr.f32.mxu0 0.0
      %v1209 = vand.u32 %v257, 4294901760
      %1210 = vmatmul.mubr.f32.gmra.mrb[0].mxu0 %v1209
      %v1211 = vpop.f32.mrb[0].mxu0
      %v1212 = vadd.f32 %v1033, %v1211
      %v1213 = vpop.f32.mrb[0].mxu0
      %1214 = vmatprep.mubr.f32.mxu0 0.0
      %v1215 = vand.u32 %v260, 4294901760
      %1216 = vmatmul.mubr.f32.gmra.mrb[0].mxu0 %v1215
      %v1217 = vpop.f32.mrb[0].mxu0
      %v1218 = vadd.f32 %v1041, %v1217
      %v1219 = vpop.f32.mrb[0].mxu0
      %1220 = vmatprep.mubr.f32.mxu0 0.0
      %v1221 = vand.u32 %v263, 4294901760
      %1222 = vmatmul.mubr.f32.gmra.mrb[0].mxu0 %v1221
      %v1223 = vpop.f32.mrb[0].mxu0
      %v1224 = vadd.f32 %v1049, %v1223
      %v1225 = vpop.f32.mrb[0].mxu0
      %1226 = vmatprep.mubr.f32.mxu0 0.0
      %v1227 = vand.u32 %v266, 4294901760
      %1228 = vmatmul.mubr.f32.gmra.mrb[0].mxu0 %v1227
      %v1229 = vpop.f32.mrb[0].mxu0
      %v1230 = vadd.f32 %v1057, %v1229
      %v1231 = vpop.f32.mrb[0].mxu0
      %1232 = vdwg.mxu0
      %1233 = vmatprep.subr.mxu0 0.0
      %v1234 = vand.u32 %v178, 4294901760
      %1235 = vmatpush1.msra.mxu0 %v1234
      %1236 = vmatprep.subr.mxu0 0.0
      %v1237 = vand.u32 %v179, 4294901760
      %1238 = vmatpush1.msra.mxu0 %v1237
      %1239 = vmatprep.subr.mxu0 0.0
      %v1240 = vand.u32 %v180, 4294901760
      %1241 = vmatpush1.msra.mxu0 %v1240
      %1242 = vmatprep.subr.mxu0 0.0
      %v1243 = vand.u32 %v181, 4294901760
      %1244 = vmatpush1.msra.mxu0 %v1243
      %1245 = vmatprep.subr.mxu0 0.0
      %1246 = vmatpush1.msra.mxu0 0.0
      %1247 = vmatprep.subr.mxu0 0.0
      %1248 = vmatpush1.msra.mxu0 0.0
      %1249 = vmatprep.subr.mxu0 0.0
      %1250 = vmatpush1.msra.mxu0 0.0
      %1251 = vmatprep.subr.mxu0 0.0
      %1252 = vmatpush1.msra.mxu0 0.0
      %1253 = vmatprep.subr.mxu0 0.0
      %1254 = vmatpush1.msra.mxu0 0.0
      %1255 = vmatprep.subr.mxu0 0.0
      %1256 = vmatpush1.msra.mxu0 0.0
      %1257 = vmatprep.subr.mxu0 0.0
      %1258 = vmatpush1.msra.mxu0 0.0
      %1259 = vmatprep.subr.mxu0 0.0
      %1260 = vmatpush1.msra.mxu0 0.0
      %1261 = vmatprep.subr.mxu0 0.0
      %1262 = vmatpush1.msra.mxu0 0.0
      %1263 = vmatprep.subr.mxu0 0.0
      %1264 = vmatpush1.msra.mxu0 0.0
      %1265 = vmatprep.subr.mxu0 0.0
      %1266 = vmatpush1.msra.mxu0 0.0
      %1267 = vmatprep.subr.mxu0 0.0
      %1268 = vmatpush1.msra.mxu0 0.0
      %1269 = vmatprep.subr.mxu0 0.0
      %1270 = vmatpush1.msra.mxu0 0.0
      %1271 = vmatprep.subr.mxu0 0.0
      %1272 = vmatpush1.msra.mxu0 0.0
      %1273 = vmatprep.subr.mxu0 0.0
      %1274 = vmatpush1.msra.mxu0 0.0
      %1275 = vmatprep.subr.mxu0 0.0
      %1276 = vmatpush1.msra.mxu0 0.0
      %1277 = vmatprep.subr.mxu0 0.0
      %1278 = vmatpush1.msra.mxu0 0.0
      %1279 = vmatprep.subr.mxu0 0.0
      %1280 = vmatpush1.msra.mxu0 0.0
      %1281 = vmatprep.subr.mxu0 0.0
      %1282 = vmatpush1.msra.mxu0 0.0
      %1283 = vmatprep.subr.mxu0 0.0
      %1284 = vmatpush1.msra.mxu0 0.0
      %1285 = vmatprep.subr.mxu0 0.0
      %1286 = vmatpush1.msra.mxu0 0.0
      %1287 = vmatprep.subr.mxu0 0.0
      %1288 = vmatpush1.msra.mxu0 0.0
      %1289 = vmatprep.subr.mxu0 0.0
      %1290 = vmatpush1.msra.mxu0 0.0
      %1291 = vmatprep.subr.mxu0 0.0
      %1292 = vmatpush1.msra.mxu0 0.0
      %1293 = vmatprep.subr.mxu0 0.0
      %1294 = vmatpush1.msra.mxu0 0.0
      %1295 = vmatprep.subr.mxu0 0.0
      %1296 = vmatpush1.msra.mxu0 0.0
      %1297 = vmatprep.subr.mxu0 0.0
      %1298 = vmatpush1.msra.mxu0 0.0
      %1299 = vmatprep.subr.mxu0 0.0
      %1300 = vmatpush1.msra.mxu0 0.0
      %1301 = vmatprep.mubr.f32.mxu0 0.0
      %v1302 = vand.u32 %v221, 4294901760
      %1303 = vmatmul.mubr.f32.gmra.mrb[0].mxu0 %v1302
      %v1304 = vpop.f32.mrb[0].mxu0
      %v1305 = vadd.f32 %v1140, %v1304
      %v1306 = vpop.f32.mrb[0].mxu0
      %1307 = vmatprep.mubr.f32.mxu0 0.0
      %v1308 = vand.u32 %v224, 4294901760
      %1309 = vmatmul.mubr.f32.gmra.mrb[0].mxu0 %v1308
      %v1310 = vpop.f32.mrb[0].mxu0
      %v1311 = vadd.f32 %v1146, %v1310
      %v1312 = vpop.f32.mrb[0].mxu0
      %1313 = vmatprep.mubr.f32.mxu0 0.0
      %v1314 = vand.u32 %v227, 4294901760
      %1315 = vmatmul.mubr.f32.gmra.mrb[0].mxu0 %v1314
      %v1316 = vpop.f32.mrb[0].mxu0
      %v1317 = vadd.f32 %v1152, %v1316
      %v1318 = vpop.f32.mrb[0].mxu0
      %1319 = vmatprep.mubr.f32.mxu0 0.0
      %v1320 = vand.u32 %v230, 4294901760
      %1321 = vmatmul.mubr.f32.gmra.mrb[0].mxu0 %v1320
      %v1322 = vpop.f32.mrb[0].mxu0
      %v1323 = vadd.f32 %v1158, %v1322
      %v1324 = vpop.f32.mrb[0].mxu0
      %1325 = vmatprep.mubr.f32.mxu0 0.0
      %v1326 = vand.u32 %v233, 4294901760
      %1327 = vmatmul.mubr.f32.gmra.mrb[0].mxu0 %v1326
      %v1328 = vpop.f32.mrb[0].mxu0
      %v1329 = vadd.f32 %v1164, %v1328
      %v1330 = vpop.f32.mrb[0].mxu0
      %1331 = vmatprep.mubr.f32.mxu0 0.0
      %v1332 = vand.u32 %v236, 4294901760
      %1333 = vmatmul.mubr.f32.gmra.mrb[0].mxu0 %v1332
      %v1334 = vpop.f32.mrb[0].mxu0
      %v1335 = vadd.f32 %v1170, %v1334
      %v1336 = vpop.f32.mrb[0].mxu0
      %1337 = vmatprep.mubr.f32.mxu0 0.0
      %v1338 = vand.u32 %v239, 4294901760
      %1339 = vmatmul.mubr.f32.gmra.mrb[0].mxu0 %v1338
      %v1340 = vpop.f32.mrb[0].mxu0
      %v1341 = vadd.f32 %v1176, %v1340
      %v1342 = vpop.f32.mrb[0].mxu0
      %1343 = vmatprep.mubr.f32.mxu0 0.0
      %v1344 = vand.u32 %v242, 4294901760
      %1345 = vmatmul.mubr.f32.gmra.mrb[0].mxu0 %v1344
      %v1346 = vpop.f32.mrb[0].mxu0
      %v1347 = vadd.f32 %v1182, %v1346
      %v1348 = vpop.f32.mrb[0].mxu0
      %1349 = vmatprep.mubr.f32.mxu0 0.0
      %v1350 = vand.u32 %v245, 4294901760
      %1351 = vmatmul.mubr.f32.gmra.mrb[0].mxu0 %v1350
      %v1352 = vpop.f32.mrb[0].mxu0
      %v1353 = vadd.f32 %v1188, %v1352
      %v1354 = vpop.f32.mrb[0].mxu0
      %1355 = vmatprep.mubr.f32.mxu0 0.0
      %v1356 = vand.u32 %v248, 4294901760
      %1357 = vmatmul.mubr.f32.gmra.mrb[0].mxu0 %v1356
      %v1358 = vpop.f32.mrb[0].mxu0
      %v1359 = vadd.f32 %v1194, %v1358
      %v1360 = vpop.f32.mrb[0].mxu0
      %1361 = vmatprep.mubr.f32.mxu0 0.0
      %v1362 = vand.u32 %v251, 4294901760
      %1363 = vmatmul.mubr.f32.gmra.mrb[0].mxu0 %v1362
      %v1364 = vpop.f32.mrb[0].mxu0
      %v1365 = vadd.f32 %v1200, %v1364
      %v1366 = vpop.f32.mrb[0].mxu0
      %1367 = vmatprep.mubr.f32.mxu0 0.0
      %v1368 = vand.u32 %v254, 4294901760
      %1369 = vmatmul.mubr.f32.gmra.mrb[0].mxu0 %v1368
      %v1370 = vpop.f32.mrb[0].mxu0
      %v1371 = vadd.f32 %v1206, %v1370
      %v1372 = vpop.f32.mrb[0].mxu0
      %1373 = vmatprep.mubr.f32.mxu0 0.0
      %v1374 = vand.u32 %v257, 4294901760
      %1375 = vmatmul.mubr.f32.gmra.mrb[0].mxu0 %v1374
      %v1376 = vpop.f32.mrb[0].mxu0
      %v1377 = vadd.f32 %v1212, %v1376
      %v1378 = vpop.f32.mrb[0].mxu0
      %1379 = vmatprep.mubr.f32.mxu0 0.0
      %v1380 = vand.u32 %v260, 4294901760
      %1381 = vmatmul.mubr.f32.gmra.mrb[0].mxu0 %v1380
      %v1382 = vpop.f32.mrb[0].mxu0
      %v1383 = vadd.f32 %v1218, %v1382
      %v1384 = vpop.f32.mrb[0].mxu0
      %1385 = vmatprep.mubr.f32.mxu0 0.0
      %v1386 = vand.u32 %v263, 4294901760
      %1387 = vmatmul.mubr.f32.gmra.mrb[0].mxu0 %v1386
      %v1388 = vpop.f32.mrb[0].mxu0
      %v1389 = vadd.f32 %v1224, %v1388
      %v1390 = vpop.f32.mrb[0].mxu0
      %1391 = vmatprep.mubr.f32.mxu0 0.0
      %v1392 = vand.u32 %v266, 4294901760
      %1393 = vmatmul.mubr.f32.gmra.mrb[0].mxu0 %v1392
      %v1394 = vpop.f32.mrb[0].mxu0
      %v1395 = vadd.f32 %v1230, %v1394
      %v1396 = vpop.f32.mrb[0].mxu0
      %1397 = vdwg.mxu0
      %v1398 = vmax.f32 %v1305, 0.0
      %v1399 = vmax.f32 %v1311, 0.0
      %v1400 = vmax.f32 %v1317, 0.0
      %v1401 = vmax.f32 %v1323, 0.0
      %v1402 = vmax.f32 %v1329, 0.0
      %v1403 = vmax.f32 %v1335, 0.0
      %v1404 = vmax.f32 %v1341, 0.0
      %v1405 = vmax.f32 %v1347, 0.0
      %v1406 = vmax.f32 %v1353, 0.0
      %v1407 = vmax.f32 %v1359, 0.0
      %v1408 = vmax.f32 %v1365, 0.0
      %v1409 = vmax.f32 %v1371, 0.0
      %v1410 = vmax.f32 %v1377, 0.0
      %v1411 = vmax.f32 %v1383, 0.0
      %v1412 = vmax.f32 %v1389, 0.0
      %v1413 = vmax.f32 %v1395, 0.0
      %s1414 = scalar_lea.vmem [#allocation2], 8
      %1415 = vst [vmem:[%s1414] sm:$0xff] %v1398
      %1416 = vst [vmem:[%s1414 + $0x8] sm:$0xff] %v1399
      %1417 = vst [vmem:[%s1414 + $0x10] sm:$0xff] %v1400
      %1418 = vst [vmem:[%s1414 + $0x18] sm:$0xff] %v1401
      %1419 = vst [vmem:[%s1414 + $0x20] sm:$0xff] %v1402
      %1420 = vst [vmem:[%s1414 + $0x28] sm:$0xff] %v1403
      %1421 = vst [vmem:[%s1414 + $0x30] sm:$0xff] %v1404
      %1422 = vst [vmem:[%s1414 + $0x38] sm:$0xff] %v1405
      %1423 = vst [vmem:[%s1414 + $0x50] sm:$0xff] %v1406
      %1424 = vst [vmem:[%s1414 + $0x58] sm:$0xff] %v1407
      %1425 = vst [vmem:[%s1414 + $0x60] sm:$0xff] %v1408
      %1426 = vst [vmem:[%s1414 + $0x68] sm:$0xff] %v1409
      %1427 = vst [vmem:[%s1414 + $0x70] sm:$0xff] %v1410
      %1428 = vst [vmem:[%s1414 + $0x78] sm:$0xff] %v1411
      %1429 = vst [vmem:[%s1414 + $0x80] sm:$0xff] %v1412
      %1430 = vst [vmem:[%s1414 + $0x88] sm:$0xff] %v1413
      %1431 = vst [vmem:[#allocation2] sm:$0xff] %v1399
      %1432 = vst [vmem:[#allocation2 + $0x50] sm:$0xff] %v1407
      %s1433 = scalar_lea.vmem [#allocation2], 72
      %1434 = vst [vmem:[%s1433] sm:$0xff] %v1404
      %1435 = vst [vmem:[%s1433 + $0x50] sm:$0xff] %v1412
      %v1436 = vld [vmem:[%s1 + $0x20] sm:$0xff]
      %v1437 = vld [vmem:[%s1 + $0x28] sm:$0x1]
      %v1438 = vld [vmem:[#allocation2] sm:$0xff]
      %v1439 = vld [vmem:[#allocation2 + $0x8] sm:$0xff]
      %v1440 = vld [vmem:[#allocation2 + $0x10] sm:$0xff]
      %v1441 = vld [vmem:[#allocation2 + $0x18] sm:$0xff]
      %v1442 = vld [vmem:[#allocation2 + $0x20] sm:$0xff]
      %v1443 = vld [vmem:[#allocation2 + $0x28] sm:$0xff]
      %v1444 = vld [vmem:[#allocation2 + $0x30] sm:$0xff]
      %v1445 = vld [vmem:[#allocation2 + $0x38] sm:$0xff]
      %v1446 = vld [vmem:[#allocation2 + $0x50] sm:$0xff]
      %v1447 = vld [vmem:[#allocation2 + $0x58] sm:$0xff]
      %v1448 = vld [vmem:[#allocation2 + $0x60] sm:$0xff]
      %v1449 = vld [vmem:[#allocation2 + $0x68] sm:$0xff]
      %v1450 = vld [vmem:[#allocation2 + $0x70] sm:$0xff]
      %v1451 = vld [vmem:[#allocation2 + $0x78] sm:$0xff]
      %v1452 = vld [vmem:[#allocation2 + $0x80] sm:$0xff]
      %v1453 = vld [vmem:[#allocation2 + $0x88] sm:$0xff]
      %v1470 = vrot.slane %v1438, 1
      %v1471 = vrot.slane %v1439, 1
      %v1472 = vrot.slane %v1440, 1
      %v1473 = vrot.slane %v1441, 1
      %v1474 = vrot.slane %v1442, 1
      %v1475 = vrot.slane %v1443, 1
      %v1476 = vrot.slane %v1444, 1
      %v1477 = vrot.slane %v1445, 1
      %v1478 = vrot.slane %v1446, 1
      %v1479 = vrot.slane %v1447, 1
      %v1480 = vrot.slane %v1448, 1
      %v1481 = vrot.slane %v1449, 1
      %v1482 = vrot.slane %v1450, 1
      %v1483 = vrot.slane %v1451, 1
      %v1484 = vrot.slane %v1452, 1
      %v1485 = vrot.slane %v1453, 1
      %v1502 = vrot.slane %v1438, 7
      %v1503 = vrot.slane %v1439, 7
      %v1504 = vrot.slane %v1440, 7
      %v1505 = vrot.slane %v1441, 7
      %v1506 = vrot.slane %v1442, 7
      %v1507 = vrot.slane %v1443, 7
      %v1508 = vrot.slane %v1444, 7
      %v1509 = vrot.slane %v1445, 7
      %v1510 = vrot.slane %v1446, 7
      %v1511 = vrot.slane %v1447, 7
      %v1512 = vrot.slane %v1448, 7
      %v1513 = vrot.slane %v1449, 7
      %v1514 = vrot.slane %v1450, 7
      %v1515 = vrot.slane %v1451, 7
      %v1516 = vrot.slane %v1452, 7
      %v1517 = vrot.slane %v1453, 7
      %vm1534 = vcmask 1040384
      %v1535 = vsel %vm1534, %v1470, %v1502
      %v1536 = vsel %vm1534, %v1471, %v1503
      %v1537 = vsel %vm1534, %v1472, %v1504
      %v1538 = vsel %vm1534, %v1473, %v1505
      %v1539 = vsel %vm1534, %v1474, %v1506
      %v1540 = vsel %vm1534, %v1475, %v1507
      %v1541 = vsel %vm1534, %v1476, %v1508
      %v1542 = vsel %vm1534, %v1477, %v1509
      %v1543 = vsel %vm1534, %v1478, %v1510
      %v1544 = vsel %vm1534, %v1479, %v1511
      %v1545 = vsel %vm1534, %v1480, %v1512
      %v1546 = vsel %vm1534, %v1481, %v1513
      %v1547 = vsel %vm1534, %v1482, %v1514
      %v1548 = vsel %vm1534, %v1483, %v1515
      %v1549 = vsel %vm1534, %v1484, %v1516
      %v1550 = vsel %vm1534, %v1485, %v1517
      %v1551 = vlaneseq
      %v1552 = vshrl.u32 %v1551, 7
      %v1553 = vsub.s32 0, %v1552
      %v1554 = vrot.slane %v1436, %v1553
      %v1555 = vmul.f32 %v1535, %v1554
      %v1556 = vmul.f32 %v1536, %v1554
      %v1557 = vmul.f32 %v1537, %v1554
      %v1558 = vmul.f32 %v1538, %v1554
      %v1559 = vmul.f32 %v1539, %v1554
      %v1560 = vmul.f32 %v1540, %v1554
      %v1561 = vmul.f32 %v1541, %v1554
      %v1562 = vmul.f32 %v1542, %v1554
      %v1563 = vmul.f32 %v1543, %v1554
      %v1564 = vmul.f32 %v1544, %v1554
      %v1565 = vmul.f32 %v1545, %v1554
      %v1566 = vmul.f32 %v1546, %v1554
      %v1567 = vmul.f32 %v1547, %v1554
      %v1568 = vmul.f32 %v1548, %v1554
      %v1569 = vmul.f32 %v1549, %v1554
      %v1570 = vmul.f32 %v1550, %v1554
      %v1571 = vlaneseq
      %v1572 = vshrl.u32 %v1571, 7
      %v1573 = vsub.s32 1, %v1572
      %v1574 = vrot.slane %v1436, %v1573
      %v1575 = vmul.f32 %v1438, %v1574
      %v1576 = vmul.f32 %v1439, %v1574
      %v1577 = vmul.f32 %v1440, %v1574
      %v1578 = vmul.f32 %v1441, %v1574
      %v1579 = vmul.f32 %v1442, %v1574
      %v1580 = vmul.f32 %v1443, %v1574
      %v1581 = vmul.f32 %v1444, %v1574
      %v1582 = vmul.f32 %v1445, %v1574
      %v1583 = vmul.f32 %v1446, %v1574
      %v1584 = vmul.f32 %v1447, %v1574
      %v1585 = vmul.f32 %v1448, %v1574
      %v1586 = vmul.f32 %v1449, %v1574
      %v1587 = vmul.f32 %v1450, %v1574
      %v1588 = vmul.f32 %v1451, %v1574
      %v1589 = vmul.f32 %v1452, %v1574
      %v1590 = vmul.f32 %v1453, %v1574
      %v1591 = vadd.f32 %v1555, %v1575
      %v1592 = vadd.f32 %v1556, %v1576
      %v1593 = vadd.f32 %v1557, %v1577
      %v1594 = vadd.f32 %v1558, %v1578
      %v1595 = vadd.f32 %v1559, %v1579
      %v1596 = vadd.f32 %v1560, %v1580
      %v1597 = vadd.f32 %v1561, %v1581
      %v1598 = vadd.f32 %v1562, %v1582
      %v1599 = vadd.f32 %v1563, %v1583
      %v1600 = vadd.f32 %v1564, %v1584
      %v1601 = vadd.f32 %v1565, %v1585
      %v1602 = vadd.f32 %v1566, %v1586
      %v1603 = vadd.f32 %v1567, %v1587
      %v1604 = vadd.f32 %v1568, %v1588
      %v1605 = vadd.f32 %v1569, %v1589
      %v1606 = vadd.f32 %v1570, %v1590
      %vm1607 = vcmask 1046528
      %v1608 = vsel %vm1607, %v1470, %v1502
      %v1609 = vsel %vm1607, %v1471, %v1503
      %v1610 = vsel %vm1607, %v1472, %v1504
      %v1611 = vsel %vm1607, %v1473, %v1505
      %v1612 = vsel %vm1607, %v1474, %v1506
      %v1613 = vsel %vm1607, %v1475, %v1507
      %v1614 = vsel %vm1607, %v1476, %v1508
      %v1615 = vsel %vm1607, %v1477, %v1509
      %v1616 = vsel %vm1607, %v1478, %v1510
      %v1617 = vsel %vm1607, %v1479, %v1511
      %v1618 = vsel %vm1607, %v1480, %v1512
      %v1619 = vsel %vm1607, %v1481, %v1513
      %v1620 = vsel %vm1607, %v1482, %v1514
      %v1621 = vsel %vm1607, %v1483, %v1515
      %v1622 = vsel %vm1607, %v1484, %v1516
      %v1623 = vsel %vm1607, %v1485, %v1517
      %v1624 = vlaneseq
      %v1625 = vshrl.u32 %v1624, 7
      %v1626 = vsub.s32 2, %v1625
      %v1627 = vrot.slane %v1436, %v1626
      %v1628 = vmul.f32 %v1608, %v1627
      %v1629 = vmul.f32 %v1609, %v1627
      %v1630 = vmul.f32 %v1610, %v1627
      %v1631 = vmul.f32 %v1611, %v1627
      %v1632 = vmul.f32 %v1612, %v1627
      %v1633 = vmul.f32 %v1613, %v1627
      %v1634 = vmul.f32 %v1614, %v1627
      %v1635 = vmul.f32 %v1615, %v1627
      %v1636 = vmul.f32 %v1616, %v1627
      %v1637 = vmul.f32 %v1617, %v1627
      %v1638 = vmul.f32 %v1618, %v1627
      %v1639 = vmul.f32 %v1619, %v1627
      %v1640 = vmul.f32 %v1620, %v1627
      %v1641 = vmul.f32 %v1621, %v1627
      %v1642 = vmul.f32 %v1622, %v1627
      %v1643 = vmul.f32 %v1623, %v1627
      %v1644 = vadd.f32 %v1591, %v1628
      %v1645 = vadd.f32 %v1592, %v1629
      %v1646 = vadd.f32 %v1593, %v1630
      %v1647 = vadd.f32 %v1594, %v1631
      %v1648 = vadd.f32 %v1595, %v1632
      %v1649 = vadd.f32 %v1596, %v1633
      %v1650 = vadd.f32 %v1597, %v1634
      %v1651 = vadd.f32 %v1598, %v1635
      %v1652 = vadd.f32 %v1599, %v1636
      %v1653 = vadd.f32 %v1600, %v1637
      %v1654 = vadd.f32 %v1601, %v1638
      %v1655 = vadd.f32 %v1602, %v1639
      %v1656 = vadd.f32 %v1603, %v1640
      %v1657 = vadd.f32 %v1604, %v1641
      %v1658 = vadd.f32 %v1605, %v1642
      %v1659 = vadd.f32 %v1606, %v1643
      %v1660 = vld [vmem:[%s1414] sm:$0xff]
      %v1661 = vld [vmem:[%s1414 + $0x8] sm:$0xff]
      %v1662 = vld [vmem:[%s1414 + $0x10] sm:$0xff]
      %v1663 = vld [vmem:[%s1414 + $0x18] sm:$0xff]
      %v1664 = vld [vmem:[%s1414 + $0x20] sm:$0xff]
      %v1665 = vld [vmem:[%s1414 + $0x28] sm:$0xff]
      %v1666 = vld [vmem:[%s1414 + $0x30] sm:$0xff]
      %v1667 = vld [vmem:[%s1414 + $0x38] sm:$0xff]
      %v1668 = vld [vmem:[%s1414 + $0x50] sm:$0xff]
      %v1669 = vld [vmem:[%s1414 + $0x58] sm:$0xff]
      %v1670 = vld [vmem:[%s1414 + $0x60] sm:$0xff]
      %v1671 = vld [vmem:[%s1414 + $0x68] sm:$0xff]
      %v1672 = vld [vmem:[%s1414 + $0x70] sm:$0xff]
      %v1673 = vld [vmem:[%s1414 + $0x78] sm:$0xff]
      %v1674 = vld [vmem:[%s1414 + $0x80] sm:$0xff]
      %v1675 = vld [vmem:[%s1414 + $0x88] sm:$0xff]
      %v1692 = vrot.slane %v1660, 1
      %v1693 = vrot.slane %v1661, 1
      %v1694 = vrot.slane %v1662, 1
      %v1695 = vrot.slane %v1663, 1
      %v1696 = vrot.slane %v1664, 1
      %v1697 = vrot.slane %v1665, 1
      %v1698 = vrot.slane %v1666, 1
      %v1699 = vrot.slane %v1667, 1
      %v1700 = vrot.slane %v1668, 1
      %v1701 = vrot.slane %v1669, 1
      %v1702 = vrot.slane %v1670, 1
      %v1703 = vrot.slane %v1671, 1
      %v1704 = vrot.slane %v1672, 1
      %v1705 = vrot.slane %v1673, 1
      %v1706 = vrot.slane %v1674, 1
      %v1707 = vrot.slane %v1675, 1
      %v1724 = vrot.slane %v1660, 7
      %v1725 = vrot.slane %v1661, 7
      %v1726 = vrot.slane %v1662, 7
      %v1727 = vrot.slane %v1663, 7
      %v1728 = vrot.slane %v1664, 7
      %v1729 = vrot.slane %v1665, 7
      %v1730 = vrot.slane %v1666, 7
      %v1731 = vrot.slane %v1667, 7
      %v1732 = vrot.slane %v1668, 7
      %v1733 = vrot.slane %v1669, 7
      %v1734 = vrot.slane %v1670, 7
      %v1735 = vrot.slane %v1671, 7
      %v1736 = vrot.slane %v1672, 7
      %v1737 = vrot.slane %v1673, 7
      %v1738 = vrot.slane %v1674, 7
      %v1739 = vrot.slane %v1675, 7
      %v1756 = vsel %vm1534, %v1692, %v1724
      %v1757 = vsel %vm1534, %v1693, %v1725
      %v1758 = vsel %vm1534, %v1694, %v1726
      %v1759 = vsel %vm1534, %v1695, %v1727
      %v1760 = vsel %vm1534, %v1696, %v1728
      %v1761 = vsel %vm1534, %v1697, %v1729
      %v1762 = vsel %vm1534, %v1698, %v1730
      %v1763 = vsel %vm1534, %v1699, %v1731
      %v1764 = vsel %vm1534, %v1700, %v1732
      %v1765 = vsel %vm1534, %v1701, %v1733
      %v1766 = vsel %vm1534, %v1702, %v1734
      %v1767 = vsel %vm1534, %v1703, %v1735
      %v1768 = vsel %vm1534, %v1704, %v1736
      %v1769 = vsel %vm1534, %v1705, %v1737
      %v1770 = vsel %vm1534, %v1706, %v1738
      %v1771 = vsel %vm1534, %v1707, %v1739
      %v1772 = vlaneseq
      %v1773 = vshrl.u32 %v1772, 7
      %v1774 = vsub.s32 3, %v1773
      %v1775 = vrot.slane %v1436, %v1774
      %v1776 = vmul.f32 %v1756, %v1775
      %v1777 = vmul.f32 %v1757, %v1775
      %v1778 = vmul.f32 %v1758, %v1775
      %v1779 = vmul.f32 %v1759, %v1775
      %v1780 = vmul.f32 %v1760, %v1775
      %v1781 = vmul.f32 %v1761, %v1775
      %v1782 = vmul.f32 %v1762, %v1775
      %v1783 = vmul.f32 %v1763, %v1775
      %v1784 = vmul.f32 %v1764, %v1775
      %v1785 = vmul.f32 %v1765, %v1775
      %v1786 = vmul.f32 %v1766, %v1775
      %v1787 = vmul.f32 %v1767, %v1775
      %v1788 = vmul.f32 %v1768, %v1775
      %v1789 = vmul.f32 %v1769, %v1775
      %v1790 = vmul.f32 %v1770, %v1775
      %v1791 = vmul.f32 %v1771, %v1775
      %v1792 = vadd.f32 %v1644, %v1776
      %v1793 = vadd.f32 %v1645, %v1777
      %v1794 = vadd.f32 %v1646, %v1778
      %v1795 = vadd.f32 %v1647, %v1779
      %v1796 = vadd.f32 %v1648, %v1780
      %v1797 = vadd.f32 %v1649, %v1781
      %v1798 = vadd.f32 %v1650, %v1782
      %v1799 = vadd.f32 %v1651, %v1783
      %v1800 = vadd.f32 %v1652, %v1784
      %v1801 = vadd.f32 %v1653, %v1785
      %v1802 = vadd.f32 %v1654, %v1786
      %v1803 = vadd.f32 %v1655, %v1787
      %v1804 = vadd.f32 %v1656, %v1788
      %v1805 = vadd.f32 %v1657, %v1789
      %v1806 = vadd.f32 %v1658, %v1790
      %v1807 = vadd.f32 %v1659, %v1791
      %v1808 = vlaneseq
      %v1809 = vshrl.u32 %v1808, 7
      %v1810 = vsub.s32 4, %v1809
      %v1811 = vrot.slane %v1436, %v1810
      %v1812 = vmul.f32 %v1660, %v1811
      %v1813 = vmul.f32 %v1661, %v1811
      %v1814 = vmul.f32 %v1662, %v1811
      %v1815 = vmul.f32 %v1663, %v1811
      %v1816 = vmul.f32 %v1664, %v1811
      %v1817 = vmul.f32 %v1665, %v1811
      %v1818 = vmul.f32 %v1666, %v1811
      %v1819 = vmul.f32 %v1667, %v1811
      %v1820 = vmul.f32 %v1668, %v1811
      %v1821 = vmul.f32 %v1669, %v1811
      %v1822 = vmul.f32 %v1670, %v1811
      %v1823 = vmul.f32 %v1671, %v1811
      %v1824 = vmul.f32 %v1672, %v1811
      %v1825 = vmul.f32 %v1673, %v1811
      %v1826 = vmul.f32 %v1674, %v1811
      %v1827 = vmul.f32 %v1675, %v1811
      %v1828 = vadd.f32 %v1792, %v1812
      %v1829 = vadd.f32 %v1793, %v1813
      %v1830 = vadd.f32 %v1794, %v1814
      %v1831 = vadd.f32 %v1795, %v1815
      %v1832 = vadd.f32 %v1796, %v1816
      %v1833 = vadd.f32 %v1797, %v1817
      %v1834 = vadd.f32 %v1798, %v1818
      %v1835 = vadd.f32 %v1799, %v1819
      %v1836 = vadd.f32 %v1800, %v1820
      %v1837 = vadd.f32 %v1801, %v1821
      %v1838 = vadd.f32 %v1802, %v1822
      %v1839 = vadd.f32 %v1803, %v1823
      %v1840 = vadd.f32 %v1804, %v1824
      %v1841 = vadd.f32 %v1805, %v1825
      %v1842 = vadd.f32 %v1806, %v1826
      %v1843 = vadd.f32 %v1807, %v1827
      %v1844 = vsel %vm1607, %v1692, %v1724
      %v1845 = vsel %vm1607, %v1693, %v1725
      %v1846 = vsel %vm1607, %v1694, %v1726
      %v1847 = vsel %vm1607, %v1695, %v1727
      %v1848 = vsel %vm1607, %v1696, %v1728
      %v1849 = vsel %vm1607, %v1697, %v1729
      %v1850 = vsel %vm1607, %v1698, %v1730
      %v1851 = vsel %vm1607, %v1699, %v1731
      %v1852 = vsel %vm1607, %v1700, %v1732
      %v1853 = vsel %vm1607, %v1701, %v1733
      %v1854 = vsel %vm1607, %v1702, %v1734
      %v1855 = vsel %vm1607, %v1703, %v1735
      %v1856 = vsel %vm1607, %v1704, %v1736
      %v1857 = vsel %vm1607, %v1705, %v1737
      %v1858 = vsel %vm1607, %v1706, %v1738
      %v1859 = vsel %vm1607, %v1707, %v1739
      %v1860 = vlaneseq
      %v1861 = vshrl.u32 %v1860, 7
      %v1862 = vsub.s32 5, %v1861
      %v1863 = vrot.slane %v1436, %v1862
      %v1864 = vmul.f32 %v1844, %v1863
      %v1865 = vmul.f32 %v1845, %v1863
      %v1866 = vmul.f32 %v1846, %v1863
      %v1867 = vmul.f32 %v1847, %v1863
      %v1868 = vmul.f32 %v1848, %v1863
      %v1869 = vmul.f32 %v1849, %v1863
      %v1870 = vmul.f32 %v1850, %v1863
      %v1871 = vmul.f32 %v1851, %v1863
      %v1872 = vmul.f32 %v1852, %v1863
      %v1873 = vmul.f32 %v1853, %v1863
      %v1874 = vmul.f32 %v1854, %v1863
      %v1875 = vmul.f32 %v1855, %v1863
      %v1876 = vmul.f32 %v1856, %v1863
      %v1877 = vmul.f32 %v1857, %v1863
      %v1878 = vmul.f32 %v1858, %v1863
      %v1879 = vmul.f32 %v1859, %v1863
      %v1880 = vadd.f32 %v1828, %v1864
      %v1881 = vadd.f32 %v1829, %v1865
      %v1882 = vadd.f32 %v1830, %v1866
      %v1883 = vadd.f32 %v1831, %v1867
      %v1884 = vadd.f32 %v1832, %v1868
      %v1885 = vadd.f32 %v1833, %v1869
      %v1886 = vadd.f32 %v1834, %v1870
      %v1887 = vadd.f32 %v1835, %v1871
      %v1888 = vadd.f32 %v1836, %v1872
      %v1889 = vadd.f32 %v1837, %v1873
      %v1890 = vadd.f32 %v1838, %v1874
      %v1891 = vadd.f32 %v1839, %v1875
      %v1892 = vadd.f32 %v1840, %v1876
      %v1893 = vadd.f32 %v1841, %v1877
      %v1894 = vadd.f32 %v1842, %v1878
      %v1895 = vadd.f32 %v1843, %v1879
      %s1896 = scalar_lea.vmem [#allocation2], 16
      %v1897 = vld [vmem:[%s1896] sm:$0xff]
      %v1898 = vld [vmem:[%s1896 + $0x8] sm:$0xff]
      %v1899 = vld [vmem:[%s1896 + $0x10] sm:$0xff]
      %v1900 = vld [vmem:[%s1896 + $0x18] sm:$0xff]
      %v1901 = vld [vmem:[%s1896 + $0x20] sm:$0xff]
      %v1902 = vld [vmem:[%s1896 + $0x28] sm:$0xff]
      %v1903 = vld [vmem:[%s1896 + $0x30] sm:$0xff]
      %v1904 = vld [vmem:[%s1896 + $0x38] sm:$0xff]
      %v1905 = vld [vmem:[%s1896 + $0x50] sm:$0xff]
      %v1906 = vld [vmem:[%s1896 + $0x58] sm:$0xff]
      %v1907 = vld [vmem:[%s1896 + $0x60] sm:$0xff]
      %v1908 = vld [vmem:[%s1896 + $0x68] sm:$0xff]
      %v1909 = vld [vmem:[%s1896 + $0x70] sm:$0xff]
      %v1910 = vld [vmem:[%s1896 + $0x78] sm:$0xff]
      %v1911 = vld [vmem:[%s1896 + $0x80] sm:$0xff]
      %v1912 = vld [vmem:[%s1896 + $0x88] sm:$0xff]
      %v1929 = vrot.slane %v1897, 1
      %v1930 = vrot.slane %v1898, 1
      %v1931 = vrot.slane %v1899, 1
      %v1932 = vrot.slane %v1900, 1
      %v1933 = vrot.slane %v1901, 1
      %v1934 = vrot.slane %v1902, 1
      %v1935 = vrot.slane %v1903, 1
      %v1936 = vrot.slane %v1904, 1
      %v1937 = vrot.slane %v1905, 1
      %v1938 = vrot.slane %v1906, 1
      %v1939 = vrot.slane %v1907, 1
      %v1940 = vrot.slane %v1908, 1
      %v1941 = vrot.slane %v1909, 1
      %v1942 = vrot.slane %v1910, 1
      %v1943 = vrot.slane %v1911, 1
      %v1944 = vrot.slane %v1912, 1
      %v1961 = vrot.slane %v1897, 7
      %v1962 = vrot.slane %v1898, 7
      %v1963 = vrot.slane %v1899, 7
      %v1964 = vrot.slane %v1900, 7
      %v1965 = vrot.slane %v1901, 7
      %v1966 = vrot.slane %v1902, 7
      %v1967 = vrot.slane %v1903, 7
      %v1968 = vrot.slane %v1904, 7
      %v1969 = vrot.slane %v1905, 7
      %v1970 = vrot.slane %v1906, 7
      %v1971 = vrot.slane %v1907, 7
      %v1972 = vrot.slane %v1908, 7
      %v1973 = vrot.slane %v1909, 7
      %v1974 = vrot.slane %v1910, 7
      %v1975 = vrot.slane %v1911, 7
      %v1976 = vrot.slane %v1912, 7
      %v1993 = vsel %vm1534, %v1929, %v1961
      %v1994 = vsel %vm1534, %v1930, %v1962
      %v1995 = vsel %vm1534, %v1931, %v1963
      %v1996 = vsel %vm1534, %v1932, %v1964
      %v1997 = vsel %vm1534, %v1933, %v1965
      %v1998 = vsel %vm1534, %v1934, %v1966
      %v1999 = vsel %vm1534, %v1935, %v1967
      %v2000 = vsel %vm1534, %v1936, %v1968
      %v2001 = vsel %vm1534, %v1937, %v1969
      %v2002 = vsel %vm1534, %v1938, %v1970
      %v2003 = vsel %vm1534, %v1939, %v1971
      %v2004 = vsel %vm1534, %v1940, %v1972
      %v2005 = vsel %vm1534, %v1941, %v1973
      %v2006 = vsel %vm1534, %v1942, %v1974
      %v2007 = vsel %vm1534, %v1943, %v1975
      %v2008 = vsel %vm1534, %v1944, %v1976
      %v2009 = vlaneseq
      %v2010 = vshrl.u32 %v2009, 7
      %v2011 = vsub.s32 6, %v2010
      %v2012 = vrot.slane %v1436, %v2011
      %v2013 = vmul.f32 %v1993, %v2012
      %v2014 = vmul.f32 %v1994, %v2012
      %v2015 = vmul.f32 %v1995, %v2012
      %v2016 = vmul.f32 %v1996, %v2012
      %v2017 = vmul.f32 %v1997, %v2012
      %v2018 = vmul.f32 %v1998, %v2012
      %v2019 = vmul.f32 %v1999, %v2012
      %v2020 = vmul.f32 %v2000, %v2012
      %v2021 = vmul.f32 %v2001, %v2012
      %v2022 = vmul.f32 %v2002, %v2012
      %v2023 = vmul.f32 %v2003, %v2012
      %v2024 = vmul.f32 %v2004, %v2012
      %v2025 = vmul.f32 %v2005, %v2012
      %v2026 = vmul.f32 %v2006, %v2012
      %v2027 = vmul.f32 %v2007, %v2012
      %v2028 = vmul.f32 %v2008, %v2012
      %v2029 = vadd.f32 %v1880, %v2013
      %v2030 = vadd.f32 %v1881, %v2014
      %v2031 = vadd.f32 %v1882, %v2015
      %v2032 = vadd.f32 %v1883, %v2016
      %v2033 = vadd.f32 %v1884, %v2017
      %v2034 = vadd.f32 %v1885, %v2018
      %v2035 = vadd.f32 %v1886, %v2019
      %v2036 = vadd.f32 %v1887, %v2020
      %v2037 = vadd.f32 %v1888, %v2021
      %v2038 = vadd.f32 %v1889, %v2022
      %v2039 = vadd.f32 %v1890, %v2023
      %v2040 = vadd.f32 %v1891, %v2024
      %v2041 = vadd.f32 %v1892, %v2025
      %v2042 = vadd.f32 %v1893, %v2026
      %v2043 = vadd.f32 %v1894, %v2027
      %v2044 = vadd.f32 %v1895, %v2028
      %v2045 = vlaneseq
      %v2046 = vshrl.u32 %v2045, 7
      %v2047 = vsub.s32 7, %v2046
      %v2048 = vrot.slane %v1436, %v2047
      %v2049 = vmul.f32 %v1897, %v2048
      %v2050 = vmul.f32 %v1898, %v2048
      %v2051 = vmul.f32 %v1899, %v2048
      %v2052 = vmul.f32 %v1900, %v2048
      %v2053 = vmul.f32 %v1901, %v2048
      %v2054 = vmul.f32 %v1902, %v2048
      %v2055 = vmul.f32 %v1903, %v2048
      %v2056 = vmul.f32 %v1904, %v2048
      %v2057 = vmul.f32 %v1905, %v2048
      %v2058 = vmul.f32 %v1906, %v2048
      %v2059 = vmul.f32 %v1907, %v2048
      %v2060 = vmul.f32 %v1908, %v2048
      %v2061 = vmul.f32 %v1909, %v2048
      %v2062 = vmul.f32 %v1910, %v2048
      %v2063 = vmul.f32 %v1911, %v2048
      %v2064 = vmul.f32 %v1912, %v2048
      %v2065 = vadd.f32 %v2029, %v2049
      %v2066 = vadd.f32 %v2030, %v2050
      %v2067 = vadd.f32 %v2031, %v2051
      %v2068 = vadd.f32 %v2032, %v2052
      %v2069 = vadd.f32 %v2033, %v2053
      %v2070 = vadd.f32 %v2034, %v2054
      %v2071 = vadd.f32 %v2035, %v2055
      %v2072 = vadd.f32 %v2036, %v2056
      %v2073 = vadd.f32 %v2037, %v2057
      %v2074 = vadd.f32 %v2038, %v2058
      %v2075 = vadd.f32 %v2039, %v2059
      %v2076 = vadd.f32 %v2040, %v2060
      %v2077 = vadd.f32 %v2041, %v2061
      %v2078 = vadd.f32 %v2042, %v2062
      %v2079 = vadd.f32 %v2043, %v2063
      %v2080 = vadd.f32 %v2044, %v2064
      %v2081 = vsel %vm1607, %v1929, %v1961
      %v2082 = vsel %vm1607, %v1930, %v1962
      %v2083 = vsel %vm1607, %v1931, %v1963
      %v2084 = vsel %vm1607, %v1932, %v1964
      %v2085 = vsel %vm1607, %v1933, %v1965
      %v2086 = vsel %vm1607, %v1934, %v1966
      %v2087 = vsel %vm1607, %v1935, %v1967
      %v2088 = vsel %vm1607, %v1936, %v1968
      %v2089 = vsel %vm1607, %v1937, %v1969
      %v2090 = vsel %vm1607, %v1938, %v1970
      %v2091 = vsel %vm1607, %v1939, %v1971
      %v2092 = vsel %vm1607, %v1940, %v1972
      %v2093 = vsel %vm1607, %v1941, %v1973
      %v2094 = vsel %vm1607, %v1942, %v1974
      %v2095 = vsel %vm1607, %v1943, %v1975
      %v2096 = vsel %vm1607, %v1944, %v1976
      %v2097 = vlaneseq
      %v2098 = vshrl.u32 %v2097, 7
      %v2099 = vsub.s32 0, %v2098
      %v2100 = vrot.slane %v1437, %v2099
      %v2101 = vmul.f32 %v2081, %v2100
      %v2102 = vmul.f32 %v2082, %v2100
      %v2103 = vmul.f32 %v2083, %v2100
      %v2104 = vmul.f32 %v2084, %v2100
      %v2105 = vmul.f32 %v2085, %v2100
      %v2106 = vmul.f32 %v2086, %v2100
      %v2107 = vmul.f32 %v2087, %v2100
      %v2108 = vmul.f32 %v2088, %v2100
      %v2109 = vmul.f32 %v2089, %v2100
      %v2110 = vmul.f32 %v2090, %v2100
      %v2111 = vmul.f32 %v2091, %v2100
      %v2112 = vmul.f32 %v2092, %v2100
      %v2113 = vmul.f32 %v2093, %v2100
      %v2114 = vmul.f32 %v2094, %v2100
      %v2115 = vmul.f32 %v2095, %v2100
      %v2116 = vmul.f32 %v2096, %v2100
      %v2117 = vadd.f32 %v2065, %v2101
      %v2118 = vadd.f32 %v2066, %v2102
      %v2119 = vadd.f32 %v2067, %v2103
      %v2120 = vadd.f32 %v2068, %v2104
      %v2121 = vadd.f32 %v2069, %v2105
      %v2122 = vadd.f32 %v2070, %v2106
      %v2123 = vadd.f32 %v2071, %v2107
      %v2124 = vadd.f32 %v2072, %v2108
      %v2125 = vadd.f32 %v2073, %v2109
      %v2126 = vadd.f32 %v2074, %v2110
      %v2127 = vadd.f32 %v2075, %v2111
      %v2128 = vadd.f32 %v2076, %v2112
      %v2129 = vadd.f32 %v2077, %v2113
      %v2130 = vadd.f32 %v2078, %v2114
      %v2131 = vadd.f32 %v2079, %v2115
      %v2132 = vadd.f32 %v2080, %v2116
      %v2133 = vld [vmem:[%s1 + $0x111] sm:$0x1]
      %v2134 = vlaneseq
      %v2135 = vshrl.u32 %v2134, 7
      %v2136 = vsub.s32 0, %v2135
      %v2137 = vrot.slane %v2133, %v2136
      %v2138 = vadd.f32 %v2117, %v2137
      %v2139 = vadd.f32 %v2118, %v2137
      %v2140 = vadd.f32 %v2119, %v2137
      %v2141 = vadd.f32 %v2120, %v2137
      %v2142 = vadd.f32 %v2121, %v2137
      %v2143 = vadd.f32 %v2122, %v2137
      %v2144 = vadd.f32 %v2123, %v2137
      %v2145 = vadd.f32 %v2124, %v2137
      %v2146 = vadd.f32 %v2125, %v2137
      %v2147 = vadd.f32 %v2126, %v2137
      %v2148 = vadd.f32 %v2127, %v2137
      %v2149 = vadd.f32 %v2128, %v2137
      %v2150 = vadd.f32 %v2129, %v2137
      %v2151 = vadd.f32 %v2130, %v2137
      %v2152 = vadd.f32 %v2131, %v2137
      %v2153 = vadd.f32 %v2132, %v2137
      %v2154 = vmax.f32 %v2138, 0.0
      %v2155 = vmax.f32 %v2139, 0.0
      %v2156 = vmax.f32 %v2140, 0.0
      %v2157 = vmax.f32 %v2141, 0.0
      %v2158 = vmax.f32 %v2142, 0.0
      %v2159 = vmax.f32 %v2143, 0.0
      %v2160 = vmax.f32 %v2144, 0.0
      %v2161 = vmax.f32 %v2145, 0.0
      %v2162 = vmax.f32 %v2146, 0.0
      %v2163 = vmax.f32 %v2147, 0.0
      %v2164 = vmax.f32 %v2148, 0.0
      %v2165 = vmax.f32 %v2149, 0.0
      %v2166 = vmax.f32 %v2150, 0.0
      %v2167 = vmax.f32 %v2151, 0.0
      %v2168 = vmax.f32 %v2152, 0.0
      %v2169 = vmax.f32 %v2153, 0.0
      %v2170 = vld [vmem:[%s1 + $0x30] sm:$0xff]
      %v2171 = vld [vmem:[%s1 + $0x38] sm:$0xff]
      %v2172 = vld [vmem:[%s1 + $0x40] sm:$0xff]
      %v2173 = vld [vmem:[%s1 + $0x48] sm:$0xff]
      %v2174 = vld [vmem:[%s1 + $0x50] sm:$0xff]
      %v2175 = vld [vmem:[%s1 + $0x58] sm:$0xff]
      %v2176 = vld [vmem:[%s1 + $0x60] sm:$0xff]
      %v2177 = vld [vmem:[%s1 + $0x68] sm:$0xff]
      %v2178 = vld [vmem:[%s1 + $0x70] sm:$0xff]
      %v2179 = vld [vmem:[%s1 + $0x78] sm:$0xff]
      %v2180 = vld [vmem:[%s1 + $0x80] sm:$0xff]
      %v2181 = vld [vmem:[%s1 + $0x88] sm:$0xff]
      %v2182 = vld [vmem:[%s1 + $0x90] sm:$0xff]
      %v2183 = vld [vmem:[%s1 + $0x98] sm:$0xff]
      %v2184 = vld [vmem:[%s1 + $0xa0] sm:$0xff]
      %v2185 = vld [vmem:[%s1 + $0xa8] sm:$0xff]
      %v2186 = vld [vmem:[%s1 + $0x112] sm:$0x1]
      %v2187 = vlaneseq
      %v2188 = vshrl.u32 %v2187, 7
      %v2189 = vsub.s32 0, %v2188
      %v2190 = vrot.slane %v2186, %v2189
      %2191 = vmatprep.subr.mxu0 0.0
      %v2192 = vand.u32 %v2170, 4294901760
      %2193 = vmatpush1.msra.mxu0 %v2192
      %2194 = vmatprep.subr.mxu0 0.0
      %v2195 = vand.u32 %v2171, 4294901760
      %2196 = vmatpush1.msra.mxu0 %v2195
      %2197 = vmatprep.subr.mxu0 0.0
      %v2198 = vand.u32 %v2172, 4294901760
      %2199 = vmatpush1.msra.mxu0 %v2198
      %2200 = vmatprep.subr.mxu0 0.0
      %v2201 = vand.u32 %v2173, 4294901760
      %2202 = vmatpush1.msra.mxu0 %v2201
      %2203 = vmatprep.subr.mxu0 0.0
      %v2204 = vand.u32 %v2174, 4294901760
      %2205 = vmatpush1.msra.mxu0 %v2204
      %2206 = vmatprep.subr.mxu0 0.0
      %v2207 = vand.u32 %v2175, 4294901760
      %2208 = vmatpush1.msra.mxu0 %v2207
      %2209 = vmatprep.subr.mxu0 0.0
      %v2210 = vand.u32 %v2176, 4294901760
      %2211 = vmatpush1.msra.mxu0 %v2210
      %2212 = vmatprep.subr.mxu0 0.0
      %v2213 = vand.u32 %v2177, 4294901760
      %2214 = vmatpush1.msra.mxu0 %v2213
      %2215 = vmatprep.subr.mxu0 0.0
      %v2216 = vand.u32 %v2178, 4294901760
      %2217 = vmatpush1.msra.mxu0 %v2216
      %2218 = vmatprep.subr.mxu0 0.0
      %v2219 = vand.u32 %v2179, 4294901760
      %2220 = vmatpush1.msra.mxu0 %v2219
      %2221 = vmatprep.subr.mxu0 0.0
      %v2222 = vand.u32 %v2180, 4294901760
      %2223 = vmatpush1.msra.mxu0 %v2222
      %2224 = vmatprep.subr.mxu0 0.0
      %v2225 = vand.u32 %v2181, 4294901760
      %2226 = vmatpush1.msra.mxu0 %v2225
      %2227 = vmatprep.subr.mxu0 0.0
      %v2228 = vand.u32 %v2182, 4294901760
      %2229 = vmatpush1.msra.mxu0 %v2228
      %2230 = vmatprep.subr.mxu0 0.0
      %v2231 = vand.u32 %v2183, 4294901760
      %2232 = vmatpush1.msra.mxu0 %v2231
      %2233 = vmatprep.subr.mxu0 0.0
      %v2234 = vand.u32 %v2184, 4294901760
      %2235 = vmatpush1.msra.mxu0 %v2234
      %2236 = vmatprep.subr.mxu0 0.0
      %v2237 = vand.u32 %v2185, 4294901760
      %2238 = vmatpush1.msra.mxu0 %v2237
      %2239 = vmatprep.subr.mxu0 0.0
      %2240 = vmatpush1.msra.mxu0 0.0
      %2241 = vmatprep.subr.mxu0 0.0
      %2242 = vmatpush1.msra.mxu0 0.0
      %2243 = vmatprep.subr.mxu0 0.0
      %2244 = vmatpush1.msra.mxu0 0.0
      %2245 = vmatprep.subr.mxu0 0.0
      %2246 = vmatpush1.msra.mxu0 0.0
      %2247 = vmatprep.subr.mxu0 0.0
      %2248 = vmatpush1.msra.mxu0 0.0
      %2249 = vmatprep.subr.mxu0 0.0
      %2250 = vmatpush1.msra.mxu0 0.0
      %2251 = vmatprep.subr.mxu0 0.0
      %2252 = vmatpush1.msra.mxu0 0.0
      %2253 = vmatprep.subr.mxu0 0.0
      %2254 = vmatpush1.msra.mxu0 0.0
      %2255 = vmatprep.subr.mxu0 0.0
      %2256 = vmatpush1.msra.mxu0 0.0
      %2257 = vmatprep.subr.mxu0 0.0
      %2258 = vmatpush1.msra.mxu0 0.0
      %2259 = vmatprep.subr.mxu0 0.0
      %2260 = vmatpush1.msra.mxu0 0.0
      %2261 = vmatprep.subr.mxu0 0.0
      %2262 = vmatpush1.msra.mxu0 0.0
      %2263 = vmatprep.subr.mxu0 0.0
      %2264 = vmatpush1.msra.mxu0 0.0
      %2265 = vmatprep.subr.mxu0 0.0
      %2266 = vmatpush1.msra.mxu0 0.0
      %2267 = vmatprep.subr.mxu0 0.0
      %2268 = vmatpush1.msra.mxu0 0.0
      %2269 = vmatprep.subr.mxu0 0.0
      %2270 = vmatpush1.msra.mxu0 0.0
      %2271 = vmatprep.mubr.f32.mxu0 0.0
      %v2272 = vand.u32 %v2154, 4294901760
      %v2273 = vsub.f32 %v2154, %v2272
      %v2274 = vand.u32 %v2273, 4294901760
      %v2275 = vsub.f32 %v2273, %v2274
      %v2276 = vand.u32 %v2275, 4294901760
      %2277 = vmatmul.mubr.f32.gmra.mrb[0].mxu0 %v2276
      %v2278 = vpop.f32.mrb[0].mxu0
      %v2279 = vadd.f32 %v2190, %v2278
      %v2280 = vpop.f32.mrb[0].mxu0
      %2281 = vmatprep.mubr.f32.mxu0 0.0
      %v2282 = vand.u32 %v2155, 4294901760
      %v2283 = vsub.f32 %v2155, %v2282
      %v2284 = vand.u32 %v2283, 4294901760
      %v2285 = vsub.f32 %v2283, %v2284
      %v2286 = vand.u32 %v2285, 4294901760
      %2287 = vmatmul.mubr.f32.gmra.mrb[0].mxu0 %v2286
      %v2288 = vpop.f32.mrb[0].mxu0
      %v2289 = vadd.f32 %v2190, %v2288
      %v2290 = vpop.f32.mrb[0].mxu0
      %2291 = vmatprep.mubr.f32.mxu0 0.0
      %v2292 = vand.u32 %v2156, 4294901760
      %v2293 = vsub.f32 %v2156, %v2292
      %v2294 = vand.u32 %v2293, 4294901760
      %v2295 = vsub.f32 %v2293, %v2294
      %v2296 = vand.u32 %v2295, 4294901760
      %2297 = vmatmul.mubr.f32.gmra.mrb[0].mxu0 %v2296
      %v2298 = vpop.f32.mrb[0].mxu0
      %v2299 = vadd.f32 %v2190, %v2298
      %v2300 = vpop.f32.mrb[0].mxu0
      %2301 = vmatprep.mubr.f32.mxu0 0.0
      %v2302 = vand.u32 %v2157, 4294901760
      %v2303 = vsub.f32 %v2157, %v2302
      %v2304 = vand.u32 %v2303, 4294901760
      %v2305 = vsub.f32 %v2303, %v2304
      %v2306 = vand.u32 %v2305, 4294901760
      %2307 = vmatmul.mubr.f32.gmra.mrb[0].mxu0 %v2306
      %v2308 = vpop.f32.mrb[0].mxu0
      %v2309 = vadd.f32 %v2190, %v2308
      %v2310 = vpop.f32.mrb[0].mxu0
      %2311 = vmatprep.mubr.f32.mxu0 0.0
      %v2312 = vand.u32 %v2158, 4294901760
      %v2313 = vsub.f32 %v2158, %v2312
      %v2314 = vand.u32 %v2313, 4294901760
      %v2315 = vsub.f32 %v2313, %v2314
      %v2316 = vand.u32 %v2315, 4294901760
      %2317 = vmatmul.mubr.f32.gmra.mrb[0].mxu0 %v2316
      %v2318 = vpop.f32.mrb[0].mxu0
      %v2319 = vadd.f32 %v2190, %v2318
      %v2320 = vpop.f32.mrb[0].mxu0
      %2321 = vmatprep.mubr.f32.mxu0 0.0
      %v2322 = vand.u32 %v2159, 4294901760
      %v2323 = vsub.f32 %v2159, %v2322
      %v2324 = vand.u32 %v2323, 4294901760
      %v2325 = vsub.f32 %v2323, %v2324
      %v2326 = vand.u32 %v2325, 4294901760
      %2327 = vmatmul.mubr.f32.gmra.mrb[0].mxu0 %v2326
      %v2328 = vpop.f32.mrb[0].mxu0
      %v2329 = vadd.f32 %v2190, %v2328
      %v2330 = vpop.f32.mrb[0].mxu0
      %2331 = vmatprep.mubr.f32.mxu0 0.0
      %v2332 = vand.u32 %v2160, 4294901760
      %v2333 = vsub.f32 %v2160, %v2332
      %v2334 = vand.u32 %v2333, 4294901760
      %v2335 = vsub.f32 %v2333, %v2334
      %v2336 = vand.u32 %v2335, 4294901760
      %2337 = vmatmul.mubr.f32.gmra.mrb[0].mxu0 %v2336
      %v2338 = vpop.f32.mrb[0].mxu0
      %v2339 = vadd.f32 %v2190, %v2338
      %v2340 = vpop.f32.mrb[0].mxu0
      %2341 = vmatprep.mubr.f32.mxu0 0.0
      %v2342 = vand.u32 %v2161, 4294901760
      %v2343 = vsub.f32 %v2161, %v2342
      %v2344 = vand.u32 %v2343, 4294901760
      %v2345 = vsub.f32 %v2343, %v2344
      %v2346 = vand.u32 %v2345, 4294901760
      %2347 = vmatmul.mubr.f32.gmra.mrb[0].mxu0 %v2346
      %v2348 = vpop.f32.mrb[0].mxu0
      %v2349 = vadd.f32 %v2190, %v2348
      %v2350 = vpop.f32.mrb[0].mxu0
      %2351 = vmatprep.mubr.f32.mxu0 0.0
      %v2352 = vand.u32 %v2162, 4294901760
      %v2353 = vsub.f32 %v2162, %v2352
      %v2354 = vand.u32 %v2353, 4294901760
      %v2355 = vsub.f32 %v2353, %v2354
      %v2356 = vand.u32 %v2355, 4294901760
      %2357 = vmatmul.mubr.f32.gmra.mrb[0].mxu0 %v2356
      %v2358 = vpop.f32.mrb[0].mxu0
      %v2359 = vadd.f32 %v2190, %v2358
      %v2360 = vpop.f32.mrb[0].mxu0
      %2361 = vmatprep.mubr.f32.mxu0 0.0
      %v2362 = vand.u32 %v2163, 4294901760
      %v2363 = vsub.f32 %v2163, %v2362
      %v2364 = vand.u32 %v2363, 4294901760
      %v2365 = vsub.f32 %v2363, %v2364
      %v2366 = vand.u32 %v2365, 4294901760
      %2367 = vmatmul.mubr.f32.gmra.mrb[0].mxu0 %v2366
      %v2368 = vpop.f32.mrb[0].mxu0
      %v2369 = vadd.f32 %v2190, %v2368
      %v2370 = vpop.f32.mrb[0].mxu0
      %2371 = vmatprep.mubr.f32.mxu0 0.0
      %v2372 = vand.u32 %v2164, 4294901760
      %v2373 = vsub.f32 %v2164, %v2372
      %v2374 = vand.u32 %v2373, 4294901760
      %v2375 = vsub.f32 %v2373, %v2374
      %v2376 = vand.u32 %v2375, 4294901760
      %2377 = vmatmul.mubr.f32.gmra.mrb[0].mxu0 %v2376
      %v2378 = vpop.f32.mrb[0].mxu0
      %v2379 = vadd.f32 %v2190, %v2378
      %v2380 = vpop.f32.mrb[0].mxu0
      %2381 = vmatprep.mubr.f32.mxu0 0.0
      %v2382 = vand.u32 %v2165, 4294901760
      %v2383 = vsub.f32 %v2165, %v2382
      %v2384 = vand.u32 %v2383, 4294901760
      %v2385 = vsub.f32 %v2383, %v2384
      %v2386 = vand.u32 %v2385, 4294901760
      %2387 = vmatmul.mubr.f32.gmra.mrb[0].mxu0 %v2386
      %v2388 = vpop.f32.mrb[0].mxu0
      %v2389 = vadd.f32 %v2190, %v2388
      %v2390 = vpop.f32.mrb[0].mxu0
      %2391 = vmatprep.mubr.f32.mxu0 0.0
      %v2392 = vand.u32 %v2166, 4294901760
      %v2393 = vsub.f32 %v2166, %v2392
      %v2394 = vand.u32 %v2393, 4294901760
      %v2395 = vsub.f32 %v2393, %v2394
      %v2396 = vand.u32 %v2395, 4294901760
      %2397 = vmatmul.mubr.f32.gmra.mrb[0].mxu0 %v2396
      %v2398 = vpop.f32.mrb[0].mxu0
      %v2399 = vadd.f32 %v2190, %v2398
      %v2400 = vpop.f32.mrb[0].mxu0
      %2401 = vmatprep.mubr.f32.mxu0 0.0
      %v2402 = vand.u32 %v2167, 4294901760
      %v2403 = vsub.f32 %v2167, %v2402
      %v2404 = vand.u32 %v2403, 4294901760
      %v2405 = vsub.f32 %v2403, %v2404
      %v2406 = vand.u32 %v2405, 4294901760
      %2407 = vmatmul.mubr.f32.gmra.mrb[0].mxu0 %v2406
      %v2408 = vpop.f32.mrb[0].mxu0
      %v2409 = vadd.f32 %v2190, %v2408
      %v2410 = vpop.f32.mrb[0].mxu0
      %2411 = vmatprep.mubr.f32.mxu0 0.0
      %v2412 = vand.u32 %v2168, 4294901760
      %v2413 = vsub.f32 %v2168, %v2412
      %v2414 = vand.u32 %v2413, 4294901760
      %v2415 = vsub.f32 %v2413, %v2414
      %v2416 = vand.u32 %v2415, 4294901760
      %2417 = vmatmul.mubr.f32.gmra.mrb[0].mxu0 %v2416
      %v2418 = vpop.f32.mrb[0].mxu0
      %v2419 = vadd.f32 %v2190, %v2418
      %v2420 = vpop.f32.mrb[0].mxu0
      %2421 = vmatprep.mubr.f32.mxu0 0.0
      %v2422 = vand.u32 %v2169, 4294901760
      %v2423 = vsub.f32 %v2169, %v2422
      %v2424 = vand.u32 %v2423, 4294901760
      %v2425 = vsub.f32 %v2423, %v2424
      %v2426 = vand.u32 %v2425, 4294901760
      %2427 = vmatmul.mubr.f32.gmra.mrb[0].mxu0 %v2426
      %v2428 = vpop.f32.mrb[0].mxu0
      %v2429 = vadd.f32 %v2190, %v2428
      %v2430 = vpop.f32.mrb[0].mxu0
      %2431 = vdwg.mxu0
      %2432 = vmatprep.subr.mxu0 0.0
      %v2433 = vand.u32 %v2170, 4294901760
      %v2434 = vsub.f32 %v2170, %v2433
      %v2435 = vand.u32 %v2434, 4294901760
      %v2436 = vsub.f32 %v2434, %v2435
      %v2437 = vand.u32 %v2436, 4294901760
      %2438 = vmatpush1.msra.mxu0 %v2437
      %2439 = vmatprep.subr.mxu0 0.0
      %v2440 = vand.u32 %v2171, 4294901760
      %v2441 = vsub.f32 %v2171, %v2440
      %v2442 = vand.u32 %v2441, 4294901760
      %v2443 = vsub.f32 %v2441, %v2442
      %v2444 = vand.u32 %v2443, 4294901760
      %2445 = vmatpush1.msra.mxu0 %v2444
      %2446 = vmatprep.subr.mxu0 0.0
      %v2447 = vand.u32 %v2172, 4294901760
      %v2448 = vsub.f32 %v2172, %v2447
      %v2449 = vand.u32 %v2448, 4294901760
      %v2450 = vsub.f32 %v2448, %v2449
      %v2451 = vand.u32 %v2450, 4294901760
      %2452 = vmatpush1.msra.mxu0 %v2451
      %2453 = vmatprep.subr.mxu0 0.0
      %v2454 = vand.u32 %v2173, 4294901760
      %v2455 = vsub.f32 %v2173, %v2454
      %v2456 = vand.u32 %v2455, 4294901760
      %v2457 = vsub.f32 %v2455, %v2456
      %v2458 = vand.u32 %v2457, 4294901760
      %2459 = vmatpush1.msra.mxu0 %v2458
      %2460 = vmatprep.subr.mxu0 0.0
      %v2461 = vand.u32 %v2174, 4294901760
      %v2462 = vsub.f32 %v2174, %v2461
      %v2463 = vand.u32 %v2462, 4294901760
      %v2464 = vsub.f32 %v2462, %v2463
      %v2465 = vand.u32 %v2464, 4294901760
      %2466 = vmatpush1.msra.mxu0 %v2465
      %2467 = vmatprep.subr.mxu0 0.0
      %v2468 = vand.u32 %v2175, 4294901760
      %v2469 = vsub.f32 %v2175, %v2468
      %v2470 = vand.u32 %v2469, 4294901760
      %v2471 = vsub.f32 %v2469, %v2470
      %v2472 = vand.u32 %v2471, 4294901760
      %2473 = vmatpush1.msra.mxu0 %v2472
      %2474 = vmatprep.subr.mxu0 0.0
      %v2475 = vand.u32 %v2176, 4294901760
      %v2476 = vsub.f32 %v2176, %v2475
      %v2477 = vand.u32 %v2476, 4294901760
      %v2478 = vsub.f32 %v2476, %v2477
      %v2479 = vand.u32 %v2478, 4294901760
      %2480 = vmatpush1.msra.mxu0 %v2479
      %2481 = vmatprep.subr.mxu0 0.0
      %v2482 = vand.u32 %v2177, 4294901760
      %v2483 = vsub.f32 %v2177, %v2482
      %v2484 = vand.u32 %v2483, 4294901760
      %v2485 = vsub.f32 %v2483, %v2484
      %v2486 = vand.u32 %v2485, 4294901760
      %2487 = vmatpush1.msra.mxu0 %v2486
      %2488 = vmatprep.subr.mxu0 0.0
      %v2489 = vand.u32 %v2178, 4294901760
      %v2490 = vsub.f32 %v2178, %v2489
      %v2491 = vand.u32 %v2490, 4294901760
      %v2492 = vsub.f32 %v2490, %v2491
      %v2493 = vand.u32 %v2492, 4294901760
      %2494 = vmatpush1.msra.mxu0 %v2493
      %2495 = vmatprep.subr.mxu0 0.0
      %v2496 = vand.u32 %v2179, 4294901760
      %v2497 = vsub.f32 %v2179, %v2496
      %v2498 = vand.u32 %v2497, 4294901760
      %v2499 = vsub.f32 %v2497, %v2498
      %v2500 = vand.u32 %v2499, 4294901760
      %2501 = vmatpush1.msra.mxu0 %v2500
      %2502 = vmatprep.subr.mxu0 0.0
      %v2503 = vand.u32 %v2180, 4294901760
      %v2504 = vsub.f32 %v2180, %v2503
      %v2505 = vand.u32 %v2504, 4294901760
      %v2506 = vsub.f32 %v2504, %v2505
      %v2507 = vand.u32 %v2506, 4294901760
      %2508 = vmatpush1.msra.mxu0 %v2507
      %2509 = vmatprep.subr.mxu0 0.0
      %v2510 = vand.u32 %v2181, 4294901760
      %v2511 = vsub.f32 %v2181, %v2510
      %v2512 = vand.u32 %v2511, 4294901760
      %v2513 = vsub.f32 %v2511, %v2512
      %v2514 = vand.u32 %v2513, 4294901760
      %2515 = vmatpush1.msra.mxu0 %v2514
      %2516 = vmatprep.subr.mxu0 0.0
      %v2517 = vand.u32 %v2182, 4294901760
      %v2518 = vsub.f32 %v2182, %v2517
      %v2519 = vand.u32 %v2518, 4294901760
      %v2520 = vsub.f32 %v2518, %v2519
      %v2521 = vand.u32 %v2520, 4294901760
      %2522 = vmatpush1.msra.mxu0 %v2521
      %2523 = vmatprep.subr.mxu0 0.0
      %v2524 = vand.u32 %v2183, 4294901760
      %v2525 = vsub.f32 %v2183, %v2524
      %v2526 = vand.u32 %v2525, 4294901760
      %v2527 = vsub.f32 %v2525, %v2526
      %v2528 = vand.u32 %v2527, 4294901760
      %2529 = vmatpush1.msra.mxu0 %v2528
      %2530 = vmatprep.subr.mxu0 0.0
      %v2531 = vand.u32 %v2184, 4294901760
      %v2532 = vsub.f32 %v2184, %v2531
      %v2533 = vand.u32 %v2532, 4294901760
      %v2534 = vsub.f32 %v2532, %v2533
      %v2535 = vand.u32 %v2534, 4294901760
      %2536 = vmatpush1.msra.mxu0 %v2535
      %2537 = vmatprep.subr.mxu0 0.0
      %v2538 = vand.u32 %v2185, 4294901760
      %v2539 = vsub.f32 %v2185, %v2538
      %v2540 = vand.u32 %v2539, 4294901760
      %v2541 = vsub.f32 %v2539, %v2540
      %v2542 = vand.u32 %v2541, 4294901760
      %2543 = vmatpush1.msra.mxu0 %v2542
      %2544 = vmatprep.subr.mxu0 0.0
      %2545 = vmatpush1.msra.mxu0 0.0
      %2546 = vmatprep.subr.mxu0 0.0
      %2547 = vmatpush1.msra.mxu0 0.0
      %2548 = vmatprep.subr.mxu0 0.0
      %2549 = vmatpush1.msra.mxu0 0.0
      %2550 = vmatprep.subr.mxu0 0.0
      %2551 = vmatpush1.msra.mxu0 0.0
      %2552 = vmatprep.subr.mxu0 0.0
      %2553 = vmatpush1.msra.mxu0 0.0
      %2554 = vmatprep.subr.mxu0 0.0
      %2555 = vmatpush1.msra.mxu0 0.0
      %2556 = vmatprep.subr.mxu0 0.0
      %2557 = vmatpush1.msra.mxu0 0.0
      %2558 = vmatprep.subr.mxu0 0.0
      %2559 = vmatpush1.msra.mxu0 0.0
      %2560 = vmatprep.subr.mxu0 0.0
      %2561 = vmatpush1.msra.mxu0 0.0
      %2562 = vmatprep.subr.mxu0 0.0
      %2563 = vmatpush1.msra.mxu0 0.0
      %2564 = vmatprep.subr.mxu0 0.0
      %2565 = vmatpush1.msra.mxu0 0.0
      %2566 = vmatprep.subr.mxu0 0.0
      %2567 = vmatpush1.msra.mxu0 0.0
      %2568 = vmatprep.subr.mxu0 0.0
      %2569 = vmatpush1.msra.mxu0 0.0
      %2570 = vmatprep.subr.mxu0 0.0
      %2571 = vmatpush1.msra.mxu0 0.0
      %2572 = vmatprep.subr.mxu0 0.0
      %2573 = vmatpush1.msra.mxu0 0.0
      %2574 = vmatprep.subr.mxu0 0.0
      %2575 = vmatpush1.msra.mxu0 0.0
      %2576 = vmatprep.mubr.f32.mxu0 0.0
      %v2577 = vand.u32 %v2154, 4294901760
      %2578 = vmatmul.mubr.f32.gmra.mrb[0].mxu0 %v2577
      %v2579 = vpop.f32.mrb[0].mxu0
      %v2580 = vadd.f32 %v2279, %v2579
      %v2581 = vpop.f32.mrb[0].mxu0
      %2582 = vmatprep.mubr.f32.mxu0 0.0
      %v2583 = vand.u32 %v2155, 4294901760
      %2584 = vmatmul.mubr.f32.gmra.mrb[0].mxu0 %v2583
      %v2585 = vpop.f32.mrb[0].mxu0
      %v2586 = vadd.f32 %v2289, %v2585
      %v2587 = vpop.f32.mrb[0].mxu0
      %2588 = vmatprep.mubr.f32.mxu0 0.0
      %v2589 = vand.u32 %v2156, 4294901760
      %2590 = vmatmul.mubr.f32.gmra.mrb[0].mxu0 %v2589
      %v2591 = vpop.f32.mrb[0].mxu0
      %v2592 = vadd.f32 %v2299, %v2591
      %v2593 = vpop.f32.mrb[0].mxu0
      %2594 = vmatprep.mubr.f32.mxu0 0.0
      %v2595 = vand.u32 %v2157, 4294901760
      %2596 = vmatmul.mubr.f32.gmra.mrb[0].mxu0 %v2595
      %v2597 = vpop.f32.mrb[0].mxu0
      %v2598 = vadd.f32 %v2309, %v2597
      %v2599 = vpop.f32.mrb[0].mxu0
      %2600 = vmatprep.mubr.f32.mxu0 0.0
      %v2601 = vand.u32 %v2158, 4294901760
      %2602 = vmatmul.mubr.f32.gmra.mrb[0].mxu0 %v2601
      %v2603 = vpop.f32.mrb[0].mxu0
      %v2604 = vadd.f32 %v2319, %v2603
      %v2605 = vpop.f32.mrb[0].mxu0
      %2606 = vmatprep.mubr.f32.mxu0 0.0
      %v2607 = vand.u32 %v2159, 4294901760
      %2608 = vmatmul.mubr.f32.gmra.mrb[0].mxu0 %v2607
      %v2609 = vpop.f32.mrb[0].mxu0
      %v2610 = vadd.f32 %v2329, %v2609
      %v2611 = vpop.f32.mrb[0].mxu0
      %2612 = vmatprep.mubr.f32.mxu0 0.0
      %v2613 = vand.u32 %v2160, 4294901760
      %2614 = vmatmul.mubr.f32.gmra.mrb[0].mxu0 %v2613
      %v2615 = vpop.f32.mrb[0].mxu0
      %v2616 = vadd.f32 %v2339, %v2615
      %v2617 = vpop.f32.mrb[0].mxu0
      %2618 = vmatprep.mubr.f32.mxu0 0.0
      %v2619 = vand.u32 %v2161, 4294901760
      %2620 = vmatmul.mubr.f32.gmra.mrb[0].mxu0 %v2619
      %v2621 = vpop.f32.mrb[0].mxu0
      %v2622 = vadd.f32 %v2349, %v2621
      %v2623 = vpop.f32.mrb[0].mxu0
      %2624 = vmatprep.mubr.f32.mxu0 0.0
      %v2625 = vand.u32 %v2162, 4294901760
      %2626 = vmatmul.mubr.f32.gmra.mrb[0].mxu0 %v2625
      %v2627 = vpop.f32.mrb[0].mxu0
      %v2628 = vadd.f32 %v2359, %v2627
      %v2629 = vpop.f32.mrb[0].mxu0
      %2630 = vmatprep.mubr.f32.mxu0 0.0
      %v2631 = vand.u32 %v2163, 4294901760
      %2632 = vmatmul.mubr.f32.gmra.mrb[0].mxu0 %v2631
      %v2633 = vpop.f32.mrb[0].mxu0
      %v2634 = vadd.f32 %v2369, %v2633
      %v2635 = vpop.f32.mrb[0].mxu0
      %2636 = vmatprep.mubr.f32.mxu0 0.0
      %v2637 = vand.u32 %v2164, 4294901760
      %2638 = vmatmul.mubr.f32.gmra.mrb[0].mxu0 %v2637
      %v2639 = vpop.f32.mrb[0].mxu0
      %v2640 = vadd.f32 %v2379, %v2639
      %v2641 = vpop.f32.mrb[0].mxu0
      %2642 = vmatprep.mubr.f32.mxu0 0.0
      %v2643 = vand.u32 %v2165, 4294901760
      %2644 = vmatmul.mubr.f32.gmra.mrb[0].mxu0 %v2643
      %v2645 = vpop.f32.mrb[0].mxu0
      %v2646 = vadd.f32 %v2389, %v2645
      %v2647 = vpop.f32.mrb[0].mxu0
      %2648 = vmatprep.mubr.f32.mxu0 0.0
      %v2649 = vand.u32 %v2166, 4294901760
      %2650 = vmatmul.mubr.f32.gmra.mrb[0].mxu0 %v2649
      %v2651 = vpop.f32.mrb[0].mxu0
      %v2652 = vadd.f32 %v2399, %v2651
      %v2653 = vpop.f32.mrb[0].mxu0
      %2654 = vmatprep.mubr.f32.mxu0 0.0
      %v2655 = vand.u32 %v2167, 4294901760
      %2656 = vmatmul.mubr.f32.gmra.mrb[0].mxu0 %v2655
      %v2657 = vpop.f32.mrb[0].mxu0
      %v2658 = vadd.f32 %v2409, %v2657
      %v2659 = vpop.f32.mrb[0].mxu0
      %2660 = vmatprep.mubr.f32.mxu0 0.0
      %v2661 = vand.u32 %v2168, 4294901760
      %2662 = vmatmul.mubr.f32.gmra.mrb[0].mxu0 %v2661
      %v2663 = vpop.f32.mrb[0].mxu0
      %v2664 = vadd.f32 %v2419, %v2663
      %v2665 = vpop.f32.mrb[0].mxu0
      %2666 = vmatprep.mubr.f32.mxu0 0.0
      %v2667 = vand.u32 %v2169, 4294901760
      %2668 = vmatmul.mubr.f32.gmra.mrb[0].mxu0 %v2667
      %v2669 = vpop.f32.mrb[0].mxu0
      %v2670 = vadd.f32 %v2429, %v2669
      %v2671 = vpop.f32.mrb[0].mxu0
      %2672 = vdwg.mxu0
      %2673 = vmatprep.subr.mxu0 0.0
      %v2674 = vand.u32 %v2170, 4294901760
      %v2675 = vsub.f32 %v2170, %v2674
      %2676 = vmatpush1.msra.mxu0 %v2675
      %2677 = vmatprep.subr.mxu0 0.0
      %v2678 = vand.u32 %v2171, 4294901760
      %v2679 = vsub.f32 %v2171, %v2678
      %2680 = vmatpush1.msra.mxu0 %v2679
      %2681 = vmatprep.subr.mxu0 0.0
      %v2682 = vand.u32 %v2172, 4294901760
      %v2683 = vsub.f32 %v2172, %v2682
      %2684 = vmatpush1.msra.mxu0 %v2683
      %2685 = vmatprep.subr.mxu0 0.0
      %v2686 = vand.u32 %v2173, 4294901760
      %v2687 = vsub.f32 %v2173, %v2686
      %2688 = vmatpush1.msra.mxu0 %v2687
      %2689 = vmatprep.subr.mxu0 0.0
      %v2690 = vand.u32 %v2174, 4294901760
      %v2691 = vsub.f32 %v2174, %v2690
      %2692 = vmatpush1.msra.mxu0 %v2691
      %2693 = vmatprep.subr.mxu0 0.0
      %v2694 = vand.u32 %v2175, 4294901760
      %v2695 = vsub.f32 %v2175, %v2694
      %2696 = vmatpush1.msra.mxu0 %v2695
      %2697 = vmatprep.subr.mxu0 0.0
      %v2698 = vand.u32 %v2176, 4294901760
      %v2699 = vsub.f32 %v2176, %v2698
      %2700 = vmatpush1.msra.mxu0 %v2699
      %2701 = vmatprep.subr.mxu0 0.0
      %v2702 = vand.u32 %v2177, 4294901760
      %v2703 = vsub.f32 %v2177, %v2702
      %2704 = vmatpush1.msra.mxu0 %v2703
      %2705 = vmatprep.subr.mxu0 0.0
      %v2706 = vand.u32 %v2178, 4294901760
      %v2707 = vsub.f32 %v2178, %v2706
      %2708 = vmatpush1.msra.mxu0 %v2707
      %2709 = vmatprep.subr.mxu0 0.0
      %v2710 = vand.u32 %v2179, 4294901760
      %v2711 = vsub.f32 %v2179, %v2710
      %2712 = vmatpush1.msra.mxu0 %v2711
      %2713 = vmatprep.subr.mxu0 0.0
      %v2714 = vand.u32 %v2180, 4294901760
      %v2715 = vsub.f32 %v2180, %v2714
      %2716 = vmatpush1.msra.mxu0 %v2715
      %2717 = vmatprep.subr.mxu0 0.0
      %v2718 = vand.u32 %v2181, 4294901760
      %v2719 = vsub.f32 %v2181, %v2718
      %2720 = vmatpush1.msra.mxu0 %v2719
      %2721 = vmatprep.subr.mxu0 0.0
      %v2722 = vand.u32 %v2182, 4294901760
      %v2723 = vsub.f32 %v2182, %v2722
      %2724 = vmatpush1.msra.mxu0 %v2723
      %2725 = vmatprep.subr.mxu0 0.0
      %v2726 = vand.u32 %v2183, 4294901760
      %v2727 = vsub.f32 %v2183, %v2726
      %2728 = vmatpush1.msra.mxu0 %v2727
      %2729 = vmatprep.subr.mxu0 0.0
      %v2730 = vand.u32 %v2184, 4294901760
      %v2731 = vsub.f32 %v2184, %v2730
      %2732 = vmatpush1.msra.mxu0 %v2731
      %2733 = vmatprep.subr.mxu0 0.0
      %v2734 = vand.u32 %v2185, 4294901760
      %v2735 = vsub.f32 %v2185, %v2734
      %2736 = vmatpush1.msra.mxu0 %v2735
      %2737 = vmatprep.subr.mxu0 0.0
      %2738 = vmatpush1.msra.mxu0 0.0
      %2739 = vmatprep.subr.mxu0 0.0
      %2740 = vmatpush1.msra.mxu0 0.0
      %2741 = vmatprep.subr.mxu0 0.0
      %2742 = vmatpush1.msra.mxu0 0.0
      %2743 = vmatprep.subr.mxu0 0.0
      %2744 = vmatpush1.msra.mxu0 0.0
      %2745 = vmatprep.subr.mxu0 0.0
      %2746 = vmatpush1.msra.mxu0 0.0
      %2747 = vmatprep.subr.mxu0 0.0
      %2748 = vmatpush1.msra.mxu0 0.0
      %2749 = vmatprep.subr.mxu0 0.0
      %2750 = vmatpush1.msra.mxu0 0.0
      %2751 = vmatprep.subr.mxu0 0.0
      %2752 = vmatpush1.msra.mxu0 0.0
      %2753 = vmatprep.subr.mxu0 0.0
      %2754 = vmatpush1.msra.mxu0 0.0
      %2755 = vmatprep.subr.mxu0 0.0
      %2756 = vmatpush1.msra.mxu0 0.0
      %2757 = vmatprep.subr.mxu0 0.0
      %2758 = vmatpush1.msra.mxu0 0.0
      %2759 = vmatprep.subr.mxu0 0.0
      %2760 = vmatpush1.msra.mxu0 0.0
      %2761 = vmatprep.subr.mxu0 0.0
      %2762 = vmatpush1.msra.mxu0 0.0
      %2763 = vmatprep.subr.mxu0 0.0
      %2764 = vmatpush1.msra.mxu0 0.0
      %2765 = vmatprep.subr.mxu0 0.0
      %2766 = vmatpush1.msra.mxu0 0.0
      %2767 = vmatprep.subr.mxu0 0.0
      %2768 = vmatpush1.msra.mxu0 0.0
      %2769 = vmatprep.mubr.f32.mxu0 0.0
      %v2770 = vand.u32 %v2154, 4294901760
      %v2771 = vsub.f32 %v2154, %v2770
      %2772 = vmatmul.mubr.f32.gmra.mrb[0].mxu0 %v2771
      %v2773 = vpop.f32.mrb[0].mxu0
      %v2774 = vadd.f32 %v2580, %v2773
      %v2775 = vpop.f32.mrb[0].mxu0
      %2776 = vmatprep.mubr.f32.mxu0 0.0
      %v2777 = vand.u32 %v2155, 4294901760
      %v2778 = vsub.f32 %v2155, %v2777
      %2779 = vmatmul.mubr.f32.gmra.mrb[0].mxu0 %v2778
      %v2780 = vpop.f32.mrb[0].mxu0
      %v2781 = vadd.f32 %v2586, %v2780
      %v2782 = vpop.f32.mrb[0].mxu0
      %2783 = vmatprep.mubr.f32.mxu0 0.0
      %v2784 = vand.u32 %v2156, 4294901760
      %v2785 = vsub.f32 %v2156, %v2784
      %2786 = vmatmul.mubr.f32.gmra.mrb[0].mxu0 %v2785
      %v2787 = vpop.f32.mrb[0].mxu0
      %v2788 = vadd.f32 %v2592, %v2787
      %v2789 = vpop.f32.mrb[0].mxu0
      %2790 = vmatprep.mubr.f32.mxu0 0.0
      %v2791 = vand.u32 %v2157, 4294901760
      %v2792 = vsub.f32 %v2157, %v2791
      %2793 = vmatmul.mubr.f32.gmra.mrb[0].mxu0 %v2792
      %v2794 = vpop.f32.mrb[0].mxu0
      %v2795 = vadd.f32 %v2598, %v2794
      %v2796 = vpop.f32.mrb[0].mxu0
      %2797 = vmatprep.mubr.f32.mxu0 0.0
      %v2798 = vand.u32 %v2158, 4294901760
      %v2799 = vsub.f32 %v2158, %v2798
      %2800 = vmatmul.mubr.f32.gmra.mrb[0].mxu0 %v2799
      %v2801 = vpop.f32.mrb[0].mxu0
      %v2802 = vadd.f32 %v2604, %v2801
      %v2803 = vpop.f32.mrb[0].mxu0
      %2804 = vmatprep.mubr.f32.mxu0 0.0
      %v2805 = vand.u32 %v2159, 4294901760
      %v2806 = vsub.f32 %v2159, %v2805
      %2807 = vmatmul.mubr.f32.gmra.mrb[0].mxu0 %v2806
      %v2808 = vpop.f32.mrb[0].mxu0
      %v2809 = vadd.f32 %v2610, %v2808
      %v2810 = vpop.f32.mrb[0].mxu0
      %2811 = vmatprep.mubr.f32.mxu0 0.0
      %v2812 = vand.u32 %v2160, 4294901760
      %v2813 = vsub.f32 %v2160, %v2812
      %2814 = vmatmul.mubr.f32.gmra.mrb[0].mxu0 %v2813
      %v2815 = vpop.f32.mrb[0].mxu0
      %v2816 = vadd.f32 %v2616, %v2815
      %v2817 = vpop.f32.mrb[0].mxu0
      %2818 = vmatprep.mubr.f32.mxu0 0.0
      %v2819 = vand.u32 %v2161, 4294901760
      %v2820 = vsub.f32 %v2161, %v2819
      %2821 = vmatmul.mubr.f32.gmra.mrb[0].mxu0 %v2820
      %v2822 = vpop.f32.mrb[0].mxu0
      %v2823 = vadd.f32 %v2622, %v2822
      %v2824 = vpop.f32.mrb[0].mxu0
      %2825 = vmatprep.mubr.f32.mxu0 0.0
      %v2826 = vand.u32 %v2162, 4294901760
      %v2827 = vsub.f32 %v2162, %v2826
      %2828 = vmatmul.mubr.f32.gmra.mrb[0].mxu0 %v2827
      %v2829 = vpop.f32.mrb[0].mxu0
      %v2830 = vadd.f32 %v2628, %v2829
      %v2831 = vpop.f32.mrb[0].mxu0
      %2832 = vmatprep.mubr.f32.mxu0 0.0
      %v2833 = vand.u32 %v2163, 4294901760
      %v2834 = vsub.f32 %v2163, %v2833
      %2835 = vmatmul.mubr.f32.gmra.mrb[0].mxu0 %v2834
      %v2836 = vpop.f32.mrb[0].mxu0
      %v2837 = vadd.f32 %v2634, %v2836
      %v2838 = vpop.f32.mrb[0].mxu0
      %2839 = vmatprep.mubr.f32.mxu0 0.0
      %v2840 = vand.u32 %v2164, 4294901760
      %v2841 = vsub.f32 %v2164, %v2840
      %2842 = vmatmul.mubr.f32.gmra.mrb[0].mxu0 %v2841
      %v2843 = vpop.f32.mrb[0].mxu0
      %v2844 = vadd.f32 %v2640, %v2843
      %v2845 = vpop.f32.mrb[0].mxu0
      %2846 = vmatprep.mubr.f32.mxu0 0.0
      %v2847 = vand.u32 %v2165, 4294901760
      %v2848 = vsub.f32 %v2165, %v2847
      %2849 = vmatmul.mubr.f32.gmra.mrb[0].mxu0 %v2848
      %v2850 = vpop.f32.mrb[0].mxu0
      %v2851 = vadd.f32 %v2646, %v2850
      %v2852 = vpop.f32.mrb[0].mxu0
      %2853 = vmatprep.mubr.f32.mxu0 0.0
      %v2854 = vand.u32 %v2166, 4294901760
      %v2855 = vsub.f32 %v2166, %v2854
      %2856 = vmatmul.mubr.f32.gmra.mrb[0].mxu0 %v2855
      %v2857 = vpop.f32.mrb[0].mxu0
      %v2858 = vadd.f32 %v2652, %v2857
      %v2859 = vpop.f32.mrb[0].mxu0
      %2860 = vmatprep.mubr.f32.mxu0 0.0
      %v2861 = vand.u32 %v2167, 4294901760
      %v2862 = vsub.f32 %v2167, %v2861
      %2863 = vmatmul.mubr.f32.gmra.mrb[0].mxu0 %v2862
      %v2864 = vpop.f32.mrb[0].mxu0
      %v2865 = vadd.f32 %v2658, %v2864
      %v2866 = vpop.f32.mrb[0].mxu0
      %2867 = vmatprep.mubr.f32.mxu0 0.0
      %v2868 = vand.u32 %v2168, 4294901760
      %v2869 = vsub.f32 %v2168, %v2868
      %2870 = vmatmul.mubr.f32.gmra.mrb[0].mxu0 %v2869
      %v2871 = vpop.f32.mrb[0].mxu0
      %v2872 = vadd.f32 %v2664, %v2871
      %v2873 = vpop.f32.mrb[0].mxu0
      %2874 = vmatprep.mubr.f32.mxu0 0.0
      %v2875 = vand.u32 %v2169, 4294901760
      %v2876 = vsub.f32 %v2169, %v2875
      %2877 = vmatmul.mubr.f32.gmra.mrb[0].mxu0 %v2876
      %v2878 = vpop.f32.mrb[0].mxu0
      %v2879 = vadd.f32 %v2670, %v2878
      %v2880 = vpop.f32.mrb[0].mxu0
      %2881 = vdwg.mxu0
      %2882 = vmatprep.subr.mxu0 0.0
      %v2883 = vand.u32 %v2170, 4294901760
      %2884 = vmatpush1.msra.mxu0 %v2883
      %2885 = vmatprep.subr.mxu0 0.0
      %v2886 = vand.u32 %v2171, 4294901760
      %2887 = vmatpush1.msra.mxu0 %v2886
      %2888 = vmatprep.subr.mxu0 0.0
      %v2889 = vand.u32 %v2172, 4294901760
      %2890 = vmatpush1.msra.mxu0 %v2889
      %2891 = vmatprep.subr.mxu0 0.0
      %v2892 = vand.u32 %v2173, 4294901760
      %2893 = vmatpush1.msra.mxu0 %v2892
      %2894 = vmatprep.subr.mxu0 0.0
      %v2895 = vand.u32 %v2174, 4294901760
      %2896 = vmatpush1.msra.mxu0 %v2895
      %2897 = vmatprep.subr.mxu0 0.0
      %v2898 = vand.u32 %v2175, 4294901760
      %2899 = vmatpush1.msra.mxu0 %v2898
      %2900 = vmatprep.subr.mxu0 0.0
      %v2901 = vand.u32 %v2176, 4294901760
      %2902 = vmatpush1.msra.mxu0 %v2901
      %2903 = vmatprep.subr.mxu0 0.0
      %v2904 = vand.u32 %v2177, 4294901760
      %2905 = vmatpush1.msra.mxu0 %v2904
      %2906 = vmatprep.subr.mxu0 0.0
      %v2907 = vand.u32 %v2178, 4294901760
      %2908 = vmatpush1.msra.mxu0 %v2907
      %2909 = vmatprep.subr.mxu0 0.0
      %v2910 = vand.u32 %v2179, 4294901760
      %2911 = vmatpush1.msra.mxu0 %v2910
      %2912 = vmatprep.subr.mxu0 0.0
      %v2913 = vand.u32 %v2180, 4294901760
      %2914 = vmatpush1.msra.mxu0 %v2913
      %2915 = vmatprep.subr.mxu0 0.0
      %v2916 = vand.u32 %v2181, 4294901760
      %2917 = vmatpush1.msra.mxu0 %v2916
      %2918 = vmatprep.subr.mxu0 0.0
      %v2919 = vand.u32 %v2182, 4294901760
      %2920 = vmatpush1.msra.mxu0 %v2919
      %2921 = vmatprep.subr.mxu0 0.0
      %v2922 = vand.u32 %v2183, 4294901760
      %2923 = vmatpush1.msra.mxu0 %v2922
      %2924 = vmatprep.subr.mxu0 0.0
      %v2925 = vand.u32 %v2184, 4294901760
      %2926 = vmatpush1.msra.mxu0 %v2925
      %2927 = vmatprep.subr.mxu0 0.0
      %v2928 = vand.u32 %v2185, 4294901760
      %2929 = vmatpush1.msra.mxu0 %v2928
      %2930 = vmatprep.subr.mxu0 0.0
      %2931 = vmatpush1.msra.mxu0 0.0
      %2932 = vmatprep.subr.mxu0 0.0
      %2933 = vmatpush1.msra.mxu0 0.0
      %2934 = vmatprep.subr.mxu0 0.0
      %2935 = vmatpush1.msra.mxu0 0.0
      %2936 = vmatprep.subr.mxu0 0.0
      %2937 = vmatpush1.msra.mxu0 0.0
      %2938 = vmatprep.subr.mxu0 0.0
      %2939 = vmatpush1.msra.mxu0 0.0
      %2940 = vmatprep.subr.mxu0 0.0
      %2941 = vmatpush1.msra.mxu0 0.0
      %2942 = vmatprep.subr.mxu0 0.0
      %2943 = vmatpush1.msra.mxu0 0.0
      %2944 = vmatprep.subr.mxu0 0.0
      %2945 = vmatpush1.msra.mxu0 0.0
      %2946 = vmatprep.subr.mxu0 0.0
      %2947 = vmatpush1.msra.mxu0 0.0
      %2948 = vmatprep.subr.mxu0 0.0
      %2949 = vmatpush1.msra.mxu0 0.0
      %2950 = vmatprep.subr.mxu0 0.0
      %2951 = vmatpush1.msra.mxu0 0.0
      %2952 = vmatprep.subr.mxu0 0.0
      %2953 = vmatpush1.msra.mxu0 0.0
      %2954 = vmatprep.subr.mxu0 0.0
      %2955 = vmatpush1.msra.mxu0 0.0
      %2956 = vmatprep.subr.mxu0 0.0
      %2957 = vmatpush1.msra.mxu0 0.0
      %2958 = vmatprep.subr.mxu0 0.0
      %2959 = vmatpush1.msra.mxu0 0.0
      %2960 = vmatprep.subr.mxu0 0.0
      %2961 = vmatpush1.msra.mxu0 0.0
      %2962 = vmatprep.mubr.f32.mxu0 0.0
      %v2963 = vand.u32 %v2154, 4294901760
      %v2964 = vsub.f32 %v2154, %v2963
      %v2965 = vand.u32 %v2964, 4294901760
      %2966 = vmatmul.mubr.f32.gmra.mrb[0].mxu0 %v2965
      %v2967 = vpop.f32.mrb[0].mxu0
      %v2968 = vadd.f32 %v2774, %v2967
      %v2969 = vpop.f32.mrb[0].mxu0
      %2970 = vmatprep.mubr.f32.mxu0 0.0
      %v2971 = vand.u32 %v2155, 4294901760
      %v2972 = vsub.f32 %v2155, %v2971
      %v2973 = vand.u32 %v2972, 4294901760
      %2974 = vmatmul.mubr.f32.gmra.mrb[0].mxu0 %v2973
      %v2975 = vpop.f32.mrb[0].mxu0
      %v2976 = vadd.f32 %v2781, %v2975
      %v2977 = vpop.f32.mrb[0].mxu0
      %2978 = vmatprep.mubr.f32.mxu0 0.0
      %v2979 = vand.u32 %v2156, 4294901760
      %v2980 = vsub.f32 %v2156, %v2979
      %v2981 = vand.u32 %v2980, 4294901760
      %2982 = vmatmul.mubr.f32.gmra.mrb[0].mxu0 %v2981
      %v2983 = vpop.f32.mrb[0].mxu0
      %v2984 = vadd.f32 %v2788, %v2983
      %v2985 = vpop.f32.mrb[0].mxu0
      %2986 = vmatprep.mubr.f32.mxu0 0.0
      %v2987 = vand.u32 %v2157, 4294901760
      %v2988 = vsub.f32 %v2157, %v2987
      %v2989 = vand.u32 %v2988, 4294901760
      %2990 = vmatmul.mubr.f32.gmra.mrb[0].mxu0 %v2989
      %v2991 = vpop.f32.mrb[0].mxu0
      %v2992 = vadd.f32 %v2795, %v2991
      %v2993 = vpop.f32.mrb[0].mxu0
      %2994 = vmatprep.mubr.f32.mxu0 0.0
      %v2995 = vand.u32 %v2158, 4294901760
      %v2996 = vsub.f32 %v2158, %v2995
      %v2997 = vand.u32 %v2996, 4294901760
      %2998 = vmatmul.mubr.f32.gmra.mrb[0].mxu0 %v2997
      %v2999 = vpop.f32.mrb[0].mxu0
      %v3000 = vadd.f32 %v2802, %v2999
      %v3001 = vpop.f32.mrb[0].mxu0
      %3002 = vmatprep.mubr.f32.mxu0 0.0
      %v3003 = vand.u32 %v2159, 4294901760
      %v3004 = vsub.f32 %v2159, %v3003
      %v3005 = vand.u32 %v3004, 4294901760
      %3006 = vmatmul.mubr.f32.gmra.mrb[0].mxu0 %v3005
      %v3007 = vpop.f32.mrb[0].mxu0
      %v3008 = vadd.f32 %v2809, %v3007
      %v3009 = vpop.f32.mrb[0].mxu0
      %3010 = vmatprep.mubr.f32.mxu0 0.0
      %v3011 = vand.u32 %v2160, 4294901760
      %v3012 = vsub.f32 %v2160, %v3011
      %v3013 = vand.u32 %v3012, 4294901760
      %3014 = vmatmul.mubr.f32.gmra.mrb[0].mxu0 %v3013
      %v3015 = vpop.f32.mrb[0].mxu0
      %v3016 = vadd.f32 %v2816, %v3015
      %v3017 = vpop.f32.mrb[0].mxu0
      %3018 = vmatprep.mubr.f32.mxu0 0.0
      %v3019 = vand.u32 %v2161, 4294901760
      %v3020 = vsub.f32 %v2161, %v3019
      %v3021 = vand.u32 %v3020, 4294901760
      %3022 = vmatmul.mubr.f32.gmra.mrb[0].mxu0 %v3021
      %v3023 = vpop.f32.mrb[0].mxu0
      %v3024 = vadd.f32 %v2823, %v3023
      %v3025 = vpop.f32.mrb[0].mxu0
      %3026 = vmatprep.mubr.f32.mxu0 0.0
      %v3027 = vand.u32 %v2162, 4294901760
      %v3028 = vsub.f32 %v2162, %v3027
      %v3029 = vand.u32 %v3028, 4294901760
      %3030 = vmatmul.mubr.f32.gmra.mrb[0].mxu0 %v3029
      %v3031 = vpop.f32.mrb[0].mxu0
      %v3032 = vadd.f32 %v2830, %v3031
      %v3033 = vpop.f32.mrb[0].mxu0
      %3034 = vmatprep.mubr.f32.mxu0 0.0
      %v3035 = vand.u32 %v2163, 4294901760
      %v3036 = vsub.f32 %v2163, %v3035
      %v3037 = vand.u32 %v3036, 4294901760
      %3038 = vmatmul.mubr.f32.gmra.mrb[0].mxu0 %v3037
      %v3039 = vpop.f32.mrb[0].mxu0
      %v3040 = vadd.f32 %v2837, %v3039
      %v3041 = vpop.f32.mrb[0].mxu0
      %3042 = vmatprep.mubr.f32.mxu0 0.0
      %v3043 = vand.u32 %v2164, 4294901760
      %v3044 = vsub.f32 %v2164, %v3043
      %v3045 = vand.u32 %v3044, 4294901760
      %3046 = vmatmul.mubr.f32.gmra.mrb[0].mxu0 %v3045
      %v3047 = vpop.f32.mrb[0].mxu0
      %v3048 = vadd.f32 %v2844, %v3047
      %v3049 = vpop.f32.mrb[0].mxu0
      %3050 = vmatprep.mubr.f32.mxu0 0.0
      %v3051 = vand.u32 %v2165, 4294901760
      %v3052 = vsub.f32 %v2165, %v3051
      %v3053 = vand.u32 %v3052, 4294901760
      %3054 = vmatmul.mubr.f32.gmra.mrb[0].mxu0 %v3053
      %v3055 = vpop.f32.mrb[0].mxu0
      %v3056 = vadd.f32 %v2851, %v3055
      %v3057 = vpop.f32.mrb[0].mxu0
      %3058 = vmatprep.mubr.f32.mxu0 0.0
      %v3059 = vand.u32 %v2166, 4294901760
      %v3060 = vsub.f32 %v2166, %v3059
      %v3061 = vand.u32 %v3060, 4294901760
      %3062 = vmatmul.mubr.f32.gmra.mrb[0].mxu0 %v3061
      %v3063 = vpop.f32.mrb[0].mxu0
      %v3064 = vadd.f32 %v2858, %v3063
      %v3065 = vpop.f32.mrb[0].mxu0
      %3066 = vmatprep.mubr.f32.mxu0 0.0
      %v3067 = vand.u32 %v2167, 4294901760
      %v3068 = vsub.f32 %v2167, %v3067
      %v3069 = vand.u32 %v3068, 4294901760
      %3070 = vmatmul.mubr.f32.gmra.mrb[0].mxu0 %v3069
      %v3071 = vpop.f32.mrb[0].mxu0
      %v3072 = vadd.f32 %v2865, %v3071
      %v3073 = vpop.f32.mrb[0].mxu0
      %3074 = vmatprep.mubr.f32.mxu0 0.0
      %v3075 = vand.u32 %v2168, 4294901760
      %v3076 = vsub.f32 %v2168, %v3075
      %v3077 = vand.u32 %v3076, 4294901760
      %3078 = vmatmul.mubr.f32.gmra.mrb[0].mxu0 %v3077
      %v3079 = vpop.f32.mrb[0].mxu0
      %v3080 = vadd.f32 %v2872, %v3079
      %v3081 = vpop.f32.mrb[0].mxu0
      %3082 = vmatprep.mubr.f32.mxu0 0.0
      %v3083 = vand.u32 %v2169, 4294901760
      %v3084 = vsub.f32 %v2169, %v3083
      %v3085 = vand.u32 %v3084, 4294901760
      %3086 = vmatmul.mubr.f32.gmra.mrb[0].mxu0 %v3085
      %v3087 = vpop.f32.mrb[0].mxu0
      %v3088 = vadd.f32 %v2879, %v3087
      %v3089 = vpop.f32.mrb[0].mxu0
      %3090 = vdwg.mxu0
      %3091 = vmatprep.subr.mxu0 0.0
      %v3092 = vand.u32 %v2170, 4294901760
      %v3093 = vsub.f32 %v2170, %v3092
      %v3094 = vand.u32 %v3093, 4294901760
      %3095 = vmatpush1.msra.mxu0 %v3094
      %3096 = vmatprep.subr.mxu0 0.0
      %v3097 = vand.u32 %v2171, 4294901760
      %v3098 = vsub.f32 %v2171, %v3097
      %v3099 = vand.u32 %v3098, 4294901760
      %3100 = vmatpush1.msra.mxu0 %v3099
      %3101 = vmatprep.subr.mxu0 0.0
      %v3102 = vand.u32 %v2172, 4294901760
      %v3103 = vsub.f32 %v2172, %v3102
      %v3104 = vand.u32 %v3103, 4294901760
      %3105 = vmatpush1.msra.mxu0 %v3104
      %3106 = vmatprep.subr.mxu0 0.0
      %v3107 = vand.u32 %v2173, 4294901760
      %v3108 = vsub.f32 %v2173, %v3107
      %v3109 = vand.u32 %v3108, 4294901760
      %3110 = vmatpush1.msra.mxu0 %v3109
      %3111 = vmatprep.subr.mxu0 0.0
      %v3112 = vand.u32 %v2174, 4294901760
      %v3113 = vsub.f32 %v2174, %v3112
      %v3114 = vand.u32 %v3113, 4294901760
      %3115 = vmatpush1.msra.mxu0 %v3114
      %3116 = vmatprep.subr.mxu0 0.0
      %v3117 = vand.u32 %v2175, 4294901760
      %v3118 = vsub.f32 %v2175, %v3117
      %v3119 = vand.u32 %v3118, 4294901760
      %3120 = vmatpush1.msra.mxu0 %v3119
      %3121 = vmatprep.subr.mxu0 0.0
      %v3122 = vand.u32 %v2176, 4294901760
      %v3123 = vsub.f32 %v2176, %v3122
      %v3124 = vand.u32 %v3123, 4294901760
      %3125 = vmatpush1.msra.mxu0 %v3124
      %3126 = vmatprep.subr.mxu0 0.0
      %v3127 = vand.u32 %v2177, 4294901760
      %v3128 = vsub.f32 %v2177, %v3127
      %v3129 = vand.u32 %v3128, 4294901760
      %3130 = vmatpush1.msra.mxu0 %v3129
      %3131 = vmatprep.subr.mxu0 0.0
      %v3132 = vand.u32 %v2178, 4294901760
      %v3133 = vsub.f32 %v2178, %v3132
      %v3134 = vand.u32 %v3133, 4294901760
      %3135 = vmatpush1.msra.mxu0 %v3134
      %3136 = vmatprep.subr.mxu0 0.0
      %v3137 = vand.u32 %v2179, 4294901760
      %v3138 = vsub.f32 %v2179, %v3137
      %v3139 = vand.u32 %v3138, 4294901760
      %3140 = vmatpush1.msra.mxu0 %v3139
      %3141 = vmatprep.subr.mxu0 0.0
      %v3142 = vand.u32 %v2180, 4294901760
      %v3143 = vsub.f32 %v2180, %v3142
      %v3144 = vand.u32 %v3143, 4294901760
      %3145 = vmatpush1.msra.mxu0 %v3144
      %3146 = vmatprep.subr.mxu0 0.0
      %v3147 = vand.u32 %v2181, 4294901760
      %v3148 = vsub.f32 %v2181, %v3147
      %v3149 = vand.u32 %v3148, 4294901760
      %3150 = vmatpush1.msra.mxu0 %v3149
      %3151 = vmatprep.subr.mxu0 0.0
      %v3152 = vand.u32 %v2182, 4294901760
      %v3153 = vsub.f32 %v2182, %v3152
      %v3154 = vand.u32 %v3153, 4294901760
      %3155 = vmatpush1.msra.mxu0 %v3154
      %3156 = vmatprep.subr.mxu0 0.0
      %v3157 = vand.u32 %v2183, 4294901760
      %v3158 = vsub.f32 %v2183, %v3157
      %v3159 = vand.u32 %v3158, 4294901760
      %3160 = vmatpush1.msra.mxu0 %v3159
      %3161 = vmatprep.subr.mxu0 0.0
      %v3162 = vand.u32 %v2184, 4294901760
      %v3163 = vsub.f32 %v2184, %v3162
      %v3164 = vand.u32 %v3163, 4294901760
      %3165 = vmatpush1.msra.mxu0 %v3164
      %3166 = vmatprep.subr.mxu0 0.0
      %v3167 = vand.u32 %v2185, 4294901760
      %v3168 = vsub.f32 %v2185, %v3167
      %v3169 = vand.u32 %v3168, 4294901760
      %3170 = vmatpush1.msra.mxu0 %v3169
      %3171 = vmatprep.subr.mxu0 0.0
      %3172 = vmatpush1.msra.mxu0 0.0
      %3173 = vmatprep.subr.mxu0 0.0
      %3174 = vmatpush1.msra.mxu0 0.0
      %3175 = vmatprep.subr.mxu0 0.0
      %3176 = vmatpush1.msra.mxu0 0.0
      %3177 = vmatprep.subr.mxu0 0.0
      %3178 = vmatpush1.msra.mxu0 0.0
      %3179 = vmatprep.subr.mxu0 0.0
      %3180 = vmatpush1.msra.mxu0 0.0
      %3181 = vmatprep.subr.mxu0 0.0
      %3182 = vmatpush1.msra.mxu0 0.0
      %3183 = vmatprep.subr.mxu0 0.0
      %3184 = vmatpush1.msra.mxu0 0.0
      %3185 = vmatprep.subr.mxu0 0.0
      %3186 = vmatpush1.msra.mxu0 0.0
      %3187 = vmatprep.subr.mxu0 0.0
      %3188 = vmatpush1.msra.mxu0 0.0
      %3189 = vmatprep.subr.mxu0 0.0
      %3190 = vmatpush1.msra.mxu0 0.0
      %3191 = vmatprep.subr.mxu0 0.0
      %3192 = vmatpush1.msra.mxu0 0.0
      %3193 = vmatprep.subr.mxu0 0.0
      %3194 = vmatpush1.msra.mxu0 0.0
      %3195 = vmatprep.subr.mxu0 0.0
      %3196 = vmatpush1.msra.mxu0 0.0
      %3197 = vmatprep.subr.mxu0 0.0
      %3198 = vmatpush1.msra.mxu0 0.0
      %3199 = vmatprep.subr.mxu0 0.0
      %3200 = vmatpush1.msra.mxu0 0.0
      %3201 = vmatprep.subr.mxu0 0.0
      %3202 = vmatpush1.msra.mxu0 0.0
      %3203 = vmatprep.mubr.f32.mxu0 0.0
      %v3204 = vand.u32 %v2154, 4294901760
      %3205 = vmatmul.mubr.f32.gmra.mrb[0].mxu0 %v3204
      %v3206 = vpop.f32.mrb[0].mxu0
      %v3207 = vadd.f32 %v2968, %v3206
      %v3208 = vpop.f32.mrb[0].mxu0
      %3209 = vmatprep.mubr.f32.mxu0 0.0
      %v3210 = vand.u32 %v2155, 4294901760
      %3211 = vmatmul.mubr.f32.gmra.mrb[0].mxu0 %v3210
      %v3212 = vpop.f32.mrb[0].mxu0
      %v3213 = vadd.f32 %v2976, %v3212
      %v3214 = vpop.f32.mrb[0].mxu0
      %3215 = vmatprep.mubr.f32.mxu0 0.0
      %v3216 = vand.u32 %v2156, 4294901760
      %3217 = vmatmul.mubr.f32.gmra.mrb[0].mxu0 %v3216
      %v3218 = vpop.f32.mrb[0].mxu0
      %v3219 = vadd.f32 %v2984, %v3218
      %v3220 = vpop.f32.mrb[0].mxu0
      %3221 = vmatprep.mubr.f32.mxu0 0.0
      %v3222 = vand.u32 %v2157, 4294901760
      %3223 = vmatmul.mubr.f32.gmra.mrb[0].mxu0 %v3222
      %v3224 = vpop.f32.mrb[0].mxu0
      %v3225 = vadd.f32 %v2992, %v3224
      %v3226 = vpop.f32.mrb[0].mxu0
      %3227 = vmatprep.mubr.f32.mxu0 0.0
      %v3228 = vand.u32 %v2158, 4294901760
      %3229 = vmatmul.mubr.f32.gmra.mrb[0].mxu0 %v3228
      %v3230 = vpop.f32.mrb[0].mxu0
      %v3231 = vadd.f32 %v3000, %v3230
      %v3232 = vpop.f32.mrb[0].mxu0
      %3233 = vmatprep.mubr.f32.mxu0 0.0
      %v3234 = vand.u32 %v2159, 4294901760
      %3235 = vmatmul.mubr.f32.gmra.mrb[0].mxu0 %v3234
      %v3236 = vpop.f32.mrb[0].mxu0
      %v3237 = vadd.f32 %v3008, %v3236
      %v3238 = vpop.f32.mrb[0].mxu0
      %3239 = vmatprep.mubr.f32.mxu0 0.0
      %v3240 = vand.u32 %v2160, 4294901760
      %3241 = vmatmul.mubr.f32.gmra.mrb[0].mxu0 %v3240
      %v3242 = vpop.f32.mrb[0].mxu0
      %v3243 = vadd.f32 %v3016, %v3242
      %v3244 = vpop.f32.mrb[0].mxu0
      %3245 = vmatprep.mubr.f32.mxu0 0.0
      %v3246 = vand.u32 %v2161, 4294901760
      %3247 = vmatmul.mubr.f32.gmra.mrb[0].mxu0 %v3246
      %v3248 = vpop.f32.mrb[0].mxu0
      %v3249 = vadd.f32 %v3024, %v3248
      %v3250 = vpop.f32.mrb[0].mxu0
      %3251 = vmatprep.mubr.f32.mxu0 0.0
      %v3252 = vand.u32 %v2162, 4294901760
      %3253 = vmatmul.mubr.f32.gmra.mrb[0].mxu0 %v3252
      %v3254 = vpop.f32.mrb[0].mxu0
      %v3255 = vadd.f32 %v3032, %v3254
      %v3256 = vpop.f32.mrb[0].mxu0
      %3257 = vmatprep.mubr.f32.mxu0 0.0
      %v3258 = vand.u32 %v2163, 4294901760
      %3259 = vmatmul.mubr.f32.gmra.mrb[0].mxu0 %v3258
      %v3260 = vpop.f32.mrb[0].mxu0
      %v3261 = vadd.f32 %v3040, %v3260
      %v3262 = vpop.f32.mrb[0].mxu0
      %3263 = vmatprep.mubr.f32.mxu0 0.0
      %v3264 = vand.u32 %v2164, 4294901760
      %3265 = vmatmul.mubr.f32.gmra.mrb[0].mxu0 %v3264
      %v3266 = vpop.f32.mrb[0].mxu0
      %v3267 = vadd.f32 %v3048, %v3266
      %v3268 = vpop.f32.mrb[0].mxu0
      %3269 = vmatprep.mubr.f32.mxu0 0.0
      %v3270 = vand.u32 %v2165, 4294901760
      %3271 = vmatmul.mubr.f32.gmra.mrb[0].mxu0 %v3270
      %v3272 = vpop.f32.mrb[0].mxu0
      %v3273 = vadd.f32 %v3056, %v3272
      %v3274 = vpop.f32.mrb[0].mxu0
      %3275 = vmatprep.mubr.f32.mxu0 0.0
      %v3276 = vand.u32 %v2166, 4294901760
      %3277 = vmatmul.mubr.f32.gmra.mrb[0].mxu0 %v3276
      %v3278 = vpop.f32.mrb[0].mxu0
      %v3279 = vadd.f32 %v3064, %v3278
      %v3280 = vpop.f32.mrb[0].mxu0
      %3281 = vmatprep.mubr.f32.mxu0 0.0
      %v3282 = vand.u32 %v2167, 4294901760
      %3283 = vmatmul.mubr.f32.gmra.mrb[0].mxu0 %v3282
      %v3284 = vpop.f32.mrb[0].mxu0
      %v3285 = vadd.f32 %v3072, %v3284
      %v3286 = vpop.f32.mrb[0].mxu0
      %3287 = vmatprep.mubr.f32.mxu0 0.0
      %v3288 = vand.u32 %v2168, 4294901760
      %3289 = vmatmul.mubr.f32.gmra.mrb[0].mxu0 %v3288
      %v3290 = vpop.f32.mrb[0].mxu0
      %v3291 = vadd.f32 %v3080, %v3290
      %v3292 = vpop.f32.mrb[0].mxu0
      %3293 = vmatprep.mubr.f32.mxu0 0.0
      %v3294 = vand.u32 %v2169, 4294901760
      %3295 = vmatmul.mubr.f32.gmra.mrb[0].mxu0 %v3294
      %v3296 = vpop.f32.mrb[0].mxu0
      %v3297 = vadd.f32 %v3088, %v3296
      %v3298 = vpop.f32.mrb[0].mxu0
      %3299 = vdwg.mxu0
      %3300 = vmatprep.subr.mxu0 0.0
      %v3301 = vand.u32 %v2170, 4294901760
      %3302 = vmatpush1.msra.mxu0 %v3301
      %3303 = vmatprep.subr.mxu0 0.0
      %v3304 = vand.u32 %v2171, 4294901760
      %3305 = vmatpush1.msra.mxu0 %v3304
      %3306 = vmatprep.subr.mxu0 0.0
      %v3307 = vand.u32 %v2172, 4294901760
      %3308 = vmatpush1.msra.mxu0 %v3307
      %3309 = vmatprep.subr.mxu0 0.0
      %v3310 = vand.u32 %v2173, 4294901760
      %3311 = vmatpush1.msra.mxu0 %v3310
      %3312 = vmatprep.subr.mxu0 0.0
      %v3313 = vand.u32 %v2174, 4294901760
      %3314 = vmatpush1.msra.mxu0 %v3313
      %3315 = vmatprep.subr.mxu0 0.0
      %v3316 = vand.u32 %v2175, 4294901760
      %3317 = vmatpush1.msra.mxu0 %v3316
      %3318 = vmatprep.subr.mxu0 0.0
      %v3319 = vand.u32 %v2176, 4294901760
      %3320 = vmatpush1.msra.mxu0 %v3319
      %3321 = vmatprep.subr.mxu0 0.0
      %v3322 = vand.u32 %v2177, 4294901760
      %3323 = vmatpush1.msra.mxu0 %v3322
      %3324 = vmatprep.subr.mxu0 0.0
      %v3325 = vand.u32 %v2178, 4294901760
      %3326 = vmatpush1.msra.mxu0 %v3325
      %3327 = vmatprep.subr.mxu0 0.0
      %v3328 = vand.u32 %v2179, 4294901760
      %3329 = vmatpush1.msra.mxu0 %v3328
      %3330 = vmatprep.subr.mxu0 0.0
      %v3331 = vand.u32 %v2180, 4294901760
      %3332 = vmatpush1.msra.mxu0 %v3331
      %3333 = vmatprep.subr.mxu0 0.0
      %v3334 = vand.u32 %v2181, 4294901760
      %3335 = vmatpush1.msra.mxu0 %v3334
      %3336 = vmatprep.subr.mxu0 0.0
      %v3337 = vand.u32 %v2182, 4294901760
      %3338 = vmatpush1.msra.mxu0 %v3337
      %3339 = vmatprep.subr.mxu0 0.0
      %v3340 = vand.u32 %v2183, 4294901760
      %3341 = vmatpush1.msra.mxu0 %v3340
      %3342 = vmatprep.subr.mxu0 0.0
      %v3343 = vand.u32 %v2184, 4294901760
      %3344 = vmatpush1.msra.mxu0 %v3343
      %3345 = vmatprep.subr.mxu0 0.0
      %v3346 = vand.u32 %v2185, 4294901760
      %3347 = vmatpush1.msra.mxu0 %v3346
      %3348 = vmatprep.subr.mxu0 0.0
      %3349 = vmatpush1.msra.mxu0 0.0
      %3350 = vmatprep.subr.mxu0 0.0
      %3351 = vmatpush1.msra.mxu0 0.0
      %3352 = vmatprep.subr.mxu0 0.0
      %3353 = vmatpush1.msra.mxu0 0.0
      %3354 = vmatprep.subr.mxu0 0.0
      %3355 = vmatpush1.msra.mxu0 0.0
      %3356 = vmatprep.subr.mxu0 0.0
      %3357 = vmatpush1.msra.mxu0 0.0
      %3358 = vmatprep.subr.mxu0 0.0
      %3359 = vmatpush1.msra.mxu0 0.0
      %3360 = vmatprep.subr.mxu0 0.0
      %3361 = vmatpush1.msra.mxu0 0.0
      %3362 = vmatprep.subr.mxu0 0.0
      %3363 = vmatpush1.msra.mxu0 0.0
      %3364 = vmatprep.subr.mxu0 0.0
      %3365 = vmatpush1.msra.mxu0 0.0
      %3366 = vmatprep.subr.mxu0 0.0
      %3367 = vmatpush1.msra.mxu0 0.0
      %3368 = vmatprep.subr.mxu0 0.0
      %3369 = vmatpush1.msra.mxu0 0.0
      %3370 = vmatprep.subr.mxu0 0.0
      %3371 = vmatpush1.msra.mxu0 0.0
      %3372 = vmatprep.subr.mxu0 0.0
      %3373 = vmatpush1.msra.mxu0 0.0
      %3374 = vmatprep.subr.mxu0 0.0
      %3375 = vmatpush1.msra.mxu0 0.0
      %3376 = vmatprep.subr.mxu0 0.0
      %3377 = vmatpush1.msra.mxu0 0.0
      %3378 = vmatprep.subr.mxu0 0.0
      %3379 = vmatpush1.msra.mxu0 0.0
      %3380 = vmatprep.mubr.f32.mxu0 0.0
      %v3381 = vand.u32 %v2154, 4294901760
      %3382 = vmatmul.mubr.f32.gmra.mrb[0].mxu0 %v3381
      %v3383 = vpop.f32.mrb[0].mxu0
      %v3384 = vadd.f32 %v3207, %v3383
      %v3385 = vpop.f32.mrb[0].mxu0
      %3386 = vmatprep.mubr.f32.mxu0 0.0
      %v3387 = vand.u32 %v2155, 4294901760
      %3388 = vmatmul.mubr.f32.gmra.mrb[0].mxu0 %v3387
      %v3389 = vpop.f32.mrb[0].mxu0
      %v3390 = vadd.f32 %v3213, %v3389
      %v3391 = vpop.f32.mrb[0].mxu0
      %3392 = vmatprep.mubr.f32.mxu0 0.0
      %v3393 = vand.u32 %v2156, 4294901760
      %3394 = vmatmul.mubr.f32.gmra.mrb[0].mxu0 %v3393
      %v3395 = vpop.f32.mrb[0].mxu0
      %v3396 = vadd.f32 %v3219, %v3395
      %v3397 = vpop.f32.mrb[0].mxu0
      %3398 = vmatprep.mubr.f32.mxu0 0.0
      %v3399 = vand.u32 %v2157, 4294901760
      %3400 = vmatmul.mubr.f32.gmra.mrb[0].mxu0 %v3399
      %v3401 = vpop.f32.mrb[0].mxu0
      %v3402 = vadd.f32 %v3225, %v3401
      %v3403 = vpop.f32.mrb[0].mxu0
      %3404 = vmatprep.mubr.f32.mxu0 0.0
      %v3405 = vand.u32 %v2158, 4294901760
      %3406 = vmatmul.mubr.f32.gmra.mrb[0].mxu0 %v3405
      %v3407 = vpop.f32.mrb[0].mxu0
      %v3408 = vadd.f32 %v3231, %v3407
      %v3409 = vpop.f32.mrb[0].mxu0
      %3410 = vmatprep.mubr.f32.mxu0 0.0
      %v3411 = vand.u32 %v2159, 4294901760
      %3412 = vmatmul.mubr.f32.gmra.mrb[0].mxu0 %v3411
      %v3413 = vpop.f32.mrb[0].mxu0
      %v3414 = vadd.f32 %v3237, %v3413
      %v3415 = vpop.f32.mrb[0].mxu0
      %3416 = vmatprep.mubr.f32.mxu0 0.0
      %v3417 = vand.u32 %v2160, 4294901760
      %3418 = vmatmul.mubr.f32.gmra.mrb[0].mxu0 %v3417
      %v3419 = vpop.f32.mrb[0].mxu0
      %v3420 = vadd.f32 %v3243, %v3419
      %v3421 = vpop.f32.mrb[0].mxu0
      %3422 = vmatprep.mubr.f32.mxu0 0.0
      %v3423 = vand.u32 %v2161, 4294901760
      %3424 = vmatmul.mubr.f32.gmra.mrb[0].mxu0 %v3423
      %v3425 = vpop.f32.mrb[0].mxu0
      %v3426 = vadd.f32 %v3249, %v3425
      %v3427 = vpop.f32.mrb[0].mxu0
      %3428 = vmatprep.mubr.f32.mxu0 0.0
      %v3429 = vand.u32 %v2162, 4294901760
      %3430 = vmatmul.mubr.f32.gmra.mrb[0].mxu0 %v3429
      %v3431 = vpop.f32.mrb[0].mxu0
      %v3432 = vadd.f32 %v3255, %v3431
      %v3433 = vpop.f32.mrb[0].mxu0
      %3434 = vmatprep.mubr.f32.mxu0 0.0
      %v3435 = vand.u32 %v2163, 4294901760
      %3436 = vmatmul.mubr.f32.gmra.mrb[0].mxu0 %v3435
      %v3437 = vpop.f32.mrb[0].mxu0
      %v3438 = vadd.f32 %v3261, %v3437
      %v3439 = vpop.f32.mrb[0].mxu0
      %3440 = vmatprep.mubr.f32.mxu0 0.0
      %v3441 = vand.u32 %v2164, 4294901760
      %3442 = vmatmul.mubr.f32.gmra.mrb[0].mxu0 %v3441
      %v3443 = vpop.f32.mrb[0].mxu0
      %v3444 = vadd.f32 %v3267, %v3443
      %v3445 = vpop.f32.mrb[0].mxu0
      %3446 = vmatprep.mubr.f32.mxu0 0.0
      %v3447 = vand.u32 %v2165, 4294901760
      %3448 = vmatmul.mubr.f32.gmra.mrb[0].mxu0 %v3447
      %v3449 = vpop.f32.mrb[0].mxu0
      %v3450 = vadd.f32 %v3273, %v3449
      %v3451 = vpop.f32.mrb[0].mxu0
      %3452 = vmatprep.mubr.f32.mxu0 0.0
      %v3453 = vand.u32 %v2166, 4294901760
      %3454 = vmatmul.mubr.f32.gmra.mrb[0].mxu0 %v3453
      %v3455 = vpop.f32.mrb[0].mxu0
      %v3456 = vadd.f32 %v3279, %v3455
      %v3457 = vpop.f32.mrb[0].mxu0
      %3458 = vmatprep.mubr.f32.mxu0 0.0
      %v3459 = vand.u32 %v2167, 4294901760
      %3460 = vmatmul.mubr.f32.gmra.mrb[0].mxu0 %v3459
      %v3461 = vpop.f32.mrb[0].mxu0
      %v3462 = vadd.f32 %v3285, %v3461
      %v3463 = vpop.f32.mrb[0].mxu0
      %3464 = vmatprep.mubr.f32.mxu0 0.0
      %v3465 = vand.u32 %v2168, 4294901760
      %3466 = vmatmul.mubr.f32.gmra.mrb[0].mxu0 %v3465
      %v3467 = vpop.f32.mrb[0].mxu0
      %v3468 = vadd.f32 %v3291, %v3467
      %v3469 = vpop.f32.mrb[0].mxu0
      %3470 = vmatprep.mubr.f32.mxu0 0.0
      %v3471 = vand.u32 %v2169, 4294901760
      %3472 = vmatmul.mubr.f32.gmra.mrb[0].mxu0 %v3471
      %v3473 = vpop.f32.mrb[0].mxu0
      %v3474 = vadd.f32 %v3297, %v3473
      %v3475 = vpop.f32.mrb[0].mxu0
      %3476 = vdwg.mxu0
      %v3477 = vmax.f32 %v3384, 0.0
      %v3478 = vmax.f32 %v3390, 0.0
      %v3479 = vmax.f32 %v3396, 0.0
      %v3480 = vmax.f32 %v3402, 0.0
      %v3481 = vmax.f32 %v3408, 0.0
      %v3482 = vmax.f32 %v3414, 0.0
      %v3483 = vmax.f32 %v3420, 0.0
      %v3484 = vmax.f32 %v3426, 0.0
      %v3485 = vmax.f32 %v3432, 0.0
      %v3486 = vmax.f32 %v3438, 0.0
      %v3487 = vmax.f32 %v3444, 0.0
      %v3488 = vmax.f32 %v3450, 0.0
      %v3489 = vmax.f32 %v3456, 0.0
      %v3490 = vmax.f32 %v3462, 0.0
      %v3491 = vmax.f32 %v3468, 0.0
      %v3492 = vmax.f32 %v3474, 0.0
      %v3493 = vld [vmem:[%s1 + $0xb0] sm:$0xff]
      %v3494 = vld [vmem:[%s1 + $0xb8] sm:$0xff]
      %v3495 = vld [vmem:[%s1 + $0xc0] sm:$0xff]
      %v3496 = vld [vmem:[%s1 + $0xc8] sm:$0xff]
      %v3497 = vld [vmem:[%s1 + $0x113] sm:$0x1]
      %v3498 = vlaneseq
      %v3499 = vshrl.u32 %v3498, 7
      %v3500 = vsub.s32 0, %v3499
      %v3501 = vrot.slane %v3497, %v3500
      %3502 = vmatprep.subr.mxu0 0.0
      %v3503 = vand.u32 %v3493, 4294901760
      %3504 = vmatpush1.xpose.msra.mxu0 %v3503
      %3505 = vmatprep.subr.mxu0 0.0
      %v3506 = vand.u32 %v3494, 4294901760
      %3507 = vmatpush1.xpose.msra.mxu0 %v3506
      %3508 = vmatprep.subr.mxu0 0.0
      %v3509 = vand.u32 %v3495, 4294901760
      %3510 = vmatpush1.xpose.msra.mxu0 %v3509
      %3511 = vmatprep.subr.mxu0 0.0
      %v3512 = vand.u32 %v3496, 4294901760
      %3513 = vmatpush1.xpose.msra.mxu0 %v3512
      %3514 = vmatprep.subr.mxu0 0.0
      %3515 = vmatpush1.xpose.msra.mxu0 0.0
      %3516 = vmatprep.subr.mxu0 0.0
      %3517 = vmatpush1.xpose.msra.mxu0 0.0
      %3518 = vmatprep.subr.mxu0 0.0
      %3519 = vmatpush1.xpose.msra.mxu0 0.0
      %3520 = vmatprep.subr.mxu0 0.0
      %3521 = vmatpush1.xpose.msra.mxu0 0.0
      %3522 = vmatprep.subr.mxu0 0.0
      %3523 = vmatpush1.xpose.msra.mxu0 0.0
      %3524 = vmatprep.subr.mxu0 0.0
      %3525 = vmatpush1.xpose.msra.mxu0 0.0
      %3526 = vmatprep.subr.mxu0 0.0
      %3527 = vmatpush1.xpose.msra.mxu0 0.0
      %3528 = vmatprep.subr.mxu0 0.0
      %3529 = vmatpush1.xpose.msra.mxu0 0.0
      %3530 = vmatprep.subr.mxu0 0.0
      %3531 = vmatpush1.xpose.msra.mxu0 0.0
      %3532 = vmatprep.subr.mxu0 0.0
      %3533 = vmatpush1.xpose.msra.mxu0 0.0
      %3534 = vmatprep.subr.mxu0 0.0
      %3535 = vmatpush1.xpose.msra.mxu0 0.0
      %3536 = vmatprep.subr.mxu0 0.0
      %3537 = vmatpush1.xpose.msra.mxu0 0.0
      %3538 = vmatprep.subr.mxu0 0.0
      %3539 = vmatpush1.xpose.msra.mxu0 0.0
      %3540 = vmatprep.subr.mxu0 0.0
      %3541 = vmatpush1.xpose.msra.mxu0 0.0
      %3542 = vmatprep.subr.mxu0 0.0
      %3543 = vmatpush1.xpose.msra.mxu0 0.0
      %3544 = vmatprep.subr.mxu0 0.0
      %3545 = vmatpush1.xpose.msra.mxu0 0.0
      %3546 = vmatprep.subr.mxu0 0.0
      %3547 = vmatpush1.xpose.msra.mxu0 0.0
      %3548 = vmatprep.subr.mxu0 0.0
      %3549 = vmatpush1.xpose.msra.mxu0 0.0
      %3550 = vmatprep.subr.mxu0 0.0
      %3551 = vmatpush1.xpose.msra.mxu0 0.0
      %3552 = vmatprep.subr.mxu0 0.0
      %3553 = vmatpush1.xpose.msra.mxu0 0.0
      %3554 = vmatprep.subr.mxu0 0.0
      %3555 = vmatpush1.xpose.msra.mxu0 0.0
      %3556 = vmatprep.subr.mxu0 0.0
      %3557 = vmatpush1.xpose.msra.mxu0 0.0
      %3558 = vmatprep.subr.mxu0 0.0
      %3559 = vmatpush1.xpose.msra.mxu0 0.0
      %3560 = vmatprep.subr.mxu0 0.0
      %3561 = vmatpush1.xpose.msra.mxu0 0.0
      %3562 = vmatprep.subr.mxu0 0.0
      %3563 = vmatpush1.xpose.msra.mxu0 0.0
      %3564 = vmatprep.subr.mxu0 0.0
      %3565 = vmatpush1.xpose.msra.mxu0 0.0
      %3566 = vmatprep.subr.mxu0 0.0
      %3567 = vmatpush1.xpose.msra.mxu0 0.0
      %3568 = vmatprep.subr.mxu0 0.0
      %3569 = vmatpush1.xpose.msra.mxu0 0.0
      %3570 = vmatprep.mubr.f32.mxu0 0.0
      %v3571 = vand.u32 %v3477, 4294901760
      %v3572 = vsub.f32 %v3477, %v3571
      %v3573 = vand.u32 %v3572, 4294901760
      %v3574 = vsub.f32 %v3572, %v3573
      %v3575 = vand.u32 %v3574, 4294901760
      %3576 = vmatmul.mubr.f32.gmra.mrb[0].mxu0 %v3575
      %v3577 = vpop.f32.mrb[0].mxu0
      %v3578 = vadd.f32 %v3501, %v3577
      %v3579 = vpop.f32.mrb[0].mxu0
      %3580 = vmatprep.mubr.f32.mxu0 0.0
      %v3581 = vand.u32 %v3478, 4294901760
      %v3582 = vsub.f32 %v3478, %v3581
      %v3583 = vand.u32 %v3582, 4294901760
      %v3584 = vsub.f32 %v3582, %v3583
      %v3585 = vand.u32 %v3584, 4294901760
      %3586 = vmatmul.mubr.f32.gmra.mrb[0].mxu0 %v3585
      %v3587 = vpop.f32.mrb[0].mxu0
      %v3588 = vadd.f32 %v3501, %v3587
      %v3589 = vpop.f32.mrb[0].mxu0
      %3590 = vmatprep.mubr.f32.mxu0 0.0
      %v3591 = vand.u32 %v3479, 4294901760
      %v3592 = vsub.f32 %v3479, %v3591
      %v3593 = vand.u32 %v3592, 4294901760
      %v3594 = vsub.f32 %v3592, %v3593
      %v3595 = vand.u32 %v3594, 4294901760
      %3596 = vmatmul.mubr.f32.gmra.mrb[0].mxu0 %v3595
      %v3597 = vpop.f32.mrb[0].mxu0
      %v3598 = vadd.f32 %v3501, %v3597
      %v3599 = vpop.f32.mrb[0].mxu0
      %3600 = vmatprep.mubr.f32.mxu0 0.0
      %v3601 = vand.u32 %v3480, 4294901760
      %v3602 = vsub.f32 %v3480, %v3601
      %v3603 = vand.u32 %v3602, 4294901760
      %v3604 = vsub.f32 %v3602, %v3603
      %v3605 = vand.u32 %v3604, 4294901760
      %3606 = vmatmul.mubr.f32.gmra.mrb[0].mxu0 %v3605
      %v3607 = vpop.f32.mrb[0].mxu0
      %v3608 = vadd.f32 %v3501, %v3607
      %v3609 = vpop.f32.mrb[0].mxu0
      %3610 = vmatprep.mubr.f32.mxu0 0.0
      %v3611 = vand.u32 %v3481, 4294901760
      %v3612 = vsub.f32 %v3481, %v3611
      %v3613 = vand.u32 %v3612, 4294901760
      %v3614 = vsub.f32 %v3612, %v3613
      %v3615 = vand.u32 %v3614, 4294901760
      %3616 = vmatmul.mubr.f32.gmra.mrb[0].mxu0 %v3615
      %v3617 = vpop.f32.mrb[0].mxu0
      %v3618 = vadd.f32 %v3501, %v3617
      %v3619 = vpop.f32.mrb[0].mxu0
      %3620 = vmatprep.mubr.f32.mxu0 0.0
      %v3621 = vand.u32 %v3482, 4294901760
      %v3622 = vsub.f32 %v3482, %v3621
      %v3623 = vand.u32 %v3622, 4294901760
      %v3624 = vsub.f32 %v3622, %v3623
      %v3625 = vand.u32 %v3624, 4294901760
      %3626 = vmatmul.mubr.f32.gmra.mrb[0].mxu0 %v3625
      %v3627 = vpop.f32.mrb[0].mxu0
      %v3628 = vadd.f32 %v3501, %v3627
      %v3629 = vpop.f32.mrb[0].mxu0
      %3630 = vmatprep.mubr.f32.mxu0 0.0
      %v3631 = vand.u32 %v3483, 4294901760
      %v3632 = vsub.f32 %v3483, %v3631
      %v3633 = vand.u32 %v3632, 4294901760
      %v3634 = vsub.f32 %v3632, %v3633
      %v3635 = vand.u32 %v3634, 4294901760
      %3636 = vmatmul.mubr.f32.gmra.mrb[0].mxu0 %v3635
      %v3637 = vpop.f32.mrb[0].mxu0
      %v3638 = vadd.f32 %v3501, %v3637
      %v3639 = vpop.f32.mrb[0].mxu0
      %3640 = vmatprep.mubr.f32.mxu0 0.0
      %v3641 = vand.u32 %v3484, 4294901760
      %v3642 = vsub.f32 %v3484, %v3641
      %v3643 = vand.u32 %v3642, 4294901760
      %v3644 = vsub.f32 %v3642, %v3643
      %v3645 = vand.u32 %v3644, 4294901760
      %3646 = vmatmul.mubr.f32.gmra.mrb[0].mxu0 %v3645
      %v3647 = vpop.f32.mrb[0].mxu0
      %v3648 = vadd.f32 %v3501, %v3647
      %v3649 = vpop.f32.mrb[0].mxu0
      %3650 = vmatprep.mubr.f32.mxu0 0.0
      %v3651 = vand.u32 %v3485, 4294901760
      %v3652 = vsub.f32 %v3485, %v3651
      %v3653 = vand.u32 %v3652, 4294901760
      %v3654 = vsub.f32 %v3652, %v3653
      %v3655 = vand.u32 %v3654, 4294901760
      %3656 = vmatmul.mubr.f32.gmra.mrb[0].mxu0 %v3655
      %v3657 = vpop.f32.mrb[0].mxu0
      %v3658 = vadd.f32 %v3501, %v3657
      %v3659 = vpop.f32.mrb[0].mxu0
      %3660 = vmatprep.mubr.f32.mxu0 0.0
      %v3661 = vand.u32 %v3486, 4294901760
      %v3662 = vsub.f32 %v3486, %v3661
      %v3663 = vand.u32 %v3662, 4294901760
      %v3664 = vsub.f32 %v3662, %v3663
      %v3665 = vand.u32 %v3664, 4294901760
      %3666 = vmatmul.mubr.f32.gmra.mrb[0].mxu0 %v3665
      %v3667 = vpop.f32.mrb[0].mxu0
      %v3668 = vadd.f32 %v3501, %v3667
      %v3669 = vpop.f32.mrb[0].mxu0
      %3670 = vmatprep.mubr.f32.mxu0 0.0
      %v3671 = vand.u32 %v3487, 4294901760
      %v3672 = vsub.f32 %v3487, %v3671
      %v3673 = vand.u32 %v3672, 4294901760
      %v3674 = vsub.f32 %v3672, %v3673
      %v3675 = vand.u32 %v3674, 4294901760
      %3676 = vmatmul.mubr.f32.gmra.mrb[0].mxu0 %v3675
      %v3677 = vpop.f32.mrb[0].mxu0
      %v3678 = vadd.f32 %v3501, %v3677
      %v3679 = vpop.f32.mrb[0].mxu0
      %3680 = vmatprep.mubr.f32.mxu0 0.0
      %v3681 = vand.u32 %v3488, 4294901760
      %v3682 = vsub.f32 %v3488, %v3681
      %v3683 = vand.u32 %v3682, 4294901760
      %v3684 = vsub.f32 %v3682, %v3683
      %v3685 = vand.u32 %v3684, 4294901760
      %3686 = vmatmul.mubr.f32.gmra.mrb[0].mxu0 %v3685
      %v3687 = vpop.f32.mrb[0].mxu0
      %v3688 = vadd.f32 %v3501, %v3687
      %v3689 = vpop.f32.mrb[0].mxu0
      %3690 = vmatprep.mubr.f32.mxu0 0.0
      %v3691 = vand.u32 %v3489, 4294901760
      %v3692 = vsub.f32 %v3489, %v3691
      %v3693 = vand.u32 %v3692, 4294901760
      %v3694 = vsub.f32 %v3692, %v3693
      %v3695 = vand.u32 %v3694, 4294901760
      %3696 = vmatmul.mubr.f32.gmra.mrb[0].mxu0 %v3695
      %v3697 = vpop.f32.mrb[0].mxu0
      %v3698 = vadd.f32 %v3501, %v3697
      %v3699 = vpop.f32.mrb[0].mxu0
      %3700 = vmatprep.mubr.f32.mxu0 0.0
      %v3701 = vand.u32 %v3490, 4294901760
      %v3702 = vsub.f32 %v3490, %v3701
      %v3703 = vand.u32 %v3702, 4294901760
      %v3704 = vsub.f32 %v3702, %v3703
      %v3705 = vand.u32 %v3704, 4294901760
      %3706 = vmatmul.mubr.f32.gmra.mrb[0].mxu0 %v3705
      %v3707 = vpop.f32.mrb[0].mxu0
      %v3708 = vadd.f32 %v3501, %v3707
      %v3709 = vpop.f32.mrb[0].mxu0
      %3710 = vmatprep.mubr.f32.mxu0 0.0
      %v3711 = vand.u32 %v3491, 4294901760
      %v3712 = vsub.f32 %v3491, %v3711
      %v3713 = vand.u32 %v3712, 4294901760
      %v3714 = vsub.f32 %v3712, %v3713
      %v3715 = vand.u32 %v3714, 4294901760
      %3716 = vmatmul.mubr.f32.gmra.mrb[0].mxu0 %v3715
      %v3717 = vpop.f32.mrb[0].mxu0
      %v3718 = vadd.f32 %v3501, %v3717
      %v3719 = vpop.f32.mrb[0].mxu0
      %3720 = vmatprep.mubr.f32.mxu0 0.0
      %v3721 = vand.u32 %v3492, 4294901760
      %v3722 = vsub.f32 %v3492, %v3721
      %v3723 = vand.u32 %v3722, 4294901760
      %v3724 = vsub.f32 %v3722, %v3723
      %v3725 = vand.u32 %v3724, 4294901760
      %3726 = vmatmul.mubr.f32.gmra.mrb[0].mxu0 %v3725
      %v3727 = vpop.f32.mrb[0].mxu0
      %v3728 = vadd.f32 %v3501, %v3727
      %v3729 = vpop.f32.mrb[0].mxu0
      %3730 = vdwg.mxu0
      %3731 = vmatprep.subr.mxu0 0.0
      %v3732 = vand.u32 %v3493, 4294901760
      %v3733 = vsub.f32 %v3493, %v3732
      %v3734 = vand.u32 %v3733, 4294901760
      %v3735 = vsub.f32 %v3733, %v3734
      %v3736 = vand.u32 %v3735, 4294901760
      %3737 = vmatpush1.xpose.msra.mxu0 %v3736
      %3738 = vmatprep.subr.mxu0 0.0
      %v3739 = vand.u32 %v3494, 4294901760
      %v3740 = vsub.f32 %v3494, %v3739
      %v3741 = vand.u32 %v3740, 4294901760
      %v3742 = vsub.f32 %v3740, %v3741
      %v3743 = vand.u32 %v3742, 4294901760
      %3744 = vmatpush1.xpose.msra.mxu0 %v3743
      %3745 = vmatprep.subr.mxu0 0.0
      %v3746 = vand.u32 %v3495, 4294901760
      %v3747 = vsub.f32 %v3495, %v3746
      %v3748 = vand.u32 %v3747, 4294901760
      %v3749 = vsub.f32 %v3747, %v3748
      %v3750 = vand.u32 %v3749, 4294901760
      %3751 = vmatpush1.xpose.msra.mxu0 %v3750
      %3752 = vmatprep.subr.mxu0 0.0
      %v3753 = vand.u32 %v3496, 4294901760
      %v3754 = vsub.f32 %v3496, %v3753
      %v3755 = vand.u32 %v3754, 4294901760
      %v3756 = vsub.f32 %v3754, %v3755
      %v3757 = vand.u32 %v3756, 4294901760
      %3758 = vmatpush1.xpose.msra.mxu0 %v3757
      %3759 = vmatprep.subr.mxu0 0.0
      %3760 = vmatpush1.xpose.msra.mxu0 0.0
      %3761 = vmatprep.subr.mxu0 0.0
      %3762 = vmatpush1.xpose.msra.mxu0 0.0
      %3763 = vmatprep.subr.mxu0 0.0
      %3764 = vmatpush1.xpose.msra.mxu0 0.0
      %3765 = vmatprep.subr.mxu0 0.0
      %3766 = vmatpush1.xpose.msra.mxu0 0.0
      %3767 = vmatprep.subr.mxu0 0.0
      %3768 = vmatpush1.xpose.msra.mxu0 0.0
      %3769 = vmatprep.subr.mxu0 0.0
      %3770 = vmatpush1.xpose.msra.mxu0 0.0
      %3771 = vmatprep.subr.mxu0 0.0
      %3772 = vmatpush1.xpose.msra.mxu0 0.0
      %3773 = vmatprep.subr.mxu0 0.0
      %3774 = vmatpush1.xpose.msra.mxu0 0.0
      %3775 = vmatprep.subr.mxu0 0.0
      %3776 = vmatpush1.xpose.msra.mxu0 0.0
      %3777 = vmatprep.subr.mxu0 0.0
      %3778 = vmatpush1.xpose.msra.mxu0 0.0
      %3779 = vmatprep.subr.mxu0 0.0
      %3780 = vmatpush1.xpose.msra.mxu0 0.0
      %3781 = vmatprep.subr.mxu0 0.0
      %3782 = vmatpush1.xpose.msra.mxu0 0.0
      %3783 = vmatprep.subr.mxu0 0.0
      %3784 = vmatpush1.xpose.msra.mxu0 0.0
      %3785 = vmatprep.subr.mxu0 0.0
      %3786 = vmatpush1.xpose.msra.mxu0 0.0
      %3787 = vmatprep.subr.mxu0 0.0
      %3788 = vmatpush1.xpose.msra.mxu0 0.0
      %3789 = vmatprep.subr.mxu0 0.0
      %3790 = vmatpush1.xpose.msra.mxu0 0.0
      %3791 = vmatprep.subr.mxu0 0.0
      %3792 = vmatpush1.xpose.msra.mxu0 0.0
      %3793 = vmatprep.subr.mxu0 0.0
      %3794 = vmatpush1.xpose.msra.mxu0 0.0
      %3795 = vmatprep.subr.mxu0 0.0
      %3796 = vmatpush1.xpose.msra.mxu0 0.0
      %3797 = vmatprep.subr.mxu0 0.0
      %3798 = vmatpush1.xpose.msra.mxu0 0.0
      %3799 = vmatprep.subr.mxu0 0.0
      %3800 = vmatpush1.xpose.msra.mxu0 0.0
      %3801 = vmatprep.subr.mxu0 0.0
      %3802 = vmatpush1.xpose.msra.mxu0 0.0
      %3803 = vmatprep.subr.mxu0 0.0
      %3804 = vmatpush1.xpose.msra.mxu0 0.0
      %3805 = vmatprep.subr.mxu0 0.0
      %3806 = vmatpush1.xpose.msra.mxu0 0.0
      %3807 = vmatprep.subr.mxu0 0.0
      %3808 = vmatpush1.xpose.msra.mxu0 0.0
      %3809 = vmatprep.subr.mxu0 0.0
      %3810 = vmatpush1.xpose.msra.mxu0 0.0
      %3811 = vmatprep.subr.mxu0 0.0
      %3812 = vmatpush1.xpose.msra.mxu0 0.0
      %3813 = vmatprep.subr.mxu0 0.0
      %3814 = vmatpush1.xpose.msra.mxu0 0.0
      %3815 = vmatprep.mubr.f32.mxu0 0.0
      %v3816 = vand.u32 %v3477, 4294901760
      %3817 = vmatmul.mubr.f32.gmra.mrb[0].mxu0 %v3816
      %v3818 = vpop.f32.mrb[0].mxu0
      %v3819 = vadd.f32 %v3578, %v3818
      %v3820 = vpop.f32.mrb[0].mxu0
      %3821 = vmatprep.mubr.f32.mxu0 0.0
      %v3822 = vand.u32 %v3478, 4294901760
      %3823 = vmatmul.mubr.f32.gmra.mrb[0].mxu0 %v3822
      %v3824 = vpop.f32.mrb[0].mxu0
      %v3825 = vadd.f32 %v3588, %v3824
      %v3826 = vpop.f32.mrb[0].mxu0
      %3827 = vmatprep.mubr.f32.mxu0 0.0
      %v3828 = vand.u32 %v3479, 4294901760
      %3829 = vmatmul.mubr.f32.gmra.mrb[0].mxu0 %v3828
      %v3830 = vpop.f32.mrb[0].mxu0
      %v3831 = vadd.f32 %v3598, %v3830
      %v3832 = vpop.f32.mrb[0].mxu0
      %3833 = vmatprep.mubr.f32.mxu0 0.0
      %v3834 = vand.u32 %v3480, 4294901760
      %3835 = vmatmul.mubr.f32.gmra.mrb[0].mxu0 %v3834
      %v3836 = vpop.f32.mrb[0].mxu0
      %v3837 = vadd.f32 %v3608, %v3836
      %v3838 = vpop.f32.mrb[0].mxu0
      %3839 = vmatprep.mubr.f32.mxu0 0.0
      %v3840 = vand.u32 %v3481, 4294901760
      %3841 = vmatmul.mubr.f32.gmra.mrb[0].mxu0 %v3840
      %v3842 = vpop.f32.mrb[0].mxu0
      %v3843 = vadd.f32 %v3618, %v3842
      %v3844 = vpop.f32.mrb[0].mxu0
      %3845 = vmatprep.mubr.f32.mxu0 0.0
      %v3846 = vand.u32 %v3482, 4294901760
      %3847 = vmatmul.mubr.f32.gmra.mrb[0].mxu0 %v3846
      %v3848 = vpop.f32.mrb[0].mxu0
      %v3849 = vadd.f32 %v3628, %v3848
      %v3850 = vpop.f32.mrb[0].mxu0
      %3851 = vmatprep.mubr.f32.mxu0 0.0
      %v3852 = vand.u32 %v3483, 4294901760
      %3853 = vmatmul.mubr.f32.gmra.mrb[0].mxu0 %v3852
      %v3854 = vpop.f32.mrb[0].mxu0
      %v3855 = vadd.f32 %v3638, %v3854
      %v3856 = vpop.f32.mrb[0].mxu0
      %3857 = vmatprep.mubr.f32.mxu0 0.0
      %v3858 = vand.u32 %v3484, 4294901760
      %3859 = vmatmul.mubr.f32.gmra.mrb[0].mxu0 %v3858
      %v3860 = vpop.f32.mrb[0].mxu0
      %v3861 = vadd.f32 %v3648, %v3860
      %v3862 = vpop.f32.mrb[0].mxu0
      %3863 = vmatprep.mubr.f32.mxu0 0.0
      %v3864 = vand.u32 %v3485, 4294901760
      %3865 = vmatmul.mubr.f32.gmra.mrb[0].mxu0 %v3864
      %v3866 = vpop.f32.mrb[0].mxu0
      %v3867 = vadd.f32 %v3658, %v3866
      %v3868 = vpop.f32.mrb[0].mxu0
      %3869 = vmatprep.mubr.f32.mxu0 0.0
      %v3870 = vand.u32 %v3486, 4294901760
      %3871 = vmatmul.mubr.f32.gmra.mrb[0].mxu0 %v3870
      %v3872 = vpop.f32.mrb[0].mxu0
      %v3873 = vadd.f32 %v3668, %v3872
      %v3874 = vpop.f32.mrb[0].mxu0
      %3875 = vmatprep.mubr.f32.mxu0 0.0
      %v3876 = vand.u32 %v3487, 4294901760
      %3877 = vmatmul.mubr.f32.gmra.mrb[0].mxu0 %v3876
      %v3878 = vpop.f32.mrb[0].mxu0
      %v3879 = vadd.f32 %v3678, %v3878
      %v3880 = vpop.f32.mrb[0].mxu0
      %3881 = vmatprep.mubr.f32.mxu0 0.0
      %v3882 = vand.u32 %v3488, 4294901760
      %3883 = vmatmul.mubr.f32.gmra.mrb[0].mxu0 %v3882
      %v3884 = vpop.f32.mrb[0].mxu0
      %v3885 = vadd.f32 %v3688, %v3884
      %v3886 = vpop.f32.mrb[0].mxu0
      %3887 = vmatprep.mubr.f32.mxu0 0.0
      %v3888 = vand.u32 %v3489, 4294901760
      %3889 = vmatmul.mubr.f32.gmra.mrb[0].mxu0 %v3888
      %v3890 = vpop.f32.mrb[0].mxu0
      %v3891 = vadd.f32 %v3698, %v3890
      %v3892 = vpop.f32.mrb[0].mxu0
      %3893 = vmatprep.mubr.f32.mxu0 0.0
      %v3894 = vand.u32 %v3490, 4294901760
      %3895 = vmatmul.mubr.f32.gmra.mrb[0].mxu0 %v3894
      %v3896 = vpop.f32.mrb[0].mxu0
      %v3897 = vadd.f32 %v3708, %v3896
      %v3898 = vpop.f32.mrb[0].mxu0
      %3899 = vmatprep.mubr.f32.mxu0 0.0
      %v3900 = vand.u32 %v3491, 4294901760
      %3901 = vmatmul.mubr.f32.gmra.mrb[0].mxu0 %v3900
      %v3902 = vpop.f32.mrb[0].mxu0
      %v3903 = vadd.f32 %v3718, %v3902
      %v3904 = vpop.f32.mrb[0].mxu0
      %3905 = vmatprep.mubr.f32.mxu0 0.0
      %v3906 = vand.u32 %v3492, 4294901760
      %3907 = vmatmul.mubr.f32.gmra.mrb[0].mxu0 %v3906
      %v3908 = vpop.f32.mrb[0].mxu0
      %v3909 = vadd.f32 %v3728, %v3908
      %v3910 = vpop.f32.mrb[0].mxu0
      %3911 = vdwg.mxu0
      %3912 = vmatprep.subr.mxu0 0.0
      %v3913 = vand.u32 %v3493, 4294901760
      %v3914 = vsub.f32 %v3493, %v3913
      %3915 = vmatpush1.xpose.msra.mxu0 %v3914
      %3916 = vmatprep.subr.mxu0 0.0
      %v3917 = vand.u32 %v3494, 4294901760
      %v3918 = vsub.f32 %v3494, %v3917
      %3919 = vmatpush1.xpose.msra.mxu0 %v3918
      %3920 = vmatprep.subr.mxu0 0.0
      %v3921 = vand.u32 %v3495, 4294901760
      %v3922 = vsub.f32 %v3495, %v3921
      %3923 = vmatpush1.xpose.msra.mxu0 %v3922
      %3924 = vmatprep.subr.mxu0 0.0
      %v3925 = vand.u32 %v3496, 4294901760
      %v3926 = vsub.f32 %v3496, %v3925
      %3927 = vmatpush1.xpose.msra.mxu0 %v3926
      %3928 = vmatprep.subr.mxu0 0.0
      %3929 = vmatpush1.xpose.msra.mxu0 0.0
      %3930 = vmatprep.subr.mxu0 0.0
      %3931 = vmatpush1.xpose.msra.mxu0 0.0
      %3932 = vmatprep.subr.mxu0 0.0
      %3933 = vmatpush1.xpose.msra.mxu0 0.0
      %3934 = vmatprep.subr.mxu0 0.0
      %3935 = vmatpush1.xpose.msra.mxu0 0.0
      %3936 = vmatprep.subr.mxu0 0.0
      %3937 = vmatpush1.xpose.msra.mxu0 0.0
      %3938 = vmatprep.subr.mxu0 0.0
      %3939 = vmatpush1.xpose.msra.mxu0 0.0
      %3940 = vmatprep.subr.mxu0 0.0
      %3941 = vmatpush1.xpose.msra.mxu0 0.0
      %3942 = vmatprep.subr.mxu0 0.0
      %3943 = vmatpush1.xpose.msra.mxu0 0.0
      %3944 = vmatprep.subr.mxu0 0.0
      %3945 = vmatpush1.xpose.msra.mxu0 0.0
      %3946 = vmatprep.subr.mxu0 0.0
      %3947 = vmatpush1.xpose.msra.mxu0 0.0
      %3948 = vmatprep.subr.mxu0 0.0
      %3949 = vmatpush1.xpose.msra.mxu0 0.0
      %3950 = vmatprep.subr.mxu0 0.0
      %3951 = vmatpush1.xpose.msra.mxu0 0.0
      %3952 = vmatprep.subr.mxu0 0.0
      %3953 = vmatpush1.xpose.msra.mxu0 0.0
      %3954 = vmatprep.subr.mxu0 0.0
      %3955 = vmatpush1.xpose.msra.mxu0 0.0
      %3956 = vmatprep.subr.mxu0 0.0
      %3957 = vmatpush1.xpose.msra.mxu0 0.0
      %3958 = vmatprep.subr.mxu0 0.0
      %3959 = vmatpush1.xpose.msra.mxu0 0.0
      %3960 = vmatprep.subr.mxu0 0.0
      %3961 = vmatpush1.xpose.msra.mxu0 0.0
      %3962 = vmatprep.subr.mxu0 0.0
      %3963 = vmatpush1.xpose.msra.mxu0 0.0
      %3964 = vmatprep.subr.mxu0 0.0
      %3965 = vmatpush1.xpose.msra.mxu0 0.0
      %3966 = vmatprep.subr.mxu0 0.0
      %3967 = vmatpush1.xpose.msra.mxu0 0.0
      %3968 = vmatprep.subr.mxu0 0.0
      %3969 = vmatpush1.xpose.msra.mxu0 0.0
      %3970 = vmatprep.subr.mxu0 0.0
      %3971 = vmatpush1.xpose.msra.mxu0 0.0
      %3972 = vmatprep.subr.mxu0 0.0
      %3973 = vmatpush1.xpose.msra.mxu0 0.0
      %3974 = vmatprep.subr.mxu0 0.0
      %3975 = vmatpush1.xpose.msra.mxu0 0.0
      %3976 = vmatprep.subr.mxu0 0.0
      %3977 = vmatpush1.xpose.msra.mxu0 0.0
      %3978 = vmatprep.subr.mxu0 0.0
      %3979 = vmatpush1.xpose.msra.mxu0 0.0
      %3980 = vmatprep.subr.mxu0 0.0
      %3981 = vmatpush1.xpose.msra.mxu0 0.0
      %3982 = vmatprep.subr.mxu0 0.0
      %3983 = vmatpush1.xpose.msra.mxu0 0.0
      %3984 = vmatprep.mubr.f32.mxu0 0.0
      %v3985 = vand.u32 %v3477, 4294901760
      %v3986 = vsub.f32 %v3477, %v3985
      %3987 = vmatmul.mubr.f32.gmra.mrb[0].mxu0 %v3986
      %v3988 = vpop.f32.mrb[0].mxu0
      %v3989 = vadd.f32 %v3819, %v3988
      %v3990 = vpop.f32.mrb[0].mxu0
      %3991 = vmatprep.mubr.f32.mxu0 0.0
      %v3992 = vand.u32 %v3478, 4294901760
      %v3993 = vsub.f32 %v3478, %v3992
      %3994 = vmatmul.mubr.f32.gmra.mrb[0].mxu0 %v3993
      %v3995 = vpop.f32.mrb[0].mxu0
      %v3996 = vadd.f32 %v3825, %v3995
      %v3997 = vpop.f32.mrb[0].mxu0
      %3998 = vmatprep.mubr.f32.mxu0 0.0
      %v3999 = vand.u32 %v3479, 4294901760
      %v4000 = vsub.f32 %v3479, %v3999
      %4001 = vmatmul.mubr.f32.gmra.mrb[0].mxu0 %v4000
      %v4002 = vpop.f32.mrb[0].mxu0
      %v4003 = vadd.f32 %v3831, %v4002
      %v4004 = vpop.f32.mrb[0].mxu0
      %4005 = vmatprep.mubr.f32.mxu0 0.0
      %v4006 = vand.u32 %v3480, 4294901760
      %v4007 = vsub.f32 %v3480, %v4006
      %4008 = vmatmul.mubr.f32.gmra.mrb[0].mxu0 %v4007
      %v4009 = vpop.f32.mrb[0].mxu0
      %v4010 = vadd.f32 %v3837, %v4009
      %v4011 = vpop.f32.mrb[0].mxu0
      %4012 = vmatprep.mubr.f32.mxu0 0.0
      %v4013 = vand.u32 %v3481, 4294901760
      %v4014 = vsub.f32 %v3481, %v4013
      %4015 = vmatmul.mubr.f32.gmra.mrb[0].mxu0 %v4014
      %v4016 = vpop.f32.mrb[0].mxu0
      %v4017 = vadd.f32 %v3843, %v4016
      %v4018 = vpop.f32.mrb[0].mxu0
      %4019 = vmatprep.mubr.f32.mxu0 0.0
      %v4020 = vand.u32 %v3482, 4294901760
      %v4021 = vsub.f32 %v3482, %v4020
      %4022 = vmatmul.mubr.f32.gmra.mrb[0].mxu0 %v4021
      %v4023 = vpop.f32.mrb[0].mxu0
      %v4024 = vadd.f32 %v3849, %v4023
      %v4025 = vpop.f32.mrb[0].mxu0
      %4026 = vmatprep.mubr.f32.mxu0 0.0
      %v4027 = vand.u32 %v3483, 4294901760
      %v4028 = vsub.f32 %v3483, %v4027
      %4029 = vmatmul.mubr.f32.gmra.mrb[0].mxu0 %v4028
      %v4030 = vpop.f32.mrb[0].mxu0
      %v4031 = vadd.f32 %v3855, %v4030
      %v4032 = vpop.f32.mrb[0].mxu0
      %4033 = vmatprep.mubr.f32.mxu0 0.0
      %v4034 = vand.u32 %v3484, 4294901760
      %v4035 = vsub.f32 %v3484, %v4034
      %4036 = vmatmul.mubr.f32.gmra.mrb[0].mxu0 %v4035
      %v4037 = vpop.f32.mrb[0].mxu0
      %v4038 = vadd.f32 %v3861, %v4037
      %v4039 = vpop.f32.mrb[0].mxu0
      %4040 = vmatprep.mubr.f32.mxu0 0.0
      %v4041 = vand.u32 %v3485, 4294901760
      %v4042 = vsub.f32 %v3485, %v4041
      %4043 = vmatmul.mubr.f32.gmra.mrb[0].mxu0 %v4042
      %v4044 = vpop.f32.mrb[0].mxu0
      %v4045 = vadd.f32 %v3867, %v4044
      %v4046 = vpop.f32.mrb[0].mxu0
      %4047 = vmatprep.mubr.f32.mxu0 0.0
      %v4048 = vand.u32 %v3486, 4294901760
      %v4049 = vsub.f32 %v3486, %v4048
      %4050 = vmatmul.mubr.f32.gmra.mrb[0].mxu0 %v4049
      %v4051 = vpop.f32.mrb[0].mxu0
      %v4052 = vadd.f32 %v3873, %v4051
      %v4053 = vpop.f32.mrb[0].mxu0
      %4054 = vmatprep.mubr.f32.mxu0 0.0
      %v4055 = vand.u32 %v3487, 4294901760
      %v4056 = vsub.f32 %v3487, %v4055
      %4057 = vmatmul.mubr.f32.gmra.mrb[0].mxu0 %v4056
      %v4058 = vpop.f32.mrb[0].mxu0
      %v4059 = vadd.f32 %v3879, %v4058
      %v4060 = vpop.f32.mrb[0].mxu0
      %4061 = vmatprep.mubr.f32.mxu0 0.0
      %v4062 = vand.u32 %v3488, 4294901760
      %v4063 = vsub.f32 %v3488, %v4062
      %4064 = vmatmul.mubr.f32.gmra.mrb[0].mxu0 %v4063
      %v4065 = vpop.f32.mrb[0].mxu0
      %v4066 = vadd.f32 %v3885, %v4065
      %v4067 = vpop.f32.mrb[0].mxu0
      %4068 = vmatprep.mubr.f32.mxu0 0.0
      %v4069 = vand.u32 %v3489, 4294901760
      %v4070 = vsub.f32 %v3489, %v4069
      %4071 = vmatmul.mubr.f32.gmra.mrb[0].mxu0 %v4070
      %v4072 = vpop.f32.mrb[0].mxu0
      %v4073 = vadd.f32 %v3891, %v4072
      %v4074 = vpop.f32.mrb[0].mxu0
      %4075 = vmatprep.mubr.f32.mxu0 0.0
      %v4076 = vand.u32 %v3490, 4294901760
      %v4077 = vsub.f32 %v3490, %v4076
      %4078 = vmatmul.mubr.f32.gmra.mrb[0].mxu0 %v4077
      %v4079 = vpop.f32.mrb[0].mxu0
      %v4080 = vadd.f32 %v3897, %v4079
      %v4081 = vpop.f32.mrb[0].mxu0
      %4082 = vmatprep.mubr.f32.mxu0 0.0
      %v4083 = vand.u32 %v3491, 4294901760
      %v4084 = vsub.f32 %v3491, %v4083
      %4085 = vmatmul.mubr.f32.gmra.mrb[0].mxu0 %v4084
      %v4086 = vpop.f32.mrb[0].mxu0
      %v4087 = vadd.f32 %v3903, %v4086
      %v4088 = vpop.f32.mrb[0].mxu0
      %4089 = vmatprep.mubr.f32.mxu0 0.0
      %v4090 = vand.u32 %v3492, 4294901760
      %v4091 = vsub.f32 %v3492, %v4090
      %4092 = vmatmul.mubr.f32.gmra.mrb[0].mxu0 %v4091
      %v4093 = vpop.f32.mrb[0].mxu0
      %v4094 = vadd.f32 %v3909, %v4093
      %v4095 = vpop.f32.mrb[0].mxu0
      %4096 = vdwg.mxu0
      %4097 = vmatprep.subr.mxu0 0.0
      %v4098 = vand.u32 %v3493, 4294901760
      %4099 = vmatpush1.xpose.msra.mxu0 %v4098
      %4100 = vmatprep.subr.mxu0 0.0
      %v4101 = vand.u32 %v3494, 4294901760
      %4102 = vmatpush1.xpose.msra.mxu0 %v4101
      %4103 = vmatprep.subr.mxu0 0.0
      %v4104 = vand.u32 %v3495, 4294901760
      %4105 = vmatpush1.xpose.msra.mxu0 %v4104
      %4106 = vmatprep.subr.mxu0 0.0
      %v4107 = vand.u32 %v3496, 4294901760
      %4108 = vmatpush1.xpose.msra.mxu0 %v4107
      %4109 = vmatprep.subr.mxu0 0.0
      %4110 = vmatpush1.xpose.msra.mxu0 0.0
      %4111 = vmatprep.subr.mxu0 0.0
      %4112 = vmatpush1.xpose.msra.mxu0 0.0
      %4113 = vmatprep.subr.mxu0 0.0
      %4114 = vmatpush1.xpose.msra.mxu0 0.0
      %4115 = vmatprep.subr.mxu0 0.0
      %4116 = vmatpush1.xpose.msra.mxu0 0.0
      %4117 = vmatprep.subr.mxu0 0.0
      %4118 = vmatpush1.xpose.msra.mxu0 0.0
      %4119 = vmatprep.subr.mxu0 0.0
      %4120 = vmatpush1.xpose.msra.mxu0 0.0
      %4121 = vmatprep.subr.mxu0 0.0
      %4122 = vmatpush1.xpose.msra.mxu0 0.0
      %4123 = vmatprep.subr.mxu0 0.0
      %4124 = vmatpush1.xpose.msra.mxu0 0.0
      %4125 = vmatprep.subr.mxu0 0.0
      %4126 = vmatpush1.xpose.msra.mxu0 0.0
      %4127 = vmatprep.subr.mxu0 0.0
      %4128 = vmatpush1.xpose.msra.mxu0 0.0
      %4129 = vmatprep.subr.mxu0 0.0
      %4130 = vmatpush1.xpose.msra.mxu0 0.0
      %4131 = vmatprep.subr.mxu0 0.0
      %4132 = vmatpush1.xpose.msra.mxu0 0.0
      %4133 = vmatprep.subr.mxu0 0.0
      %4134 = vmatpush1.xpose.msra.mxu0 0.0
      %4135 = vmatprep.subr.mxu0 0.0
      %4136 = vmatpush1.xpose.msra.mxu0 0.0
      %4137 = vmatprep.subr.mxu0 0.0
      %4138 = vmatpush1.xpose.msra.mxu0 0.0
      %4139 = vmatprep.subr.mxu0 0.0
      %4140 = vmatpush1.xpose.msra.mxu0 0.0
      %4141 = vmatprep.subr.mxu0 0.0
      %4142 = vmatpush1.xpose.msra.mxu0 0.0
      %4143 = vmatprep.subr.mxu0 0.0
      %4144 = vmatpush1.xpose.msra.mxu0 0.0
      %4145 = vmatprep.subr.mxu0 0.0
      %4146 = vmatpush1.xpose.msra.mxu0 0.0
      %4147 = vmatprep.subr.mxu0 0.0
      %4148 = vmatpush1.xpose.msra.mxu0 0.0
      %4149 = vmatprep.subr.mxu0 0.0
      %4150 = vmatpush1.xpose.msra.mxu0 0.0
      %4151 = vmatprep.subr.mxu0 0.0
      %4152 = vmatpush1.xpose.msra.mxu0 0.0
      %4153 = vmatprep.subr.mxu0 0.0
      %4154 = vmatpush1.xpose.msra.mxu0 0.0
      %4155 = vmatprep.subr.mxu0 0.0
      %4156 = vmatpush1.xpose.msra.mxu0 0.0
      %4157 = vmatprep.subr.mxu0 0.0
      %4158 = vmatpush1.xpose.msra.mxu0 0.0
      %4159 = vmatprep.subr.mxu0 0.0
      %4160 = vmatpush1.xpose.msra.mxu0 0.0
      %4161 = vmatprep.subr.mxu0 0.0
      %4162 = vmatpush1.xpose.msra.mxu0 0.0
      %4163 = vmatprep.subr.mxu0 0.0
      %4164 = vmatpush1.xpose.msra.mxu0 0.0
      %4165 = vmatprep.mubr.f32.mxu0 0.0
      %v4166 = vand.u32 %v3477, 4294901760
      %v4167 = vsub.f32 %v3477, %v4166
      %v4168 = vand.u32 %v4167, 4294901760
      %4169 = vmatmul.mubr.f32.gmra.mrb[0].mxu0 %v4168
      %v4170 = vpop.f32.mrb[0].mxu0
      %v4171 = vadd.f32 %v3989, %v4170
      %v4172 = vpop.f32.mrb[0].mxu0
      %4173 = vmatprep.mubr.f32.mxu0 0.0
      %v4174 = vand.u32 %v3478, 4294901760
      %v4175 = vsub.f32 %v3478, %v4174
      %v4176 = vand.u32 %v4175, 4294901760
      %4177 = vmatmul.mubr.f32.gmra.mrb[0].mxu0 %v4176
      %v4178 = vpop.f32.mrb[0].mxu0
      %v4179 = vadd.f32 %v3996, %v4178
      %v4180 = vpop.f32.mrb[0].mxu0
      %4181 = vmatprep.mubr.f32.mxu0 0.0
      %v4182 = vand.u32 %v3479, 4294901760
      %v4183 = vsub.f32 %v3479, %v4182
      %v4184 = vand.u32 %v4183, 4294901760
      %4185 = vmatmul.mubr.f32.gmra.mrb[0].mxu0 %v4184
      %v4186 = vpop.f32.mrb[0].mxu0
      %v4187 = vadd.f32 %v4003, %v4186
      %v4188 = vpop.f32.mrb[0].mxu0
      %4189 = vmatprep.mubr.f32.mxu0 0.0
      %v4190 = vand.u32 %v3480, 4294901760
      %v4191 = vsub.f32 %v3480, %v4190
      %v4192 = vand.u32 %v4191, 4294901760
      %4193 = vmatmul.mubr.f32.gmra.mrb[0].mxu0 %v4192
      %v4194 = vpop.f32.mrb[0].mxu0
      %v4195 = vadd.f32 %v4010, %v4194
      %v4196 = vpop.f32.mrb[0].mxu0
      %4197 = vmatprep.mubr.f32.mxu0 0.0
      %v4198 = vand.u32 %v3481, 4294901760
      %v4199 = vsub.f32 %v3481, %v4198
      %v4200 = vand.u32 %v4199, 4294901760
      %4201 = vmatmul.mubr.f32.gmra.mrb[0].mxu0 %v4200
      %v4202 = vpop.f32.mrb[0].mxu0
      %v4203 = vadd.f32 %v4017, %v4202
      %v4204 = vpop.f32.mrb[0].mxu0
      %4205 = vmatprep.mubr.f32.mxu0 0.0
      %v4206 = vand.u32 %v3482, 4294901760
      %v4207 = vsub.f32 %v3482, %v4206
      %v4208 = vand.u32 %v4207, 4294901760
      %4209 = vmatmul.mubr.f32.gmra.mrb[0].mxu0 %v4208
      %v4210 = vpop.f32.mrb[0].mxu0
      %v4211 = vadd.f32 %v4024, %v4210
      %v4212 = vpop.f32.mrb[0].mxu0
      %4213 = vmatprep.mubr.f32.mxu0 0.0
      %v4214 = vand.u32 %v3483, 4294901760
      %v4215 = vsub.f32 %v3483, %v4214
      %v4216 = vand.u32 %v4215, 4294901760
      %4217 = vmatmul.mubr.f32.gmra.mrb[0].mxu0 %v4216
      %v4218 = vpop.f32.mrb[0].mxu0
      %v4219 = vadd.f32 %v4031, %v4218
      %v4220 = vpop.f32.mrb[0].mxu0
      %4221 = vmatprep.mubr.f32.mxu0 0.0
      %v4222 = vand.u32 %v3484, 4294901760
      %v4223 = vsub.f32 %v3484, %v4222
      %v4224 = vand.u32 %v4223, 4294901760
      %4225 = vmatmul.mubr.f32.gmra.mrb[0].mxu0 %v4224
      %v4226 = vpop.f32.mrb[0].mxu0
      %v4227 = vadd.f32 %v4038, %v4226
      %v4228 = vpop.f32.mrb[0].mxu0
      %4229 = vmatprep.mubr.f32.mxu0 0.0
      %v4230 = vand.u32 %v3485, 4294901760
      %v4231 = vsub.f32 %v3485, %v4230
      %v4232 = vand.u32 %v4231, 4294901760
      %4233 = vmatmul.mubr.f32.gmra.mrb[0].mxu0 %v4232
      %v4234 = vpop.f32.mrb[0].mxu0
      %v4235 = vadd.f32 %v4045, %v4234
      %v4236 = vpop.f32.mrb[0].mxu0
      %4237 = vmatprep.mubr.f32.mxu0 0.0
      %v4238 = vand.u32 %v3486, 4294901760
      %v4239 = vsub.f32 %v3486, %v4238
      %v4240 = vand.u32 %v4239, 4294901760
      %4241 = vmatmul.mubr.f32.gmra.mrb[0].mxu0 %v4240
      %v4242 = vpop.f32.mrb[0].mxu0
      %v4243 = vadd.f32 %v4052, %v4242
      %v4244 = vpop.f32.mrb[0].mxu0
      %4245 = vmatprep.mubr.f32.mxu0 0.0
      %v4246 = vand.u32 %v3487, 4294901760
      %v4247 = vsub.f32 %v3487, %v4246
      %v4248 = vand.u32 %v4247, 4294901760
      %4249 = vmatmul.mubr.f32.gmra.mrb[0].mxu0 %v4248
      %v4250 = vpop.f32.mrb[0].mxu0
      %v4251 = vadd.f32 %v4059, %v4250
      %v4252 = vpop.f32.mrb[0].mxu0
      %4253 = vmatprep.mubr.f32.mxu0 0.0
      %v4254 = vand.u32 %v3488, 4294901760
      %v4255 = vsub.f32 %v3488, %v4254
      %v4256 = vand.u32 %v4255, 4294901760
      %4257 = vmatmul.mubr.f32.gmra.mrb[0].mxu0 %v4256
      %v4258 = vpop.f32.mrb[0].mxu0
      %v4259 = vadd.f32 %v4066, %v4258
      %v4260 = vpop.f32.mrb[0].mxu0
      %4261 = vmatprep.mubr.f32.mxu0 0.0
      %v4262 = vand.u32 %v3489, 4294901760
      %v4263 = vsub.f32 %v3489, %v4262
      %v4264 = vand.u32 %v4263, 4294901760
      %4265 = vmatmul.mubr.f32.gmra.mrb[0].mxu0 %v4264
      %v4266 = vpop.f32.mrb[0].mxu0
      %v4267 = vadd.f32 %v4073, %v4266
      %v4268 = vpop.f32.mrb[0].mxu0
      %4269 = vmatprep.mubr.f32.mxu0 0.0
      %v4270 = vand.u32 %v3490, 4294901760
      %v4271 = vsub.f32 %v3490, %v4270
      %v4272 = vand.u32 %v4271, 4294901760
      %4273 = vmatmul.mubr.f32.gmra.mrb[0].mxu0 %v4272
      %v4274 = vpop.f32.mrb[0].mxu0
      %v4275 = vadd.f32 %v4080, %v4274
      %v4276 = vpop.f32.mrb[0].mxu0
      %4277 = vmatprep.mubr.f32.mxu0 0.0
      %v4278 = vand.u32 %v3491, 4294901760
      %v4279 = vsub.f32 %v3491, %v4278
      %v4280 = vand.u32 %v4279, 4294901760
      %4281 = vmatmul.mubr.f32.gmra.mrb[0].mxu0 %v4280
      %v4282 = vpop.f32.mrb[0].mxu0
      %v4283 = vadd.f32 %v4087, %v4282
      %v4284 = vpop.f32.mrb[0].mxu0
      %4285 = vmatprep.mubr.f32.mxu0 0.0
      %v4286 = vand.u32 %v3492, 4294901760
      %v4287 = vsub.f32 %v3492, %v4286
      %v4288 = vand.u32 %v4287, 4294901760
      %4289 = vmatmul.mubr.f32.gmra.mrb[0].mxu0 %v4288
      %v4290 = vpop.f32.mrb[0].mxu0
      %v4291 = vadd.f32 %v4094, %v4290
      %v4292 = vpop.f32.mrb[0].mxu0
      %4293 = vdwg.mxu0
      %4294 = vmatprep.subr.mxu0 0.0
      %v4295 = vand.u32 %v3493, 4294901760
      %v4296 = vsub.f32 %v3493, %v4295
      %v4297 = vand.u32 %v4296, 4294901760
      %4298 = vmatpush1.xpose.msra.mxu0 %v4297
      %4299 = vmatprep.subr.mxu0 0.0
      %v4300 = vand.u32 %v3494, 4294901760
      %v4301 = vsub.f32 %v3494, %v4300
      %v4302 = vand.u32 %v4301, 4294901760
      %4303 = vmatpush1.xpose.msra.mxu0 %v4302
      %4304 = vmatprep.subr.mxu0 0.0
      %v4305 = vand.u32 %v3495, 4294901760
      %v4306 = vsub.f32 %v3495, %v4305
      %v4307 = vand.u32 %v4306, 4294901760
      %4308 = vmatpush1.xpose.msra.mxu0 %v4307
      %4309 = vmatprep.subr.mxu0 0.0
      %v4310 = vand.u32 %v3496, 4294901760
      %v4311 = vsub.f32 %v3496, %v4310
      %v4312 = vand.u32 %v4311, 4294901760
      %4313 = vmatpush1.xpose.msra.mxu0 %v4312
      %4314 = vmatprep.subr.mxu0 0.0
      %4315 = vmatpush1.xpose.msra.mxu0 0.0
      %4316 = vmatprep.subr.mxu0 0.0
      %4317 = vmatpush1.xpose.msra.mxu0 0.0
      %4318 = vmatprep.subr.mxu0 0.0
      %4319 = vmatpush1.xpose.msra.mxu0 0.0
      %4320 = vmatprep.subr.mxu0 0.0
      %4321 = vmatpush1.xpose.msra.mxu0 0.0
      %4322 = vmatprep.subr.mxu0 0.0
      %4323 = vmatpush1.xpose.msra.mxu0 0.0
      %4324 = vmatprep.subr.mxu0 0.0
      %4325 = vmatpush1.xpose.msra.mxu0 0.0
      %4326 = vmatprep.subr.mxu0 0.0
      %4327 = vmatpush1.xpose.msra.mxu0 0.0
      %4328 = vmatprep.subr.mxu0 0.0
      %4329 = vmatpush1.xpose.msra.mxu0 0.0
      %4330 = vmatprep.subr.mxu0 0.0
      %4331 = vmatpush1.xpose.msra.mxu0 0.0
      %4332 = vmatprep.subr.mxu0 0.0
      %4333 = vmatpush1.xpose.msra.mxu0 0.0
      %4334 = vmatprep.subr.mxu0 0.0
      %4335 = vmatpush1.xpose.msra.mxu0 0.0
      %4336 = vmatprep.subr.mxu0 0.0
      %4337 = vmatpush1.xpose.msra.mxu0 0.0
      %4338 = vmatprep.subr.mxu0 0.0
      %4339 = vmatpush1.xpose.msra.mxu0 0.0
      %4340 = vmatprep.subr.mxu0 0.0
      %4341 = vmatpush1.xpose.msra.mxu0 0.0
      %4342 = vmatprep.subr.mxu0 0.0
      %4343 = vmatpush1.xpose.msra.mxu0 0.0
      %4344 = vmatprep.subr.mxu0 0.0
      %4345 = vmatpush1.xpose.msra.mxu0 0.0
      %4346 = vmatprep.subr.mxu0 0.0
      %4347 = vmatpush1.xpose.msra.mxu0 0.0
      %4348 = vmatprep.subr.mxu0 0.0
      %4349 = vmatpush1.xpose.msra.mxu0 0.0
      %4350 = vmatprep.subr.mxu0 0.0
      %4351 = vmatpush1.xpose.msra.mxu0 0.0
      %4352 = vmatprep.subr.mxu0 0.0
      %4353 = vmatpush1.xpose.msra.mxu0 0.0
      %4354 = vmatprep.subr.mxu0 0.0
      %4355 = vmatpush1.xpose.msra.mxu0 0.0
      %4356 = vmatprep.subr.mxu0 0.0
      %4357 = vmatpush1.xpose.msra.mxu0 0.0
      %4358 = vmatprep.subr.mxu0 0.0
      %4359 = vmatpush1.xpose.msra.mxu0 0.0
      %4360 = vmatprep.subr.mxu0 0.0
      %4361 = vmatpush1.xpose.msra.mxu0 0.0
      %4362 = vmatprep.subr.mxu0 0.0
      %4363 = vmatpush1.xpose.msra.mxu0 0.0
      %4364 = vmatprep.subr.mxu0 0.0
      %4365 = vmatpush1.xpose.msra.mxu0 0.0
      %4366 = vmatprep.subr.mxu0 0.0
      %4367 = vmatpush1.xpose.msra.mxu0 0.0
      %4368 = vmatprep.subr.mxu0 0.0
      %4369 = vmatpush1.xpose.msra.mxu0 0.0
      %4370 = vmatprep.mubr.f32.mxu0 0.0
      %v4371 = vand.u32 %v3477, 4294901760
      %4372 = vmatmul.mubr.f32.gmra.mrb[0].mxu0 %v4371
      %v4373 = vpop.f32.mrb[0].mxu0
      %v4374 = vadd.f32 %v4171, %v4373
      %v4375 = vpop.f32.mrb[0].mxu0
      %4376 = vmatprep.mubr.f32.mxu0 0.0
      %v4377 = vand.u32 %v3478, 4294901760
      %4378 = vmatmul.mubr.f32.gmra.mrb[0].mxu0 %v4377
      %v4379 = vpop.f32.mrb[0].mxu0
      %v4380 = vadd.f32 %v4179, %v4379
      %v4381 = vpop.f32.mrb[0].mxu0
      %4382 = vmatprep.mubr.f32.mxu0 0.0
      %v4383 = vand.u32 %v3479, 4294901760
      %4384 = vmatmul.mubr.f32.gmra.mrb[0].mxu0 %v4383
      %v4385 = vpop.f32.mrb[0].mxu0
      %v4386 = vadd.f32 %v4187, %v4385
      %v4387 = vpop.f32.mrb[0].mxu0
      %4388 = vmatprep.mubr.f32.mxu0 0.0
      %v4389 = vand.u32 %v3480, 4294901760
      %4390 = vmatmul.mubr.f32.gmra.mrb[0].mxu0 %v4389
      %v4391 = vpop.f32.mrb[0].mxu0
      %v4392 = vadd.f32 %v4195, %v4391
      %v4393 = vpop.f32.mrb[0].mxu0
      %4394 = vmatprep.mubr.f32.mxu0 0.0
      %v4395 = vand.u32 %v3481, 4294901760
      %4396 = vmatmul.mubr.f32.gmra.mrb[0].mxu0 %v4395
      %v4397 = vpop.f32.mrb[0].mxu0
      %v4398 = vadd.f32 %v4203, %v4397
      %v4399 = vpop.f32.mrb[0].mxu0
      %4400 = vmatprep.mubr.f32.mxu0 0.0
      %v4401 = vand.u32 %v3482, 4294901760
      %4402 = vmatmul.mubr.f32.gmra.mrb[0].mxu0 %v4401
      %v4403 = vpop.f32.mrb[0].mxu0
      %v4404 = vadd.f32 %v4211, %v4403
      %v4405 = vpop.f32.mrb[0].mxu0
      %4406 = vmatprep.mubr.f32.mxu0 0.0
      %v4407 = vand.u32 %v3483, 4294901760
      %4408 = vmatmul.mubr.f32.gmra.mrb[0].mxu0 %v4407
      %v4409 = vpop.f32.mrb[0].mxu0
      %v4410 = vadd.f32 %v4219, %v4409
      %v4411 = vpop.f32.mrb[0].mxu0
      %4412 = vmatprep.mubr.f32.mxu0 0.0
      %v4413 = vand.u32 %v3484, 4294901760
      %4414 = vmatmul.mubr.f32.gmra.mrb[0].mxu0 %v4413
      %v4415 = vpop.f32.mrb[0].mxu0
      %v4416 = vadd.f32 %v4227, %v4415
      %v4417 = vpop.f32.mrb[0].mxu0
      %4418 = vmatprep.mubr.f32.mxu0 0.0
      %v4419 = vand.u32 %v3485, 4294901760
      %4420 = vmatmul.mubr.f32.gmra.mrb[0].mxu0 %v4419
      %v4421 = vpop.f32.mrb[0].mxu0
      %v4422 = vadd.f32 %v4235, %v4421
      %v4423 = vpop.f32.mrb[0].mxu0
      %4424 = vmatprep.mubr.f32.mxu0 0.0
      %v4425 = vand.u32 %v3486, 4294901760
      %4426 = vmatmul.mubr.f32.gmra.mrb[0].mxu0 %v4425
      %v4427 = vpop.f32.mrb[0].mxu0
      %v4428 = vadd.f32 %v4243, %v4427
      %v4429 = vpop.f32.mrb[0].mxu0
      %4430 = vmatprep.mubr.f32.mxu0 0.0
      %v4431 = vand.u32 %v3487, 4294901760
      %4432 = vmatmul.mubr.f32.gmra.mrb[0].mxu0 %v4431
      %v4433 = vpop.f32.mrb[0].mxu0
      %v4434 = vadd.f32 %v4251, %v4433
      %v4435 = vpop.f32.mrb[0].mxu0
      %4436 = vmatprep.mubr.f32.mxu0 0.0
      %v4437 = vand.u32 %v3488, 4294901760
      %4438 = vmatmul.mubr.f32.gmra.mrb[0].mxu0 %v4437
      %v4439 = vpop.f32.mrb[0].mxu0
      %v4440 = vadd.f32 %v4259, %v4439
      %v4441 = vpop.f32.mrb[0].mxu0
      %4442 = vmatprep.mubr.f32.mxu0 0.0
      %v4443 = vand.u32 %v3489, 4294901760
      %4444 = vmatmul.mubr.f32.gmra.mrb[0].mxu0 %v4443
      %v4445 = vpop.f32.mrb[0].mxu0
      %v4446 = vadd.f32 %v4267, %v4445
      %v4447 = vpop.f32.mrb[0].mxu0
      %4448 = vmatprep.mubr.f32.mxu0 0.0
      %v4449 = vand.u32 %v3490, 4294901760
      %4450 = vmatmul.mubr.f32.gmra.mrb[0].mxu0 %v4449
      %v4451 = vpop.f32.mrb[0].mxu0
      %v4452 = vadd.f32 %v4275, %v4451
      %v4453 = vpop.f32.mrb[0].mxu0
      %4454 = vmatprep.mubr.f32.mxu0 0.0
      %v4455 = vand.u32 %v3491, 4294901760
      %4456 = vmatmul.mubr.f32.gmra.mrb[0].mxu0 %v4455
      %v4457 = vpop.f32.mrb[0].mxu0
      %v4458 = vadd.f32 %v4283, %v4457
      %v4459 = vpop.f32.mrb[0].mxu0
      %4460 = vmatprep.mubr.f32.mxu0 0.0
      %v4461 = vand.u32 %v3492, 4294901760
      %4462 = vmatmul.mubr.f32.gmra.mrb[0].mxu0 %v4461
      %v4463 = vpop.f32.mrb[0].mxu0
      %v4464 = vadd.f32 %v4291, %v4463
      %v4465 = vpop.f32.mrb[0].mxu0
      %4466 = vdwg.mxu0
      %4467 = vmatprep.subr.mxu0 0.0
      %v4468 = vand.u32 %v3493, 4294901760
      %4469 = vmatpush1.xpose.msra.mxu0 %v4468
      %4470 = vmatprep.subr.mxu0 0.0
      %v4471 = vand.u32 %v3494, 4294901760
      %4472 = vmatpush1.xpose.msra.mxu0 %v4471
      %4473 = vmatprep.subr.mxu0 0.0
      %v4474 = vand.u32 %v3495, 4294901760
      %4475 = vmatpush1.xpose.msra.mxu0 %v4474
      %4476 = vmatprep.subr.mxu0 0.0
      %v4477 = vand.u32 %v3496, 4294901760
      %4478 = vmatpush1.xpose.msra.mxu0 %v4477
      %4479 = vmatprep.subr.mxu0 0.0
      %4480 = vmatpush1.xpose.msra.mxu0 0.0
      %4481 = vmatprep.subr.mxu0 0.0
      %4482 = vmatpush1.xpose.msra.mxu0 0.0
      %4483 = vmatprep.subr.mxu0 0.0
      %4484 = vmatpush1.xpose.msra.mxu0 0.0
      %4485 = vmatprep.subr.mxu0 0.0
      %4486 = vmatpush1.xpose.msra.mxu0 0.0
      %4487 = vmatprep.subr.mxu0 0.0
      %4488 = vmatpush1.xpose.msra.mxu0 0.0
      %4489 = vmatprep.subr.mxu0 0.0
      %4490 = vmatpush1.xpose.msra.mxu0 0.0
      %4491 = vmatprep.subr.mxu0 0.0
      %4492 = vmatpush1.xpose.msra.mxu0 0.0
      %4493 = vmatprep.subr.mxu0 0.0
      %4494 = vmatpush1.xpose.msra.mxu0 0.0
      %4495 = vmatprep.subr.mxu0 0.0
      %4496 = vmatpush1.xpose.msra.mxu0 0.0
      %4497 = vmatprep.subr.mxu0 0.0
      %4498 = vmatpush1.xpose.msra.mxu0 0.0
      %4499 = vmatprep.subr.mxu0 0.0
      %4500 = vmatpush1.xpose.msra.mxu0 0.0
      %4501 = vmatprep.subr.mxu0 0.0
      %4502 = vmatpush1.xpose.msra.mxu0 0.0
      %4503 = vmatprep.subr.mxu0 0.0
      %4504 = vmatpush1.xpose.msra.mxu0 0.0
      %4505 = vmatprep.subr.mxu0 0.0
      %4506 = vmatpush1.xpose.msra.mxu0 0.0
      %4507 = vmatprep.subr.mxu0 0.0
      %4508 = vmatpush1.xpose.msra.mxu0 0.0
      %4509 = vmatprep.subr.mxu0 0.0
      %4510 = vmatpush1.xpose.msra.mxu0 0.0
      %4511 = vmatprep.subr.mxu0 0.0
      %4512 = vmatpush1.xpose.msra.mxu0 0.0
      %4513 = vmatprep.subr.mxu0 0.0
      %4514 = vmatpush1.xpose.msra.mxu0 0.0
      %4515 = vmatprep.subr.mxu0 0.0
      %4516 = vmatpush1.xpose.msra.mxu0 0.0
      %4517 = vmatprep.subr.mxu0 0.0
      %4518 = vmatpush1.xpose.msra.mxu0 0.0
      %4519 = vmatprep.subr.mxu0 0.0
      %4520 = vmatpush1.xpose.msra.mxu0 0.0
      %4521 = vmatprep.subr.mxu0 0.0
      %4522 = vmatpush1.xpose.msra.mxu0 0.0
      %4523 = vmatprep.subr.mxu0 0.0
      %4524 = vmatpush1.xpose.msra.mxu0 0.0
      %4525 = vmatprep.subr.mxu0 0.0
      %4526 = vmatpush1.xpose.msra.mxu0 0.0
      %4527 = vmatprep.subr.mxu0 0.0
      %4528 = vmatpush1.xpose.msra.mxu0 0.0
      %4529 = vmatprep.subr.mxu0 0.0
      %4530 = vmatpush1.xpose.msra.mxu0 0.0
      %4531 = vmatprep.subr.mxu0 0.0
      %4532 = vmatpush1.xpose.msra.mxu0 0.0
      %4533 = vmatprep.subr.mxu0 0.0
      %4534 = vmatpush1.xpose.msra.mxu0 0.0
      %4535 = vmatprep.mubr.f32.mxu0 0.0
      %v4536 = vand.u32 %v3477, 4294901760
      %4537 = vmatmul.mubr.f32.gmra.mrb[0].mxu0 %v4536
      %v4538 = vpop.f32.mrb[0].mxu0
      %v4539 = vadd.f32 %v4374, %v4538
      %v4540 = vpop.f32.mrb[0].mxu0
      %4541 = vmatprep.mubr.f32.mxu0 0.0
      %v4542 = vand.u32 %v3478, 4294901760
      %4543 = vmatmul.mubr.f32.gmra.mrb[0].mxu0 %v4542
      %v4544 = vpop.f32.mrb[0].mxu0
      %v4545 = vadd.f32 %v4380, %v4544
      %v4546 = vpop.f32.mrb[0].mxu0
      %4547 = vmatprep.mubr.f32.mxu0 0.0
      %v4548 = vand.u32 %v3479, 4294901760
      %4549 = vmatmul.mubr.f32.gmra.mrb[0].mxu0 %v4548
      %v4550 = vpop.f32.mrb[0].mxu0
      %v4551 = vadd.f32 %v4386, %v4550
      %v4552 = vpop.f32.mrb[0].mxu0
      %4553 = vmatprep.mubr.f32.mxu0 0.0
      %v4554 = vand.u32 %v3480, 4294901760
      %4555 = vmatmul.mubr.f32.gmra.mrb[0].mxu0 %v4554
      %v4556 = vpop.f32.mrb[0].mxu0
      %v4557 = vadd.f32 %v4392, %v4556
      %v4558 = vpop.f32.mrb[0].mxu0
      %4559 = vmatprep.mubr.f32.mxu0 0.0
      %v4560 = vand.u32 %v3481, 4294901760
      %4561 = vmatmul.mubr.f32.gmra.mrb[0].mxu0 %v4560
      %v4562 = vpop.f32.mrb[0].mxu0
      %v4563 = vadd.f32 %v4398, %v4562
      %v4564 = vpop.f32.mrb[0].mxu0
      %4565 = vmatprep.mubr.f32.mxu0 0.0
      %v4566 = vand.u32 %v3482, 4294901760
      %4567 = vmatmul.mubr.f32.gmra.mrb[0].mxu0 %v4566
      %v4568 = vpop.f32.mrb[0].mxu0
      %v4569 = vadd.f32 %v4404, %v4568
      %v4570 = vpop.f32.mrb[0].mxu0
      %4571 = vmatprep.mubr.f32.mxu0 0.0
      %v4572 = vand.u32 %v3483, 4294901760
      %4573 = vmatmul.mubr.f32.gmra.mrb[0].mxu0 %v4572
      %v4574 = vpop.f32.mrb[0].mxu0
      %v4575 = vadd.f32 %v4410, %v4574
      %v4576 = vpop.f32.mrb[0].mxu0
      %4577 = vmatprep.mubr.f32.mxu0 0.0
      %v4578 = vand.u32 %v3484, 4294901760
      %4579 = vmatmul.mubr.f32.gmra.mrb[0].mxu0 %v4578
      %v4580 = vpop.f32.mrb[0].mxu0
      %v4581 = vadd.f32 %v4416, %v4580
      %v4582 = vpop.f32.mrb[0].mxu0
      %4583 = vmatprep.mubr.f32.mxu0 0.0
      %v4584 = vand.u32 %v3485, 4294901760
      %4585 = vmatmul.mubr.f32.gmra.mrb[0].mxu0 %v4584
      %v4586 = vpop.f32.mrb[0].mxu0
      %v4587 = vadd.f32 %v4422, %v4586
      %v4588 = vpop.f32.mrb[0].mxu0
      %4589 = vmatprep.mubr.f32.mxu0 0.0
      %v4590 = vand.u32 %v3486, 4294901760
      %4591 = vmatmul.mubr.f32.gmra.mrb[0].mxu0 %v4590
      %v4592 = vpop.f32.mrb[0].mxu0
      %v4593 = vadd.f32 %v4428, %v4592
      %v4594 = vpop.f32.mrb[0].mxu0
      %4595 = vmatprep.mubr.f32.mxu0 0.0
      %v4596 = vand.u32 %v3487, 4294901760
      %4597 = vmatmul.mubr.f32.gmra.mrb[0].mxu0 %v4596
      %v4598 = vpop.f32.mrb[0].mxu0
      %v4599 = vadd.f32 %v4434, %v4598
      %v4600 = vpop.f32.mrb[0].mxu0
      %4601 = vmatprep.mubr.f32.mxu0 0.0
      %v4602 = vand.u32 %v3488, 4294901760
      %4603 = vmatmul.mubr.f32.gmra.mrb[0].mxu0 %v4602
      %v4604 = vpop.f32.mrb[0].mxu0
      %v4605 = vadd.f32 %v4440, %v4604
      %v4606 = vpop.f32.mrb[0].mxu0
      %4607 = vmatprep.mubr.f32.mxu0 0.0
      %v4608 = vand.u32 %v3489, 4294901760
      %4609 = vmatmul.mubr.f32.gmra.mrb[0].mxu0 %v4608
      %v4610 = vpop.f32.mrb[0].mxu0
      %v4611 = vadd.f32 %v4446, %v4610
      %v4612 = vpop.f32.mrb[0].mxu0
      %4613 = vmatprep.mubr.f32.mxu0 0.0
      %v4614 = vand.u32 %v3490, 4294901760
      %4615 = vmatmul.mubr.f32.gmra.mrb[0].mxu0 %v4614
      %v4616 = vpop.f32.mrb[0].mxu0
      %v4617 = vadd.f32 %v4452, %v4616
      %v4618 = vpop.f32.mrb[0].mxu0
      %4619 = vmatprep.mubr.f32.mxu0 0.0
      %v4620 = vand.u32 %v3491, 4294901760
      %4621 = vmatmul.mubr.f32.gmra.mrb[0].mxu0 %v4620
      %v4622 = vpop.f32.mrb[0].mxu0
      %v4623 = vadd.f32 %v4458, %v4622
      %v4624 = vpop.f32.mrb[0].mxu0
      %4625 = vmatprep.mubr.f32.mxu0 0.0
      %v4626 = vand.u32 %v3492, 4294901760
      %4627 = vmatmul.mubr.f32.gmra.mrb[0].mxu0 %v4626
      %v4628 = vpop.f32.mrb[0].mxu0
      %v4629 = vadd.f32 %v4464, %v4628
      %v4630 = vpop.f32.mrb[0].mxu0
      %4631 = vdwg.mxu0
      %v4632 = vmax.f32 %v4539, 0.0
      %v4633 = vmax.f32 %v4545, 0.0
      %v4634 = vmax.f32 %v4551, 0.0
      %v4635 = vmax.f32 %v4557, 0.0
      %v4636 = vmax.f32 %v4563, 0.0
      %v4637 = vmax.f32 %v4569, 0.0
      %v4638 = vmax.f32 %v4575, 0.0
      %v4639 = vmax.f32 %v4581, 0.0
      %v4640 = vmax.f32 %v4587, 0.0
      %v4641 = vmax.f32 %v4593, 0.0
      %v4642 = vmax.f32 %v4599, 0.0
      %v4643 = vmax.f32 %v4605, 0.0
      %v4644 = vmax.f32 %v4611, 0.0
      %v4645 = vmax.f32 %v4617, 0.0
      %v4646 = vmax.f32 %v4623, 0.0
      %v4647 = vmax.f32 %v4629, 0.0
      %v4648 = vld [vmem:[%s1 + $0xd0] sm:$0xff]
      %v4649 = vld [vmem:[%s1 + $0xd8] sm:$0xff]
      %v4650 = vld [vmem:[%s1 + $0xe0] sm:$0xff]
      %v4651 = vld [vmem:[%s1 + $0xe8] sm:$0xff]
      %v4652 = vld [vmem:[%s1 + $0x114] sm:$0x1]
      %v4653 = vlaneseq
      %v4654 = vshrl.u32 %v4653, 7
      %v4655 = vsub.s32 0, %v4654
      %v4656 = vrot.slane %v4652, %v4655
      %v4658 = vsel %vm219, %v4632, 0
      %v4661 = vsel %vm219, %v4633, 0
      %v4664 = vsel %vm219, %v4634, 0
      %v4667 = vsel %vm219, %v4635, 0
      %v4670 = vsel %vm219, %v4636, 0
      %v4673 = vsel %vm219, %v4637, 0
      %v4676 = vsel %vm219, %v4638, 0
      %v4679 = vsel %vm219, %v4639, 0
      %v4682 = vsel %vm219, %v4640, 0
      %v4685 = vsel %vm219, %v4641, 0
      %v4688 = vsel %vm219, %v4642, 0
      %v4691 = vsel %vm219, %v4643, 0
      %v4694 = vsel %vm219, %v4644, 0
      %v4697 = vsel %vm219, %v4645, 0
      %v4700 = vsel %vm219, %v4646, 0
      %v4703 = vsel %vm219, %v4647, 0
      %4705 = vmatprep.subr.mxu0 0.0
      %v4706 = vand.u32 %v4648, 4294901760
      %4707 = vmatpush1.msra.mxu0 %v4706
      %4708 = vmatprep.subr.mxu0 0.0
      %v4709 = vand.u32 %v4649, 4294901760
      %4710 = vmatpush1.msra.mxu0 %v4709
      %4711 = vmatprep.subr.mxu0 0.0
      %v4712 = vand.u32 %v4650, 4294901760
      %4713 = vmatpush1.msra.mxu0 %v4712
      %4714 = vmatprep.subr.mxu0 0.0
      %v4715 = vand.u32 %v4651, 4294901760
      %4716 = vmatpush1.msra.mxu0 %v4715
      %4717 = vmatprep.subr.mxu0 0.0
      %4718 = vmatpush1.msra.mxu0 0.0
      %4719 = vmatprep.subr.mxu0 0.0
      %4720 = vmatpush1.msra.mxu0 0.0
      %4721 = vmatprep.subr.mxu0 0.0
      %4722 = vmatpush1.msra.mxu0 0.0
      %4723 = vmatprep.subr.mxu0 0.0
      %4724 = vmatpush1.msra.mxu0 0.0
      %4725 = vmatprep.subr.mxu0 0.0
      %4726 = vmatpush1.msra.mxu0 0.0
      %4727 = vmatprep.subr.mxu0 0.0
      %4728 = vmatpush1.msra.mxu0 0.0
      %4729 = vmatprep.subr.mxu0 0.0
      %4730 = vmatpush1.msra.mxu0 0.0
      %4731 = vmatprep.subr.mxu0 0.0
      %4732 = vmatpush1.msra.mxu0 0.0
      %4733 = vmatprep.subr.mxu0 0.0
      %4734 = vmatpush1.msra.mxu0 0.0
      %4735 = vmatprep.subr.mxu0 0.0
      %4736 = vmatpush1.msra.mxu0 0.0
      %4737 = vmatprep.subr.mxu0 0.0
      %4738 = vmatpush1.msra.mxu0 0.0
      %4739 = vmatprep.subr.mxu0 0.0
      %4740 = vmatpush1.msra.mxu0 0.0
      %4741 = vmatprep.subr.mxu0 0.0
      %4742 = vmatpush1.msra.mxu0 0.0
      %4743 = vmatprep.subr.mxu0 0.0
      %4744 = vmatpush1.msra.mxu0 0.0
      %4745 = vmatprep.subr.mxu0 0.0
      %4746 = vmatpush1.msra.mxu0 0.0
      %4747 = vmatprep.subr.mxu0 0.0
      %4748 = vmatpush1.msra.mxu0 0.0
      %4749 = vmatprep.subr.mxu0 0.0
      %4750 = vmatpush1.msra.mxu0 0.0
      %4751 = vmatprep.subr.mxu0 0.0
      %4752 = vmatpush1.msra.mxu0 0.0
      %4753 = vmatprep.subr.mxu0 0.0
      %4754 = vmatpush1.msra.mxu0 0.0
      %4755 = vmatprep.subr.mxu0 0.0
      %4756 = vmatpush1.msra.mxu0 0.0
      %4757 = vmatprep.subr.mxu0 0.0
      %4758 = vmatpush1.msra.mxu0 0.0
      %4759 = vmatprep.subr.mxu0 0.0
      %4760 = vmatpush1.msra.mxu0 0.0
      %4761 = vmatprep.subr.mxu0 0.0
      %4762 = vmatpush1.msra.mxu0 0.0
      %4763 = vmatprep.subr.mxu0 0.0
      %4764 = vmatpush1.msra.mxu0 0.0
      %4765 = vmatprep.subr.mxu0 0.0
      %4766 = vmatpush1.msra.mxu0 0.0
      %4767 = vmatprep.subr.mxu0 0.0
      %4768 = vmatpush1.msra.mxu0 0.0
      %4769 = vmatprep.subr.mxu0 0.0
      %4770 = vmatpush1.msra.mxu0 0.0
      %4771 = vmatprep.subr.mxu0 0.0
      %4772 = vmatpush1.msra.mxu0 0.0
      %4773 = vmatprep.mubr.f32.mxu0 0.0
      %v4774 = vand.u32 %v4658, 4294901760
      %v4775 = vsub.f32 %v4658, %v4774
      %v4776 = vand.u32 %v4775, 4294901760
      %v4777 = vsub.f32 %v4775, %v4776
      %v4778 = vand.u32 %v4777, 4294901760
      %4779 = vmatmul.mubr.f32.gmra.mrb[0].mxu0 %v4778
      %v4780 = vpop.f32.mrb[0].mxu0
      %v4781 = vadd.f32 %v4656, %v4780
      %v4782 = vpop.f32.mrb[0].mxu0
      %4783 = vmatprep.mubr.f32.mxu0 0.0
      %v4784 = vand.u32 %v4661, 4294901760
      %v4785 = vsub.f32 %v4661, %v4784
      %v4786 = vand.u32 %v4785, 4294901760
      %v4787 = vsub.f32 %v4785, %v4786
      %v4788 = vand.u32 %v4787, 4294901760
      %4789 = vmatmul.mubr.f32.gmra.mrb[0].mxu0 %v4788
      %v4790 = vpop.f32.mrb[0].mxu0
      %v4791 = vadd.f32 %v4656, %v4790
      %v4792 = vpop.f32.mrb[0].mxu0
      %4793 = vmatprep.mubr.f32.mxu0 0.0
      %v4794 = vand.u32 %v4664, 4294901760
      %v4795 = vsub.f32 %v4664, %v4794
      %v4796 = vand.u32 %v4795, 4294901760
      %v4797 = vsub.f32 %v4795, %v4796
      %v4798 = vand.u32 %v4797, 4294901760
      %4799 = vmatmul.mubr.f32.gmra.mrb[0].mxu0 %v4798
      %v4800 = vpop.f32.mrb[0].mxu0
      %v4801 = vadd.f32 %v4656, %v4800
      %v4802 = vpop.f32.mrb[0].mxu0
      %4803 = vmatprep.mubr.f32.mxu0 0.0
      %v4804 = vand.u32 %v4667, 4294901760
      %v4805 = vsub.f32 %v4667, %v4804
      %v4806 = vand.u32 %v4805, 4294901760
      %v4807 = vsub.f32 %v4805, %v4806
      %v4808 = vand.u32 %v4807, 4294901760
      %4809 = vmatmul.mubr.f32.gmra.mrb[0].mxu0 %v4808
      %v4810 = vpop.f32.mrb[0].mxu0
      %v4811 = vadd.f32 %v4656, %v4810
      %v4812 = vpop.f32.mrb[0].mxu0
      %4813 = vmatprep.mubr.f32.mxu0 0.0
      %v4814 = vand.u32 %v4670, 4294901760
      %v4815 = vsub.f32 %v4670, %v4814
      %v4816 = vand.u32 %v4815, 4294901760
      %v4817 = vsub.f32 %v4815, %v4816
      %v4818 = vand.u32 %v4817, 4294901760
      %4819 = vmatmul.mubr.f32.gmra.mrb[0].mxu0 %v4818
      %v4820 = vpop.f32.mrb[0].mxu0
      %v4821 = vadd.f32 %v4656, %v4820
      %v4822 = vpop.f32.mrb[0].mxu0
      %4823 = vmatprep.mubr.f32.mxu0 0.0
      %v4824 = vand.u32 %v4673, 4294901760
      %v4825 = vsub.f32 %v4673, %v4824
      %v4826 = vand.u32 %v4825, 4294901760
      %v4827 = vsub.f32 %v4825, %v4826
      %v4828 = vand.u32 %v4827, 4294901760
      %4829 = vmatmul.mubr.f32.gmra.mrb[0].mxu0 %v4828
      %v4830 = vpop.f32.mrb[0].mxu0
      %v4831 = vadd.f32 %v4656, %v4830
      %v4832 = vpop.f32.mrb[0].mxu0
      %4833 = vmatprep.mubr.f32.mxu0 0.0
      %v4834 = vand.u32 %v4676, 4294901760
      %v4835 = vsub.f32 %v4676, %v4834
      %v4836 = vand.u32 %v4835, 4294901760
      %v4837 = vsub.f32 %v4835, %v4836
      %v4838 = vand.u32 %v4837, 4294901760
      %4839 = vmatmul.mubr.f32.gmra.mrb[0].mxu0 %v4838
      %v4840 = vpop.f32.mrb[0].mxu0
      %v4841 = vadd.f32 %v4656, %v4840
      %v4842 = vpop.f32.mrb[0].mxu0
      %4843 = vmatprep.mubr.f32.mxu0 0.0
      %v4844 = vand.u32 %v4679, 4294901760
      %v4845 = vsub.f32 %v4679, %v4844
      %v4846 = vand.u32 %v4845, 4294901760
      %v4847 = vsub.f32 %v4845, %v4846
      %v4848 = vand.u32 %v4847, 4294901760
      %4849 = vmatmul.mubr.f32.gmra.mrb[0].mxu0 %v4848
      %v4850 = vpop.f32.mrb[0].mxu0
      %v4851 = vadd.f32 %v4656, %v4850
      %v4852 = vpop.f32.mrb[0].mxu0
      %4853 = vmatprep.mubr.f32.mxu0 0.0
      %v4854 = vand.u32 %v4682, 4294901760
      %v4855 = vsub.f32 %v4682, %v4854
      %v4856 = vand.u32 %v4855, 4294901760
      %v4857 = vsub.f32 %v4855, %v4856
      %v4858 = vand.u32 %v4857, 4294901760
      %4859 = vmatmul.mubr.f32.gmra.mrb[0].mxu0 %v4858
      %v4860 = vpop.f32.mrb[0].mxu0
      %v4861 = vadd.f32 %v4656, %v4860
      %v4862 = vpop.f32.mrb[0].mxu0
      %4863 = vmatprep.mubr.f32.mxu0 0.0
      %v4864 = vand.u32 %v4685, 4294901760
      %v4865 = vsub.f32 %v4685, %v4864
      %v4866 = vand.u32 %v4865, 4294901760
      %v4867 = vsub.f32 %v4865, %v4866
      %v4868 = vand.u32 %v4867, 4294901760
      %4869 = vmatmul.mubr.f32.gmra.mrb[0].mxu0 %v4868
      %v4870 = vpop.f32.mrb[0].mxu0
      %v4871 = vadd.f32 %v4656, %v4870
      %v4872 = vpop.f32.mrb[0].mxu0
      %4873 = vmatprep.mubr.f32.mxu0 0.0
      %v4874 = vand.u32 %v4688, 4294901760
      %v4875 = vsub.f32 %v4688, %v4874
      %v4876 = vand.u32 %v4875, 4294901760
      %v4877 = vsub.f32 %v4875, %v4876
      %v4878 = vand.u32 %v4877, 4294901760
      %4879 = vmatmul.mubr.f32.gmra.mrb[0].mxu0 %v4878
      %v4880 = vpop.f32.mrb[0].mxu0
      %v4881 = vadd.f32 %v4656, %v4880
      %v4882 = vpop.f32.mrb[0].mxu0
      %4883 = vmatprep.mubr.f32.mxu0 0.0
      %v4884 = vand.u32 %v4691, 4294901760
      %v4885 = vsub.f32 %v4691, %v4884
      %v4886 = vand.u32 %v4885, 4294901760
      %v4887 = vsub.f32 %v4885, %v4886
      %v4888 = vand.u32 %v4887, 4294901760
      %4889 = vmatmul.mubr.f32.gmra.mrb[0].mxu0 %v4888
      %v4890 = vpop.f32.mrb[0].mxu0
      %v4891 = vadd.f32 %v4656, %v4890
      %v4892 = vpop.f32.mrb[0].mxu0
      %4893 = vmatprep.mubr.f32.mxu0 0.0
      %v4894 = vand.u32 %v4694, 4294901760
      %v4895 = vsub.f32 %v4694, %v4894
      %v4896 = vand.u32 %v4895, 4294901760
      %v4897 = vsub.f32 %v4895, %v4896
      %v4898 = vand.u32 %v4897, 4294901760
      %4899 = vmatmul.mubr.f32.gmra.mrb[0].mxu0 %v4898
      %v4900 = vpop.f32.mrb[0].mxu0
      %v4901 = vadd.f32 %v4656, %v4900
      %v4902 = vpop.f32.mrb[0].mxu0
      %4903 = vmatprep.mubr.f32.mxu0 0.0
      %v4904 = vand.u32 %v4697, 4294901760
      %v4905 = vsub.f32 %v4697, %v4904
      %v4906 = vand.u32 %v4905, 4294901760
      %v4907 = vsub.f32 %v4905, %v4906
      %v4908 = vand.u32 %v4907, 4294901760
      %4909 = vmatmul.mubr.f32.gmra.mrb[0].mxu0 %v4908
      %v4910 = vpop.f32.mrb[0].mxu0
      %v4911 = vadd.f32 %v4656, %v4910
      %v4912 = vpop.f32.mrb[0].mxu0
      %4913 = vmatprep.mubr.f32.mxu0 0.0
      %v4914 = vand.u32 %v4700, 4294901760
      %v4915 = vsub.f32 %v4700, %v4914
      %v4916 = vand.u32 %v4915, 4294901760
      %v4917 = vsub.f32 %v4915, %v4916
      %v4918 = vand.u32 %v4917, 4294901760
      %4919 = vmatmul.mubr.f32.gmra.mrb[0].mxu0 %v4918
      %v4920 = vpop.f32.mrb[0].mxu0
      %v4921 = vadd.f32 %v4656, %v4920
      %v4922 = vpop.f32.mrb[0].mxu0
      %4923 = vmatprep.mubr.f32.mxu0 0.0
      %v4924 = vand.u32 %v4703, 4294901760
      %v4925 = vsub.f32 %v4703, %v4924
      %v4926 = vand.u32 %v4925, 4294901760
      %v4927 = vsub.f32 %v4925, %v4926
      %v4928 = vand.u32 %v4927, 4294901760
      %4929 = vmatmul.mubr.f32.gmra.mrb[0].mxu0 %v4928
      %v4930 = vpop.f32.mrb[0].mxu0
      %v4931 = vadd.f32 %v4656, %v4930
      %v4932 = vpop.f32.mrb[0].mxu0
      %4933 = vdwg.mxu0
      %4934 = vmatprep.subr.mxu0 0.0
      %v4935 = vand.u32 %v4648, 4294901760
      %v4936 = vsub.f32 %v4648, %v4935
      %v4937 = vand.u32 %v4936, 4294901760
      %v4938 = vsub.f32 %v4936, %v4937
      %v4939 = vand.u32 %v4938, 4294901760
      %4940 = vmatpush1.msra.mxu0 %v4939
      %4941 = vmatprep.subr.mxu0 0.0
      %v4942 = vand.u32 %v4649, 4294901760
      %v4943 = vsub.f32 %v4649, %v4942
      %v4944 = vand.u32 %v4943, 4294901760
      %v4945 = vsub.f32 %v4943, %v4944
      %v4946 = vand.u32 %v4945, 4294901760
      %4947 = vmatpush1.msra.mxu0 %v4946
      %4948 = vmatprep.subr.mxu0 0.0
      %v4949 = vand.u32 %v4650, 4294901760
      %v4950 = vsub.f32 %v4650, %v4949
      %v4951 = vand.u32 %v4950, 4294901760
      %v4952 = vsub.f32 %v4950, %v4951
      %v4953 = vand.u32 %v4952, 4294901760
      %4954 = vmatpush1.msra.mxu0 %v4953
      %4955 = vmatprep.subr.mxu0 0.0
      %v4956 = vand.u32 %v4651, 4294901760
      %v4957 = vsub.f32 %v4651, %v4956
      %v4958 = vand.u32 %v4957, 4294901760
      %v4959 = vsub.f32 %v4957, %v4958
      %v4960 = vand.u32 %v4959, 4294901760
      %4961 = vmatpush1.msra.mxu0 %v4960
      %4962 = vmatprep.subr.mxu0 0.0
      %4963 = vmatpush1.msra.mxu0 0.0
      %4964 = vmatprep.subr.mxu0 0.0
      %4965 = vmatpush1.msra.mxu0 0.0
      %4966 = vmatprep.subr.mxu0 0.0
      %4967 = vmatpush1.msra.mxu0 0.0
      %4968 = vmatprep.subr.mxu0 0.0
      %4969 = vmatpush1.msra.mxu0 0.0
      %4970 = vmatprep.subr.mxu0 0.0
      %4971 = vmatpush1.msra.mxu0 0.0
      %4972 = vmatprep.subr.mxu0 0.0
      %4973 = vmatpush1.msra.mxu0 0.0
      %4974 = vmatprep.subr.mxu0 0.0
      %4975 = vmatpush1.msra.mxu0 0.0
      %4976 = vmatprep.subr.mxu0 0.0
      %4977 = vmatpush1.msra.mxu0 0.0
      %4978 = vmatprep.subr.mxu0 0.0
      %4979 = vmatpush1.msra.mxu0 0.0
      %4980 = vmatprep.subr.mxu0 0.0
      %4981 = vmatpush1.msra.mxu0 0.0
      %4982 = vmatprep.subr.mxu0 0.0
      %4983 = vmatpush1.msra.mxu0 0.0
      %4984 = vmatprep.subr.mxu0 0.0
      %4985 = vmatpush1.msra.mxu0 0.0
      %4986 = vmatprep.subr.mxu0 0.0
      %4987 = vmatpush1.msra.mxu0 0.0
      %4988 = vmatprep.subr.mxu0 0.0
      %4989 = vmatpush1.msra.mxu0 0.0
      %4990 = vmatprep.subr.mxu0 0.0
      %4991 = vmatpush1.msra.mxu0 0.0
      %4992 = vmatprep.subr.mxu0 0.0
      %4993 = vmatpush1.msra.mxu0 0.0
      %4994 = vmatprep.subr.mxu0 0.0
      %4995 = vmatpush1.msra.mxu0 0.0
      %4996 = vmatprep.subr.mxu0 0.0
      %4997 = vmatpush1.msra.mxu0 0.0
      %4998 = vmatprep.subr.mxu0 0.0
      %4999 = vmatpush1.msra.mxu0 0.0
      %5000 = vmatprep.subr.mxu0 0.0
      %5001 = vmatpush1.msra.mxu0 0.0
      %5002 = vmatprep.subr.mxu0 0.0
      %5003 = vmatpush1.msra.mxu0 0.0
      %5004 = vmatprep.subr.mxu0 0.0
      %5005 = vmatpush1.msra.mxu0 0.0
      %5006 = vmatprep.subr.mxu0 0.0
      %5007 = vmatpush1.msra.mxu0 0.0
      %5008 = vmatprep.subr.mxu0 0.0
      %5009 = vmatpush1.msra.mxu0 0.0
      %5010 = vmatprep.subr.mxu0 0.0
      %5011 = vmatpush1.msra.mxu0 0.0
      %5012 = vmatprep.subr.mxu0 0.0
      %5013 = vmatpush1.msra.mxu0 0.0
      %5014 = vmatprep.subr.mxu0 0.0
      %5015 = vmatpush1.msra.mxu0 0.0
      %5016 = vmatprep.subr.mxu0 0.0
      %5017 = vmatpush1.msra.mxu0 0.0
      %5018 = vmatprep.mubr.f32.mxu0 0.0
      %v5019 = vand.u32 %v4658, 4294901760
      %5020 = vmatmul.mubr.f32.gmra.mrb[0].mxu0 %v5019
      %v5021 = vpop.f32.mrb[0].mxu0
      %v5022 = vadd.f32 %v4781, %v5021
      %v5023 = vpop.f32.mrb[0].mxu0
      %5024 = vmatprep.mubr.f32.mxu0 0.0
      %v5025 = vand.u32 %v4661, 4294901760
      %5026 = vmatmul.mubr.f32.gmra.mrb[0].mxu0 %v5025
      %v5027 = vpop.f32.mrb[0].mxu0
      %v5028 = vadd.f32 %v4791, %v5027
      %v5029 = vpop.f32.mrb[0].mxu0
      %5030 = vmatprep.mubr.f32.mxu0 0.0
      %v5031 = vand.u32 %v4664, 4294901760
      %5032 = vmatmul.mubr.f32.gmra.mrb[0].mxu0 %v5031
      %v5033 = vpop.f32.mrb[0].mxu0
      %v5034 = vadd.f32 %v4801, %v5033
      %v5035 = vpop.f32.mrb[0].mxu0
      %5036 = vmatprep.mubr.f32.mxu0 0.0
      %v5037 = vand.u32 %v4667, 4294901760
      %5038 = vmatmul.mubr.f32.gmra.mrb[0].mxu0 %v5037
      %v5039 = vpop.f32.mrb[0].mxu0
      %v5040 = vadd.f32 %v4811, %v5039
      %v5041 = vpop.f32.mrb[0].mxu0
      %5042 = vmatprep.mubr.f32.mxu0 0.0
      %v5043 = vand.u32 %v4670, 4294901760
      %5044 = vmatmul.mubr.f32.gmra.mrb[0].mxu0 %v5043
      %v5045 = vpop.f32.mrb[0].mxu0
      %v5046 = vadd.f32 %v4821, %v5045
      %v5047 = vpop.f32.mrb[0].mxu0
      %5048 = vmatprep.mubr.f32.mxu0 0.0
      %v5049 = vand.u32 %v4673, 4294901760
      %5050 = vmatmul.mubr.f32.gmra.mrb[0].mxu0 %v5049
      %v5051 = vpop.f32.mrb[0].mxu0
      %v5052 = vadd.f32 %v4831, %v5051
      %v5053 = vpop.f32.mrb[0].mxu0
      %5054 = vmatprep.mubr.f32.mxu0 0.0
      %v5055 = vand.u32 %v4676, 4294901760
      %5056 = vmatmul.mubr.f32.gmra.mrb[0].mxu0 %v5055
      %v5057 = vpop.f32.mrb[0].mxu0
      %v5058 = vadd.f32 %v4841, %v5057
      %v5059 = vpop.f32.mrb[0].mxu0
      %5060 = vmatprep.mubr.f32.mxu0 0.0
      %v5061 = vand.u32 %v4679, 4294901760
      %5062 = vmatmul.mubr.f32.gmra.mrb[0].mxu0 %v5061
      %v5063 = vpop.f32.mrb[0].mxu0
      %v5064 = vadd.f32 %v4851, %v5063
      %v5065 = vpop.f32.mrb[0].mxu0
      %5066 = vmatprep.mubr.f32.mxu0 0.0
      %v5067 = vand.u32 %v4682, 4294901760
      %5068 = vmatmul.mubr.f32.gmra.mrb[0].mxu0 %v5067
      %v5069 = vpop.f32.mrb[0].mxu0
      %v5070 = vadd.f32 %v4861, %v5069
      %v5071 = vpop.f32.mrb[0].mxu0
      %5072 = vmatprep.mubr.f32.mxu0 0.0
      %v5073 = vand.u32 %v4685, 4294901760
      %5074 = vmatmul.mubr.f32.gmra.mrb[0].mxu0 %v5073
      %v5075 = vpop.f32.mrb[0].mxu0
      %v5076 = vadd.f32 %v4871, %v5075
      %v5077 = vpop.f32.mrb[0].mxu0
      %5078 = vmatprep.mubr.f32.mxu0 0.0
      %v5079 = vand.u32 %v4688, 4294901760
      %5080 = vmatmul.mubr.f32.gmra.mrb[0].mxu0 %v5079
      %v5081 = vpop.f32.mrb[0].mxu0
      %v5082 = vadd.f32 %v4881, %v5081
      %v5083 = vpop.f32.mrb[0].mxu0
      %5084 = vmatprep.mubr.f32.mxu0 0.0
      %v5085 = vand.u32 %v4691, 4294901760
      %5086 = vmatmul.mubr.f32.gmra.mrb[0].mxu0 %v5085
      %v5087 = vpop.f32.mrb[0].mxu0
      %v5088 = vadd.f32 %v4891, %v5087
      %v5089 = vpop.f32.mrb[0].mxu0
      %5090 = vmatprep.mubr.f32.mxu0 0.0
      %v5091 = vand.u32 %v4694, 4294901760
      %5092 = vmatmul.mubr.f32.gmra.mrb[0].mxu0 %v5091
      %v5093 = vpop.f32.mrb[0].mxu0
      %v5094 = vadd.f32 %v4901, %v5093
      %v5095 = vpop.f32.mrb[0].mxu0
      %5096 = vmatprep.mubr.f32.mxu0 0.0
      %v5097 = vand.u32 %v4697, 4294901760
      %5098 = vmatmul.mubr.f32.gmra.mrb[0].mxu0 %v5097
      %v5099 = vpop.f32.mrb[0].mxu0
      %v5100 = vadd.f32 %v4911, %v5099
      %v5101 = vpop.f32.mrb[0].mxu0
      %5102 = vmatprep.mubr.f32.mxu0 0.0
      %v5103 = vand.u32 %v4700, 4294901760
      %5104 = vmatmul.mubr.f32.gmra.mrb[0].mxu0 %v5103
      %v5105 = vpop.f32.mrb[0].mxu0
      %v5106 = vadd.f32 %v4921, %v5105
      %v5107 = vpop.f32.mrb[0].mxu0
      %5108 = vmatprep.mubr.f32.mxu0 0.0
      %v5109 = vand.u32 %v4703, 4294901760
      %5110 = vmatmul.mubr.f32.gmra.mrb[0].mxu0 %v5109
      %v5111 = vpop.f32.mrb[0].mxu0
      %v5112 = vadd.f32 %v4931, %v5111
      %v5113 = vpop.f32.mrb[0].mxu0
      %5114 = vdwg.mxu0
      %5115 = vmatprep.subr.mxu0 0.0
      %v5116 = vand.u32 %v4648, 4294901760
      %v5117 = vsub.f32 %v4648, %v5116
      %5118 = vmatpush1.msra.mxu0 %v5117
      %5119 = vmatprep.subr.mxu0 0.0
      %v5120 = vand.u32 %v4649, 4294901760
      %v5121 = vsub.f32 %v4649, %v5120
      %5122 = vmatpush1.msra.mxu0 %v5121
      %5123 = vmatprep.subr.mxu0 0.0
      %v5124 = vand.u32 %v4650, 4294901760
      %v5125 = vsub.f32 %v4650, %v5124
      %5126 = vmatpush1.msra.mxu0 %v5125
      %5127 = vmatprep.subr.mxu0 0.0
      %v5128 = vand.u32 %v4651, 4294901760
      %v5129 = vsub.f32 %v4651, %v5128
      %5130 = vmatpush1.msra.mxu0 %v5129
      %5131 = vmatprep.subr.mxu0 0.0
      %5132 = vmatpush1.msra.mxu0 0.0
      %5133 = vmatprep.subr.mxu0 0.0
      %5134 = vmatpush1.msra.mxu0 0.0
      %5135 = vmatprep.subr.mxu0 0.0
      %5136 = vmatpush1.msra.mxu0 0.0
      %5137 = vmatprep.subr.mxu0 0.0
      %5138 = vmatpush1.msra.mxu0 0.0
      %5139 = vmatprep.subr.mxu0 0.0
      %5140 = vmatpush1.msra.mxu0 0.0
      %5141 = vmatprep.subr.mxu0 0.0
      %5142 = vmatpush1.msra.mxu0 0.0
      %5143 = vmatprep.subr.mxu0 0.0
      %5144 = vmatpush1.msra.mxu0 0.0
      %5145 = vmatprep.subr.mxu0 0.0
      %5146 = vmatpush1.msra.mxu0 0.0
      %5147 = vmatprep.subr.mxu0 0.0
      %5148 = vmatpush1.msra.mxu0 0.0
      %5149 = vmatprep.subr.mxu0 0.0
      %5150 = vmatpush1.msra.mxu0 0.0
      %5151 = vmatprep.subr.mxu0 0.0
      %5152 = vmatpush1.msra.mxu0 0.0
      %5153 = vmatprep.subr.mxu0 0.0
      %5154 = vmatpush1.msra.mxu0 0.0
      %5155 = vmatprep.subr.mxu0 0.0
      %5156 = vmatpush1.msra.mxu0 0.0
      %5157 = vmatprep.subr.mxu0 0.0
      %5158 = vmatpush1.msra.mxu0 0.0
      %5159 = vmatprep.subr.mxu0 0.0
      %5160 = vmatpush1.msra.mxu0 0.0
      %5161 = vmatprep.subr.mxu0 0.0
      %5162 = vmatpush1.msra.mxu0 0.0
      %5163 = vmatprep.subr.mxu0 0.0
      %5164 = vmatpush1.msra.mxu0 0.0
      %5165 = vmatprep.subr.mxu0 0.0
      %5166 = vmatpush1.msra.mxu0 0.0
      %5167 = vmatprep.subr.mxu0 0.0
      %5168 = vmatpush1.msra.mxu0 0.0
      %5169 = vmatprep.subr.mxu0 0.0
      %5170 = vmatpush1.msra.mxu0 0.0
      %5171 = vmatprep.subr.mxu0 0.0
      %5172 = vmatpush1.msra.mxu0 0.0
      %5173 = vmatprep.subr.mxu0 0.0
      %5174 = vmatpush1.msra.mxu0 0.0
      %5175 = vmatprep.subr.mxu0 0.0
      %5176 = vmatpush1.msra.mxu0 0.0
      %5177 = vmatprep.subr.mxu0 0.0
      %5178 = vmatpush1.msra.mxu0 0.0
      %5179 = vmatprep.subr.mxu0 0.0
      %5180 = vmatpush1.msra.mxu0 0.0
      %5181 = vmatprep.subr.mxu0 0.0
      %5182 = vmatpush1.msra.mxu0 0.0
      %5183 = vmatprep.subr.mxu0 0.0
      %5184 = vmatpush1.msra.mxu0 0.0
      %5185 = vmatprep.subr.mxu0 0.0
      %5186 = vmatpush1.msra.mxu0 0.0
      %5187 = vmatprep.mubr.f32.mxu0 0.0
      %v5188 = vand.u32 %v4658, 4294901760
      %v5189 = vsub.f32 %v4658, %v5188
      %5190 = vmatmul.mubr.f32.gmra.mrb[0].mxu0 %v5189
      %v5191 = vpop.f32.mrb[0].mxu0
      %v5192 = vadd.f32 %v5022, %v5191
      %v5193 = vpop.f32.mrb[0].mxu0
      %5194 = vmatprep.mubr.f32.mxu0 0.0
      %v5195 = vand.u32 %v4661, 4294901760
      %v5196 = vsub.f32 %v4661, %v5195
      %5197 = vmatmul.mubr.f32.gmra.mrb[0].mxu0 %v5196
      %v5198 = vpop.f32.mrb[0].mxu0
      %v5199 = vadd.f32 %v5028, %v5198
      %v5200 = vpop.f32.mrb[0].mxu0
      %5201 = vmatprep.mubr.f32.mxu0 0.0
      %v5202 = vand.u32 %v4664, 4294901760
      %v5203 = vsub.f32 %v4664, %v5202
      %5204 = vmatmul.mubr.f32.gmra.mrb[0].mxu0 %v5203
      %v5205 = vpop.f32.mrb[0].mxu0
      %v5206 = vadd.f32 %v5034, %v5205
      %v5207 = vpop.f32.mrb[0].mxu0
      %5208 = vmatprep.mubr.f32.mxu0 0.0
      %v5209 = vand.u32 %v4667, 4294901760
      %v5210 = vsub.f32 %v4667, %v5209
      %5211 = vmatmul.mubr.f32.gmra.mrb[0].mxu0 %v5210
      %v5212 = vpop.f32.mrb[0].mxu0
      %v5213 = vadd.f32 %v5040, %v5212
      %v5214 = vpop.f32.mrb[0].mxu0
      %5215 = vmatprep.mubr.f32.mxu0 0.0
      %v5216 = vand.u32 %v4670, 4294901760
      %v5217 = vsub.f32 %v4670, %v5216
      %5218 = vmatmul.mubr.f32.gmra.mrb[0].mxu0 %v5217
      %v5219 = vpop.f32.mrb[0].mxu0
      %v5220 = vadd.f32 %v5046, %v5219
      %v5221 = vpop.f32.mrb[0].mxu0
      %5222 = vmatprep.mubr.f32.mxu0 0.0
      %v5223 = vand.u32 %v4673, 4294901760
      %v5224 = vsub.f32 %v4673, %v5223
      %5225 = vmatmul.mubr.f32.gmra.mrb[0].mxu0 %v5224
      %v5226 = vpop.f32.mrb[0].mxu0
      %v5227 = vadd.f32 %v5052, %v5226
      %v5228 = vpop.f32.mrb[0].mxu0
      %5229 = vmatprep.mubr.f32.mxu0 0.0
      %v5230 = vand.u32 %v4676, 4294901760
      %v5231 = vsub.f32 %v4676, %v5230
      %5232 = vmatmul.mubr.f32.gmra.mrb[0].mxu0 %v5231
      %v5233 = vpop.f32.mrb[0].mxu0
      %v5234 = vadd.f32 %v5058, %v5233
      %v5235 = vpop.f32.mrb[0].mxu0
      %5236 = vmatprep.mubr.f32.mxu0 0.0
      %v5237 = vand.u32 %v4679, 4294901760
      %v5238 = vsub.f32 %v4679, %v5237
      %5239 = vmatmul.mubr.f32.gmra.mrb[0].mxu0 %v5238
      %v5240 = vpop.f32.mrb[0].mxu0
      %v5241 = vadd.f32 %v5064, %v5240
      %v5242 = vpop.f32.mrb[0].mxu0
      %5243 = vmatprep.mubr.f32.mxu0 0.0
      %v5244 = vand.u32 %v4682, 4294901760
      %v5245 = vsub.f32 %v4682, %v5244
      %5246 = vmatmul.mubr.f32.gmra.mrb[0].mxu0 %v5245
      %v5247 = vpop.f32.mrb[0].mxu0
      %v5248 = vadd.f32 %v5070, %v5247
      %v5249 = vpop.f32.mrb[0].mxu0
      %5250 = vmatprep.mubr.f32.mxu0 0.0
      %v5251 = vand.u32 %v4685, 4294901760
      %v5252 = vsub.f32 %v4685, %v5251
      %5253 = vmatmul.mubr.f32.gmra.mrb[0].mxu0 %v5252
      %v5254 = vpop.f32.mrb[0].mxu0
      %v5255 = vadd.f32 %v5076, %v5254
      %v5256 = vpop.f32.mrb[0].mxu0
      %5257 = vmatprep.mubr.f32.mxu0 0.0
      %v5258 = vand.u32 %v4688, 4294901760
      %v5259 = vsub.f32 %v4688, %v5258
      %5260 = vmatmul.mubr.f32.gmra.mrb[0].mxu0 %v5259
      %v5261 = vpop.f32.mrb[0].mxu0
      %v5262 = vadd.f32 %v5082, %v5261
      %v5263 = vpop.f32.mrb[0].mxu0
      %5264 = vmatprep.mubr.f32.mxu0 0.0
      %v5265 = vand.u32 %v4691, 4294901760
      %v5266 = vsub.f32 %v4691, %v5265
      %5267 = vmatmul.mubr.f32.gmra.mrb[0].mxu0 %v5266
      %v5268 = vpop.f32.mrb[0].mxu0
      %v5269 = vadd.f32 %v5088, %v5268
      %v5270 = vpop.f32.mrb[0].mxu0
      %5271 = vmatprep.mubr.f32.mxu0 0.0
      %v5272 = vand.u32 %v4694, 4294901760
      %v5273 = vsub.f32 %v4694, %v5272
      %5274 = vmatmul.mubr.f32.gmra.mrb[0].mxu0 %v5273
      %v5275 = vpop.f32.mrb[0].mxu0
      %v5276 = vadd.f32 %v5094, %v5275
      %v5277 = vpop.f32.mrb[0].mxu0
      %5278 = vmatprep.mubr.f32.mxu0 0.0
      %v5279 = vand.u32 %v4697, 4294901760
      %v5280 = vsub.f32 %v4697, %v5279
      %5281 = vmatmul.mubr.f32.gmra.mrb[0].mxu0 %v5280
      %v5282 = vpop.f32.mrb[0].mxu0
      %v5283 = vadd.f32 %v5100, %v5282
      %v5284 = vpop.f32.mrb[0].mxu0
      %5285 = vmatprep.mubr.f32.mxu0 0.0
      %v5286 = vand.u32 %v4700, 4294901760
      %v5287 = vsub.f32 %v4700, %v5286
      %5288 = vmatmul.mubr.f32.gmra.mrb[0].mxu0 %v5287
      %v5289 = vpop.f32.mrb[0].mxu0
      %v5290 = vadd.f32 %v5106, %v5289
      %v5291 = vpop.f32.mrb[0].mxu0
      %5292 = vmatprep.mubr.f32.mxu0 0.0
      %v5293 = vand.u32 %v4703, 4294901760
      %v5294 = vsub.f32 %v4703, %v5293
      %5295 = vmatmul.mubr.f32.gmra.mrb[0].mxu0 %v5294
      %v5296 = vpop.f32.mrb[0].mxu0
      %v5297 = vadd.f32 %v5112, %v5296
      %v5298 = vpop.f32.mrb[0].mxu0
      %5299 = vdwg.mxu0
      %5300 = vmatprep.subr.mxu0 0.0
      %v5301 = vand.u32 %v4648, 4294901760
      %5302 = vmatpush1.msra.mxu0 %v5301
      %5303 = vmatprep.subr.mxu0 0.0
      %v5304 = vand.u32 %v4649, 4294901760
      %5305 = vmatpush1.msra.mxu0 %v5304
      %5306 = vmatprep.subr.mxu0 0.0
      %v5307 = vand.u32 %v4650, 4294901760
      %5308 = vmatpush1.msra.mxu0 %v5307
      %5309 = vmatprep.subr.mxu0 0.0
      %v5310 = vand.u32 %v4651, 4294901760
      %5311 = vmatpush1.msra.mxu0 %v5310
      %5312 = vmatprep.subr.mxu0 0.0
      %5313 = vmatpush1.msra.mxu0 0.0
      %5314 = vmatprep.subr.mxu0 0.0
      %5315 = vmatpush1.msra.mxu0 0.0
      %5316 = vmatprep.subr.mxu0 0.0
      %5317 = vmatpush1.msra.mxu0 0.0
      %5318 = vmatprep.subr.mxu0 0.0
      %5319 = vmatpush1.msra.mxu0 0.0
      %5320 = vmatprep.subr.mxu0 0.0
      %5321 = vmatpush1.msra.mxu0 0.0
      %5322 = vmatprep.subr.mxu0 0.0
      %5323 = vmatpush1.msra.mxu0 0.0
      %5324 = vmatprep.subr.mxu0 0.0
      %5325 = vmatpush1.msra.mxu0 0.0
      %5326 = vmatprep.subr.mxu0 0.0
      %5327 = vmatpush1.msra.mxu0 0.0
      %5328 = vmatprep.subr.mxu0 0.0
      %5329 = vmatpush1.msra.mxu0 0.0
      %5330 = vmatprep.subr.mxu0 0.0
      %5331 = vmatpush1.msra.mxu0 0.0
      %5332 = vmatprep.subr.mxu0 0.0
      %5333 = vmatpush1.msra.mxu0 0.0
      %5334 = vmatprep.subr.mxu0 0.0
      %5335 = vmatpush1.msra.mxu0 0.0
      %5336 = vmatprep.subr.mxu0 0.0
      %5337 = vmatpush1.msra.mxu0 0.0
      %5338 = vmatprep.subr.mxu0 0.0
      %5339 = vmatpush1.msra.mxu0 0.0
      %5340 = vmatprep.subr.mxu0 0.0
      %5341 = vmatpush1.msra.mxu0 0.0
      %5342 = vmatprep.subr.mxu0 0.0
      %5343 = vmatpush1.msra.mxu0 0.0
      %5344 = vmatprep.subr.mxu0 0.0
      %5345 = vmatpush1.msra.mxu0 0.0
      %5346 = vmatprep.subr.mxu0 0.0
      %5347 = vmatpush1.msra.mxu0 0.0
      %5348 = vmatprep.subr.mxu0 0.0
      %5349 = vmatpush1.msra.mxu0 0.0
      %5350 = vmatprep.subr.mxu0 0.0
      %5351 = vmatpush1.msra.mxu0 0.0
      %5352 = vmatprep.subr.mxu0 0.0
      %5353 = vmatpush1.msra.mxu0 0.0
      %5354 = vmatprep.subr.mxu0 0.0
      %5355 = vmatpush1.msra.mxu0 0.0
      %5356 = vmatprep.subr.mxu0 0.0
      %5357 = vmatpush1.msra.mxu0 0.0
      %5358 = vmatprep.subr.mxu0 0.0
      %5359 = vmatpush1.msra.mxu0 0.0
      %5360 = vmatprep.subr.mxu0 0.0
      %5361 = vmatpush1.msra.mxu0 0.0
      %5362 = vmatprep.subr.mxu0 0.0
      %5363 = vmatpush1.msra.mxu0 0.0
      %5364 = vmatprep.subr.mxu0 0.0
      %5365 = vmatpush1.msra.mxu0 0.0
      %5366 = vmatprep.subr.mxu0 0.0
      %5367 = vmatpush1.msra.mxu0 0.0
      %5368 = vmatprep.mubr.f32.mxu0 0.0
      %v5369 = vand.u32 %v4658, 4294901760
      %v5370 = vsub.f32 %v4658, %v5369
      %v5371 = vand.u32 %v5370, 4294901760
      %5372 = vmatmul.mubr.f32.gmra.mrb[0].mxu0 %v5371
      %v5373 = vpop.f32.mrb[0].mxu0
      %v5374 = vadd.f32 %v5192, %v5373
      %v5375 = vpop.f32.mrb[0].mxu0
      %5376 = vmatprep.mubr.f32.mxu0 0.0
      %v5377 = vand.u32 %v4661, 4294901760
      %v5378 = vsub.f32 %v4661, %v5377
      %v5379 = vand.u32 %v5378, 4294901760
      %5380 = vmatmul.mubr.f32.gmra.mrb[0].mxu0 %v5379
      %v5381 = vpop.f32.mrb[0].mxu0
      %v5382 = vadd.f32 %v5199, %v5381
      %v5383 = vpop.f32.mrb[0].mxu0
      %5384 = vmatprep.mubr.f32.mxu0 0.0
      %v5385 = vand.u32 %v4664, 4294901760
      %v5386 = vsub.f32 %v4664, %v5385
      %v5387 = vand.u32 %v5386, 4294901760
      %5388 = vmatmul.mubr.f32.gmra.mrb[0].mxu0 %v5387
      %v5389 = vpop.f32.mrb[0].mxu0
      %v5390 = vadd.f32 %v5206, %v5389
      %v5391 = vpop.f32.mrb[0].mxu0
      %5392 = vmatprep.mubr.f32.mxu0 0.0
      %v5393 = vand.u32 %v4667, 4294901760
      %v5394 = vsub.f32 %v4667, %v5393
      %v5395 = vand.u32 %v5394, 4294901760
      %5396 = vmatmul.mubr.f32.gmra.mrb[0].mxu0 %v5395
      %v5397 = vpop.f32.mrb[0].mxu0
      %v5398 = vadd.f32 %v5213, %v5397
      %v5399 = vpop.f32.mrb[0].mxu0
      %5400 = vmatprep.mubr.f32.mxu0 0.0
      %v5401 = vand.u32 %v4670, 4294901760
      %v5402 = vsub.f32 %v4670, %v5401
      %v5403 = vand.u32 %v5402, 4294901760
      %5404 = vmatmul.mubr.f32.gmra.mrb[0].mxu0 %v5403
      %v5405 = vpop.f32.mrb[0].mxu0
      %v5406 = vadd.f32 %v5220, %v5405
      %v5407 = vpop.f32.mrb[0].mxu0
      %5408 = vmatprep.mubr.f32.mxu0 0.0
      %v5409 = vand.u32 %v4673, 4294901760
      %v5410 = vsub.f32 %v4673, %v5409
      %v5411 = vand.u32 %v5410, 4294901760
      %5412 = vmatmul.mubr.f32.gmra.mrb[0].mxu0 %v5411
      %v5413 = vpop.f32.mrb[0].mxu0
      %v5414 = vadd.f32 %v5227, %v5413
      %v5415 = vpop.f32.mrb[0].mxu0
      %5416 = vmatprep.mubr.f32.mxu0 0.0
      %v5417 = vand.u32 %v4676, 4294901760
      %v5418 = vsub.f32 %v4676, %v5417
      %v5419 = vand.u32 %v5418, 4294901760
      %5420 = vmatmul.mubr.f32.gmra.mrb[0].mxu0 %v5419
      %v5421 = vpop.f32.mrb[0].mxu0
      %v5422 = vadd.f32 %v5234, %v5421
      %v5423 = vpop.f32.mrb[0].mxu0
      %5424 = vmatprep.mubr.f32.mxu0 0.0
      %v5425 = vand.u32 %v4679, 4294901760
      %v5426 = vsub.f32 %v4679, %v5425
      %v5427 = vand.u32 %v5426, 4294901760
      %5428 = vmatmul.mubr.f32.gmra.mrb[0].mxu0 %v5427
      %v5429 = vpop.f32.mrb[0].mxu0
      %v5430 = vadd.f32 %v5241, %v5429
      %v5431 = vpop.f32.mrb[0].mxu0
      %5432 = vmatprep.mubr.f32.mxu0 0.0
      %v5433 = vand.u32 %v4682, 4294901760
      %v5434 = vsub.f32 %v4682, %v5433
      %v5435 = vand.u32 %v5434, 4294901760
      %5436 = vmatmul.mubr.f32.gmra.mrb[0].mxu0 %v5435
      %v5437 = vpop.f32.mrb[0].mxu0
      %v5438 = vadd.f32 %v5248, %v5437
      %v5439 = vpop.f32.mrb[0].mxu0
      %5440 = vmatprep.mubr.f32.mxu0 0.0
      %v5441 = vand.u32 %v4685, 4294901760
      %v5442 = vsub.f32 %v4685, %v5441
      %v5443 = vand.u32 %v5442, 4294901760
      %5444 = vmatmul.mubr.f32.gmra.mrb[0].mxu0 %v5443
      %v5445 = vpop.f32.mrb[0].mxu0
      %v5446 = vadd.f32 %v5255, %v5445
      %v5447 = vpop.f32.mrb[0].mxu0
      %5448 = vmatprep.mubr.f32.mxu0 0.0
      %v5449 = vand.u32 %v4688, 4294901760
      %v5450 = vsub.f32 %v4688, %v5449
      %v5451 = vand.u32 %v5450, 4294901760
      %5452 = vmatmul.mubr.f32.gmra.mrb[0].mxu0 %v5451
      %v5453 = vpop.f32.mrb[0].mxu0
      %v5454 = vadd.f32 %v5262, %v5453
      %v5455 = vpop.f32.mrb[0].mxu0
      %5456 = vmatprep.mubr.f32.mxu0 0.0
      %v5457 = vand.u32 %v4691, 4294901760
      %v5458 = vsub.f32 %v4691, %v5457
      %v5459 = vand.u32 %v5458, 4294901760
      %5460 = vmatmul.mubr.f32.gmra.mrb[0].mxu0 %v5459
      %v5461 = vpop.f32.mrb[0].mxu0
      %v5462 = vadd.f32 %v5269, %v5461
      %v5463 = vpop.f32.mrb[0].mxu0
      %5464 = vmatprep.mubr.f32.mxu0 0.0
      %v5465 = vand.u32 %v4694, 4294901760
      %v5466 = vsub.f32 %v4694, %v5465
      %v5467 = vand.u32 %v5466, 4294901760
      %5468 = vmatmul.mubr.f32.gmra.mrb[0].mxu0 %v5467
      %v5469 = vpop.f32.mrb[0].mxu0
      %v5470 = vadd.f32 %v5276, %v5469
      %v5471 = vpop.f32.mrb[0].mxu0
      %5472 = vmatprep.mubr.f32.mxu0 0.0
      %v5473 = vand.u32 %v4697, 4294901760
      %v5474 = vsub.f32 %v4697, %v5473
      %v5475 = vand.u32 %v5474, 4294901760
      %5476 = vmatmul.mubr.f32.gmra.mrb[0].mxu0 %v5475
      %v5477 = vpop.f32.mrb[0].mxu0
      %v5478 = vadd.f32 %v5283, %v5477
      %v5479 = vpop.f32.mrb[0].mxu0
      %5480 = vmatprep.mubr.f32.mxu0 0.0
      %v5481 = vand.u32 %v4700, 4294901760
      %v5482 = vsub.f32 %v4700, %v5481
      %v5483 = vand.u32 %v5482, 4294901760
      %5484 = vmatmul.mubr.f32.gmra.mrb[0].mxu0 %v5483
      %v5485 = vpop.f32.mrb[0].mxu0
      %v5486 = vadd.f32 %v5290, %v5485
      %v5487 = vpop.f32.mrb[0].mxu0
      %5488 = vmatprep.mubr.f32.mxu0 0.0
      %v5489 = vand.u32 %v4703, 4294901760
      %v5490 = vsub.f32 %v4703, %v5489
      %v5491 = vand.u32 %v5490, 4294901760
      %5492 = vmatmul.mubr.f32.gmra.mrb[0].mxu0 %v5491
      %v5493 = vpop.f32.mrb[0].mxu0
      %v5494 = vadd.f32 %v5297, %v5493
      %v5495 = vpop.f32.mrb[0].mxu0
      %5496 = vdwg.mxu0
      %5497 = vmatprep.subr.mxu0 0.0
      %v5498 = vand.u32 %v4648, 4294901760
      %v5499 = vsub.f32 %v4648, %v5498
      %v5500 = vand.u32 %v5499, 4294901760
      %5501 = vmatpush1.msra.mxu0 %v5500
      %5502 = vmatprep.subr.mxu0 0.0
      %v5503 = vand.u32 %v4649, 4294901760
      %v5504 = vsub.f32 %v4649, %v5503
      %v5505 = vand.u32 %v5504, 4294901760
      %5506 = vmatpush1.msra.mxu0 %v5505
      %5507 = vmatprep.subr.mxu0 0.0
      %v5508 = vand.u32 %v4650, 4294901760
      %v5509 = vsub.f32 %v4650, %v5508
      %v5510 = vand.u32 %v5509, 4294901760
      %5511 = vmatpush1.msra.mxu0 %v5510
      %5512 = vmatprep.subr.mxu0 0.0
      %v5513 = vand.u32 %v4651, 4294901760
      %v5514 = vsub.f32 %v4651, %v5513
      %v5515 = vand.u32 %v5514, 4294901760
      %5516 = vmatpush1.msra.mxu0 %v5515
      %5517 = vmatprep.subr.mxu0 0.0
      %5518 = vmatpush1.msra.mxu0 0.0
      %5519 = vmatprep.subr.mxu0 0.0
      %5520 = vmatpush1.msra.mxu0 0.0
      %5521 = vmatprep.subr.mxu0 0.0
      %5522 = vmatpush1.msra.mxu0 0.0
      %5523 = vmatprep.subr.mxu0 0.0
      %5524 = vmatpush1.msra.mxu0 0.0
      %5525 = vmatprep.subr.mxu0 0.0
      %5526 = vmatpush1.msra.mxu0 0.0
      %5527 = vmatprep.subr.mxu0 0.0
      %5528 = vmatpush1.msra.mxu0 0.0
      %5529 = vmatprep.subr.mxu0 0.0
      %5530 = vmatpush1.msra.mxu0 0.0
      %5531 = vmatprep.subr.mxu0 0.0
      %5532 = vmatpush1.msra.mxu0 0.0
      %5533 = vmatprep.subr.mxu0 0.0
      %5534 = vmatpush1.msra.mxu0 0.0
      %5535 = vmatprep.subr.mxu0 0.0
      %5536 = vmatpush1.msra.mxu0 0.0
      %5537 = vmatprep.subr.mxu0 0.0
      %5538 = vmatpush1.msra.mxu0 0.0
      %5539 = vmatprep.subr.mxu0 0.0
      %5540 = vmatpush1.msra.mxu0 0.0
      %5541 = vmatprep.subr.mxu0 0.0
      %5542 = vmatpush1.msra.mxu0 0.0
      %5543 = vmatprep.subr.mxu0 0.0
      %5544 = vmatpush1.msra.mxu0 0.0
      %5545 = vmatprep.subr.mxu0 0.0
      %5546 = vmatpush1.msra.mxu0 0.0
      %5547 = vmatprep.subr.mxu0 0.0
      %5548 = vmatpush1.msra.mxu0 0.0
      %5549 = vmatprep.subr.mxu0 0.0
      %5550 = vmatpush1.msra.mxu0 0.0
      %5551 = vmatprep.subr.mxu0 0.0
      %5552 = vmatpush1.msra.mxu0 0.0
      %5553 = vmatprep.subr.mxu0 0.0
      %5554 = vmatpush1.msra.mxu0 0.0
      %5555 = vmatprep.subr.mxu0 0.0
      %5556 = vmatpush1.msra.mxu0 0.0
      %5557 = vmatprep.subr.mxu0 0.0
      %5558 = vmatpush1.msra.mxu0 0.0
      %5559 = vmatprep.subr.mxu0 0.0
      %5560 = vmatpush1.msra.mxu0 0.0
      %5561 = vmatprep.subr.mxu0 0.0
      %5562 = vmatpush1.msra.mxu0 0.0
      %5563 = vmatprep.subr.mxu0 0.0
      %5564 = vmatpush1.msra.mxu0 0.0
      %5565 = vmatprep.subr.mxu0 0.0
      %5566 = vmatpush1.msra.mxu0 0.0
      %5567 = vmatprep.subr.mxu0 0.0
      %5568 = vmatpush1.msra.mxu0 0.0
      %5569 = vmatprep.subr.mxu0 0.0
      %5570 = vmatpush1.msra.mxu0 0.0
      %5571 = vmatprep.subr.mxu0 0.0
      %5572 = vmatpush1.msra.mxu0 0.0
      %5573 = vmatprep.mubr.f32.mxu0 0.0
      %v5574 = vand.u32 %v4658, 4294901760
      %5575 = vmatmul.mubr.f32.gmra.mrb[0].mxu0 %v5574
      %v5576 = vpop.f32.mrb[0].mxu0
      %v5577 = vadd.f32 %v5374, %v5576
      %v5578 = vpop.f32.mrb[0].mxu0
      %5579 = vmatprep.mubr.f32.mxu0 0.0
      %v5580 = vand.u32 %v4661, 4294901760
      %5581 = vmatmul.mubr.f32.gmra.mrb[0].mxu0 %v5580
      %v5582 = vpop.f32.mrb[0].mxu0
      %v5583 = vadd.f32 %v5382, %v5582
      %v5584 = vpop.f32.mrb[0].mxu0
      %5585 = vmatprep.mubr.f32.mxu0 0.0
      %v5586 = vand.u32 %v4664, 4294901760
      %5587 = vmatmul.mubr.f32.gmra.mrb[0].mxu0 %v5586
      %v5588 = vpop.f32.mrb[0].mxu0
      %v5589 = vadd.f32 %v5390, %v5588
      %v5590 = vpop.f32.mrb[0].mxu0
      %5591 = vmatprep.mubr.f32.mxu0 0.0
      %v5592 = vand.u32 %v4667, 4294901760
      %5593 = vmatmul.mubr.f32.gmra.mrb[0].mxu0 %v5592
      %v5594 = vpop.f32.mrb[0].mxu0
      %v5595 = vadd.f32 %v5398, %v5594
      %v5596 = vpop.f32.mrb[0].mxu0
      %5597 = vmatprep.mubr.f32.mxu0 0.0
      %v5598 = vand.u32 %v4670, 4294901760
      %5599 = vmatmul.mubr.f32.gmra.mrb[0].mxu0 %v5598
      %v5600 = vpop.f32.mrb[0].mxu0
      %v5601 = vadd.f32 %v5406, %v5600
      %v5602 = vpop.f32.mrb[0].mxu0
      %5603 = vmatprep.mubr.f32.mxu0 0.0
      %v5604 = vand.u32 %v4673, 4294901760
      %5605 = vmatmul.mubr.f32.gmra.mrb[0].mxu0 %v5604
      %v5606 = vpop.f32.mrb[0].mxu0
      %v5607 = vadd.f32 %v5414, %v5606
      %v5608 = vpop.f32.mrb[0].mxu0
      %5609 = vmatprep.mubr.f32.mxu0 0.0
      %v5610 = vand.u32 %v4676, 4294901760
      %5611 = vmatmul.mubr.f32.gmra.mrb[0].mxu0 %v5610
      %v5612 = vpop.f32.mrb[0].mxu0
      %v5613 = vadd.f32 %v5422, %v5612
      %v5614 = vpop.f32.mrb[0].mxu0
      %5615 = vmatprep.mubr.f32.mxu0 0.0
      %v5616 = vand.u32 %v4679, 4294901760
      %5617 = vmatmul.mubr.f32.gmra.mrb[0].mxu0 %v5616
      %v5618 = vpop.f32.mrb[0].mxu0
      %v5619 = vadd.f32 %v5430, %v5618
      %v5620 = vpop.f32.mrb[0].mxu0
      %5621 = vmatprep.mubr.f32.mxu0 0.0
      %v5622 = vand.u32 %v4682, 4294901760
      %5623 = vmatmul.mubr.f32.gmra.mrb[0].mxu0 %v5622
      %v5624 = vpop.f32.mrb[0].mxu0
      %v5625 = vadd.f32 %v5438, %v5624
      %v5626 = vpop.f32.mrb[0].mxu0
      %5627 = vmatprep.mubr.f32.mxu0 0.0
      %v5628 = vand.u32 %v4685, 4294901760
      %5629 = vmatmul.mubr.f32.gmra.mrb[0].mxu0 %v5628
      %v5630 = vpop.f32.mrb[0].mxu0
      %v5631 = vadd.f32 %v5446, %v5630
      %v5632 = vpop.f32.mrb[0].mxu0
      %5633 = vmatprep.mubr.f32.mxu0 0.0
      %v5634 = vand.u32 %v4688, 4294901760
      %5635 = vmatmul.mubr.f32.gmra.mrb[0].mxu0 %v5634
      %v5636 = vpop.f32.mrb[0].mxu0
      %v5637 = vadd.f32 %v5454, %v5636
      %v5638 = vpop.f32.mrb[0].mxu0
      %5639 = vmatprep.mubr.f32.mxu0 0.0
      %v5640 = vand.u32 %v4691, 4294901760
      %5641 = vmatmul.mubr.f32.gmra.mrb[0].mxu0 %v5640
      %v5642 = vpop.f32.mrb[0].mxu0
      %v5643 = vadd.f32 %v5462, %v5642
      %v5644 = vpop.f32.mrb[0].mxu0
      %5645 = vmatprep.mubr.f32.mxu0 0.0
      %v5646 = vand.u32 %v4694, 4294901760
      %5647 = vmatmul.mubr.f32.gmra.mrb[0].mxu0 %v5646
      %v5648 = vpop.f32.mrb[0].mxu0
      %v5649 = vadd.f32 %v5470, %v5648
      %v5650 = vpop.f32.mrb[0].mxu0
      %5651 = vmatprep.mubr.f32.mxu0 0.0
      %v5652 = vand.u32 %v4697, 4294901760
      %5653 = vmatmul.mubr.f32.gmra.mrb[0].mxu0 %v5652
      %v5654 = vpop.f32.mrb[0].mxu0
      %v5655 = vadd.f32 %v5478, %v5654
      %v5656 = vpop.f32.mrb[0].mxu0
      %5657 = vmatprep.mubr.f32.mxu0 0.0
      %v5658 = vand.u32 %v4700, 4294901760
      %5659 = vmatmul.mubr.f32.gmra.mrb[0].mxu0 %v5658
      %v5660 = vpop.f32.mrb[0].mxu0
      %v5661 = vadd.f32 %v5486, %v5660
      %v5662 = vpop.f32.mrb[0].mxu0
      %5663 = vmatprep.mubr.f32.mxu0 0.0
      %v5664 = vand.u32 %v4703, 4294901760
      %5665 = vmatmul.mubr.f32.gmra.mrb[0].mxu0 %v5664
      %v5666 = vpop.f32.mrb[0].mxu0
      %v5667 = vadd.f32 %v5494, %v5666
      %v5668 = vpop.f32.mrb[0].mxu0
      %5669 = vdwg.mxu0
      %5670 = vmatprep.subr.mxu0 0.0
      %v5671 = vand.u32 %v4648, 4294901760
      %5672 = vmatpush1.msra.mxu0 %v5671
      %5673 = vmatprep.subr.mxu0 0.0
      %v5674 = vand.u32 %v4649, 4294901760
      %5675 = vmatpush1.msra.mxu0 %v5674
      %5676 = vmatprep.subr.mxu0 0.0
      %v5677 = vand.u32 %v4650, 4294901760
      %5678 = vmatpush1.msra.mxu0 %v5677
      %5679 = vmatprep.subr.mxu0 0.0
      %v5680 = vand.u32 %v4651, 4294901760
      %5681 = vmatpush1.msra.mxu0 %v5680
      %5682 = vmatprep.subr.mxu0 0.0
      %5683 = vmatpush1.msra.mxu0 0.0
      %5684 = vmatprep.subr.mxu0 0.0
      %5685 = vmatpush1.msra.mxu0 0.0
      %5686 = vmatprep.subr.mxu0 0.0
      %5687 = vmatpush1.msra.mxu0 0.0
      %5688 = vmatprep.subr.mxu0 0.0
      %5689 = vmatpush1.msra.mxu0 0.0
      %5690 = vmatprep.subr.mxu0 0.0
      %5691 = vmatpush1.msra.mxu0 0.0
      %5692 = vmatprep.subr.mxu0 0.0
      %5693 = vmatpush1.msra.mxu0 0.0
      %5694 = vmatprep.subr.mxu0 0.0
      %5695 = vmatpush1.msra.mxu0 0.0
      %5696 = vmatprep.subr.mxu0 0.0
      %5697 = vmatpush1.msra.mxu0 0.0
      %5698 = vmatprep.subr.mxu0 0.0
      %5699 = vmatpush1.msra.mxu0 0.0
      %5700 = vmatprep.subr.mxu0 0.0
      %5701 = vmatpush1.msra.mxu0 0.0
      %5702 = vmatprep.subr.mxu0 0.0
      %5703 = vmatpush1.msra.mxu0 0.0
      %5704 = vmatprep.subr.mxu0 0.0
      %5705 = vmatpush1.msra.mxu0 0.0
      %5706 = vmatprep.subr.mxu0 0.0
      %5707 = vmatpush1.msra.mxu0 0.0
      %5708 = vmatprep.subr.mxu0 0.0
      %5709 = vmatpush1.msra.mxu0 0.0
      %5710 = vmatprep.subr.mxu0 0.0
      %5711 = vmatpush1.msra.mxu0 0.0
      %5712 = vmatprep.subr.mxu0 0.0
      %5713 = vmatpush1.msra.mxu0 0.0
      %5714 = vmatprep.subr.mxu0 0.0
      %5715 = vmatpush1.msra.mxu0 0.0
      %5716 = vmatprep.subr.mxu0 0.0
      %5717 = vmatpush1.msra.mxu0 0.0
      %5718 = vmatprep.subr.mxu0 0.0
      %5719 = vmatpush1.msra.mxu0 0.0
      %5720 = vmatprep.subr.mxu0 0.0
      %5721 = vmatpush1.msra.mxu0 0.0
      %5722 = vmatprep.subr.mxu0 0.0
      %5723 = vmatpush1.msra.mxu0 0.0
      %5724 = vmatprep.subr.mxu0 0.0
      %5725 = vmatpush1.msra.mxu0 0.0
      %5726 = vmatprep.subr.mxu0 0.0
      %5727 = vmatpush1.msra.mxu0 0.0
      %5728 = vmatprep.subr.mxu0 0.0
      %5729 = vmatpush1.msra.mxu0 0.0
      %5730 = vmatprep.subr.mxu0 0.0
      %5731 = vmatpush1.msra.mxu0 0.0
      %5732 = vmatprep.subr.mxu0 0.0
      %5733 = vmatpush1.msra.mxu0 0.0
      %5734 = vmatprep.subr.mxu0 0.0
      %5735 = vmatpush1.msra.mxu0 0.0
      %5736 = vmatprep.subr.mxu0 0.0
      %5737 = vmatpush1.msra.mxu0 0.0
      %5738 = vmatprep.mubr.f32.mxu0 0.0
      %v5739 = vand.u32 %v4658, 4294901760
      %5740 = vmatmul.mubr.f32.gmra.mrb[0].mxu0 %v5739
      %v5741 = vpop.f32.mrb[0].mxu0
      %v5742 = vadd.f32 %v5577, %v5741
      %v5743 = vpop.f32.mrb[0].mxu0
      %5744 = vmatprep.mubr.f32.mxu0 0.0
      %v5745 = vand.u32 %v4661, 4294901760
      %5746 = vmatmul.mubr.f32.gmra.mrb[0].mxu0 %v5745
      %v5747 = vpop.f32.mrb[0].mxu0
      %v5748 = vadd.f32 %v5583, %v5747
      %v5749 = vpop.f32.mrb[0].mxu0
      %5750 = vmatprep.mubr.f32.mxu0 0.0
      %v5751 = vand.u32 %v4664, 4294901760
      %5752 = vmatmul.mubr.f32.gmra.mrb[0].mxu0 %v5751
      %v5753 = vpop.f32.mrb[0].mxu0
      %v5754 = vadd.f32 %v5589, %v5753
      %v5755 = vpop.f32.mrb[0].mxu0
      %5756 = vmatprep.mubr.f32.mxu0 0.0
      %v5757 = vand.u32 %v4667, 4294901760
      %5758 = vmatmul.mubr.f32.gmra.mrb[0].mxu0 %v5757
      %v5759 = vpop.f32.mrb[0].mxu0
      %v5760 = vadd.f32 %v5595, %v5759
      %v5761 = vpop.f32.mrb[0].mxu0
      %5762 = vmatprep.mubr.f32.mxu0 0.0
      %v5763 = vand.u32 %v4670, 4294901760
      %5764 = vmatmul.mubr.f32.gmra.mrb[0].mxu0 %v5763
      %v5765 = vpop.f32.mrb[0].mxu0
      %v5766 = vadd.f32 %v5601, %v5765
      %v5767 = vpop.f32.mrb[0].mxu0
      %5768 = vmatprep.mubr.f32.mxu0 0.0
      %v5769 = vand.u32 %v4673, 4294901760
      %5770 = vmatmul.mubr.f32.gmra.mrb[0].mxu0 %v5769
      %v5771 = vpop.f32.mrb[0].mxu0
      %v5772 = vadd.f32 %v5607, %v5771
      %v5773 = vpop.f32.mrb[0].mxu0
      %5774 = vmatprep.mubr.f32.mxu0 0.0
      %v5775 = vand.u32 %v4676, 4294901760
      %5776 = vmatmul.mubr.f32.gmra.mrb[0].mxu0 %v5775
      %v5777 = vpop.f32.mrb[0].mxu0
      %v5778 = vadd.f32 %v5613, %v5777
      %v5779 = vpop.f32.mrb[0].mxu0
      %5780 = vmatprep.mubr.f32.mxu0 0.0
      %v5781 = vand.u32 %v4679, 4294901760
      %5782 = vmatmul.mubr.f32.gmra.mrb[0].mxu0 %v5781
      %v5783 = vpop.f32.mrb[0].mxu0
      %v5784 = vadd.f32 %v5619, %v5783
      %v5785 = vpop.f32.mrb[0].mxu0
      %5786 = vmatprep.mubr.f32.mxu0 0.0
      %v5787 = vand.u32 %v4682, 4294901760
      %5788 = vmatmul.mubr.f32.gmra.mrb[0].mxu0 %v5787
      %v5789 = vpop.f32.mrb[0].mxu0
      %v5790 = vadd.f32 %v5625, %v5789
      %v5791 = vpop.f32.mrb[0].mxu0
      %5792 = vmatprep.mubr.f32.mxu0 0.0
      %v5793 = vand.u32 %v4685, 4294901760
      %5794 = vmatmul.mubr.f32.gmra.mrb[0].mxu0 %v5793
      %v5795 = vpop.f32.mrb[0].mxu0
      %v5796 = vadd.f32 %v5631, %v5795
      %v5797 = vpop.f32.mrb[0].mxu0
      %5798 = vmatprep.mubr.f32.mxu0 0.0
      %v5799 = vand.u32 %v4688, 4294901760
      %5800 = vmatmul.mubr.f32.gmra.mrb[0].mxu0 %v5799
      %v5801 = vpop.f32.mrb[0].mxu0
      %v5802 = vadd.f32 %v5637, %v5801
      %v5803 = vpop.f32.mrb[0].mxu0
      %5804 = vmatprep.mubr.f32.mxu0 0.0
      %v5805 = vand.u32 %v4691, 4294901760
      %5806 = vmatmul.mubr.f32.gmra.mrb[0].mxu0 %v5805
      %v5807 = vpop.f32.mrb[0].mxu0
      %v5808 = vadd.f32 %v5643, %v5807
      %v5809 = vpop.f32.mrb[0].mxu0
      %5810 = vmatprep.mubr.f32.mxu0 0.0
      %v5811 = vand.u32 %v4694, 4294901760
      %5812 = vmatmul.mubr.f32.gmra.mrb[0].mxu0 %v5811
      %v5813 = vpop.f32.mrb[0].mxu0
      %v5814 = vadd.f32 %v5649, %v5813
      %v5815 = vpop.f32.mrb[0].mxu0
      %5816 = vmatprep.mubr.f32.mxu0 0.0
      %v5817 = vand.u32 %v4697, 4294901760
      %5818 = vmatmul.mubr.f32.gmra.mrb[0].mxu0 %v5817
      %v5819 = vpop.f32.mrb[0].mxu0
      %v5820 = vadd.f32 %v5655, %v5819
      %v5821 = vpop.f32.mrb[0].mxu0
      %5822 = vmatprep.mubr.f32.mxu0 0.0
      %v5823 = vand.u32 %v4700, 4294901760
      %5824 = vmatmul.mubr.f32.gmra.mrb[0].mxu0 %v5823
      %v5825 = vpop.f32.mrb[0].mxu0
      %v5826 = vadd.f32 %v5661, %v5825
      %v5827 = vpop.f32.mrb[0].mxu0
      %5828 = vmatprep.mubr.f32.mxu0 0.0
      %v5829 = vand.u32 %v4703, 4294901760
      %5830 = vmatmul.mubr.f32.gmra.mrb[0].mxu0 %v5829
      %v5831 = vpop.f32.mrb[0].mxu0
      %v5832 = vadd.f32 %v5667, %v5831
      %v5833 = vpop.f32.mrb[0].mxu0
      %5834 = vdwg.mxu0
      %v5835 = vxor.u32 %v5742, 2147483648
      %v5836 = vxor.u32 %v5748, 2147483648
      %v5837 = vxor.u32 %v5754, 2147483648
      %v5838 = vxor.u32 %v5760, 2147483648
      %v5839 = vxor.u32 %v5766, 2147483648
      %v5840 = vxor.u32 %v5772, 2147483648
      %v5841 = vxor.u32 %v5778, 2147483648
      %v5842 = vxor.u32 %v5784, 2147483648
      %v5843 = vxor.u32 %v5790, 2147483648
      %v5844 = vxor.u32 %v5796, 2147483648
      %v5845 = vxor.u32 %v5802, 2147483648
      %v5846 = vxor.u32 %v5808, 2147483648
      %v5847 = vxor.u32 %v5814, 2147483648
      %v5848 = vxor.u32 %v5820, 2147483648
      %v5849 = vxor.u32 %v5826, 2147483648
      %v5850 = vxor.u32 %v5832, 2147483648
      %v5851 = vmul.f32 %v5835, 1.442695
      %v5852 = vpow.pop %v5851
      %v5853 = vmul.f32 %v5836, 1.442695
      %v5854 = vpow.pop %v5853
      %v5855 = vmul.f32 %v5837, 1.442695
      %v5856 = vpow.pop %v5855
      %v5857 = vmul.f32 %v5838, 1.442695
      %v5858 = vpow.pop %v5857
      %v5859 = vmul.f32 %v5839, 1.442695
      %v5860 = vpow.pop %v5859
      %v5861 = vmul.f32 %v5840, 1.442695
      %v5862 = vpow.pop %v5861
      %v5863 = vmul.f32 %v5841, 1.442695
      %v5864 = vpow.pop %v5863
      %v5865 = vmul.f32 %v5842, 1.442695
      %v5866 = vpow.pop %v5865
      %v5867 = vmul.f32 %v5843, 1.442695
      %v5868 = vpow.pop %v5867
      %v5869 = vmul.f32 %v5844, 1.442695
      %v5870 = vpow.pop %v5869
      %v5871 = vmul.f32 %v5845, 1.442695
      %v5872 = vpow.pop %v5871
      %v5873 = vmul.f32 %v5846, 1.442695
      %v5874 = vpow.pop %v5873
      %v5875 = vmul.f32 %v5847, 1.442695
      %v5876 = vpow.pop %v5875
      %v5877 = vmul.f32 %v5848, 1.442695
      %v5878 = vpow.pop %v5877
      %v5879 = vmul.f32 %v5849, 1.442695
      %v5880 = vpow.pop %v5879
      %v5881 = vmul.f32 %v5850, 1.442695
      %v5882 = vpow.pop %v5881
      %v5883 = vadd.f32 %v5852, 1.0
      %v5884 = vadd.f32 %v5854, 1.0
      %v5885 = vadd.f32 %v5856, 1.0
      %v5886 = vadd.f32 %v5858, 1.0
      %v5887 = vadd.f32 %v5860, 1.0
      %v5888 = vadd.f32 %v5862, 1.0
      %v5889 = vadd.f32 %v5864, 1.0
      %v5890 = vadd.f32 %v5866, 1.0
      %v5891 = vadd.f32 %v5868, 1.0
      %v5892 = vadd.f32 %v5870, 1.0
      %v5893 = vadd.f32 %v5872, 1.0
      %v5894 = vadd.f32 %v5874, 1.0
      %v5895 = vadd.f32 %v5876, 1.0
      %v5896 = vadd.f32 %v5878, 1.0
      %v5897 = vadd.f32 %v5880, 1.0
      %v5898 = vadd.f32 %v5882, 1.0
      %v5899 = vrcp.pop %v5883
      %v5900 = vmul.f32 1.0, %v5899
      %v5901 = vrcp.pop %v5884
      %v5902 = vmul.f32 1.0, %v5901
      %v5903 = vrcp.pop %v5885
      %v5904 = vmul.f32 1.0, %v5903
      %v5905 = vrcp.pop %v5886
      %v5906 = vmul.f32 1.0, %v5905
      %v5907 = vrcp.pop %v5887
      %v5908 = vmul.f32 1.0, %v5907
      %v5909 = vrcp.pop %v5888
      %v5910 = vmul.f32 1.0, %v5909
      %v5911 = vrcp.pop %v5889
      %v5912 = vmul.f32 1.0, %v5911
      %v5913 = vrcp.pop %v5890
      %v5914 = vmul.f32 1.0, %v5913
      %v5915 = vrcp.pop %v5891
      %v5916 = vmul.f32 1.0, %v5915
      %v5917 = vrcp.pop %v5892
      %v5918 = vmul.f32 1.0, %v5917
      %v5919 = vrcp.pop %v5893
      %v5920 = vmul.f32 1.0, %v5919
      %v5921 = vrcp.pop %v5894
      %v5922 = vmul.f32 1.0, %v5921
      %v5923 = vrcp.pop %v5895
      %v5924 = vmul.f32 1.0, %v5923
      %v5925 = vrcp.pop %v5896
      %v5926 = vmul.f32 1.0, %v5925
      %v5927 = vrcp.pop %v5897
      %v5928 = vmul.f32 1.0, %v5927
      %v5929 = vrcp.pop %v5898
      %v5930 = vmul.f32 1.0, %v5929
      %v5931 = vmul.f32 %v3477, %v5900
      %v5932 = vmul.f32 %v3478, %v5902
      %v5933 = vmul.f32 %v3479, %v5904
      %v5934 = vmul.f32 %v3480, %v5906
      %v5935 = vmul.f32 %v3481, %v5908
      %v5936 = vmul.f32 %v3482, %v5910
      %v5937 = vmul.f32 %v3483, %v5912
      %v5938 = vmul.f32 %v3484, %v5914
      %v5939 = vmul.f32 %v3485, %v5916
      %v5940 = vmul.f32 %v3486, %v5918
      %v5941 = vmul.f32 %v3487, %v5920
      %v5942 = vmul.f32 %v3488, %v5922
      %v5943 = vmul.f32 %v3489, %v5924
      %v5944 = vmul.f32 %v3490, %v5926
      %v5945 = vmul.f32 %v3491, %v5928
      %v5946 = vmul.f32 %v3492, %v5930
      %v5947 = vld [vmem:[%s1 + $0xf0] sm:$0xff]
      %v5948 = vld [vmem:[%s1 + $0xf8] sm:$0xff]
      %v5949 = vld [vmem:[%s1 + $0x100] sm:$0xff]
      %v5950 = vld [vmem:[%s1 + $0x108] sm:$0xff]
      %v5951 = vld [vmem:[%s1 + $0x118] sm:$0xff]
      %v5952 = vld [vmem:[%s1 + $0x120] sm:$0xff]
      %v5953 = vld [vmem:[%s1 + $0x128] sm:$0xff]
      %v5954 = vld [vmem:[%s1 + $0x130] sm:$0xff]
      %5956 = vset.pattern.permute.xlu0 0
      %5957 = vperm.xlu0 %5956, %v5951
      %v5958 = vpop.permute.xlu0 %5957
      %5961 = vset.pattern.permute.xlu0 0
      %5962 = vperm.xlu0 %5961, %v5952
      %v5963 = vpop.permute.xlu0 %5962
      %5966 = vset.pattern.permute.xlu0 0
      %5967 = vperm.xlu0 %5966, %v5953
      %v5968 = vpop.permute.xlu0 %5967
      %5971 = vset.pattern.permute.xlu0 0
      %5972 = vperm.xlu0 %5971, %v5954
      %v5973 = vpop.permute.xlu0 %5972
      %5975 = vmatprep.subr.mxu0 0.0
      %v5976 = vand.u32 %v5931, 4294901760
      %5977 = vmatpush1.xpose.msra.mxu0 %v5976
      %5978 = vmatprep.subr.mxu0 0.0
      %v5979 = vand.u32 %v5932, 4294901760
      %5980 = vmatpush1.xpose.msra.mxu0 %v5979
      %5981 = vmatprep.subr.mxu0 0.0
      %v5982 = vand.u32 %v5933, 4294901760
      %5983 = vmatpush1.xpose.msra.mxu0 %v5982
      %5984 = vmatprep.subr.mxu0 0.0
      %v5985 = vand.u32 %v5934, 4294901760
      %5986 = vmatpush1.xpose.msra.mxu0 %v5985
      %5987 = vmatprep.subr.mxu0 0.0
      %v5988 = vand.u32 %v5935, 4294901760
      %5989 = vmatpush1.xpose.msra.mxu0 %v5988
      %5990 = vmatprep.subr.mxu0 0.0
      %v5991 = vand.u32 %v5936, 4294901760
      %5992 = vmatpush1.xpose.msra.mxu0 %v5991
      %5993 = vmatprep.subr.mxu0 0.0
      %v5994 = vand.u32 %v5937, 4294901760
      %5995 = vmatpush1.xpose.msra.mxu0 %v5994
      %5996 = vmatprep.subr.mxu0 0.0
      %v5997 = vand.u32 %v5938, 4294901760
      %5998 = vmatpush1.xpose.msra.mxu0 %v5997
      %5999 = vmatprep.subr.mxu0 0.0
      %v6000 = vand.u32 %v5939, 4294901760
      %6001 = vmatpush1.xpose.msra.mxu0 %v6000
      %6002 = vmatprep.subr.mxu0 0.0
      %v6003 = vand.u32 %v5940, 4294901760
      %6004 = vmatpush1.xpose.msra.mxu0 %v6003
      %6005 = vmatprep.subr.mxu0 0.0
      %v6006 = vand.u32 %v5941, 4294901760
      %6007 = vmatpush1.xpose.msra.mxu0 %v6006
      %6008 = vmatprep.subr.mxu0 0.0
      %v6009 = vand.u32 %v5942, 4294901760
      %6010 = vmatpush1.xpose.msra.mxu0 %v6009
      %6011 = vmatprep.subr.mxu0 0.0
      %v6012 = vand.u32 %v5943, 4294901760
      %6013 = vmatpush1.xpose.msra.mxu0 %v6012
      %6014 = vmatprep.subr.mxu0 0.0
      %v6015 = vand.u32 %v5944, 4294901760
      %6016 = vmatpush1.xpose.msra.mxu0 %v6015
      %6017 = vmatprep.subr.mxu0 0.0
      %v6018 = vand.u32 %v5945, 4294901760
      %6019 = vmatpush1.xpose.msra.mxu0 %v6018
      %6020 = vmatprep.subr.mxu0 0.0
      %v6021 = vand.u32 %v5946, 4294901760
      %6022 = vmatpush1.xpose.msra.mxu0 %v6021
      %6023 = vmatprep.subr.mxu0 0.0
      %6024 = vmatpush1.xpose.msra.mxu0 0.0
      %6025 = vmatprep.subr.mxu0 0.0
      %6026 = vmatpush1.xpose.msra.mxu0 0.0
      %6027 = vmatprep.subr.mxu0 0.0
      %6028 = vmatpush1.xpose.msra.mxu0 0.0
      %6029 = vmatprep.subr.mxu0 0.0
      %6030 = vmatpush1.xpose.msra.mxu0 0.0
      %6031 = vmatprep.subr.mxu0 0.0
      %6032 = vmatpush1.xpose.msra.mxu0 0.0
      %6033 = vmatprep.subr.mxu0 0.0
      %6034 = vmatpush1.xpose.msra.mxu0 0.0
      %6035 = vmatprep.subr.mxu0 0.0
      %6036 = vmatpush1.xpose.msra.mxu0 0.0
      %6037 = vmatprep.subr.mxu0 0.0
      %6038 = vmatpush1.xpose.msra.mxu0 0.0
      %6039 = vmatprep.subr.mxu0 0.0
      %6040 = vmatpush1.xpose.msra.mxu0 0.0
      %6041 = vmatprep.subr.mxu0 0.0
      %6042 = vmatpush1.xpose.msra.mxu0 0.0
      %6043 = vmatprep.subr.mxu0 0.0
      %6044 = vmatpush1.xpose.msra.mxu0 0.0
      %6045 = vmatprep.subr.mxu0 0.0
      %6046 = vmatpush1.xpose.msra.mxu0 0.0
      %6047 = vmatprep.subr.mxu0 0.0
      %6048 = vmatpush1.xpose.msra.mxu0 0.0
      %6049 = vmatprep.subr.mxu0 0.0
      %6050 = vmatpush1.xpose.msra.mxu0 0.0
      %6051 = vmatprep.subr.mxu0 0.0
      %6052 = vmatpush1.xpose.msra.mxu0 0.0
      %6053 = vmatprep.subr.mxu0 0.0
      %6054 = vmatpush1.xpose.msra.mxu0 0.0
      %6055 = vmatprep.mubr.f32.mxu0 0.0
      %v6056 = vand.u32 %v5947, 4294901760
      %v6057 = vsub.f32 %v5947, %v6056
      %v6058 = vand.u32 %v6057, 4294901760
      %v6059 = vsub.f32 %v6057, %v6058
      %v6060 = vand.u32 %v6059, 4294901760
      %6061 = vmatmul.mubr.f32.gmra.mrb[0].mxu0 %v6060
      %v6062 = vpop.f32.mrb[0].mxu0
      %v6063 = vadd.f32 %v5958, %v6062
      %v6064 = vpop.f32.mrb[0].mxu0
      %6065 = vmatprep.mubr.f32.mxu0 0.0
      %v6066 = vand.u32 %v5948, 4294901760
      %v6067 = vsub.f32 %v5948, %v6066
      %v6068 = vand.u32 %v6067, 4294901760
      %v6069 = vsub.f32 %v6067, %v6068
      %v6070 = vand.u32 %v6069, 4294901760
      %6071 = vmatmul.mubr.f32.gmra.mrb[0].mxu0 %v6070
      %v6072 = vpop.f32.mrb[0].mxu0
      %v6073 = vadd.f32 %v5963, %v6072
      %v6074 = vpop.f32.mrb[0].mxu0
      %6075 = vmatprep.mubr.f32.mxu0 0.0
      %v6076 = vand.u32 %v5949, 4294901760
      %v6077 = vsub.f32 %v5949, %v6076
      %v6078 = vand.u32 %v6077, 4294901760
      %v6079 = vsub.f32 %v6077, %v6078
      %v6080 = vand.u32 %v6079, 4294901760
      %6081 = vmatmul.mubr.f32.gmra.mrb[0].mxu0 %v6080
      %v6082 = vpop.f32.mrb[0].mxu0
      %v6083 = vadd.f32 %v5968, %v6082
      %v6084 = vpop.f32.mrb[0].mxu0
      %6085 = vmatprep.mubr.f32.mxu0 0.0
      %v6086 = vand.u32 %v5950, 4294901760
      %v6087 = vsub.f32 %v5950, %v6086
      %v6088 = vand.u32 %v6087, 4294901760
      %v6089 = vsub.f32 %v6087, %v6088
      %v6090 = vand.u32 %v6089, 4294901760
      %6091 = vmatmul.mubr.f32.gmra.mrb[0].mxu0 %v6090
      %v6092 = vpop.f32.mrb[0].mxu0
      %v6093 = vadd.f32 %v5973, %v6092
      %v6094 = vpop.f32.mrb[0].mxu0
      %6095 = vdwg.mxu0
      %6096 = vmatprep.subr.mxu0 0.0
      %v6097 = vand.u32 %v5931, 4294901760
      %v6098 = vsub.f32 %v5931, %v6097
      %v6099 = vand.u32 %v6098, 4294901760
      %v6100 = vsub.f32 %v6098, %v6099
      %v6101 = vand.u32 %v6100, 4294901760
      %6102 = vmatpush1.xpose.msra.mxu0 %v6101
      %6103 = vmatprep.subr.mxu0 0.0
      %v6104 = vand.u32 %v5932, 4294901760
      %v6105 = vsub.f32 %v5932, %v6104
      %v6106 = vand.u32 %v6105, 4294901760
      %v6107 = vsub.f32 %v6105, %v6106
      %v6108 = vand.u32 %v6107, 4294901760
      %6109 = vmatpush1.xpose.msra.mxu0 %v6108
      %6110 = vmatprep.subr.mxu0 0.0
      %v6111 = vand.u32 %v5933, 4294901760
      %v6112 = vsub.f32 %v5933, %v6111
      %v6113 = vand.u32 %v6112, 4294901760
      %v6114 = vsub.f32 %v6112, %v6113
      %v6115 = vand.u32 %v6114, 4294901760
      %6116 = vmatpush1.xpose.msra.mxu0 %v6115
      %6117 = vmatprep.subr.mxu0 0.0
      %v6118 = vand.u32 %v5934, 4294901760
      %v6119 = vsub.f32 %v5934, %v6118
      %v6120 = vand.u32 %v6119, 4294901760
      %v6121 = vsub.f32 %v6119, %v6120
      %v6122 = vand.u32 %v6121, 4294901760
      %6123 = vmatpush1.xpose.msra.mxu0 %v6122
      %6124 = vmatprep.subr.mxu0 0.0
      %v6125 = vand.u32 %v5935, 4294901760
      %v6126 = vsub.f32 %v5935, %v6125
      %v6127 = vand.u32 %v6126, 4294901760
      %v6128 = vsub.f32 %v6126, %v6127
      %v6129 = vand.u32 %v6128, 4294901760
      %6130 = vmatpush1.xpose.msra.mxu0 %v6129
      %6131 = vmatprep.subr.mxu0 0.0
      %v6132 = vand.u32 %v5936, 4294901760
      %v6133 = vsub.f32 %v5936, %v6132
      %v6134 = vand.u32 %v6133, 4294901760
      %v6135 = vsub.f32 %v6133, %v6134
      %v6136 = vand.u32 %v6135, 4294901760
      %6137 = vmatpush1.xpose.msra.mxu0 %v6136
      %6138 = vmatprep.subr.mxu0 0.0
      %v6139 = vand.u32 %v5937, 4294901760
      %v6140 = vsub.f32 %v5937, %v6139
      %v6141 = vand.u32 %v6140, 4294901760
      %v6142 = vsub.f32 %v6140, %v6141
      %v6143 = vand.u32 %v6142, 4294901760
      %6144 = vmatpush1.xpose.msra.mxu0 %v6143
      %6145 = vmatprep.subr.mxu0 0.0
      %v6146 = vand.u32 %v5938, 4294901760
      %v6147 = vsub.f32 %v5938, %v6146
      %v6148 = vand.u32 %v6147, 4294901760
      %v6149 = vsub.f32 %v6147, %v6148
      %v6150 = vand.u32 %v6149, 4294901760
      %6151 = vmatpush1.xpose.msra.mxu0 %v6150
      %6152 = vmatprep.subr.mxu0 0.0
      %v6153 = vand.u32 %v5939, 4294901760
      %v6154 = vsub.f32 %v5939, %v6153
      %v6155 = vand.u32 %v6154, 4294901760
      %v6156 = vsub.f32 %v6154, %v6155
      %v6157 = vand.u32 %v6156, 4294901760
      %6158 = vmatpush1.xpose.msra.mxu0 %v6157
      %6159 = vmatprep.subr.mxu0 0.0
      %v6160 = vand.u32 %v5940, 4294901760
      %v6161 = vsub.f32 %v5940, %v6160
      %v6162 = vand.u32 %v6161, 4294901760
      %v6163 = vsub.f32 %v6161, %v6162
      %v6164 = vand.u32 %v6163, 4294901760
      %6165 = vmatpush1.xpose.msra.mxu0 %v6164
      %6166 = vmatprep.subr.mxu0 0.0
      %v6167 = vand.u32 %v5941, 4294901760
      %v6168 = vsub.f32 %v5941, %v6167
      %v6169 = vand.u32 %v6168, 4294901760
      %v6170 = vsub.f32 %v6168, %v6169
      %v6171 = vand.u32 %v6170, 4294901760
      %6172 = vmatpush1.xpose.msra.mxu0 %v6171
      %6173 = vmatprep.subr.mxu0 0.0
      %v6174 = vand.u32 %v5942, 4294901760
      %v6175 = vsub.f32 %v5942, %v6174
      %v6176 = vand.u32 %v6175, 4294901760
      %v6177 = vsub.f32 %v6175, %v6176
      %v6178 = vand.u32 %v6177, 4294901760
      %6179 = vmatpush1.xpose.msra.mxu0 %v6178
      %6180 = vmatprep.subr.mxu0 0.0
      %v6181 = vand.u32 %v5943, 4294901760
      %v6182 = vsub.f32 %v5943, %v6181
      %v6183 = vand.u32 %v6182, 4294901760
      %v6184 = vsub.f32 %v6182, %v6183
      %v6185 = vand.u32 %v6184, 4294901760
      %6186 = vmatpush1.xpose.msra.mxu0 %v6185
      %6187 = vmatprep.subr.mxu0 0.0
      %v6188 = vand.u32 %v5944, 4294901760
      %v6189 = vsub.f32 %v5944, %v6188
      %v6190 = vand.u32 %v6189, 4294901760
      %v6191 = vsub.f32 %v6189, %v6190
      %v6192 = vand.u32 %v6191, 4294901760
      %6193 = vmatpush1.xpose.msra.mxu0 %v6192
      %6194 = vmatprep.subr.mxu0 0.0
      %v6195 = vand.u32 %v5945, 4294901760
      %v6196 = vsub.f32 %v5945, %v6195
      %v6197 = vand.u32 %v6196, 4294901760
      %v6198 = vsub.f32 %v6196, %v6197
      %v6199 = vand.u32 %v6198, 4294901760
      %6200 = vmatpush1.xpose.msra.mxu0 %v6199
      %6201 = vmatprep.subr.mxu0 0.0
      %v6202 = vand.u32 %v5946, 4294901760
      %v6203 = vsub.f32 %v5946, %v6202
      %v6204 = vand.u32 %v6203, 4294901760
      %v6205 = vsub.f32 %v6203, %v6204
      %v6206 = vand.u32 %v6205, 4294901760
      %6207 = vmatpush1.xpose.msra.mxu0 %v6206
      %6208 = vmatprep.subr.mxu0 0.0
      %6209 = vmatpush1.xpose.msra.mxu0 0.0
      %6210 = vmatprep.subr.mxu0 0.0
      %6211 = vmatpush1.xpose.msra.mxu0 0.0
      %6212 = vmatprep.subr.mxu0 0.0
      %6213 = vmatpush1.xpose.msra.mxu0 0.0
      %6214 = vmatprep.subr.mxu0 0.0
      %6215 = vmatpush1.xpose.msra.mxu0 0.0
      %6216 = vmatprep.subr.mxu0 0.0
      %6217 = vmatpush1.xpose.msra.mxu0 0.0
      %6218 = vmatprep.subr.mxu0 0.0
      %6219 = vmatpush1.xpose.msra.mxu0 0.0
      %6220 = vmatprep.subr.mxu0 0.0
      %6221 = vmatpush1.xpose.msra.mxu0 0.0
      %6222 = vmatprep.subr.mxu0 0.0
      %6223 = vmatpush1.xpose.msra.mxu0 0.0
      %6224 = vmatprep.subr.mxu0 0.0
      %6225 = vmatpush1.xpose.msra.mxu0 0.0
      %6226 = vmatprep.subr.mxu0 0.0
      %6227 = vmatpush1.xpose.msra.mxu0 0.0
      %6228 = vmatprep.subr.mxu0 0.0
      %6229 = vmatpush1.xpose.msra.mxu0 0.0
      %6230 = vmatprep.subr.mxu0 0.0
      %6231 = vmatpush1.xpose.msra.mxu0 0.0
      %6232 = vmatprep.subr.mxu0 0.0
      %6233 = vmatpush1.xpose.msra.mxu0 0.0
      %6234 = vmatprep.subr.mxu0 0.0
      %6235 = vmatpush1.xpose.msra.mxu0 0.0
      %6236 = vmatprep.subr.mxu0 0.0
      %6237 = vmatpush1.xpose.msra.mxu0 0.0
      %6238 = vmatprep.subr.mxu0 0.0
      %6239 = vmatpush1.xpose.msra.mxu0 0.0
      %6240 = vmatprep.mubr.f32.mxu0 0.0
      %v6241 = vand.u32 %v5947, 4294901760
      %6242 = vmatmul.mubr.f32.gmra.mrb[0].mxu0 %v6241
      %v6243 = vpop.f32.mrb[0].mxu0
      %v6244 = vadd.f32 %v6063, %v6243
      %v6245 = vpop.f32.mrb[0].mxu0
      %6246 = vmatprep.mubr.f32.mxu0 0.0
      %v6247 = vand.u32 %v5948, 4294901760
      %6248 = vmatmul.mubr.f32.gmra.mrb[0].mxu0 %v6247
      %v6249 = vpop.f32.mrb[0].mxu0
      %v6250 = vadd.f32 %v6073, %v6249
      %v6251 = vpop.f32.mrb[0].mxu0
      %6252 = vmatprep.mubr.f32.mxu0 0.0
      %v6253 = vand.u32 %v5949, 4294901760
      %6254 = vmatmul.mubr.f32.gmra.mrb[0].mxu0 %v6253
      %v6255 = vpop.f32.mrb[0].mxu0
      %v6256 = vadd.f32 %v6083, %v6255
      %v6257 = vpop.f32.mrb[0].mxu0
      %6258 = vmatprep.mubr.f32.mxu0 0.0
      %v6259 = vand.u32 %v5950, 4294901760
      %6260 = vmatmul.mubr.f32.gmra.mrb[0].mxu0 %v6259
      %v6261 = vpop.f32.mrb[0].mxu0
      %v6262 = vadd.f32 %v6093, %v6261
      %v6263 = vpop.f32.mrb[0].mxu0
      %6264 = vdwg.mxu0
      %6265 = vmatprep.subr.mxu0 0.0
      %v6266 = vand.u32 %v5931, 4294901760
      %v6267 = vsub.f32 %v5931, %v6266
      %6268 = vmatpush1.xpose.msra.mxu0 %v6267
      %6269 = vmatprep.subr.mxu0 0.0
      %v6270 = vand.u32 %v5932, 4294901760
      %v6271 = vsub.f32 %v5932, %v6270
      %6272 = vmatpush1.xpose.msra.mxu0 %v6271
      %6273 = vmatprep.subr.mxu0 0.0
      %v6274 = vand.u32 %v5933, 4294901760
      %v6275 = vsub.f32 %v5933, %v6274
      %6276 = vmatpush1.xpose.msra.mxu0 %v6275
      %6277 = vmatprep.subr.mxu0 0.0
      %v6278 = vand.u32 %v5934, 4294901760
      %v6279 = vsub.f32 %v5934, %v6278
      %6280 = vmatpush1.xpose.msra.mxu0 %v6279
      %6281 = vmatprep.subr.mxu0 0.0
      %v6282 = vand.u32 %v5935, 4294901760
      %v6283 = vsub.f32 %v5935, %v6282
      %6284 = vmatpush1.xpose.msra.mxu0 %v6283
      %6285 = vmatprep.subr.mxu0 0.0
      %v6286 = vand.u32 %v5936, 4294901760
      %v6287 = vsub.f32 %v5936, %v6286
      %6288 = vmatpush1.xpose.msra.mxu0 %v6287
      %6289 = vmatprep.subr.mxu0 0.0
      %v6290 = vand.u32 %v5937, 4294901760
      %v6291 = vsub.f32 %v5937, %v6290
      %6292 = vmatpush1.xpose.msra.mxu0 %v6291
      %6293 = vmatprep.subr.mxu0 0.0
      %v6294 = vand.u32 %v5938, 4294901760
      %v6295 = vsub.f32 %v5938, %v6294
      %6296 = vmatpush1.xpose.msra.mxu0 %v6295
      %6297 = vmatprep.subr.mxu0 0.0
      %v6298 = vand.u32 %v5939, 4294901760
      %v6299 = vsub.f32 %v5939, %v6298
      %6300 = vmatpush1.xpose.msra.mxu0 %v6299
      %6301 = vmatprep.subr.mxu0 0.0
      %v6302 = vand.u32 %v5940, 4294901760
      %v6303 = vsub.f32 %v5940, %v6302
      %6304 = vmatpush1.xpose.msra.mxu0 %v6303
      %6305 = vmatprep.subr.mxu0 0.0
      %v6306 = vand.u32 %v5941, 4294901760
      %v6307 = vsub.f32 %v5941, %v6306
      %6308 = vmatpush1.xpose.msra.mxu0 %v6307
      %6309 = vmatprep.subr.mxu0 0.0
      %v6310 = vand.u32 %v5942, 4294901760
      %v6311 = vsub.f32 %v5942, %v6310
      %6312 = vmatpush1.xpose.msra.mxu0 %v6311
      %6313 = vmatprep.subr.mxu0 0.0
      %v6314 = vand.u32 %v5943, 4294901760
      %v6315 = vsub.f32 %v5943, %v6314
      %6316 = vmatpush1.xpose.msra.mxu0 %v6315
      %6317 = vmatprep.subr.mxu0 0.0
      %v6318 = vand.u32 %v5944, 4294901760
      %v6319 = vsub.f32 %v5944, %v6318
      %6320 = vmatpush1.xpose.msra.mxu0 %v6319
      %6321 = vmatprep.subr.mxu0 0.0
      %v6322 = vand.u32 %v5945, 4294901760
      %v6323 = vsub.f32 %v5945, %v6322
      %6324 = vmatpush1.xpose.msra.mxu0 %v6323
      %6325 = vmatprep.subr.mxu0 0.0
      %v6326 = vand.u32 %v5946, 4294901760
      %v6327 = vsub.f32 %v5946, %v6326
      %6328 = vmatpush1.xpose.msra.mxu0 %v6327
      %6329 = vmatprep.subr.mxu0 0.0
      %6330 = vmatpush1.xpose.msra.mxu0 0.0
      %6331 = vmatprep.subr.mxu0 0.0
      %6332 = vmatpush1.xpose.msra.mxu0 0.0
      %6333 = vmatprep.subr.mxu0 0.0
      %6334 = vmatpush1.xpose.msra.mxu0 0.0
      %6335 = vmatprep.subr.mxu0 0.0
      %6336 = vmatpush1.xpose.msra.mxu0 0.0
      %6337 = vmatprep.subr.mxu0 0.0
      %6338 = vmatpush1.xpose.msra.mxu0 0.0
      %6339 = vmatprep.subr.mxu0 0.0
      %6340 = vmatpush1.xpose.msra.mxu0 0.0
      %6341 = vmatprep.subr.mxu0 0.0
      %6342 = vmatpush1.xpose.msra.mxu0 0.0
      %6343 = vmatprep.subr.mxu0 0.0
      %6344 = vmatpush1.xpose.msra.mxu0 0.0
      %6345 = vmatprep.subr.mxu0 0.0
      %6346 = vmatpush1.xpose.msra.mxu0 0.0
      %6347 = vmatprep.subr.mxu0 0.0
      %6348 = vmatpush1.xpose.msra.mxu0 0.0
      %6349 = vmatprep.subr.mxu0 0.0
      %6350 = vmatpush1.xpose.msra.mxu0 0.0
      %6351 = vmatprep.subr.mxu0 0.0
      %6352 = vmatpush1.xpose.msra.mxu0 0.0
      %6353 = vmatprep.subr.mxu0 0.0
      %6354 = vmatpush1.xpose.msra.mxu0 0.0
      %6355 = vmatprep.subr.mxu0 0.0
      %6356 = vmatpush1.xpose.msra.mxu0 0.0
      %6357 = vmatprep.subr.mxu0 0.0
      %6358 = vmatpush1.xpose.msra.mxu0 0.0
      %6359 = vmatprep.subr.mxu0 0.0
      %6360 = vmatpush1.xpose.msra.mxu0 0.0
      %6361 = vmatprep.mubr.f32.mxu0 0.0
      %v6362 = vand.u32 %v5947, 4294901760
      %v6363 = vsub.f32 %v5947, %v6362
      %6364 = vmatmul.mubr.f32.gmra.mrb[0].mxu0 %v6363
      %v6365 = vpop.f32.mrb[0].mxu0
      %v6366 = vadd.f32 %v6244, %v6365
      %v6367 = vpop.f32.mrb[0].mxu0
      %6368 = vmatprep.mubr.f32.mxu0 0.0
      %v6369 = vand.u32 %v5948, 4294901760
      %v6370 = vsub.f32 %v5948, %v6369
      %6371 = vmatmul.mubr.f32.gmra.mrb[0].mxu0 %v6370
      %v6372 = vpop.f32.mrb[0].mxu0
      %v6373 = vadd.f32 %v6250, %v6372
      %v6374 = vpop.f32.mrb[0].mxu0
      %6375 = vmatprep.mubr.f32.mxu0 0.0
      %v6376 = vand.u32 %v5949, 4294901760
      %v6377 = vsub.f32 %v5949, %v6376
      %6378 = vmatmul.mubr.f32.gmra.mrb[0].mxu0 %v6377
      %v6379 = vpop.f32.mrb[0].mxu0
      %v6380 = vadd.f32 %v6256, %v6379
      %v6381 = vpop.f32.mrb[0].mxu0
      %6382 = vmatprep.mubr.f32.mxu0 0.0
      %v6383 = vand.u32 %v5950, 4294901760
      %v6384 = vsub.f32 %v5950, %v6383
      %6385 = vmatmul.mubr.f32.gmra.mrb[0].mxu0 %v6384
      %v6386 = vpop.f32.mrb[0].mxu0
      %v6387 = vadd.f32 %v6262, %v6386
      %v6388 = vpop.f32.mrb[0].mxu0
      %6389 = vdwg.mxu0
      %6390 = vmatprep.subr.mxu0 0.0
      %v6391 = vand.u32 %v5931, 4294901760
      %6392 = vmatpush1.xpose.msra.mxu0 %v6391
      %6393 = vmatprep.subr.mxu0 0.0
      %v6394 = vand.u32 %v5932, 4294901760
      %6395 = vmatpush1.xpose.msra.mxu0 %v6394
      %6396 = vmatprep.subr.mxu0 0.0
      %v6397 = vand.u32 %v5933, 4294901760
      %6398 = vmatpush1.xpose.msra.mxu0 %v6397
      %6399 = vmatprep.subr.mxu0 0.0
      %v6400 = vand.u32 %v5934, 4294901760
      %6401 = vmatpush1.xpose.msra.mxu0 %v6400
      %6402 = vmatprep.subr.mxu0 0.0
      %v6403 = vand.u32 %v5935, 4294901760
      %6404 = vmatpush1.xpose.msra.mxu0 %v6403
      %6405 = vmatprep.subr.mxu0 0.0
      %v6406 = vand.u32 %v5936, 4294901760
      %6407 = vmatpush1.xpose.msra.mxu0 %v6406
      %6408 = vmatprep.subr.mxu0 0.0
      %v6409 = vand.u32 %v5937, 4294901760
      %6410 = vmatpush1.xpose.msra.mxu0 %v6409
      %6411 = vmatprep.subr.mxu0 0.0
      %v6412 = vand.u32 %v5938, 4294901760
      %6413 = vmatpush1.xpose.msra.mxu0 %v6412
      %6414 = vmatprep.subr.mxu0 0.0
      %v6415 = vand.u32 %v5939, 4294901760
      %6416 = vmatpush1.xpose.msra.mxu0 %v6415
      %6417 = vmatprep.subr.mxu0 0.0
      %v6418 = vand.u32 %v5940, 4294901760
      %6419 = vmatpush1.xpose.msra.mxu0 %v6418
      %6420 = vmatprep.subr.mxu0 0.0
      %v6421 = vand.u32 %v5941, 4294901760
      %6422 = vmatpush1.xpose.msra.mxu0 %v6421
      %6423 = vmatprep.subr.mxu0 0.0
      %v6424 = vand.u32 %v5942, 4294901760
      %6425 = vmatpush1.xpose.msra.mxu0 %v6424
      %6426 = vmatprep.subr.mxu0 0.0
      %v6427 = vand.u32 %v5943, 4294901760
      %6428 = vmatpush1.xpose.msra.mxu0 %v6427
      %6429 = vmatprep.subr.mxu0 0.0
      %v6430 = vand.u32 %v5944, 4294901760
      %6431 = vmatpush1.xpose.msra.mxu0 %v6430
      %6432 = vmatprep.subr.mxu0 0.0
      %v6433 = vand.u32 %v5945, 4294901760
      %6434 = vmatpush1.xpose.msra.mxu0 %v6433
      %6435 = vmatprep.subr.mxu0 0.0
      %v6436 = vand.u32 %v5946, 4294901760
      %6437 = vmatpush1.xpose.msra.mxu0 %v6436
      %6438 = vmatprep.subr.mxu0 0.0
      %6439 = vmatpush1.xpose.msra.mxu0 0.0
      %6440 = vmatprep.subr.mxu0 0.0
      %6441 = vmatpush1.xpose.msra.mxu0 0.0
      %6442 = vmatprep.subr.mxu0 0.0
      %6443 = vmatpush1.xpose.msra.mxu0 0.0
      %6444 = vmatprep.subr.mxu0 0.0
      %6445 = vmatpush1.xpose.msra.mxu0 0.0
      %6446 = vmatprep.subr.mxu0 0.0
      %6447 = vmatpush1.xpose.msra.mxu0 0.0
      %6448 = vmatprep.subr.mxu0 0.0
      %6449 = vmatpush1.xpose.msra.mxu0 0.0
      %6450 = vmatprep.subr.mxu0 0.0
      %6451 = vmatpush1.xpose.msra.mxu0 0.0
      %6452 = vmatprep.subr.mxu0 0.0
      %6453 = vmatpush1.xpose.msra.mxu0 0.0
      %6454 = vmatprep.subr.mxu0 0.0
      %6455 = vmatpush1.xpose.msra.mxu0 0.0
      %6456 = vmatprep.subr.mxu0 0.0
      %6457 = vmatpush1.xpose.msra.mxu0 0.0
      %6458 = vmatprep.subr.mxu0 0.0
      %6459 = vmatpush1.xpose.msra.mxu0 0.0
      %6460 = vmatprep.subr.mxu0 0.0
      %6461 = vmatpush1.xpose.msra.mxu0 0.0
      %6462 = vmatprep.subr.mxu0 0.0
      %6463 = vmatpush1.xpose.msra.mxu0 0.0
      %6464 = vmatprep.subr.mxu0 0.0
      %6465 = vmatpush1.xpose.msra.mxu0 0.0
      %6466 = vmatprep.subr.mxu0 0.0
      %6467 = vmatpush1.xpose.msra.mxu0 0.0
      %6468 = vmatprep.subr.mxu0 0.0
      %6469 = vmatpush1.xpose.msra.mxu0 0.0
      %6470 = vmatprep.mubr.f32.mxu0 0.0
      %v6471 = vand.u32 %v5947, 4294901760
      %v6472 = vsub.f32 %v5947, %v6471
      %v6473 = vand.u32 %v6472, 4294901760
      %6474 = vmatmul.mubr.f32.gmra.mrb[0].mxu0 %v6473
      %v6475 = vpop.f32.mrb[0].mxu0
      %v6476 = vadd.f32 %v6366, %v6475
      %v6477 = vpop.f32.mrb[0].mxu0
      %6478 = vmatprep.mubr.f32.mxu0 0.0
      %v6479 = vand.u32 %v5948, 4294901760
      %v6480 = vsub.f32 %v5948, %v6479
      %v6481 = vand.u32 %v6480, 4294901760
      %6482 = vmatmul.mubr.f32.gmra.mrb[0].mxu0 %v6481
      %v6483 = vpop.f32.mrb[0].mxu0
      %v6484 = vadd.f32 %v6373, %v6483
      %v6485 = vpop.f32.mrb[0].mxu0
      %6486 = vmatprep.mubr.f32.mxu0 0.0
      %v6487 = vand.u32 %v5949, 4294901760
      %v6488 = vsub.f32 %v5949, %v6487
      %v6489 = vand.u32 %v6488, 4294901760
      %6490 = vmatmul.mubr.f32.gmra.mrb[0].mxu0 %v6489
      %v6491 = vpop.f32.mrb[0].mxu0
      %v6492 = vadd.f32 %v6380, %v6491
      %v6493 = vpop.f32.mrb[0].mxu0
      %6494 = vmatprep.mubr.f32.mxu0 0.0
      %v6495 = vand.u32 %v5950, 4294901760
      %v6496 = vsub.f32 %v5950, %v6495
      %v6497 = vand.u32 %v6496, 4294901760
      %6498 = vmatmul.mubr.f32.gmra.mrb[0].mxu0 %v6497
      %v6499 = vpop.f32.mrb[0].mxu0
      %v6500 = vadd.f32 %v6387, %v6499
      %v6501 = vpop.f32.mrb[0].mxu0
      %6502 = vdwg.mxu0
      %6503 = vmatprep.subr.mxu0 0.0
      %v6504 = vand.u32 %v5931, 4294901760
      %v6505 = vsub.f32 %v5931, %v6504
      %v6506 = vand.u32 %v6505, 4294901760
      %6507 = vmatpush1.xpose.msra.mxu0 %v6506
      %6508 = vmatprep.subr.mxu0 0.0
      %v6509 = vand.u32 %v5932, 4294901760
      %v6510 = vsub.f32 %v5932, %v6509
      %v6511 = vand.u32 %v6510, 4294901760
      %6512 = vmatpush1.xpose.msra.mxu0 %v6511
      %6513 = vmatprep.subr.mxu0 0.0
      %v6514 = vand.u32 %v5933, 4294901760
      %v6515 = vsub.f32 %v5933, %v6514
      %v6516 = vand.u32 %v6515, 4294901760
      %6517 = vmatpush1.xpose.msra.mxu0 %v6516
      %6518 = vmatprep.subr.mxu0 0.0
      %v6519 = vand.u32 %v5934, 4294901760
      %v6520 = vsub.f32 %v5934, %v6519
      %v6521 = vand.u32 %v6520, 4294901760
      %6522 = vmatpush1.xpose.msra.mxu0 %v6521
      %6523 = vmatprep.subr.mxu0 0.0
      %v6524 = vand.u32 %v5935, 4294901760
      %v6525 = vsub.f32 %v5935, %v6524
      %v6526 = vand.u32 %v6525, 4294901760
      %6527 = vmatpush1.xpose.msra.mxu0 %v6526
      %6528 = vmatprep.subr.mxu0 0.0
      %v6529 = vand.u32 %v5936, 4294901760
      %v6530 = vsub.f32 %v5936, %v6529
      %v6531 = vand.u32 %v6530, 4294901760
      %6532 = vmatpush1.xpose.msra.mxu0 %v6531
      %6533 = vmatprep.subr.mxu0 0.0
      %v6534 = vand.u32 %v5937, 4294901760
      %v6535 = vsub.f32 %v5937, %v6534
      %v6536 = vand.u32 %v6535, 4294901760
      %6537 = vmatpush1.xpose.msra.mxu0 %v6536
      %6538 = vmatprep.subr.mxu0 0.0
      %v6539 = vand.u32 %v5938, 4294901760
      %v6540 = vsub.f32 %v5938, %v6539
      %v6541 = vand.u32 %v6540, 4294901760
      %6542 = vmatpush1.xpose.msra.mxu0 %v6541
      %6543 = vmatprep.subr.mxu0 0.0
      %v6544 = vand.u32 %v5939, 4294901760
      %v6545 = vsub.f32 %v5939, %v6544
      %v6546 = vand.u32 %v6545, 4294901760
      %6547 = vmatpush1.xpose.msra.mxu0 %v6546
      %6548 = vmatprep.subr.mxu0 0.0
      %v6549 = vand.u32 %v5940, 4294901760
      %v6550 = vsub.f32 %v5940, %v6549
      %v6551 = vand.u32 %v6550, 4294901760
      %6552 = vmatpush1.xpose.msra.mxu0 %v6551
      %6553 = vmatprep.subr.mxu0 0.0
      %v6554 = vand.u32 %v5941, 4294901760
      %v6555 = vsub.f32 %v5941, %v6554
      %v6556 = vand.u32 %v6555, 4294901760
      %6557 = vmatpush1.xpose.msra.mxu0 %v6556
      %6558 = vmatprep.subr.mxu0 0.0
      %v6559 = vand.u32 %v5942, 4294901760
      %v6560 = vsub.f32 %v5942, %v6559
      %v6561 = vand.u32 %v6560, 4294901760
      %6562 = vmatpush1.xpose.msra.mxu0 %v6561
      %6563 = vmatprep.subr.mxu0 0.0
      %v6564 = vand.u32 %v5943, 4294901760
      %v6565 = vsub.f32 %v5943, %v6564
      %v6566 = vand.u32 %v6565, 4294901760
      %6567 = vmatpush1.xpose.msra.mxu0 %v6566
      %6568 = vmatprep.subr.mxu0 0.0
      %v6569 = vand.u32 %v5944, 4294901760
      %v6570 = vsub.f32 %v5944, %v6569
      %v6571 = vand.u32 %v6570, 4294901760
      %6572 = vmatpush1.xpose.msra.mxu0 %v6571
      %6573 = vmatprep.subr.mxu0 0.0
      %v6574 = vand.u32 %v5945, 4294901760
      %v6575 = vsub.f32 %v5945, %v6574
      %v6576 = vand.u32 %v6575, 4294901760
      %6577 = vmatpush1.xpose.msra.mxu0 %v6576
      %6578 = vmatprep.subr.mxu0 0.0
      %v6579 = vand.u32 %v5946, 4294901760
      %v6580 = vsub.f32 %v5946, %v6579
      %v6581 = vand.u32 %v6580, 4294901760
      %6582 = vmatpush1.xpose.msra.mxu0 %v6581
      %6583 = vmatprep.subr.mxu0 0.0
      %6584 = vmatpush1.xpose.msra.mxu0 0.0
      %6585 = vmatprep.subr.mxu0 0.0
      %6586 = vmatpush1.xpose.msra.mxu0 0.0
      %6587 = vmatprep.subr.mxu0 0.0
      %6588 = vmatpush1.xpose.msra.mxu0 0.0
      %6589 = vmatprep.subr.mxu0 0.0
      %6590 = vmatpush1.xpose.msra.mxu0 0.0
      %6591 = vmatprep.subr.mxu0 0.0
      %6592 = vmatpush1.xpose.msra.mxu0 0.0
      %6593 = vmatprep.subr.mxu0 0.0
      %6594 = vmatpush1.xpose.msra.mxu0 0.0
      %6595 = vmatprep.subr.mxu0 0.0
      %6596 = vmatpush1.xpose.msra.mxu0 0.0
      %6597 = vmatprep.subr.mxu0 0.0
      %6598 = vmatpush1.xpose.msra.mxu0 0.0
      %6599 = vmatprep.subr.mxu0 0.0
      %6600 = vmatpush1.xpose.msra.mxu0 0.0
      %6601 = vmatprep.subr.mxu0 0.0
      %6602 = vmatpush1.xpose.msra.mxu0 0.0
      %6603 = vmatprep.subr.mxu0 0.0
      %6604 = vmatpush1.xpose.msra.mxu0 0.0
      %6605 = vmatprep.subr.mxu0 0.0
      %6606 = vmatpush1.xpose.msra.mxu0 0.0
      %6607 = vmatprep.subr.mxu0 0.0
      %6608 = vmatpush1.xpose.msra.mxu0 0.0
      %6609 = vmatprep.subr.mxu0 0.0
      %6610 = vmatpush1.xpose.msra.mxu0 0.0
      %6611 = vmatprep.subr.mxu0 0.0
      %6612 = vmatpush1.xpose.msra.mxu0 0.0
      %6613 = vmatprep.subr.mxu0 0.0
      %6614 = vmatpush1.xpose.msra.mxu0 0.0
      %6615 = vmatprep.mubr.f32.mxu0 0.0
      %v6616 = vand.u32 %v5947, 4294901760
      %6617 = vmatmul.mubr.f32.gmra.mrb[0].mxu0 %v6616
      %v6618 = vpop.f32.mrb[0].mxu0
      %v6619 = vadd.f32 %v6476, %v6618
      %v6620 = vpop.f32.mrb[0].mxu0
      %6621 = vmatprep.mubr.f32.mxu0 0.0
      %v6622 = vand.u32 %v5948, 4294901760
      %6623 = vmatmul.mubr.f32.gmra.mrb[0].mxu0 %v6622
      %v6624 = vpop.f32.mrb[0].mxu0
      %v6625 = vadd.f32 %v6484, %v6624
      %v6626 = vpop.f32.mrb[0].mxu0
      %6627 = vmatprep.mubr.f32.mxu0 0.0
      %v6628 = vand.u32 %v5949, 4294901760
      %6629 = vmatmul.mubr.f32.gmra.mrb[0].mxu0 %v6628
      %v6630 = vpop.f32.mrb[0].mxu0
      %v6631 = vadd.f32 %v6492, %v6630
      %v6632 = vpop.f32.mrb[0].mxu0
      %6633 = vmatprep.mubr.f32.mxu0 0.0
      %v6634 = vand.u32 %v5950, 4294901760
      %6635 = vmatmul.mubr.f32.gmra.mrb[0].mxu0 %v6634
      %v6636 = vpop.f32.mrb[0].mxu0
      %v6637 = vadd.f32 %v6500, %v6636
      %v6638 = vpop.f32.mrb[0].mxu0
      %6639 = vdwg.mxu0
      %6640 = vmatprep.subr.mxu0 0.0
      %v6641 = vand.u32 %v5931, 4294901760
      %6642 = vmatpush1.xpose.msra.mxu0 %v6641
      %6643 = vmatprep.subr.mxu0 0.0
      %v6644 = vand.u32 %v5932, 4294901760
      %6645 = vmatpush1.xpose.msra.mxu0 %v6644
      %6646 = vmatprep.subr.mxu0 0.0
      %v6647 = vand.u32 %v5933, 4294901760
      %6648 = vmatpush1.xpose.msra.mxu0 %v6647
      %6649 = vmatprep.subr.mxu0 0.0
      %v6650 = vand.u32 %v5934, 4294901760
      %6651 = vmatpush1.xpose.msra.mxu0 %v6650
      %6652 = vmatprep.subr.mxu0 0.0
      %v6653 = vand.u32 %v5935, 4294901760
      %6654 = vmatpush1.xpose.msra.mxu0 %v6653
      %6655 = vmatprep.subr.mxu0 0.0
      %v6656 = vand.u32 %v5936, 4294901760
      %6657 = vmatpush1.xpose.msra.mxu0 %v6656
      %6658 = vmatprep.subr.mxu0 0.0
      %v6659 = vand.u32 %v5937, 4294901760
      %6660 = vmatpush1.xpose.msra.mxu0 %v6659
      %6661 = vmatprep.subr.mxu0 0.0
      %v6662 = vand.u32 %v5938, 4294901760
      %6663 = vmatpush1.xpose.msra.mxu0 %v6662
      %6664 = vmatprep.subr.mxu0 0.0
      %v6665 = vand.u32 %v5939, 4294901760
      %6666 = vmatpush1.xpose.msra.mxu0 %v6665
      %6667 = vmatprep.subr.mxu0 0.0
      %v6668 = vand.u32 %v5940, 4294901760
      %6669 = vmatpush1.xpose.msra.mxu0 %v6668
      %6670 = vmatprep.subr.mxu0 0.0
      %v6671 = vand.u32 %v5941, 4294901760
      %6672 = vmatpush1.xpose.msra.mxu0 %v6671
      %6673 = vmatprep.subr.mxu0 0.0
      %v6674 = vand.u32 %v5942, 4294901760
      %6675 = vmatpush1.xpose.msra.mxu0 %v6674
      %6676 = vmatprep.subr.mxu0 0.0
      %v6677 = vand.u32 %v5943, 4294901760
      %6678 = vmatpush1.xpose.msra.mxu0 %v6677
      %6679 = vmatprep.subr.mxu0 0.0
      %v6680 = vand.u32 %v5944, 4294901760
      %6681 = vmatpush1.xpose.msra.mxu0 %v6680
      %6682 = vmatprep.subr.mxu0 0.0
      %v6683 = vand.u32 %v5945, 4294901760
      %6684 = vmatpush1.xpose.msra.mxu0 %v6683
      %6685 = vmatprep.subr.mxu0 0.0
      %v6686 = vand.u32 %v5946, 4294901760
      %6687 = vmatpush1.xpose.msra.mxu0 %v6686
      %6688 = vmatprep.subr.mxu0 0.0
      %6689 = vmatpush1.xpose.msra.mxu0 0.0
      %6690 = vmatprep.subr.mxu0 0.0
      %6691 = vmatpush1.xpose.msra.mxu0 0.0
      %6692 = vmatprep.subr.mxu0 0.0
      %6693 = vmatpush1.xpose.msra.mxu0 0.0
      %6694 = vmatprep.subr.mxu0 0.0
      %6695 = vmatpush1.xpose.msra.mxu0 0.0
      %6696 = vmatprep.subr.mxu0 0.0
      %6697 = vmatpush1.xpose.msra.mxu0 0.0
      %6698 = vmatprep.subr.mxu0 0.0
      %6699 = vmatpush1.xpose.msra.mxu0 0.0
      %6700 = vmatprep.subr.mxu0 0.0
      %6701 = vmatpush1.xpose.msra.mxu0 0.0
      %6702 = vmatprep.subr.mxu0 0.0
      %6703 = vmatpush1.xpose.msra.mxu0 0.0
      %6704 = vmatprep.subr.mxu0 0.0
      %6705 = vmatpush1.xpose.msra.mxu0 0.0
      %6706 = vmatprep.subr.mxu0 0.0
      %6707 = vmatpush1.xpose.msra.mxu0 0.0
      %6708 = vmatprep.subr.mxu0 0.0
      %6709 = vmatpush1.xpose.msra.mxu0 0.0
      %6710 = vmatprep.subr.mxu0 0.0
      %6711 = vmatpush1.xpose.msra.mxu0 0.0
      %6712 = vmatprep.subr.mxu0 0.0
      %6713 = vmatpush1.xpose.msra.mxu0 0.0
      %6714 = vmatprep.subr.mxu0 0.0
      %6715 = vmatpush1.xpose.msra.mxu0 0.0
      %6716 = vmatprep.subr.mxu0 0.0
      %6717 = vmatpush1.xpose.msra.mxu0 0.0
      %6718 = vmatprep.subr.mxu0 0.0
      %6719 = vmatpush1.xpose.msra.mxu0 0.0
      %6720 = vmatprep.mubr.f32.mxu0 0.0
      %v6721 = vand.u32 %v5947, 4294901760
      %6722 = vmatmul.mubr.f32.gmra.mrb[0].mxu0 %v6721
      %v6723 = vpop.f32.mrb[0].mxu0
      %v6724 = vadd.f32 %v6619, %v6723
      %v6725 = vpop.f32.mrb[0].mxu0
      %6726 = vmatprep.mubr.f32.mxu0 0.0
      %v6727 = vand.u32 %v5948, 4294901760
      %6728 = vmatmul.mubr.f32.gmra.mrb[0].mxu0 %v6727
      %v6729 = vpop.f32.mrb[0].mxu0
      %v6730 = vadd.f32 %v6625, %v6729
      %v6731 = vpop.f32.mrb[0].mxu0
      %6732 = vmatprep.mubr.f32.mxu0 0.0
      %v6733 = vand.u32 %v5949, 4294901760
      %6734 = vmatmul.mubr.f32.gmra.mrb[0].mxu0 %v6733
      %v6735 = vpop.f32.mrb[0].mxu0
      %v6736 = vadd.f32 %v6631, %v6735
      %v6737 = vpop.f32.mrb[0].mxu0
      %6738 = vmatprep.mubr.f32.mxu0 0.0
      %v6739 = vand.u32 %v5950, 4294901760
      %6740 = vmatmul.mubr.f32.gmra.mrb[0].mxu0 %v6739
      %v6741 = vpop.f32.mrb[0].mxu0
      %v6742 = vadd.f32 %v6637, %v6741
      %v6743 = vpop.f32.mrb[0].mxu0
      %6744 = vdwg.mxu0
      %v6745 = vmax.f32 %v6724, 0.0
      %v6746 = vmax.f32 %v6730, 0.0
      %v6747 = vmax.f32 %v6736, 0.0
      %v6748 = vmax.f32 %v6742, 0.0
      %6750 = vrot.lane.b32.xlu0 %v6746, 64
      %v6751 = vpop.permute.xlu0 %6750
      %6754 = vrot.lane.b32.xlu0 %v6748, 64
      %v6755 = vpop.permute.xlu0 %6754
      %v6757 = vsel %vm161, %v6745, %v6751
      %v6758 = vsel %vm161, %v6747, %v6755
      %v6759 = vadd.f32 %v152, %v6757
      %v6760 = vadd.f32 %v153, %v6758
      %6761 = vst [vmem:[%s150] sm:$0xff] %v6759
      %6762 = vst [vmem:[%s150 + $0x8] sm:$0xff] %v6760
      %6764 = vrot.lane.b32.xlu0 %v6745, 64
      %v6765 = vpop.permute.xlu0 %6764
      %6768 = vrot.lane.b32.xlu0 %v6747, 64
      %v6769 = vpop.permute.xlu0 %6768
      %v6771 = vsel %vm161, %v6765, %v6746
      %v6772 = vsel %vm161, %v6769, %v6748
      %v6773 = vadd.f32 %v155, %v6771
      %v6774 = vadd.f32 %v156, %v6772
      %s6775 = scalar_lea.vmem %s150, 16
      %6776 = vst [vmem:[%s6775] sm:$0xff] %v6773
      %6777 = vst [vmem:[%s6775 + $0x8] sm:$0xff] %v6774
      %s6778 = smul.u32 2, %s13
      %p6779 = scmp.lt.s32.totalorder %s6778, 3
      %s6780 = scalar_select %p6779, %s6778, 3
      %s6781 = smul.addr %s6780, 2
      %s6782 = smul.addr %s6781, 8
      %s6783 = scalar_lea.vmem %s2, %s6782
      // Predicated region
      $region29: #{_lambda_.1} parent=27 // pred_check
        %p6784 = pneg %p78
      $region30: #{_lambda_.1} parent=27 // pred_check_branch
        %6786 = sbr.rel (%p6784) target = $region32
      $region31: #{_lambda_.1} parent=27 // pred_region
        %s6787 = smul.u32 2, %s13
      $region32: #{_lambda_.1} parent=27 // pred_fallthru
        _
    $region28: #{_lambda_.1} parent=5 // pred_fallthru
      _
    %p6788 = scmp.le.s32.totalorder 2, %s8
    // Predicated region
    $region33: #{_lambda_.1} parent=5 // pred_check
      %p6789 = pneg %p6788
    $region34: #{_lambda_.1} parent=5 // pred_check_branch
      %6791 = sbr.rel (%p6789) target = $region36
    $region35: #{_lambda_.1} parent=5 // pred_region
      %s6792 = ssub.s32 %s8, 2
      // Predicated region
      $region37: #{_lambda_.1} parent=35 // pred_check
        %p6793 = pneg %p84
      $region38: #{_lambda_.1} parent=35 // pred_check_branch
        %6795 = sbr.rel (%p6793) target = $region40
      $region39: #{_lambda_.1} parent=35 // pred_region
        %s6796 = smul.u32 2, %s14
        %p6797 = scmp.lt.s32.totalorder %s6796, 3
        %s6798 = scalar_select %p6797, %s6796, 3
        %s6799 = smul.addr %s6798, 2
        %s6800 = smul.addr %s6799, 8
        %s6801 = scalar_lea.vmem %s2, %s6800
      $region40: #{_lambda_.1} parent=35 // pred_fallthru
        _
    $region36: #{_lambda_.1} parent=5 // pred_fallthru
      _
  $region6: #{_lambda_.1} parent=0 // loop_footer
    %s12 = sadd.s32 1, %s8
  $region7: #{_lambda_.1} parent=0 // loop_footer_branch
    %7 = sbr.rel target = $region3
  $region8: #{_lambda_.1} parent=0 // loop_exit
    _

</llo_original>
